<compile_context>
chip_gen: v6e
topology: v6e:2x2x1
jax: 0.10.0
libtpu: 0.0.40
codegen_flags: <defaults>
</compile_context>

<pallas_src>
import jax
import jax.numpy as jnp
from jax.experimental import pallas as pl
from jax.experimental.pallas import tpu as pltpu


def rcab_kernel(xpad_ref, w1_ref, b1_ref, w2_ref, b2_ref,
                wd_ref, bd_ref, wu_ref, bu_ref, out_ref,
                xb_sc, slab_sc, pad_sc):
    Hp, Wp, C = xpad_ref.shape[1], xpad_ref.shape[2], xpad_ref.shape[3]
    H, W = Hp - 2, Wp - 2
    HW = H * W
    C2 = 2 * C                               # 128-lane tap-pair block (C=64)

    # ---- one-time bf16 cast of the padded input (conv1 taps read bf16) ----
    xb_sc[...] = xpad_ref[0].astype(jnp.bfloat16)

    zpad = jnp.zeros((HW, C), jnp.bfloat16)   # hoisted: shared by both convs

    def build_slab(src_ref):
        # im2col slab with 128-lane-aligned column writes.  Taps t=0..8
        # ((dy,dx)=(t//3,t%3)) are written in pairs: columns [p*128,(p+1)*128)
        # hold taps (2p, 2p+1) concatenated, so every store is a full aligned
        # 128-wide vst.  The 5th block is tap 8 + explicit zeros; the matching
        # weight rows are zero, and the pad columns are rewritten every step,
        # so no stale/NaN VMEM can leak into the matmul.
        def tap(t):
            dy, dx = t // 3, t % 3
            return (src_ref[dy:dy + H, dx:dx + W, :]
                    .reshape(HW, C).astype(jnp.bfloat16))
        for p in range(4):
            slab_sc[:, p * C2:(p + 1) * C2] = jnp.concatenate(
                [tap(2 * p), tap(2 * p + 1)], axis=1)
        slab_sc[:, 4 * C2:5 * C2] = jnp.concatenate([tap(8), zpad], axis=1)

    # ---- conv1: slab (HW, 10C) -> one MXU matmul (K=640) -> +bias -> ReLU --
    build_slab(xb_sc)
    out1 = jnp.maximum(
        jnp.dot(slab_sc[...], w1_ref[...], preferred_element_type=jnp.float32)
        + b1_ref[...], 0.0)                                      # (HW, C) f32

    # ---- re-pad intermediate activation (zero only the border strips; the
    #      interior is fully overwritten, so this is correct every step even
    #      when the batch axis is split across TensorCores) ----
    pad_sc[0:1, :, :] = jnp.zeros((1, Wp, C), jnp.float32)
    pad_sc[H + 1:H + 2, :, :] = jnp.zeros((1, Wp, C), jnp.float32)
    pad_sc[:, 0:1, :] = jnp.zeros((Hp, 1, C), jnp.float32)
    pad_sc[:, W + 1:W + 2, :] = jnp.zeros((Hp, 1, C), jnp.float32)
    pad_sc[1:H + 1, 1:W + 1, :] = out1.reshape(H, W, C)

    # ---- conv2: same aligned slab construction, one MXU matmul, +bias ----
    build_slab(pad_sc)
    out2 = jnp.dot(slab_sc[...], w2_ref[...],
                   preferred_element_type=jnp.float32) + b2_ref[...]  # (HW, C)

    # ---- channel attention: GAP -> 1x1 -> ReLU -> 1x1 -> sigmoid ----
    # 1x1 layers as broadcast-mul + reduce (VPU/XLU); sigmoid rides the EUP.
    gap = jnp.mean(out2, axis=0, keepdims=True)                  # (1, C)
    hid = jnp.maximum(
        jnp.sum(gap * wd_ref[...], axis=1, keepdims=True) + bd_ref[...],
        0.0)                                                     # (Cr, 1)
    att = jax.nn.sigmoid(
        jnp.sum(hid * wu_ref[...], axis=0, keepdims=True) + bu_ref[...])  # (1,C)

    # ---- channel scale + residual add (residual read from the f32 input) ---
    x_center = xpad_ref[0, 1:H + 1, 1:W + 1, :].reshape(HW, C)
    out_ref[0] = (out2 * att + x_center).reshape(H, W, C).astype(out_ref.dtype)


def rcab_forward(x_nchw, params):
    """x_nchw: [N, C, H, W] float32. params: dict of kernel-layout weights."""
    N, C, H, W = x_nchw.shape
    Cr = params["wd"].shape[0]
    Kp = params["w1"].shape[0]                 # padded im2col K (= 10*C)
    assert (2 * C) % 128 == 0, "pair-aligned slab layout assumes 2*C % 128 == 0"
    assert Kp == 10 * C

    x = jnp.transpose(x_nchw, (0, 2, 3, 1))                      # -> NHWC
    xpad = jnp.pad(x, ((0, 0), (1, 1), (1, 1), (0, 0)))          # spatial pad=1

    out_nhwc = pl.pallas_call(
        rcab_kernel,
        out_shape=jax.ShapeDtypeStruct((N, H, W, C), jnp.float32),
        grid_spec=pltpu.PrefetchScalarGridSpec(
            num_scalar_prefetch=0,
            grid=(N,),
            in_specs=[
                pl.BlockSpec((1, H + 2, W + 2, C), lambda n: (n, 0, 0, 0)),
                # Constant-index weights: Pallas skips re-fetch across steps.
                pl.BlockSpec((Kp, C), lambda n: (0, 0)),   # w1 (im2col, bf16)
                pl.BlockSpec((1, C), lambda n: (0, 0)),    # b1
                pl.BlockSpec((Kp, C), lambda n: (0, 0)),   # w2 (im2col, bf16)
                pl.BlockSpec((1, C), lambda n: (0, 0)),    # b2
                pl.BlockSpec((Cr, C), lambda n: (0, 0)),   # wd (CA down)
                pl.BlockSpec((Cr, 1), lambda n: (0, 0)),   # bd
                pl.BlockSpec((Cr, C), lambda n: (0, 0)),   # wu (CA up)
                pl.BlockSpec((1, C), lambda n: (0, 0)),    # bu
            ],
            out_specs=pl.BlockSpec((1, H, W, C), lambda n: (n, 0, 0, 0)),
            scratch_shapes=[
                pltpu.VMEM((H + 2, W + 2, C), jnp.bfloat16),  # bf16 input copy
                pltpu.VMEM((H * W, Kp), jnp.bfloat16),        # im2col slab
                pltpu.VMEM((H + 2, W + 2, C), jnp.float32),   # padded out1
            ],
        ),
        compiler_params=pltpu.CompilerParams(
            dimension_semantics=("parallel",),               # v7x: 2 TCs
            vmem_limit_bytes=32 * 1024 * 1024,
        ),
    )(xpad, params["w1"], params["b1"], params["w2"], params["b2"],
      params["wd"], params["bd"], params["wu"], params["bu"])

    return jnp.transpose(out_nhwc, (0, 3, 1, 2))                 # -> NCHW


def make_params(key, channels=64, reduction=16, scale=0.05):
    """Deterministic synthetic parameters, generated in PyTorch layout then
    converted to the kernel's layouts (K-padded im2col conv weights in bf16)."""
    Cr = channels // reduction
    Kp = 10 * channels                         # 9 taps + 1 zero group
    ks = jax.random.split(key, 8)
    # PyTorch layouts: conv weight OIHW, bias (O,)
    w1_t = scale * jax.random.normal(ks[0], (channels, channels, 3, 3), jnp.float32)
    b1_t = scale * jax.random.normal(ks[1], (channels,), jnp.float32)
    w2_t = scale * jax.random.normal(ks[2], (channels, channels, 3, 3), jnp.float32)
    b2_t = scale * jax.random.normal(ks[3], (channels,), jnp.float32)
    wd_t = scale * jax.random.normal(ks[4], (Cr, channels, 1, 1), jnp.float32)
    bd_t = scale * jax.random.normal(ks[5], (Cr,), jnp.float32)
    wu_t = scale * jax.random.normal(ks[6], (channels, Cr, 1, 1), jnp.float32)
    bu_t = scale * jax.random.normal(ks[7], (channels,), jnp.float32)

    torch_params = dict(w1=w1_t, b1=b1_t, w2=w2_t, b2=b2_t,
                        wd=wd_t, bd=bd_t, wu=wu_t, bu=bu_t)

    def to_im2col(w_oihw):
        # OIHW -> (kh, kw, in, out) -> (9*Cin, Cout), rows ordered (ky, kx, cin),
        # then zero-padded to Kp rows to match the lane-aligned slab layout.
        w = jnp.transpose(w_oihw, (2, 3, 1, 0)).reshape(9 * channels, channels)
        w = jnp.concatenate(
            [w, jnp.zeros((Kp - 9 * channels, channels), w.dtype)], axis=0)
        return w.astype(jnp.bfloat16)

    kernel_params = dict(
        w1=to_im2col(w1_t),
        b1=b1_t.reshape(1, channels),
        w2=to_im2col(w2_t),
        b2=b2_t.reshape(1, channels),
        wd=wd_t[:, :, 0, 0],                          # (Cr, C)
        bd=bd_t.reshape(Cr, 1),                       # (Cr, 1)
        wu=jnp.transpose(wu_t[:, :, 0, 0], (1, 0)),   # (Cr, C)
        bu=bu_t.reshape(1, channels),                 # (1, C)
    )
    return kernel_params, torch_params


def ref_forward(x, p):
    """Pure-JAX reference mirroring the PyTorch module (NCHW, f32 HIGHEST)."""
    dn = ("NCHW", "OIHW", "NCHW")
    hp = jax.lax.Precision.HIGHEST

    def conv(v, w, pad):
        return jax.lax.conv_general_dilated(v, w, (1, 1), pad,
                                            dimension_numbers=dn, precision=hp)

    out = conv(x, p["w1"], "SAME") + p["b1"][None, :, None, None]
    out = jnp.maximum(out, 0.0)
    out = conv(out, p["w2"], "SAME") + p["b2"][None, :, None, None]
    g = jnp.mean(out, axis=(2, 3), keepdims=True)
    h = jnp.maximum(conv(g, p["wd"], "VALID") + p["bd"][None, :, None, None], 0.0)
    a = jax.nn.sigmoid(conv(h, p["wu"], "VALID") + p["bu"][None, :, None, None])
    return out * a + x


if __name__ == "__main__":
    channels, reduction = 64, 16
    N, H, W = 2, 16, 16

    key = jax.random.PRNGKey(0)
    kx, kp = jax.random.split(key)
    x = jax.random.normal(kx, (N, channels, H, W), jnp.float32)
    kernel_params, torch_params = make_params(kp, channels, reduction)

    out = jax.block_until_ready(rcab_forward(x, kernel_params))
    ref = jax.block_until_ready(ref_forward(x, torch_params))

    assert out.shape == (N, channels, H, W)
    # Tolerance note: the kernel feeds bf16 operands to the MXU (f32 accum)
    # while the reference is f32 at Precision.HIGHEST; observed error through
    # the two stacked convs stays well under this bound.
    assert jnp.allclose(out, ref, atol=5e-2, rtol=2e-2), (
        float(jnp.max(jnp.abs(out - ref))))

    print("KERNEL_OK")
</pallas_src>

<mosaic_0001>
module attributes {stable_mosaic.version = 11 : i64} {
  func.func @rcab_kernel(%arg0: i32, %arg1: memref<1x18x18x64xf32, #tpu.memory_space<vmem>>, %arg2: memref<640x64xbf16, #tpu.memory_space<vmem>>, %arg3: memref<1x64xf32, #tpu.memory_space<vmem>>, %arg4: memref<640x64xbf16, #tpu.memory_space<vmem>>, %arg5: memref<1x64xf32, #tpu.memory_space<vmem>>, %arg6: memref<4x64xf32, #tpu.memory_space<vmem>>, %arg7: memref<4x1xf32, #tpu.memory_space<vmem>>, %arg8: memref<4x64xf32, #tpu.memory_space<vmem>>, %arg9: memref<1x64xf32, #tpu.memory_space<vmem>>, %arg10: memref<1x16x16x64xf32, #tpu.memory_space<vmem>>, %arg11: memref<18x18x64xbf16, #tpu.memory_space<vmem>>, %arg12: memref<256x640xbf16, #tpu.memory_space<vmem>>, %arg13: memref<18x18x64xf32, #tpu.memory_space<vmem>>) attributes {dimension_semantics = [#tpu.dimension_semantics<parallel>], iteration_bounds = array<i64: 2>, scalar_prefetch = 0 : i64, scratch_operands = 3 : i64, tpu.core_type = #tpu.core_type<tc>, window_params = [{transform_indices = @transform_0, window_bounds = array<i64: 1, 18, 18, 64>}, {pipeline_mode = #tpu.pipeline_mode<synchronous>, transform_indices = @transform_1, window_bounds = array<i64: 640, 64>}, {pipeline_mode = #tpu.pipeline_mode<synchronous>, transform_indices = @transform_2, window_bounds = array<i64: 1, 64>}, {pipeline_mode = #tpu.pipeline_mode<synchronous>, transform_indices = @transform_3, window_bounds = array<i64: 640, 64>}, {pipeline_mode = #tpu.pipeline_mode<synchronous>, transform_indices = @transform_4, window_bounds = array<i64: 1, 64>}, {pipeline_mode = #tpu.pipeline_mode<synchronous>, transform_indices = @transform_5, window_bounds = array<i64: 4, 64>}, {pipeline_mode = #tpu.pipeline_mode<synchronous>, transform_indices = @transform_6, window_bounds = array<i64: 4, 1>}, {pipeline_mode = #tpu.pipeline_mode<synchronous>, transform_indices = @transform_7, window_bounds = array<i64: 4, 64>}, {pipeline_mode = #tpu.pipeline_mode<synchronous>, transform_indices = @transform_8, window_bounds = array<i64: 1, 64>}, {transform_indices = @transform_9, window_bounds = array<i64: 1, 16, 16, 64>}]} {
    %c0 = arith.constant 0 : index
    %c0_0 = arith.constant 0 : index
    %c0_1 = arith.constant 0 : index
    %c0_2 = arith.constant 0 : index
    %0 = vector.load %arg1[%c0, %c0_0, %c0_1, %c0_2] : memref<1x18x18x64xf32, #tpu.memory_space<vmem>>, vector<1x18x18x64xf32>
    %1 = vector.shape_cast %0 : vector<1x18x18x64xf32> to vector<18x18x64xf32>
    %2 = arith.truncf %1 : vector<18x18x64xf32> to vector<18x18x64xbf16>
    %c0_3 = arith.constant 0 : index
    %c0_4 = arith.constant 0 : index
    %c0_5 = arith.constant 0 : index
    %3 = vector.load %arg11[%c0_3, %c0_4, %c0_5] : memref<18x18x64xbf16, #tpu.memory_space<vmem>>, vector<18x18x64xbf16>
    tpu.vector_store %arg11[%c0_3, %c0_4, %c0_5], %2 {strides = array<i32>} : memref<18x18x64xbf16, #tpu.memory_space<vmem>>, vector<18x18x64xbf16>,
    %cst = arith.constant 0.000000e+00 : bf16
    %4 = vector.broadcast %cst : bf16 to vector<256x64xbf16>
    %c0_6 = arith.constant 0 : index
    %c0_7 = arith.constant 0 : index
    %c0_8 = arith.constant 0 : index
    %5 = vector.load %arg11[%c0_6, %c0_7, %c0_8] : memref<18x18x64xbf16, #tpu.memory_space<vmem>>, vector<16x16x64xbf16>
    %6 = vector.shape_cast %5 : vector<16x16x64xbf16> to vector<256x64xbf16>
    %c0_9 = arith.constant 0 : index
    %c1 = arith.constant 1 : index
    %c0_10 = arith.constant 0 : index
    %7 = vector.load %arg11[%c0_9, %c1, %c0_10] : memref<18x18x64xbf16, #tpu.memory_space<vmem>>, vector<16x16x64xbf16>
    %8 = vector.shape_cast %7 : vector<16x16x64xbf16> to vector<256x64xbf16>
    %9 = tpu.concatenate %6, %8 in 1 : vector<256x64xbf16>, vector<256x64xbf16> -> vector<256x128xbf16>
    %c0_11 = arith.constant 0 : index
    %c0_12 = arith.constant 0 : index
    %10 = vector.load %arg12[%c0_11, %c0_12] : memref<256x640xbf16, #tpu.memory_space<vmem>>, vector<256x128xbf16>
    tpu.vector_store %arg12[%c0_11, %c0_12], %9 {strides = array<i32>} : memref<256x640xbf16, #tpu.memory_space<vmem>>, vector<256x128xbf16>,
    %c0_13 = arith.constant 0 : index
    %c2 = arith.constant 2 : index
    %c0_14 = arith.constant 0 : index
    %11 = vector.load %arg11[%c0_13, %c2, %c0_14] : memref<18x18x64xbf16, #tpu.memory_space<vmem>>, vector<16x16x64xbf16>
    %12 = vector.shape_cast %11 : vector<16x16x64xbf16> to vector<256x64xbf16>
    %c1_15 = arith.constant 1 : index
    %c0_16 = arith.constant 0 : index
    %c0_17 = arith.constant 0 : index
    %13 = vector.load %arg11[%c1_15, %c0_16, %c0_17] : memref<18x18x64xbf16, #tpu.memory_space<vmem>>, vector<16x16x64xbf16>
    %14 = vector.shape_cast %13 : vector<16x16x64xbf16> to vector<256x64xbf16>
    %15 = tpu.concatenate %12, %14 in 1 : vector<256x64xbf16>, vector<256x64xbf16> -> vector<256x128xbf16>
    %c0_18 = arith.constant 0 : index
    %c128 = arith.constant 128 : index
    %16 = vector.load %arg12[%c0_18, %c128] : memref<256x640xbf16, #tpu.memory_space<vmem>>, vector<256x128xbf16>
    tpu.vector_store %arg12[%c0_18, %c128], %15 {strides = array<i32>} : memref<256x640xbf16, #tpu.memory_space<vmem>>, vector<256x128xbf16>,
    %c1_19 = arith.constant 1 : index
    %c1_20 = arith.constant 1 : index
    %c0_21 = arith.constant 0 : index
    %17 = vector.load %arg11[%c1_19, %c1_20, %c0_21] : memref<18x18x64xbf16, #tpu.memory_space<vmem>>, vector<16x16x64xbf16>
    %18 = vector.shape_cast %17 : vector<16x16x64xbf16> to vector<256x64xbf16>
    %c1_22 = arith.constant 1 : index
    %c2_23 = arith.constant 2 : index
    %c0_24 = arith.constant 0 : index
    %19 = vector.load %arg11[%c1_22, %c2_23, %c0_24] : memref<18x18x64xbf16, #tpu.memory_space<vmem>>, vector<16x16x64xbf16>
    %20 = vector.shape_cast %19 : vector<16x16x64xbf16> to vector<256x64xbf16>
    %21 = tpu.concatenate %18, %20 in 1 : vector<256x64xbf16>, vector<256x64xbf16> -> vector<256x128xbf16>
    %c0_25 = arith.constant 0 : index
    %c256 = arith.constant 256 : index
    %22 = vector.load %arg12[%c0_25, %c256] : memref<256x640xbf16, #tpu.memory_space<vmem>>, vector<256x128xbf16>
    tpu.vector_store %arg12[%c0_25, %c256], %21 {strides = array<i32>} : memref<256x640xbf16, #tpu.memory_space<vmem>>, vector<256x128xbf16>,
    %c2_26 = arith.constant 2 : index
    %c0_27 = arith.constant 0 : index
    %c0_28 = arith.constant 0 : index
    %23 = vector.load %arg11[%c2_26, %c0_27, %c0_28] : memref<18x18x64xbf16, #tpu.memory_space<vmem>>, vector<16x16x64xbf16>
    %24 = vector.shape_cast %23 : vector<16x16x64xbf16> to vector<256x64xbf16>
    %c2_29 = arith.constant 2 : index
    %c1_30 = arith.constant 1 : index
    %c0_31 = arith.constant 0 : index
    %25 = vector.load %arg11[%c2_29, %c1_30, %c0_31] : memref<18x18x64xbf16, #tpu.memory_space<vmem>>, vector<16x16x64xbf16>
    %26 = vector.shape_cast %25 : vector<16x16x64xbf16> to vector<256x64xbf16>
    %27 = tpu.concatenate %24, %26 in 1 : vector<256x64xbf16>, vector<256x64xbf16> -> vector<256x128xbf16>
    %c0_32 = arith.constant 0 : index
    %c384 = arith.constant 384 : index
    %28 = vector.load %arg12[%c0_32, %c384] : memref<256x640xbf16, #tpu.memory_space<vmem>>, vector<256x128xbf16>
    tpu.vector_store %arg12[%c0_32, %c384], %27 {strides = array<i32>} : memref<256x640xbf16, #tpu.memory_space<vmem>>, vector<256x128xbf16>,
    %c2_33 = arith.constant 2 : index
    %c2_34 = arith.constant 2 : index
    %c0_35 = arith.constant 0 : index
    %29 = vector.load %arg11[%c2_33, %c2_34, %c0_35] : memref<18x18x64xbf16, #tpu.memory_space<vmem>>, vector<16x16x64xbf16>
    %30 = vector.shape_cast %29 : vector<16x16x64xbf16> to vector<256x64xbf16>
    %31 = tpu.concatenate %30, %4 in 1 : vector<256x64xbf16>, vector<256x64xbf16> -> vector<256x128xbf16>
    %c0_36 = arith.constant 0 : index
    %c512 = arith.constant 512 : index
    %32 = vector.load %arg12[%c0_36, %c512] : memref<256x640xbf16, #tpu.memory_space<vmem>>, vector<256x128xbf16>
    tpu.vector_store %arg12[%c0_36, %c512], %31 {strides = array<i32>} : memref<256x640xbf16, #tpu.memory_space<vmem>>, vector<256x128xbf16>,
    %c0_37 = arith.constant 0 : index
    %c0_38 = arith.constant 0 : index
    %33 = vector.load %arg12[%c0_37, %c0_38] : memref<256x640xbf16, #tpu.memory_space<vmem>>, vector<256x640xbf16>
    %c0_39 = arith.constant 0 : index
    %c0_40 = arith.constant 0 : index
    %34 = vector.load %arg2[%c0_39, %c0_40] : memref<640x64xbf16, #tpu.memory_space<vmem>>, vector<640x64xbf16>
    %cst_41 = arith.constant dense<0.000000e+00> : vector<256x64xf32>
    %35 = tpu.matmul %33, %34, %cst_41 {dimension_numbers = #tpu.dot_dimension_numbers<[1], [0], [0], [1], [0, 0, 1, 1], [], []>} : vector<256x640xbf16>, vector<640x64xbf16>, vector<256x64xf32> -> vector<256x64xf32>
    %c0_42 = arith.constant 0 : index
    %c0_43 = arith.constant 0 : index
    %36 = vector.load %arg3[%c0_42, %c0_43] : memref<1x64xf32, #tpu.memory_space<vmem>>, vector<1x64xf32>
    %37 = vector.broadcast %36 : vector<1x64xf32> to vector<256x64xf32>
    %38 = arith.addf %35, %37 : vector<256x64xf32>
    %cst_44 = arith.constant 0.000000e+00 : f32
    %39 = vector.broadcast %cst_44 : f32 to vector<256x64xf32>
    %40 = arith.maximumf %38, %39 : vector<256x64xf32>
    %cst_45 = arith.constant 0.000000e+00 : f32
    %41 = vector.broadcast %cst_45 : f32 to vector<1x18x64xf32>
    %c0_46 = arith.constant 0 : index
    %c0_47 = arith.constant 0 : index
    %c0_48 = arith.constant 0 : index
    %42 = vector.load %arg13[%c0_46, %c0_47, %c0_48] : memref<18x18x64xf32, #tpu.memory_space<vmem>>, vector<1x18x64xf32>
    tpu.vector_store %arg13[%c0_46, %c0_47, %c0_48], %41 {strides = array<i32>} : memref<18x18x64xf32, #tpu.memory_space<vmem>>, vector<1x18x64xf32>,
    %cst_49 = arith.constant 0.000000e+00 : f32
    %43 = vector.broadcast %cst_49 : f32 to vector<1x18x64xf32>
    %c17 = arith.constant 17 : index
    %c0_50 = arith.constant 0 : index
    %c0_51 = arith.constant 0 : index
    %44 = vector.load %arg13[%c17, %c0_50, %c0_51] : memref<18x18x64xf32, #tpu.memory_space<vmem>>, vector<1x18x64xf32>
    tpu.vector_store %arg13[%c17, %c0_50, %c0_51], %43 {strides = array<i32>} : memref<18x18x64xf32, #tpu.memory_space<vmem>>, vector<1x18x64xf32>,
    %cst_52 = arith.constant 0.000000e+00 : f32
    %45 = vector.broadcast %cst_52 : f32 to vector<18x1x64xf32>
    %c0_53 = arith.constant 0 : index
    %c0_54 = arith.constant 0 : index
    %c0_55 = arith.constant 0 : index
    %46 = vector.load %arg13[%c0_53, %c0_54, %c0_55] : memref<18x18x64xf32, #tpu.memory_space<vmem>>, vector<18x1x64xf32>
    tpu.vector_store %arg13[%c0_53, %c0_54, %c0_55], %45 {strides = array<i32>} : memref<18x18x64xf32, #tpu.memory_space<vmem>>, vector<18x1x64xf32>,
    %cst_56 = arith.constant 0.000000e+00 : f32
    %47 = vector.broadcast %cst_56 : f32 to vector<18x1x64xf32>
    %c0_57 = arith.constant 0 : index
    %c17_58 = arith.constant 17 : index
    %c0_59 = arith.constant 0 : index
    %48 = vector.load %arg13[%c0_57, %c17_58, %c0_59] : memref<18x18x64xf32, #tpu.memory_space<vmem>>, vector<18x1x64xf32>
    tpu.vector_store %arg13[%c0_57, %c17_58, %c0_59], %47 {strides = array<i32>} : memref<18x18x64xf32, #tpu.memory_space<vmem>>, vector<18x1x64xf32>,
    %49 = vector.shape_cast %40 : vector<256x64xf32> to vector<16x16x64xf32>
    %c1_60 = arith.constant 1 : index
    %c1_61 = arith.constant 1 : index
    %c0_62 = arith.constant 0 : index
    %50 = vector.load %arg13[%c1_60, %c1_61, %c0_62] : memref<18x18x64xf32, #tpu.memory_space<vmem>>, vector<16x16x64xf32>
    tpu.vector_store %arg13[%c1_60, %c1_61, %c0_62], %49 {strides = array<i32>} : memref<18x18x64xf32, #tpu.memory_space<vmem>>, vector<16x16x64xf32>,
    %c0_63 = arith.constant 0 : index
    %c0_64 = arith.constant 0 : index
    %c0_65 = arith.constant 0 : index
    %51 = vector.load %arg13[%c0_63, %c0_64, %c0_65] : memref<18x18x64xf32, #tpu.memory_space<vmem>>, vector<16x16x64xf32>
    %52 = vector.shape_cast %51 : vector<16x16x64xf32> to vector<256x64xf32>
    %53 = arith.truncf %52 : vector<256x64xf32> to vector<256x64xbf16>
    %c0_66 = arith.constant 0 : index
    %c1_67 = arith.constant 1 : index
    %c0_68 = arith.constant 0 : index
    %54 = vector.load %arg13[%c0_66, %c1_67, %c0_68] : memref<18x18x64xf32, #tpu.memory_space<vmem>>, vector<16x16x64xf32>
    %55 = vector.shape_cast %54 : vector<16x16x64xf32> to vector<256x64xf32>
    %56 = arith.truncf %55 : vector<256x64xf32> to vector<256x64xbf16>
    %57 = tpu.concatenate %53, %56 in 1 : vector<256x64xbf16>, vector<256x64xbf16> -> vector<256x128xbf16>
    %c0_69 = arith.constant 0 : index
    %c0_70 = arith.constant 0 : index
    %58 = vector.load %arg12[%c0_69, %c0_70] : memref<256x640xbf16, #tpu.memory_space<vmem>>, vector<256x128xbf16>
    tpu.vector_store %arg12[%c0_69, %c0_70], %57 {strides = array<i32>} : memref<256x640xbf16, #tpu.memory_space<vmem>>, vector<256x128xbf16>,
    %c0_71 = arith.constant 0 : index
    %c2_72 = arith.constant 2 : index
    %c0_73 = arith.constant 0 : index
    %59 = vector.load %arg13[%c0_71, %c2_72, %c0_73] : memref<18x18x64xf32, #tpu.memory_space<vmem>>, vector<16x16x64xf32>
    %60 = vector.shape_cast %59 : vector<16x16x64xf32> to vector<256x64xf32>
    %61 = arith.truncf %60 : vector<256x64xf32> to vector<256x64xbf16>
    %c1_74 = arith.constant 1 : index
    %c0_75 = arith.constant 0 : index
    %c0_76 = arith.constant 0 : index
    %62 = vector.load %arg13[%c1_74, %c0_75, %c0_76] : memref<18x18x64xf32, #tpu.memory_space<vmem>>, vector<16x16x64xf32>
    %63 = vector.shape_cast %62 : vector<16x16x64xf32> to vector<256x64xf32>
    %64 = arith.truncf %63 : vector<256x64xf32> to vector<256x64xbf16>
    %65 = tpu.concatenate %61, %64 in 1 : vector<256x64xbf16>, vector<256x64xbf16> -> vector<256x128xbf16>
    %c0_77 = arith.constant 0 : index
    %c128_78 = arith.constant 128 : index
    %66 = vector.load %arg12[%c0_77, %c128_78] : memref<256x640xbf16, #tpu.memory_space<vmem>>, vector<256x128xbf16>
    tpu.vector_store %arg12[%c0_77, %c128_78], %65 {strides = array<i32>} : memref<256x640xbf16, #tpu.memory_space<vmem>>, vector<256x128xbf16>,
    %c1_79 = arith.constant 1 : index
    %c1_80 = arith.constant 1 : index
    %c0_81 = arith.constant 0 : index
    %67 = vector.load %arg13[%c1_79, %c1_80, %c0_81] : memref<18x18x64xf32, #tpu.memory_space<vmem>>, vector<16x16x64xf32>
    %68 = vector.shape_cast %67 : vector<16x16x64xf32> to vector<256x64xf32>
    %69 = arith.truncf %68 : vector<256x64xf32> to vector<256x64xbf16>
    %c1_82 = arith.constant 1 : index
    %c2_83 = arith.constant 2 : index
    %c0_84 = arith.constant 0 : index
    %70 = vector.load %arg13[%c1_82, %c2_83, %c0_84] : memref<18x18x64xf32, #tpu.memory_space<vmem>>, vector<16x16x64xf32>
    %71 = vector.shape_cast %70 : vector<16x16x64xf32> to vector<256x64xf32>
    %72 = arith.truncf %71 : vector<256x64xf32> to vector<256x64xbf16>
    %73 = tpu.concatenate %69, %72 in 1 : vector<256x64xbf16>, vector<256x64xbf16> -> vector<256x128xbf16>
    %c0_85 = arith.constant 0 : index
    %c256_86 = arith.constant 256 : index
    %74 = vector.load %arg12[%c0_85, %c256_86] : memref<256x640xbf16, #tpu.memory_space<vmem>>, vector<256x128xbf16>
    tpu.vector_store %arg12[%c0_85, %c256_86], %73 {strides = array<i32>} : memref<256x640xbf16, #tpu.memory_space<vmem>>, vector<256x128xbf16>,
    %c2_87 = arith.constant 2 : index
    %c0_88 = arith.constant 0 : index
    %c0_89 = arith.constant 0 : index
    %75 = vector.load %arg13[%c2_87, %c0_88, %c0_89] : memref<18x18x64xf32, #tpu.memory_space<vmem>>, vector<16x16x64xf32>
    %76 = vector.shape_cast %75 : vector<16x16x64xf32> to vector<256x64xf32>
    %77 = arith.truncf %76 : vector<256x64xf32> to vector<256x64xbf16>
    %c2_90 = arith.constant 2 : index
    %c1_91 = arith.constant 1 : index
    %c0_92 = arith.constant 0 : index
    %78 = vector.load %arg13[%c2_90, %c1_91, %c0_92] : memref<18x18x64xf32, #tpu.memory_space<vmem>>, vector<16x16x64xf32>
    %79 = vector.shape_cast %78 : vector<16x16x64xf32> to vector<256x64xf32>
    %80 = arith.truncf %79 : vector<256x64xf32> to vector<256x64xbf16>
    %81 = tpu.concatenate %77, %80 in 1 : vector<256x64xbf16>, vector<256x64xbf16> -> vector<256x128xbf16>
    %c0_93 = arith.constant 0 : index
    %c384_94 = arith.constant 384 : index
    %82 = vector.load %arg12[%c0_93, %c384_94] : memref<256x640xbf16, #tpu.memory_space<vmem>>, vector<256x128xbf16>
    tpu.vector_store %arg12[%c0_93, %c384_94], %81 {strides = array<i32>} : memref<256x640xbf16, #tpu.memory_space<vmem>>, vector<256x128xbf16>,
    %c2_95 = arith.constant 2 : index
    %c2_96 = arith.constant 2 : index
    %c0_97 = arith.constant 0 : index
    %83 = vector.load %arg13[%c2_95, %c2_96, %c0_97] : memref<18x18x64xf32, #tpu.memory_space<vmem>>, vector<16x16x64xf32>
    %84 = vector.shape_cast %83 : vector<16x16x64xf32> to vector<256x64xf32>
    %85 = arith.truncf %84 : vector<256x64xf32> to vector<256x64xbf16>
    %86 = tpu.concatenate %85, %4 in 1 : vector<256x64xbf16>, vector<256x64xbf16> -> vector<256x128xbf16>
    %c0_98 = arith.constant 0 : index
    %c512_99 = arith.constant 512 : index
    %87 = vector.load %arg12[%c0_98, %c512_99] : memref<256x640xbf16, #tpu.memory_space<vmem>>, vector<256x128xbf16>
    tpu.vector_store %arg12[%c0_98, %c512_99], %86 {strides = array<i32>} : memref<256x640xbf16, #tpu.memory_space<vmem>>, vector<256x128xbf16>,
    %c0_100 = arith.constant 0 : index
    %c0_101 = arith.constant 0 : index
    %88 = vector.load %arg12[%c0_100, %c0_101] : memref<256x640xbf16, #tpu.memory_space<vmem>>, vector<256x640xbf16>
    %c0_102 = arith.constant 0 : index
    %c0_103 = arith.constant 0 : index
    %89 = vector.load %arg4[%c0_102, %c0_103] : memref<640x64xbf16, #tpu.memory_space<vmem>>, vector<640x64xbf16>
    %cst_104 = arith.constant dense<0.000000e+00> : vector<256x64xf32>
    %90 = tpu.matmul %88, %89, %cst_104 {dimension_numbers = #tpu.dot_dimension_numbers<[1], [0], [0], [1], [0, 0, 1, 1], [], []>} : vector<256x640xbf16>, vector<640x64xbf16>, vector<256x64xf32> -> vector<256x64xf32>
    %c0_105 = arith.constant 0 : index
    %c0_106 = arith.constant 0 : index
    %91 = vector.load %arg5[%c0_105, %c0_106] : memref<1x64xf32, #tpu.memory_space<vmem>>, vector<1x64xf32>
    %92 = vector.broadcast %91 : vector<1x64xf32> to vector<256x64xf32>
    %93 = arith.addf %90, %92 : vector<256x64xf32>
    %cst_107 = arith.constant dense<0.000000e+00> : vector<64xf32>
    %94 = vector.multi_reduction <add>, %93, %cst_107 [0] : vector<256x64xf32> to vector<64xf32>
    %95 = vector.shape_cast %94 : vector<64xf32> to vector<1x64xf32>
    %cst_108 = arith.constant 2.560000e+02 : f32
    %96 = vector.broadcast %cst_108 : f32 to vector<1x64xf32>
    %97 = arith.divf %95, %96 : vector<1x64xf32>
    %c0_109 = arith.constant 0 : index
    %c0_110 = arith.constant 0 : index
    %98 = vector.load %arg6[%c0_109, %c0_110] : memref<4x64xf32, #tpu.memory_space<vmem>>, vector<4x64xf32>
    %99 = vector.broadcast %97 : vector<1x64xf32> to vector<4x64xf32>
    %100 = arith.mulf %99, %98 : vector<4x64xf32>
    %cst_111 = arith.constant dense<0.000000e+00> : vector<4xf32>
    %101 = vector.multi_reduction <add>, %100, %cst_111 [1] : vector<4x64xf32> to vector<4xf32>
    %102 = vector.shape_cast %101 : vector<4xf32> to vector<4x1xf32>
    %c0_112 = arith.constant 0 : index
    %c0_113 = arith.constant 0 : index
    %103 = vector.load %arg7[%c0_112, %c0_113] : memref<4x1xf32, #tpu.memory_space<vmem>>, vector<4x1xf32>
    %104 = arith.addf %102, %103 : vector<4x1xf32>
    %cst_114 = arith.constant 0.000000e+00 : f32
    %105 = vector.broadcast %cst_114 : f32 to vector<4x1xf32>
    %106 = arith.maximumf %104, %105 : vector<4x1xf32>
    %c0_115 = arith.constant 0 : index
    %c0_116 = arith.constant 0 : index
    %107 = vector.load %arg8[%c0_115, %c0_116] : memref<4x64xf32, #tpu.memory_space<vmem>>, vector<4x64xf32>
    %108 = vector.broadcast %106 : vector<4x1xf32> to vector<4x64xf32>
    %109 = arith.mulf %108, %107 : vector<4x64xf32>
    %cst_117 = arith.constant dense<0.000000e+00> : vector<64xf32>
    %110 = vector.multi_reduction <add>, %109, %cst_117 [0] : vector<4x64xf32> to vector<64xf32>
    %111 = vector.shape_cast %110 : vector<64xf32> to vector<1x64xf32>
    %c0_118 = arith.constant 0 : index
    %c0_119 = arith.constant 0 : index
    %112 = vector.load %arg9[%c0_118, %c0_119] : memref<1x64xf32, #tpu.memory_space<vmem>>, vector<1x64xf32>
    %113 = arith.addf %111, %112 : vector<1x64xf32>
    %114 = arith.negf %113 : vector<1x64xf32>
    %115 = math.exp %114 : vector<1x64xf32>
    %cst_120 = arith.constant 1.000000e+00 : f32
    %116 = vector.broadcast %cst_120 : f32 to vector<1x64xf32>
    %117 = arith.addf %116, %115 : vector<1x64xf32>
    %118 = arith.divf %116, %117 : vector<1x64xf32>
    %c0_121 = arith.constant 0 : index
    %c1_122 = arith.constant 1 : index
    %c1_123 = arith.constant 1 : index
    %c0_124 = arith.constant 0 : index
    %119 = vector.load %arg1[%c0_121, %c1_122, %c1_123, %c0_124] : memref<1x18x18x64xf32, #tpu.memory_space<vmem>>, vector<1x16x16x64xf32>
    %120 = vector.shape_cast %119 : vector<1x16x16x64xf32> to vector<16x16x64xf32>
    %121 = vector.shape_cast %120 : vector<16x16x64xf32> to vector<256x64xf32>
    %122 = vector.broadcast %118 : vector<1x64xf32> to vector<256x64xf32>
    %123 = arith.mulf %93, %122 : vector<256x64xf32>
    %124 = arith.addf %123, %121 : vector<256x64xf32>
    %125 = vector.shape_cast %124 : vector<256x64xf32> to vector<16x16x64xf32>
    %c0_125 = arith.constant 0 : index
    %c0_126 = arith.constant 0 : index
    %c0_127 = arith.constant 0 : index
    %c0_128 = arith.constant 0 : index
    %126 = vector.load %arg10[%c0_125, %c0_126, %c0_127, %c0_128] : memref<1x16x16x64xf32, #tpu.memory_space<vmem>>, vector<1x16x16x64xf32>
    %127 = vector.shape_cast %126 : vector<1x16x16x64xf32> to vector<16x16x64xf32>
    %128 = vector.shape_cast %125 : vector<16x16x64xf32> to vector<1x16x16x64xf32>
    tpu.vector_store %arg10[%c0_125, %c0_126, %c0_127, %c0_128], %128 {strides = array<i32>} : memref<1x16x16x64xf32, #tpu.memory_space<vmem>>, vector<1x16x16x64xf32>,
    return
  }
  func.func @transform_0(%arg0: i32) -> (i32, i32, i32, i32) {
    %c0_i32 = arith.constant 0 : i32
    %c0_i32_0 = arith.constant 0 : i32
    %c0_i32_1 = arith.constant 0 : i32
    %c0_i32_2 = arith.constant 0 : i32
    return %arg0, %c0_i32, %c0_i32_0, %c0_i32_1 : i32, i32, i32, i32
  }
  func.func @transform_1(%arg0: i32) -> (i32, i32) {
    %c0_i32 = arith.constant 0 : i32
    %c0_i32_0 = arith.constant 0 : i32
    %c0_i32_1 = arith.constant 0 : i32
    return %c0_i32, %c0_i32_0 : i32, i32
  }
  func.func @transform_2(%arg0: i32) -> (i32, i32) {
    %c0_i32 = arith.constant 0 : i32
    %c0_i32_0 = arith.constant 0 : i32
    %c0_i32_1 = arith.constant 0 : i32
    return %c0_i32, %c0_i32_0 : i32, i32
  }
  func.func @transform_3(%arg0: i32) -> (i32, i32) {
    %c0_i32 = arith.constant 0 : i32
    %c0_i32_0 = arith.constant 0 : i32
    %c0_i32_1 = arith.constant 0 : i32
    return %c0_i32, %c0_i32_0 : i32, i32
  }
  func.func @transform_4(%arg0: i32) -> (i32, i32) {
    %c0_i32 = arith.constant 0 : i32
    %c0_i32_0 = arith.constant 0 : i32
    %c0_i32_1 = arith.constant 0 : i32
    return %c0_i32, %c0_i32_0 : i32, i32
  }
  func.func @transform_5(%arg0: i32) -> (i32, i32) {
    %c0_i32 = arith.constant 0 : i32
    %c0_i32_0 = arith.constant 0 : i32
    %c0_i32_1 = arith.constant 0 : i32
    return %c0_i32, %c0_i32_0 : i32, i32
  }
  func.func @transform_6(%arg0: i32) -> (i32, i32) {
    %c0_i32 = arith.constant 0 : i32
    %c0_i32_0 = arith.constant 0 : i32
    %c0_i32_1 = arith.constant 0 : i32
    return %c0_i32, %c0_i32_0 : i32, i32
  }
  func.func @transform_7(%arg0: i32) -> (i32, i32) {
    %c0_i32 = arith.constant 0 : i32
    %c0_i32_0 = arith.constant 0 : i32
    %c0_i32_1 = arith.constant 0 : i32
    return %c0_i32, %c0_i32_0 : i32, i32
  }
  func.func @transform_8(%arg0: i32) -> (i32, i32) {
    %c0_i32 = arith.constant 0 : i32
    %c0_i32_0 = arith.constant 0 : i32
    %c0_i32_1 = arith.constant 0 : i32
    return %c0_i32, %c0_i32_0 : i32, i32
  }
  func.func @transform_9(%arg0: i32) -> (i32, i32, i32, i32) {
    %c0_i32 = arith.constant 0 : i32
    %c0_i32_0 = arith.constant 0 : i32
    %c0_i32_1 = arith.constant 0 : i32
    %c0_i32_2 = arith.constant 0 : i32
    return %arg0, %c0_i32, %c0_i32_0, %c0_i32_1 : i32, i32, i32, i32
  }
}

</mosaic_0001>

<llo_original>
// kernel: tpu_custom_call.1
$region0: #{tpu_custom_call.1}
  #allocation0 [shape = 'u32[]', space=smem, size = 0x4, offset = 0x4, fixed_abs, tag = 'smem constant byte address 0x4 - core index']
  #allocation1 [shape = 'u32[144,128]{1,0:T(1,128)}', space=vmem, size = 0x12000, scoped, tag = 'internal scratch']
  #allocation2 [shape = 'bf16[18,18,64]{2,1,0:T(8,128)(2,1)}', space=vmem, size = 0x1b000, scoped, tag = 'scratch operand']
  #allocation3 [shape = 'bf16[256,640]{1,0:T(8,128)(2,1)}', space=vmem, size = 0x50000, scoped, tag = 'scratch operand']
  #allocation4 [shape = 'f32[18,18,64]{2,1,0:T(8,128)}', space=vmem, size = 0x36000, scoped, tag = 'scratch operand']
  %s0 = inlined_call_operand.vmem [shape: f32[2,18,18,64], index: 0, kind: input, shape index: {}]
  %s1 = inlined_call_operand.vmem [shape: bf16[640,64], index: 1, kind: input, shape index: {}]
  %s2 = inlined_call_operand.vmem [shape: f32[1,64], index: 2, kind: input, shape index: {}]
  %s3 = inlined_call_operand.vmem [shape: bf16[640,64], index: 3, kind: input, shape index: {}]
  %s4 = inlined_call_operand.vmem [shape: f32[1,64], index: 4, kind: input, shape index: {}]
  %s5 = inlined_call_operand.vmem [shape: f32[4,64], index: 5, kind: input, shape index: {}]
  %s6 = inlined_call_operand.vmem [shape: f32[4,1], index: 6, kind: input, shape index: {}]
  %s7 = inlined_call_operand.vmem [shape: f32[4,64], index: 7, kind: input, shape index: {}]
  %s8 = inlined_call_operand.vmem [shape: f32[1,64], index: 8, kind: input, shape index: {}]
  %s9 = inlined_call_operand.hbm [shape: f32[2,16,16,64], index: 9, kind: output, shape index: {}]
  %s10 = sld [smem:[#allocation0]]
  $region69: #{tpu_custom_call.1} parent=0
    _
  %s12 = ssub.s32 1, %s10
  %s13 = scalar_select 0, %s12, %s10
  $region1: #{tpu_custom_call.1} parent=0
    #allocation5 [shape = 'u8[262144]{0}', space=vmem, size = 0x40000, scoped, tag = 'output window, operand 0']
    #allocation6 [shape = 's32[2]{0}', space=sflag, size = 0x8, scoped, tag = 'scoped memory for tpu_custom_call.1']
    %14 = vsyncpa [#allocation6], 0
    %s15 = scalar_lea.sflag [#allocation6], 1
    %16 = vsyncpa %s15, 0
    loop: start=0, step=1, limit=4
    $region2: #{tpu_custom_call.1} parent=1 // loop_pre_header
      _
    $region3: #{tpu_custom_call.1} parent=1 // loop_header
      %s18 = sphi 0, %s22
      %p19 = scmp.ge.s32.totalorder %s18, 4
      %s28 = sphi 0, %s30
      %s31 = sphi 0, %s28
      %s32 = sphi 0, %s31
      %s48 = sphi 0, %s32
      %s52 = sphi 0, %s52
      %s54 = sphi 0, %s52
      %s55 = sphi 0, %s54
      %s69 = sphi 0, %s55
      %s73 = sphi 0, %s73
      %s75 = sphi 0, %s73
      %s76 = sphi 0, %s75
      %s90 = sphi 0, %s76
      %s94 = sphi 0, %s94
      %s96 = sphi 0, %s94
      %s97 = sphi 0, %s96
      %s111 = sphi 0, %s97
      %s115 = sphi 0, %s115
      %s117 = sphi 0, %s115
      %s118 = sphi 0, %s117
      %s132 = sphi 0, %s118
      %s136 = sphi 0, %s136
      %s138 = sphi 0, %s136
      %s139 = sphi 0, %s138
      %s153 = sphi 0, %s139
      %s157 = sphi 0, %s157
      %s159 = sphi 0, %s157
      %s160 = sphi 0, %s159
      %s174 = sphi 0, %s160
      %s178 = sphi 0, %s178
      %s180 = sphi 0, %s178
      %s181 = sphi 0, %s180
      %s195 = sphi 0, %s181
      %s199 = sphi 0, %s199
      %s201 = sphi 0, %s199
      %s202 = sphi 0, %s201
      %s216 = sphi 0, %s202
      %s222 = sphi 0, %s224
      %s225 = sphi 0, %s222
      %s226 = sphi 0, %s225
      %s242 = sphi 0, %s226
    $region4: #{tpu_custom_call.1} parent=1 // loop_header_branch
      %21 = sbr.rel (%p19) target = $region8
    $region5: #{tpu_custom_call.1} parent=1 // loop_body
      %s23 = ssub.s32 %s18, 1
      %s24 = ssub.s32 %s18, 2
      %s25 = sadd.s32 %s18, 1
      %s26 = ssub.s32 %s18, %s25
      %p27 = scmp.eq.s32.totalorder %s26, 0
      %s29 = sadd.s32 %s28, 1
      %s30 = scalar_select %p27, %s28, %s29
      %p33 = pneg %p27
      %p34 = scmp.eq.s32.totalorder %s18, 1
      %p35 = por %p33, %p34
      %p36 = scmp.ne.s32.totalorder %s28, %s31
      %p37 = scmp.eq.s32.totalorder %s18, 0
      %p38 = por %p36, %p37
      %p39 = scmp.ne.s32.totalorder %s28, %s31
      %p40 = scmp.eq.s32.totalorder %s23, 1
      %p41 = por %p39, %p40
      %p42 = scmp.ne.s32.totalorder %s31, %s32
      %p43 = scmp.eq.s32.totalorder %s23, 0
      %p44 = por %p42, %p43
      %p45 = scmp.ne.s32.totalorder %s31, %s32
      %p46 = scmp.eq.s32.totalorder %s24, 1
      %p47 = por %p45, %p46
      %p49 = scmp.ne.s32.totalorder %s32, %s48
      %p50 = scmp.eq.s32.totalorder %s24, 0
      %p51 = por %p49, %p50
      %s53 = sadd.s32 %s52, 1
      %p56 = scmp.eq.s32.totalorder %s18, 1
      %p57 = scmp.ne.s32.totalorder %s52, %s54
      %p58 = scmp.eq.s32.totalorder %s18, 0
      %p59 = por %p57, %p58
      %p60 = scmp.ne.s32.totalorder %s52, %s54
      %p61 = scmp.eq.s32.totalorder %s23, 1
      %p62 = por %p60, %p61
      %p63 = scmp.ne.s32.totalorder %s54, %s55
      %p64 = scmp.eq.s32.totalorder %s23, 0
      %p65 = por %p63, %p64
      %p66 = scmp.ne.s32.totalorder %s54, %s55
      %p67 = scmp.eq.s32.totalorder %s24, 1
      %p68 = por %p66, %p67
      %p70 = scmp.ne.s32.totalorder %s55, %s69
      %p71 = scmp.eq.s32.totalorder %s24, 0
      %p72 = por %p70, %p71
      %s74 = sadd.s32 %s73, 1
      %p77 = scmp.eq.s32.totalorder %s18, 1
      %p78 = scmp.ne.s32.totalorder %s73, %s75
      %p79 = scmp.eq.s32.totalorder %s18, 0
      %p80 = por %p78, %p79
      %p81 = scmp.ne.s32.totalorder %s73, %s75
      %p82 = scmp.eq.s32.totalorder %s23, 1
      %p83 = por %p81, %p82
      %p84 = scmp.ne.s32.totalorder %s75, %s76
      %p85 = scmp.eq.s32.totalorder %s23, 0
      %p86 = por %p84, %p85
      %p87 = scmp.ne.s32.totalorder %s75, %s76
      %p88 = scmp.eq.s32.totalorder %s24, 1
      %p89 = por %p87, %p88
      %p91 = scmp.ne.s32.totalorder %s76, %s90
      %p92 = scmp.eq.s32.totalorder %s24, 0
      %p93 = por %p91, %p92
      %s95 = sadd.s32 %s94, 1
      %p98 = scmp.eq.s32.totalorder %s18, 1
      %p99 = scmp.ne.s32.totalorder %s94, %s96
      %p100 = scmp.eq.s32.totalorder %s18, 0
      %p101 = por %p99, %p100
      %p102 = scmp.ne.s32.totalorder %s94, %s96
      %p103 = scmp.eq.s32.totalorder %s23, 1
      %p104 = por %p102, %p103
      %p105 = scmp.ne.s32.totalorder %s96, %s97
      %p106 = scmp.eq.s32.totalorder %s23, 0
      %p107 = por %p105, %p106
      %p108 = scmp.ne.s32.totalorder %s96, %s97
      %p109 = scmp.eq.s32.totalorder %s24, 1
      %p110 = por %p108, %p109
      %p112 = scmp.ne.s32.totalorder %s97, %s111
      %p113 = scmp.eq.s32.totalorder %s24, 0
      %p114 = por %p112, %p113
      %s116 = sadd.s32 %s115, 1
      %p119 = scmp.eq.s32.totalorder %s18, 1
      %p120 = scmp.ne.s32.totalorder %s115, %s117
      %p121 = scmp.eq.s32.totalorder %s18, 0
      %p122 = por %p120, %p121
      %p123 = scmp.ne.s32.totalorder %s115, %s117
      %p124 = scmp.eq.s32.totalorder %s23, 1
      %p125 = por %p123, %p124
      %p126 = scmp.ne.s32.totalorder %s117, %s118
      %p127 = scmp.eq.s32.totalorder %s23, 0
      %p128 = por %p126, %p127
      %p129 = scmp.ne.s32.totalorder %s117, %s118
      %p130 = scmp.eq.s32.totalorder %s24, 1
      %p131 = por %p129, %p130
      %p133 = scmp.ne.s32.totalorder %s118, %s132
      %p134 = scmp.eq.s32.totalorder %s24, 0
      %p135 = por %p133, %p134
      %s137 = sadd.s32 %s136, 1
      %p140 = scmp.eq.s32.totalorder %s18, 1
      %p141 = scmp.ne.s32.totalorder %s136, %s138
      %p142 = scmp.eq.s32.totalorder %s18, 0
      %p143 = por %p141, %p142
      %p144 = scmp.ne.s32.totalorder %s136, %s138
      %p145 = scmp.eq.s32.totalorder %s23, 1
      %p146 = por %p144, %p145
      %p147 = scmp.ne.s32.totalorder %s138, %s139
      %p148 = scmp.eq.s32.totalorder %s23, 0
      %p149 = por %p147, %p148
      %p150 = scmp.ne.s32.totalorder %s138, %s139
      %p151 = scmp.eq.s32.totalorder %s24, 1
      %p152 = por %p150, %p151
      %p154 = scmp.ne.s32.totalorder %s139, %s153
      %p155 = scmp.eq.s32.totalorder %s24, 0
      %p156 = por %p154, %p155
      %s158 = sadd.s32 %s157, 1
      %p161 = scmp.eq.s32.totalorder %s18, 1
      %p162 = scmp.ne.s32.totalorder %s157, %s159
      %p163 = scmp.eq.s32.totalorder %s18, 0
      %p164 = por %p162, %p163
      %p165 = scmp.ne.s32.totalorder %s157, %s159
      %p166 = scmp.eq.s32.totalorder %s23, 1
      %p167 = por %p165, %p166
      %p168 = scmp.ne.s32.totalorder %s159, %s160
      %p169 = scmp.eq.s32.totalorder %s23, 0
      %p170 = por %p168, %p169
      %p171 = scmp.ne.s32.totalorder %s159, %s160
      %p172 = scmp.eq.s32.totalorder %s24, 1
      %p173 = por %p171, %p172
      %p175 = scmp.ne.s32.totalorder %s160, %s174
      %p176 = scmp.eq.s32.totalorder %s24, 0
      %p177 = por %p175, %p176
      %s179 = sadd.s32 %s178, 1
      %p182 = scmp.eq.s32.totalorder %s18, 1
      %p183 = scmp.ne.s32.totalorder %s178, %s180
      %p184 = scmp.eq.s32.totalorder %s18, 0
      %p185 = por %p183, %p184
      %p186 = scmp.ne.s32.totalorder %s178, %s180
      %p187 = scmp.eq.s32.totalorder %s23, 1
      %p188 = por %p186, %p187
      %p189 = scmp.ne.s32.totalorder %s180, %s181
      %p190 = scmp.eq.s32.totalorder %s23, 0
      %p191 = por %p189, %p190
      %p192 = scmp.ne.s32.totalorder %s180, %s181
      %p193 = scmp.eq.s32.totalorder %s24, 1
      %p194 = por %p192, %p193
      %p196 = scmp.ne.s32.totalorder %s181, %s195
      %p197 = scmp.eq.s32.totalorder %s24, 0
      %p198 = por %p196, %p197
      %s200 = sadd.s32 %s199, 1
      %p203 = scmp.eq.s32.totalorder %s18, 1
      %p204 = scmp.ne.s32.totalorder %s199, %s201
      %p205 = scmp.eq.s32.totalorder %s18, 0
      %p206 = por %p204, %p205
      %p207 = scmp.ne.s32.totalorder %s199, %s201
      %p208 = scmp.eq.s32.totalorder %s23, 1
      %p209 = por %p207, %p208
      %p210 = scmp.ne.s32.totalorder %s201, %s202
      %p211 = scmp.eq.s32.totalorder %s23, 0
      %p212 = por %p210, %p211
      %p213 = scmp.ne.s32.totalorder %s201, %s202
      %p214 = scmp.eq.s32.totalorder %s24, 1
      %p215 = por %p213, %p214
      %p217 = scmp.ne.s32.totalorder %s202, %s216
      %p218 = scmp.eq.s32.totalorder %s24, 0
      %p219 = por %p217, %p218
      %s220 = ssub.s32 %s18, %s25
      %p221 = scmp.eq.s32.totalorder %s220, 0
      %s223 = sadd.s32 %s222, 1
      %s224 = scalar_select %p221, %s222, %s223
      %p227 = pneg %p221
      %p228 = scmp.eq.s32.totalorder %s18, 1
      %p229 = por %p227, %p228
      %p230 = scmp.ne.s32.totalorder %s222, %s225
      %p231 = scmp.eq.s32.totalorder %s18, 0
      %p232 = por %p230, %p231
      %p233 = scmp.ne.s32.totalorder %s222, %s225
      %p234 = scmp.eq.s32.totalorder %s23, 1
      %p235 = por %p233, %p234
      %p236 = scmp.ne.s32.totalorder %s225, %s226
      %p237 = scmp.eq.s32.totalorder %s23, 0
      %p238 = por %p236, %p237
      %p239 = scmp.ne.s32.totalorder %s225, %s226
      %p240 = scmp.eq.s32.totalorder %s24, 1
      %p241 = por %p239, %p240
      %p243 = scmp.ne.s32.totalorder %s226, %s242
      %p244 = scmp.eq.s32.totalorder %s24, 0
      %p245 = por %p243, %p244
      %p246 = scmp.le.s32.totalorder 1, %s18
      %p247 = scmp.lt.s32.totalorder %s18, 3
      %p248 = pnand %p246, %p247
      %p249 = pneg %p248
      // Predicated region
      $region9: #{tpu_custom_call.1} parent=5 // pred_check
        _
      $region10: #{tpu_custom_call.1} parent=5 // pred_check_branch
        %251 = sbr.rel (%p248) target = $region12
      $region11: #{tpu_custom_call.1} parent=5 // pred_region
        %s252 = ssub.s32 %s18, 1
        // Predicated region
        $region13: #{tpu_custom_call.1} parent=11 // pred_check
          %p253 = pneg %p65
        $region14: #{tpu_custom_call.1} parent=11 // pred_check_branch
          %255 = sbr.rel (%p253) target = $region16
        $region15: #{tpu_custom_call.1} parent=11 // pred_region
          _
        $region16: #{tpu_custom_call.1} parent=11 // pred_fallthru
          _
        // Predicated region
        $region17: #{tpu_custom_call.1} parent=11 // pred_check
          %p256 = pneg %p86
        $region18: #{tpu_custom_call.1} parent=11 // pred_check_branch
          %258 = sbr.rel (%p256) target = $region20
        $region19: #{tpu_custom_call.1} parent=11 // pred_region
          _
        $region20: #{tpu_custom_call.1} parent=11 // pred_fallthru
          _
        // Predicated region
        $region21: #{tpu_custom_call.1} parent=11 // pred_check
          %p259 = pneg %p107
        $region22: #{tpu_custom_call.1} parent=11 // pred_check_branch
          %261 = sbr.rel (%p259) target = $region24
        $region23: #{tpu_custom_call.1} parent=11 // pred_region
          _
        $region24: #{tpu_custom_call.1} parent=11 // pred_fallthru
          _
        // Predicated region
        $region25: #{tpu_custom_call.1} parent=11 // pred_check
          %p262 = pneg %p128
        $region26: #{tpu_custom_call.1} parent=11 // pred_check_branch
          %264 = sbr.rel (%p262) target = $region28
        $region27: #{tpu_custom_call.1} parent=11 // pred_region
          _
        $region28: #{tpu_custom_call.1} parent=11 // pred_fallthru
          _
        // Predicated region
        $region29: #{tpu_custom_call.1} parent=11 // pred_check
          %p265 = pneg %p149
        $region30: #{tpu_custom_call.1} parent=11 // pred_check_branch
          %267 = sbr.rel (%p265) target = $region32
        $region31: #{tpu_custom_call.1} parent=11 // pred_region
          _
        $region32: #{tpu_custom_call.1} parent=11 // pred_fallthru
          _
        // Predicated region
        $region33: #{tpu_custom_call.1} parent=11 // pred_check
          %p268 = pneg %p170
        $region34: #{tpu_custom_call.1} parent=11 // pred_check_branch
          %270 = sbr.rel (%p268) target = $region36
        $region35: #{tpu_custom_call.1} parent=11 // pred_region
          _
        $region36: #{tpu_custom_call.1} parent=11 // pred_fallthru
          _
        // Predicated region
        $region37: #{tpu_custom_call.1} parent=11 // pred_check
          %p271 = pneg %p191
        $region38: #{tpu_custom_call.1} parent=11 // pred_check_branch
          %273 = sbr.rel (%p271) target = $region40
        $region39: #{tpu_custom_call.1} parent=11 // pred_region
          _
        $region40: #{tpu_custom_call.1} parent=11 // pred_fallthru
          _
        // Predicated region
        $region41: #{tpu_custom_call.1} parent=11 // pred_check
          %p274 = pneg %p212
        $region42: #{tpu_custom_call.1} parent=11 // pred_check_branch
          %276 = sbr.rel (%p274) target = $region44
        $region43: #{tpu_custom_call.1} parent=11 // pred_region
          _
        $region44: #{tpu_custom_call.1} parent=11 // pred_fallthru
          _
      $region12: #{tpu_custom_call.1} parent=5 // pred_fallthru
        _
      %p277 = scmp.lt.s32.totalorder %s18, 2
      // Predicated region
      $region45: #{tpu_custom_call.1} parent=5 // pred_check
        %p278 = pneg %p277
      $region46: #{tpu_custom_call.1} parent=5 // pred_check_branch
        %280 = sbr.rel (%p278) target = $region48
      $region47: #{tpu_custom_call.1} parent=5 // pred_region
        // Predicated region
        $region49: #{tpu_custom_call.1} parent=47 // pred_check
          %p281 = pneg %p38
        $region50: #{tpu_custom_call.1} parent=47 // pred_check_branch
          %283 = sbr.rel (%p281) target = $region52
        $region51: #{tpu_custom_call.1} parent=47 // pred_region
          %p284 = scmp.lt.s32.totalorder %s18, 1
          %s285 = scalar_select %p284, %s18, 1
          %s286 = smul.addr %s285, 54
          %s287 = smul.addr %s286, 8
          %s288 = scalar_lea.vmem %s0, %s287
        $region52: #{tpu_custom_call.1} parent=47 // pred_fallthru
          _
      $region48: #{tpu_custom_call.1} parent=5 // pred_fallthru
        _
      %p289 = scmp.le.s32.totalorder 1, %s18
      %p290 = scmp.lt.s32.totalorder %s18, 3
      %p291 = pnand %p289, %p290
      %p292 = pneg %p291
      // Predicated region
      $region53: #{tpu_custom_call.1} parent=5 // pred_check
        _
      $region54: #{tpu_custom_call.1} parent=5 // pred_check_branch
        %294 = sbr.rel (%p291) target = $region56
      $region55: #{tpu_custom_call.1} parent=5 // pred_region
        %s295 = ssub.s32 %s18, 1
        %p296 = scmp.lt.s32.totalorder %s23, 1
        %s297 = scalar_select %p296, %s23, 1
        %s298 = smul.addr %s297, 54
        %s299 = smul.addr %s298, 8
        %s300 = scalar_lea.vmem %s0, %s299
        %p301 = pneg %p44
        %p302 = pneg %p41
        %p303 = pneg %p65
        %p304 = pneg %p62
        %p305 = pneg %p86
        %p306 = pneg %p83
        %p307 = pneg %p107
        %p308 = pneg %p104
        %p309 = pneg %p128
        %p310 = pneg %p125
        %p311 = pneg %p149
        %p312 = pneg %p146
        %p313 = pneg %p170
        %p314 = pneg %p167
        %p315 = pneg %p191
        %p316 = pneg %p188
        %p317 = pneg %p212
        %p318 = pneg %p209
        %p319 = pneg %p238
        %p320 = pneg %p235
        %s321 = sand.u32 %s225, 1
        %s322 = scalar_lea.sflag [#allocation6], %s321
        %s323 = sand.u32 %s225, 1
        %s324 = smul.addr %s323, 256
        %s325 = scalar_lea.vmem [#allocation5], %s324
        %p326 = scmp.lt.s32.totalorder %s23, 1
        %s327 = scalar_select %p326, %s23, 1
        %s328 = smul.addr %s327, 54
        %s329 = smul.addr %s328, 8
        %s330 = scalar_lea.vmem %s0, %s329
        %v332 = vld [vmem:[%s330] sm:$0xff]
        %v333 = vld [vmem:[%s330 + $0x8] sm:$0xff]
        %v334 = vld [vmem:[%s330 + $0x10] sm:$0x3]
        %v335 = vld [vmem:[%s330 + $0x18] sm:$0xff]
        %v336 = vld [vmem:[%s330 + $0x20] sm:$0xff]
        %v337 = vld [vmem:[%s330 + $0x28] sm:$0x3]
        %v338 = vld [vmem:[%s330 + $0x30] sm:$0xff]
        %v339 = vld [vmem:[%s330 + $0x38] sm:$0xff]
        %v340 = vld [vmem:[%s330 + $0x40] sm:$0x3]
        %v341 = vld [vmem:[%s330 + $0x48] sm:$0xff]
        %v342 = vld [vmem:[%s330 + $0x50] sm:$0xff]
        %v343 = vld [vmem:[%s330 + $0x58] sm:$0x3]
        %v344 = vld [vmem:[%s330 + $0x60] sm:$0xff]
        %v345 = vld [vmem:[%s330 + $0x68] sm:$0xff]
        %v346 = vld [vmem:[%s330 + $0x70] sm:$0x3]
        %v347 = vld [vmem:[%s330 + $0x78] sm:$0xff]
        %v348 = vld [vmem:[%s330 + $0x80] sm:$0xff]
        %v349 = vld [vmem:[%s330 + $0x88] sm:$0x3]
        %v350 = vld [vmem:[%s330 + $0x90] sm:$0xff]
        %v351 = vld [vmem:[%s330 + $0x98] sm:$0xff]
        %v352 = vld [vmem:[%s330 + $0xa0] sm:$0x3]
        %v353 = vld [vmem:[%s330 + $0xa8] sm:$0xff]
        %v354 = vld [vmem:[%s330 + $0xb0] sm:$0xff]
        %v355 = vld [vmem:[%s330 + $0xb8] sm:$0x3]
        %v356 = vld [vmem:[%s330 + $0xc0] sm:$0xff]
        %v357 = vld [vmem:[%s330 + $0xc8] sm:$0xff]
        %v358 = vld [vmem:[%s330 + $0xd0] sm:$0x3]
        %v359 = vld [vmem:[%s330 + $0xd8] sm:$0xff]
        %v360 = vld [vmem:[%s330 + $0xe0] sm:$0xff]
        %v361 = vld [vmem:[%s330 + $0xe8] sm:$0x3]
        %v362 = vld [vmem:[%s330 + $0xf0] sm:$0xff]
        %v363 = vld [vmem:[%s330 + $0xf8] sm:$0xff]
        %v364 = vld [vmem:[%s330 + $0x100] sm:$0x3]
        %v365 = vld [vmem:[%s330 + $0x108] sm:$0xff]
        %v366 = vld [vmem:[%s330 + $0x110] sm:$0xff]
        %v367 = vld [vmem:[%s330 + $0x118] sm:$0x3]
        %v368 = vld [vmem:[%s330 + $0x120] sm:$0xff]
        %v369 = vld [vmem:[%s330 + $0x128] sm:$0xff]
        %v370 = vld [vmem:[%s330 + $0x130] sm:$0x3]
        %v371 = vld [vmem:[%s330 + $0x138] sm:$0xff]
        %v372 = vld [vmem:[%s330 + $0x140] sm:$0xff]
        %v373 = vld [vmem:[%s330 + $0x148] sm:$0x3]
        %v374 = vld [vmem:[%s330 + $0x150] sm:$0xff]
        %v375 = vld [vmem:[%s330 + $0x158] sm:$0xff]
        %v376 = vld [vmem:[%s330 + $0x160] sm:$0x3]
        %v377 = vld [vmem:[%s330 + $0x168] sm:$0xff]
        %v378 = vld [vmem:[%s330 + $0x170] sm:$0xff]
        %v379 = vld [vmem:[%s330 + $0x178] sm:$0x3]
        %v380 = vld [vmem:[%s330 + $0x180] sm:$0xff]
        %v381 = vld [vmem:[%s330 + $0x188] sm:$0xff]
        %v382 = vld [vmem:[%s330 + $0x190] sm:$0x3]
        %v383 = vld [vmem:[%s330 + $0x198] sm:$0xff]
        %v384 = vld [vmem:[%s330 + $0x1a0] sm:$0xff]
        %v385 = vld [vmem:[%s330 + $0x1a8] sm:$0x3]
        %v386 = vpack.c.bf16 %v333, %v332
        %v387 = vpack.c.bf16 %v334, %v334
        %v388 = vpack.c.bf16 %v336, %v335
        %v389 = vpack.c.bf16 %v337, %v337
        %v390 = vpack.c.bf16 %v339, %v338
        %v391 = vpack.c.bf16 %v340, %v340
        %v392 = vpack.c.bf16 %v342, %v341
        %v393 = vpack.c.bf16 %v343, %v343
        %v394 = vpack.c.bf16 %v345, %v344
        %v395 = vpack.c.bf16 %v346, %v346
        %v396 = vpack.c.bf16 %v348, %v347
        %v397 = vpack.c.bf16 %v349, %v349
        %v398 = vpack.c.bf16 %v351, %v350
        %v399 = vpack.c.bf16 %v352, %v352
        %v400 = vpack.c.bf16 %v354, %v353
        %v401 = vpack.c.bf16 %v355, %v355
        %v402 = vpack.c.bf16 %v357, %v356
        %v403 = vpack.c.bf16 %v358, %v358
        %v404 = vpack.c.bf16 %v360, %v359
        %v405 = vpack.c.bf16 %v361, %v361
        %v406 = vpack.c.bf16 %v363, %v362
        %v407 = vpack.c.bf16 %v364, %v364
        %v408 = vpack.c.bf16 %v366, %v365
        %v409 = vpack.c.bf16 %v367, %v367
        %v410 = vpack.c.bf16 %v369, %v368
        %v411 = vpack.c.bf16 %v370, %v370
        %v412 = vpack.c.bf16 %v372, %v371
        %v413 = vpack.c.bf16 %v373, %v373
        %v414 = vpack.c.bf16 %v375, %v374
        %v415 = vpack.c.bf16 %v376, %v376
        %v416 = vpack.c.bf16 %v378, %v377
        %v417 = vpack.c.bf16 %v379, %v379
        %v418 = vpack.c.bf16 %v381, %v380
        %v419 = vpack.c.bf16 %v382, %v382
        %v420 = vpack.c.bf16 %v384, %v383
        %v421 = vpack.c.bf16 %v385, %v385
        %v458 = vunpack.c.l.b16 %v386
        %v459 = vunpack.c.h.b16 %v386
        %v460 = vunpack.c.l.b16 %v387
        %v461 = vunpack.c.l.b16 %v388
        %v462 = vunpack.c.h.b16 %v388
        %v463 = vunpack.c.l.b16 %v389
        %v464 = vunpack.c.l.b16 %v390
        %v465 = vunpack.c.h.b16 %v390
        %v466 = vunpack.c.l.b16 %v391
        %v467 = vunpack.c.l.b16 %v392
        %v468 = vunpack.c.h.b16 %v392
        %v469 = vunpack.c.l.b16 %v393
        %v470 = vunpack.c.l.b16 %v394
        %v471 = vunpack.c.h.b16 %v394
        %v472 = vunpack.c.l.b16 %v395
        %v473 = vunpack.c.l.b16 %v396
        %v474 = vunpack.c.h.b16 %v396
        %v475 = vunpack.c.l.b16 %v397
        %v476 = vunpack.c.l.b16 %v398
        %v477 = vunpack.c.h.b16 %v398
        %v478 = vunpack.c.l.b16 %v399
        %v479 = vunpack.c.l.b16 %v400
        %v480 = vunpack.c.h.b16 %v400
        %v481 = vunpack.c.l.b16 %v401
        %v482 = vunpack.c.l.b16 %v402
        %v483 = vunpack.c.h.b16 %v402
        %v484 = vunpack.c.l.b16 %v403
        %v485 = vunpack.c.l.b16 %v404
        %v486 = vunpack.c.h.b16 %v404
        %v487 = vunpack.c.l.b16 %v405
        %v488 = vunpack.c.l.b16 %v406
        %v489 = vunpack.c.h.b16 %v406
        %v490 = vunpack.c.l.b16 %v407
        %v491 = vunpack.c.l.b16 %v408
        %v492 = vunpack.c.h.b16 %v408
        %v493 = vunpack.c.l.b16 %v409
        %v494 = vunpack.c.l.b16 %v410
        %v495 = vunpack.c.h.b16 %v410
        %v496 = vunpack.c.l.b16 %v411
        %v497 = vunpack.c.l.b16 %v412
        %v498 = vunpack.c.h.b16 %v412
        %v499 = vunpack.c.l.b16 %v413
        %v500 = vunpack.c.l.b16 %v414
        %v501 = vunpack.c.h.b16 %v414
        %v502 = vunpack.c.l.b16 %v415
        %v503 = vunpack.c.l.b16 %v416
        %v504 = vunpack.c.h.b16 %v416
        %v505 = vunpack.c.l.b16 %v417
        %v506 = vunpack.c.l.b16 %v418
        %v507 = vunpack.c.h.b16 %v418
        %v508 = vunpack.c.l.b16 %v419
        %v509 = vunpack.c.l.b16 %v420
        %v510 = vunpack.c.h.b16 %v420
        %v511 = vunpack.c.l.b16 %v421
        %v512 = vpack.c.b16 %v458, %v458
        %v513 = vpack.c.b16 %v459, %v459
        %v514 = vpack.c.b16 %v460, %v460
        %v515 = vpack.c.b16 %v461, %v461
        %v516 = vpack.c.b16 %v462, %v462
        %v517 = vpack.c.b16 %v463, %v463
        %v518 = vpack.c.b16 %v464, %v464
        %v519 = vpack.c.b16 %v465, %v465
        %v520 = vpack.c.b16 %v466, %v466
        %v521 = vpack.c.b16 %v467, %v467
        %v522 = vpack.c.b16 %v468, %v468
        %v523 = vpack.c.b16 %v469, %v469
        %v524 = vpack.c.b16 %v470, %v470
        %v525 = vpack.c.b16 %v471, %v471
        %v526 = vpack.c.b16 %v472, %v472
        %v527 = vpack.c.b16 %v473, %v473
        %v528 = vpack.c.b16 %v474, %v474
        %v529 = vpack.c.b16 %v475, %v475
        %v530 = vpack.c.b16 %v476, %v476
        %v531 = vpack.c.b16 %v477, %v477
        %v532 = vpack.c.b16 %v478, %v478
        %v533 = vpack.c.b16 %v479, %v479
        %v534 = vpack.c.b16 %v480, %v480
        %v535 = vpack.c.b16 %v481, %v481
        %v536 = vpack.c.b16 %v482, %v482
        %v537 = vpack.c.b16 %v483, %v483
        %v538 = vpack.c.b16 %v484, %v484
        %v539 = vpack.c.b16 %v485, %v485
        %v540 = vpack.c.b16 %v486, %v486
        %v541 = vpack.c.b16 %v487, %v487
        %v542 = vpack.c.b16 %v488, %v488
        %v543 = vpack.c.b16 %v489, %v489
        %v544 = vpack.c.b16 %v490, %v490
        %v545 = vpack.c.b16 %v491, %v491
        %v546 = vpack.c.b16 %v492, %v492
        %v547 = vpack.c.b16 %v493, %v493
        %v548 = vpack.c.b16 %v494, %v494
        %v549 = vpack.c.b16 %v495, %v495
        %v550 = vpack.c.b16 %v496, %v496
        %v551 = vpack.c.b16 %v497, %v497
        %v552 = vpack.c.b16 %v498, %v498
        %v553 = vpack.c.b16 %v499, %v499
        %v554 = vpack.c.b16 %v500, %v500
        %v555 = vpack.c.b16 %v501, %v501
        %v556 = vpack.c.b16 %v502, %v502
        %v557 = vpack.c.b16 %v503, %v503
        %v558 = vpack.c.b16 %v504, %v504
        %v559 = vpack.c.b16 %v505, %v505
        %v560 = vpack.c.b16 %v506, %v506
        %v561 = vpack.c.b16 %v507, %v507
        %v562 = vpack.c.b16 %v508, %v508
        %v563 = vpack.c.b16 %v509, %v509
        %v564 = vpack.c.b16 %v510, %v510
        %v565 = vpack.c.b16 %v511, %v511
        %vm620 = vcmask 519168
        %621 = vst.msk [vmem:[#allocation2] sm:$0xf] %vm620, %v512
        %622 = vst.msk [vmem:[#allocation2 + $0x4] sm:$0xf] %vm620, %v513
        %vm623 = vcmask 516096
        %624 = vst.msk [vmem:[#allocation2 + $0x8] sm:$0x1] %vm623, %v514
        %625 = vst.msk [vmem:[#allocation2 + $0xc] sm:$0xf] %vm620, %v515
        %626 = vst.msk [vmem:[#allocation2 + $0x10] sm:$0xf] %vm620, %v516
        %627 = vst.msk [vmem:[#allocation2 + $0x14] sm:$0x1] %vm623, %v517
        %628 = vst.msk [vmem:[#allocation2 + $0x18] sm:$0xf] %vm620, %v518
        %629 = vst.msk [vmem:[#allocation2 + $0x1c] sm:$0xf] %vm620, %v519
        %630 = vst.msk [vmem:[#allocation2 + $0x20] sm:$0x1] %vm623, %v520
        %631 = vst.msk [vmem:[#allocation2 + $0x24] sm:$0xf] %vm620, %v521
        %632 = vst.msk [vmem:[#allocation2 + $0x28] sm:$0xf] %vm620, %v522
        %633 = vst.msk [vmem:[#allocation2 + $0x2c] sm:$0x1] %vm623, %v523
        %634 = vst.msk [vmem:[#allocation2 + $0x30] sm:$0xf] %vm620, %v524
        %635 = vst.msk [vmem:[#allocation2 + $0x34] sm:$0xf] %vm620, %v525
        %636 = vst.msk [vmem:[#allocation2 + $0x38] sm:$0x1] %vm623, %v526
        %637 = vst.msk [vmem:[#allocation2 + $0x3c] sm:$0xf] %vm620, %v527
        %638 = vst.msk [vmem:[#allocation2 + $0x40] sm:$0xf] %vm620, %v528
        %639 = vst.msk [vmem:[#allocation2 + $0x44] sm:$0x1] %vm623, %v529
        %640 = vst.msk [vmem:[#allocation2 + $0x48] sm:$0xf] %vm620, %v530
        %641 = vst.msk [vmem:[#allocation2 + $0x4c] sm:$0xf] %vm620, %v531
        %642 = vst.msk [vmem:[#allocation2 + $0x50] sm:$0x1] %vm623, %v532
        %643 = vst.msk [vmem:[#allocation2 + $0x54] sm:$0xf] %vm620, %v533
        %644 = vst.msk [vmem:[#allocation2 + $0x58] sm:$0xf] %vm620, %v534
        %645 = vst.msk [vmem:[#allocation2 + $0x5c] sm:$0x1] %vm623, %v535
        %646 = vst.msk [vmem:[#allocation2 + $0x60] sm:$0xf] %vm620, %v536
        %647 = vst.msk [vmem:[#allocation2 + $0x64] sm:$0xf] %vm620, %v537
        %648 = vst.msk [vmem:[#allocation2 + $0x68] sm:$0x1] %vm623, %v538
        %649 = vst.msk [vmem:[#allocation2 + $0x6c] sm:$0xf] %vm620, %v539
        %650 = vst.msk [vmem:[#allocation2 + $0x70] sm:$0xf] %vm620, %v540
        %651 = vst.msk [vmem:[#allocation2 + $0x74] sm:$0x1] %vm623, %v541
        %652 = vst.msk [vmem:[#allocation2 + $0x78] sm:$0xf] %vm620, %v542
        %653 = vst.msk [vmem:[#allocation2 + $0x7c] sm:$0xf] %vm620, %v543
        %654 = vst.msk [vmem:[#allocation2 + $0x80] sm:$0x1] %vm623, %v544
        %655 = vst.msk [vmem:[#allocation2 + $0x84] sm:$0xf] %vm620, %v545
        %656 = vst.msk [vmem:[#allocation2 + $0x88] sm:$0xf] %vm620, %v546
        %657 = vst.msk [vmem:[#allocation2 + $0x8c] sm:$0x1] %vm623, %v547
        %658 = vst.msk [vmem:[#allocation2 + $0x90] sm:$0xf] %vm620, %v548
        %659 = vst.msk [vmem:[#allocation2 + $0x94] sm:$0xf] %vm620, %v549
        %660 = vst.msk [vmem:[#allocation2 + $0x98] sm:$0x1] %vm623, %v550
        %661 = vst.msk [vmem:[#allocation2 + $0x9c] sm:$0xf] %vm620, %v551
        %662 = vst.msk [vmem:[#allocation2 + $0xa0] sm:$0xf] %vm620, %v552
        %663 = vst.msk [vmem:[#allocation2 + $0xa4] sm:$0x1] %vm623, %v553
        %664 = vst.msk [vmem:[#allocation2 + $0xa8] sm:$0xf] %vm620, %v554
        %665 = vst.msk [vmem:[#allocation2 + $0xac] sm:$0xf] %vm620, %v555
        %666 = vst.msk [vmem:[#allocation2 + $0xb0] sm:$0x1] %vm623, %v556
        %667 = vst.msk [vmem:[#allocation2 + $0xb4] sm:$0xf] %vm620, %v557
        %668 = vst.msk [vmem:[#allocation2 + $0xb8] sm:$0xf] %vm620, %v558
        %669 = vst.msk [vmem:[#allocation2 + $0xbc] sm:$0x1] %vm623, %v559
        %670 = vst.msk [vmem:[#allocation2 + $0xc0] sm:$0xf] %vm620, %v560
        %671 = vst.msk [vmem:[#allocation2 + $0xc4] sm:$0xf] %vm620, %v561
        %672 = vst.msk [vmem:[#allocation2 + $0xc8] sm:$0x1] %vm623, %v562
        %673 = vst.msk [vmem:[#allocation2 + $0xcc] sm:$0xf] %vm620, %v563
        %674 = vst.msk [vmem:[#allocation2 + $0xd0] sm:$0xf] %vm620, %v564
        %675 = vst.msk [vmem:[#allocation2 + $0xd4] sm:$0x1] %vm623, %v565
        %v676 = vld [vmem:[#allocation2] sm:$0xf]
        %v677 = vld [vmem:[#allocation2 + $0x4] sm:$0xf]
        %v678 = vld [vmem:[#allocation2 + $0xc] sm:$0xf]
        %v679 = vld [vmem:[#allocation2 + $0x10] sm:$0xf]
        %v680 = vld [vmem:[#allocation2 + $0x18] sm:$0xf]
        %v681 = vld [vmem:[#allocation2 + $0x1c] sm:$0xf]
        %v682 = vld [vmem:[#allocation2 + $0x24] sm:$0xf]
        %v683 = vld [vmem:[#allocation2 + $0x28] sm:$0xf]
        %v684 = vld [vmem:[#allocation2 + $0x30] sm:$0xf]
        %v685 = vld [vmem:[#allocation2 + $0x34] sm:$0xf]
        %v686 = vld [vmem:[#allocation2 + $0x3c] sm:$0xf]
        %v687 = vld [vmem:[#allocation2 + $0x40] sm:$0xf]
        %v688 = vld [vmem:[#allocation2 + $0x48] sm:$0xf]
        %v689 = vld [vmem:[#allocation2 + $0x4c] sm:$0xf]
        %v690 = vld [vmem:[#allocation2 + $0x54] sm:$0xf]
        %v691 = vld [vmem:[#allocation2 + $0x58] sm:$0xf]
        %v692 = vld [vmem:[#allocation2 + $0x60] sm:$0xf]
        %v693 = vld [vmem:[#allocation2 + $0x64] sm:$0xf]
        %v694 = vld [vmem:[#allocation2 + $0x6c] sm:$0xf]
        %v695 = vld [vmem:[#allocation2 + $0x70] sm:$0xf]
        %v696 = vld [vmem:[#allocation2 + $0x78] sm:$0xf]
        %v697 = vld [vmem:[#allocation2 + $0x7c] sm:$0xf]
        %v698 = vld [vmem:[#allocation2 + $0x84] sm:$0xf]
        %v699 = vld [vmem:[#allocation2 + $0x88] sm:$0xf]
        %v700 = vld [vmem:[#allocation2 + $0x90] sm:$0xf]
        %v701 = vld [vmem:[#allocation2 + $0x94] sm:$0xf]
        %v702 = vld [vmem:[#allocation2 + $0x9c] sm:$0xf]
        %v703 = vld [vmem:[#allocation2 + $0xa0] sm:$0xf]
        %v704 = vld [vmem:[#allocation2 + $0xa8] sm:$0xf]
        %v705 = vld [vmem:[#allocation2 + $0xac] sm:$0xf]
        %v706 = vld [vmem:[#allocation2 + $0xb4] sm:$0xf]
        %v707 = vld [vmem:[#allocation2 + $0xb8] sm:$0xf]
        %v708 = vld [vmem:[#allocation2 + $0x8] sm:$0x1]
        %v709 = vld [vmem:[#allocation2 + $0x14] sm:$0x1]
        %v710 = vld [vmem:[#allocation2 + $0x20] sm:$0x1]
        %v711 = vld [vmem:[#allocation2 + $0x2c] sm:$0x1]
        %v712 = vld [vmem:[#allocation2 + $0x38] sm:$0x1]
        %v713 = vld [vmem:[#allocation2 + $0x44] sm:$0x1]
        %v714 = vld [vmem:[#allocation2 + $0x50] sm:$0x1]
        %v715 = vld [vmem:[#allocation2 + $0x5c] sm:$0x1]
        %v716 = vld [vmem:[#allocation2 + $0x68] sm:$0x1]
        %v717 = vld [vmem:[#allocation2 + $0x74] sm:$0x1]
        %v718 = vld [vmem:[#allocation2 + $0x80] sm:$0x1]
        %v719 = vld [vmem:[#allocation2 + $0x8c] sm:$0x1]
        %v720 = vld [vmem:[#allocation2 + $0x98] sm:$0x1]
        %v721 = vld [vmem:[#allocation2 + $0xa4] sm:$0x1]
        %v722 = vld [vmem:[#allocation2 + $0xb0] sm:$0x1]
        %v723 = vld [vmem:[#allocation2 + $0xbc] sm:$0x1]
        %vm724 = vsmask.f32 3328
        %vm725 = vsmask.f32 7440
        %vm726 = vmor %vm724, %vm725
        %v728 = vshrl.u32 %v676, 16
        %v730 = vrot.slane %v728, 4
        %v731 = vshll.u32 %v676, 16
        %v733 = vrot.slane %v731, 5
        %v734 = vor.u32 %v730, %v733
        %v735 = vrot.slane %v734, 4
        %v737 = vshll.u32 %v677, 16
        %v739 = vrot.slane %v737, 5
        %v740 = vsel %vm726, %v735, %v739
        %v741 = vshrl.u32 %v677, 16
        %v743 = vrot.slane %v741, 4
        %v744 = vor.u32 %v743, %v739
        %v745 = vrot.slane %v744, 4
        %v747 = vshll.u32 %v708, 16
        %v749 = vrot.slane %v747, 5
        %v750 = vsel %vm726, %v745, %v749
        %v752 = vshrl.u32 %v678, 16
        %v754 = vrot.slane %v752, 4
        %v755 = vshll.u32 %v678, 16
        %v757 = vrot.slane %v755, 5
        %v758 = vor.u32 %v754, %v757
        %v759 = vrot.slane %v758, 4
        %v761 = vshll.u32 %v679, 16
        %v763 = vrot.slane %v761, 5
        %v764 = vsel %vm726, %v759, %v763
        %v765 = vshrl.u32 %v679, 16
        %v767 = vrot.slane %v765, 4
        %v768 = vor.u32 %v767, %v763
        %v769 = vrot.slane %v768, 4
        %v771 = vshll.u32 %v709, 16
        %v773 = vrot.slane %v771, 5
        %v774 = vsel %vm726, %v769, %v773
        %v776 = vshrl.u32 %v680, 16
        %v778 = vrot.slane %v776, 4
        %v779 = vshll.u32 %v680, 16
        %v781 = vrot.slane %v779, 5
        %v782 = vor.u32 %v778, %v781
        %v783 = vrot.slane %v782, 4
        %v785 = vshll.u32 %v681, 16
        %v787 = vrot.slane %v785, 5
        %v788 = vsel %vm726, %v783, %v787
        %v789 = vshrl.u32 %v681, 16
        %v791 = vrot.slane %v789, 4
        %v792 = vor.u32 %v791, %v787
        %v793 = vrot.slane %v792, 4
        %v795 = vshll.u32 %v710, 16
        %v797 = vrot.slane %v795, 5
        %v798 = vsel %vm726, %v793, %v797
        %v800 = vshrl.u32 %v682, 16
        %v802 = vrot.slane %v800, 4
        %v803 = vshll.u32 %v682, 16
        %v805 = vrot.slane %v803, 5
        %v806 = vor.u32 %v802, %v805
        %v807 = vrot.slane %v806, 4
        %v809 = vshll.u32 %v683, 16
        %v811 = vrot.slane %v809, 5
        %v812 = vsel %vm726, %v807, %v811
        %v813 = vshrl.u32 %v683, 16
        %v815 = vrot.slane %v813, 4
        %v816 = vor.u32 %v815, %v811
        %v817 = vrot.slane %v816, 4
        %v819 = vshll.u32 %v711, 16
        %v821 = vrot.slane %v819, 5
        %v822 = vsel %vm726, %v817, %v821
        %v824 = vshrl.u32 %v684, 16
        %v826 = vrot.slane %v824, 4
        %v827 = vshll.u32 %v684, 16
        %v829 = vrot.slane %v827, 5
        %v830 = vor.u32 %v826, %v829
        %v831 = vrot.slane %v830, 4
        %v833 = vshll.u32 %v685, 16
        %v835 = vrot.slane %v833, 5
        %v836 = vsel %vm726, %v831, %v835
        %v837 = vshrl.u32 %v685, 16
        %v839 = vrot.slane %v837, 4
        %v840 = vor.u32 %v839, %v835
        %v841 = vrot.slane %v840, 4
        %v843 = vshll.u32 %v712, 16
        %v845 = vrot.slane %v843, 5
        %v846 = vsel %vm726, %v841, %v845
        %v848 = vshrl.u32 %v686, 16
        %v850 = vrot.slane %v848, 4
        %v851 = vshll.u32 %v686, 16
        %v853 = vrot.slane %v851, 5
        %v854 = vor.u32 %v850, %v853
        %v855 = vrot.slane %v854, 4
        %v857 = vshll.u32 %v687, 16
        %v859 = vrot.slane %v857, 5
        %v860 = vsel %vm726, %v855, %v859
        %v861 = vshrl.u32 %v687, 16
        %v863 = vrot.slane %v861, 4
        %v864 = vor.u32 %v863, %v859
        %v865 = vrot.slane %v864, 4
        %v867 = vshll.u32 %v713, 16
        %v869 = vrot.slane %v867, 5
        %v870 = vsel %vm726, %v865, %v869
        %v872 = vshrl.u32 %v688, 16
        %v874 = vrot.slane %v872, 4
        %v875 = vshll.u32 %v688, 16
        %v877 = vrot.slane %v875, 5
        %v878 = vor.u32 %v874, %v877
        %v879 = vrot.slane %v878, 4
        %v881 = vshll.u32 %v689, 16
        %v883 = vrot.slane %v881, 5
        %v884 = vsel %vm726, %v879, %v883
        %v885 = vshrl.u32 %v689, 16
        %v887 = vrot.slane %v885, 4
        %v888 = vor.u32 %v887, %v883
        %v889 = vrot.slane %v888, 4
        %v891 = vshll.u32 %v714, 16
        %v893 = vrot.slane %v891, 5
        %v894 = vsel %vm726, %v889, %v893
        %v896 = vshrl.u32 %v690, 16
        %v898 = vrot.slane %v896, 4
        %v899 = vshll.u32 %v690, 16
        %v901 = vrot.slane %v899, 5
        %v902 = vor.u32 %v898, %v901
        %v903 = vrot.slane %v902, 4
        %v905 = vshll.u32 %v691, 16
        %v907 = vrot.slane %v905, 5
        %v908 = vsel %vm726, %v903, %v907
        %v909 = vshrl.u32 %v691, 16
        %v911 = vrot.slane %v909, 4
        %v912 = vor.u32 %v911, %v907
        %v913 = vrot.slane %v912, 4
        %v915 = vshll.u32 %v715, 16
        %v917 = vrot.slane %v915, 5
        %v918 = vsel %vm726, %v913, %v917
        %v920 = vshrl.u32 %v692, 16
        %v922 = vrot.slane %v920, 4
        %v923 = vshll.u32 %v692, 16
        %v925 = vrot.slane %v923, 5
        %v926 = vor.u32 %v922, %v925
        %v927 = vrot.slane %v926, 4
        %v929 = vshll.u32 %v693, 16
        %v931 = vrot.slane %v929, 5
        %v932 = vsel %vm726, %v927, %v931
        %v933 = vshrl.u32 %v693, 16
        %v935 = vrot.slane %v933, 4
        %v936 = vor.u32 %v935, %v931
        %v937 = vrot.slane %v936, 4
        %v939 = vshll.u32 %v716, 16
        %v941 = vrot.slane %v939, 5
        %v942 = vsel %vm726, %v937, %v941
        %v944 = vshrl.u32 %v694, 16
        %v946 = vrot.slane %v944, 4
        %v947 = vshll.u32 %v694, 16
        %v949 = vrot.slane %v947, 5
        %v950 = vor.u32 %v946, %v949
        %v951 = vrot.slane %v950, 4
        %v953 = vshll.u32 %v695, 16
        %v955 = vrot.slane %v953, 5
        %v956 = vsel %vm726, %v951, %v955
        %v957 = vshrl.u32 %v695, 16
        %v959 = vrot.slane %v957, 4
        %v960 = vor.u32 %v959, %v955
        %v961 = vrot.slane %v960, 4
        %v963 = vshll.u32 %v717, 16
        %v965 = vrot.slane %v963, 5
        %v966 = vsel %vm726, %v961, %v965
        %v968 = vshrl.u32 %v696, 16
        %v970 = vrot.slane %v968, 4
        %v971 = vshll.u32 %v696, 16
        %v973 = vrot.slane %v971, 5
        %v974 = vor.u32 %v970, %v973
        %v975 = vrot.slane %v974, 4
        %v977 = vshll.u32 %v697, 16
        %v979 = vrot.slane %v977, 5
        %v980 = vsel %vm726, %v975, %v979
        %v981 = vshrl.u32 %v697, 16
        %v983 = vrot.slane %v981, 4
        %v984 = vor.u32 %v983, %v979
        %v985 = vrot.slane %v984, 4
        %v987 = vshll.u32 %v718, 16
        %v989 = vrot.slane %v987, 5
        %v990 = vsel %vm726, %v985, %v989
        %v992 = vshrl.u32 %v698, 16
        %v994 = vrot.slane %v992, 4
        %v995 = vshll.u32 %v698, 16
        %v997 = vrot.slane %v995, 5
        %v998 = vor.u32 %v994, %v997
        %v999 = vrot.slane %v998, 4
        %v1001 = vshll.u32 %v699, 16
        %v1003 = vrot.slane %v1001, 5
        %v1004 = vsel %vm726, %v999, %v1003
        %v1005 = vshrl.u32 %v699, 16
        %v1007 = vrot.slane %v1005, 4
        %v1008 = vor.u32 %v1007, %v1003
        %v1009 = vrot.slane %v1008, 4
        %v1011 = vshll.u32 %v719, 16
        %v1013 = vrot.slane %v1011, 5
        %v1014 = vsel %vm726, %v1009, %v1013
        %v1016 = vshrl.u32 %v700, 16
        %v1018 = vrot.slane %v1016, 4
        %v1019 = vshll.u32 %v700, 16
        %v1021 = vrot.slane %v1019, 5
        %v1022 = vor.u32 %v1018, %v1021
        %v1023 = vrot.slane %v1022, 4
        %v1025 = vshll.u32 %v701, 16
        %v1027 = vrot.slane %v1025, 5
        %v1028 = vsel %vm726, %v1023, %v1027
        %v1029 = vshrl.u32 %v701, 16
        %v1031 = vrot.slane %v1029, 4
        %v1032 = vor.u32 %v1031, %v1027
        %v1033 = vrot.slane %v1032, 4
        %v1035 = vshll.u32 %v720, 16
        %v1037 = vrot.slane %v1035, 5
        %v1038 = vsel %vm726, %v1033, %v1037
        %v1040 = vshrl.u32 %v702, 16
        %v1042 = vrot.slane %v1040, 4
        %v1043 = vshll.u32 %v702, 16
        %v1045 = vrot.slane %v1043, 5
        %v1046 = vor.u32 %v1042, %v1045
        %v1047 = vrot.slane %v1046, 4
        %v1049 = vshll.u32 %v703, 16
        %v1051 = vrot.slane %v1049, 5
        %v1052 = vsel %vm726, %v1047, %v1051
        %v1053 = vshrl.u32 %v703, 16
        %v1055 = vrot.slane %v1053, 4
        %v1056 = vor.u32 %v1055, %v1051
        %v1057 = vrot.slane %v1056, 4
        %v1059 = vshll.u32 %v721, 16
        %v1061 = vrot.slane %v1059, 5
        %v1062 = vsel %vm726, %v1057, %v1061
        %v1064 = vshrl.u32 %v704, 16
        %v1066 = vrot.slane %v1064, 4
        %v1067 = vshll.u32 %v704, 16
        %v1069 = vrot.slane %v1067, 5
        %v1070 = vor.u32 %v1066, %v1069
        %v1071 = vrot.slane %v1070, 4
        %v1073 = vshll.u32 %v705, 16
        %v1075 = vrot.slane %v1073, 5
        %v1076 = vsel %vm726, %v1071, %v1075
        %v1077 = vshrl.u32 %v705, 16
        %v1079 = vrot.slane %v1077, 4
        %v1080 = vor.u32 %v1079, %v1075
        %v1081 = vrot.slane %v1080, 4
        %v1083 = vshll.u32 %v722, 16
        %v1085 = vrot.slane %v1083, 5
        %v1086 = vsel %vm726, %v1081, %v1085
        %v1088 = vshrl.u32 %v706, 16
        %v1090 = vrot.slane %v1088, 4
        %v1091 = vshll.u32 %v706, 16
        %v1093 = vrot.slane %v1091, 5
        %v1094 = vor.u32 %v1090, %v1093
        %v1095 = vrot.slane %v1094, 4
        %v1097 = vshll.u32 %v707, 16
        %v1099 = vrot.slane %v1097, 5
        %v1100 = vsel %vm726, %v1095, %v1099
        %v1101 = vshrl.u32 %v707, 16
        %v1103 = vrot.slane %v1101, 4
        %v1104 = vor.u32 %v1103, %v1099
        %v1105 = vrot.slane %v1104, 4
        %v1107 = vshll.u32 %v723, 16
        %v1109 = vrot.slane %v1107, 5
        %v1110 = vsel %vm726, %v1105, %v1109
        %v1143 = vunpack.c.l.b16 %v676
        %v1144 = vunpack.c.l.b16 %v677
        %v1145 = vunpack.c.l.b16 %v678
        %v1146 = vunpack.c.l.b16 %v679
        %v1147 = vunpack.c.l.b16 %v680
        %v1148 = vunpack.c.l.b16 %v681
        %v1149 = vunpack.c.l.b16 %v682
        %v1150 = vunpack.c.l.b16 %v683
        %v1151 = vunpack.c.l.b16 %v684
        %v1152 = vunpack.c.l.b16 %v685
        %v1153 = vunpack.c.l.b16 %v686
        %v1154 = vunpack.c.l.b16 %v687
        %v1155 = vunpack.c.l.b16 %v688
        %v1156 = vunpack.c.l.b16 %v689
        %v1157 = vunpack.c.l.b16 %v690
        %v1158 = vunpack.c.l.b16 %v691
        %v1159 = vunpack.c.l.b16 %v692
        %v1160 = vunpack.c.l.b16 %v693
        %v1161 = vunpack.c.l.b16 %v694
        %v1162 = vunpack.c.l.b16 %v695
        %v1163 = vunpack.c.l.b16 %v696
        %v1164 = vunpack.c.l.b16 %v697
        %v1165 = vunpack.c.l.b16 %v698
        %v1166 = vunpack.c.l.b16 %v699
        %v1167 = vunpack.c.l.b16 %v700
        %v1168 = vunpack.c.l.b16 %v701
        %v1169 = vunpack.c.l.b16 %v702
        %v1170 = vunpack.c.l.b16 %v703
        %v1171 = vunpack.c.l.b16 %v704
        %v1172 = vunpack.c.l.b16 %v705
        %v1173 = vunpack.c.l.b16 %v706
        %v1174 = vunpack.c.l.b16 %v707
        %v1175 = vpack.c.b16 %v1144, %v1143
        %v1176 = vpack.c.b16 %v1146, %v1145
        %v1177 = vpack.c.b16 %v1148, %v1147
        %v1178 = vpack.c.b16 %v1150, %v1149
        %v1179 = vpack.c.b16 %v1152, %v1151
        %v1180 = vpack.c.b16 %v1154, %v1153
        %v1181 = vpack.c.b16 %v1156, %v1155
        %v1182 = vpack.c.b16 %v1158, %v1157
        %v1183 = vpack.c.b16 %v1160, %v1159
        %v1184 = vpack.c.b16 %v1162, %v1161
        %v1185 = vpack.c.b16 %v1164, %v1163
        %v1186 = vpack.c.b16 %v1166, %v1165
        %v1187 = vpack.c.b16 %v1168, %v1167
        %v1188 = vpack.c.b16 %v1170, %v1169
        %v1189 = vpack.c.b16 %v1172, %v1171
        %v1190 = vpack.c.b16 %v1174, %v1173
        %v1191 = vunpack.c.l.b16 %v740
        %v1192 = vunpack.c.l.b16 %v750
        %v1193 = vunpack.c.l.b16 %v764
        %v1194 = vunpack.c.l.b16 %v774
        %v1195 = vunpack.c.l.b16 %v788
        %v1196 = vunpack.c.l.b16 %v798
        %v1197 = vunpack.c.l.b16 %v812
        %v1198 = vunpack.c.l.b16 %v822
        %v1199 = vunpack.c.l.b16 %v836
        %v1200 = vunpack.c.l.b16 %v846
        %v1201 = vunpack.c.l.b16 %v860
        %v1202 = vunpack.c.l.b16 %v870
        %v1203 = vunpack.c.l.b16 %v884
        %v1204 = vunpack.c.l.b16 %v894
        %v1205 = vunpack.c.l.b16 %v908
        %v1206 = vunpack.c.l.b16 %v918
        %v1207 = vunpack.c.l.b16 %v932
        %v1208 = vunpack.c.l.b16 %v942
        %v1209 = vunpack.c.l.b16 %v956
        %v1210 = vunpack.c.l.b16 %v966
        %v1211 = vunpack.c.l.b16 %v980
        %v1212 = vunpack.c.l.b16 %v990
        %v1213 = vunpack.c.l.b16 %v1004
        %v1214 = vunpack.c.l.b16 %v1014
        %v1215 = vunpack.c.l.b16 %v1028
        %v1216 = vunpack.c.l.b16 %v1038
        %v1217 = vunpack.c.l.b16 %v1052
        %v1218 = vunpack.c.l.b16 %v1062
        %v1219 = vunpack.c.l.b16 %v1076
        %v1220 = vunpack.c.l.b16 %v1086
        %v1221 = vunpack.c.l.b16 %v1100
        %v1222 = vunpack.c.l.b16 %v1110
        %v1223 = vpack.c.b16 %v1192, %v1191
        %v1224 = vpack.c.b16 %v1194, %v1193
        %v1225 = vpack.c.b16 %v1196, %v1195
        %v1226 = vpack.c.b16 %v1198, %v1197
        %v1227 = vpack.c.b16 %v1200, %v1199
        %v1228 = vpack.c.b16 %v1202, %v1201
        %v1229 = vpack.c.b16 %v1204, %v1203
        %v1230 = vpack.c.b16 %v1206, %v1205
        %v1231 = vpack.c.b16 %v1208, %v1207
        %v1232 = vpack.c.b16 %v1210, %v1209
        %v1233 = vpack.c.b16 %v1212, %v1211
        %v1234 = vpack.c.b16 %v1214, %v1213
        %v1235 = vpack.c.b16 %v1216, %v1215
        %v1236 = vpack.c.b16 %v1218, %v1217
        %v1237 = vpack.c.b16 %v1220, %v1219
        %v1238 = vpack.c.b16 %v1222, %v1221
        %1239 = vrot.lane.b32.xlu0 %v1223, 64
        %v1240 = vpop.permute.xlu0 %1239
        %1241 = vrot.lane.b32.xlu0 %v1224, 64
        %v1242 = vpop.permute.xlu0 %1241
        %1243 = vrot.lane.b32.xlu0 %v1225, 64
        %v1244 = vpop.permute.xlu0 %1243
        %1245 = vrot.lane.b32.xlu0 %v1226, 64
        %v1246 = vpop.permute.xlu0 %1245
        %1247 = vrot.lane.b32.xlu0 %v1227, 64
        %v1248 = vpop.permute.xlu0 %1247
        %1249 = vrot.lane.b32.xlu0 %v1228, 64
        %v1250 = vpop.permute.xlu0 %1249
        %1251 = vrot.lane.b32.xlu0 %v1229, 64
        %v1252 = vpop.permute.xlu0 %1251
        %1253 = vrot.lane.b32.xlu0 %v1230, 64
        %v1254 = vpop.permute.xlu0 %1253
        %1255 = vrot.lane.b32.xlu0 %v1231, 64
        %v1256 = vpop.permute.xlu0 %1255
        %1257 = vrot.lane.b32.xlu0 %v1232, 64
        %v1258 = vpop.permute.xlu0 %1257
        %1259 = vrot.lane.b32.xlu0 %v1233, 64
        %v1260 = vpop.permute.xlu0 %1259
        %1261 = vrot.lane.b32.xlu0 %v1234, 64
        %v1262 = vpop.permute.xlu0 %1261
        %1263 = vrot.lane.b32.xlu0 %v1235, 64
        %v1264 = vpop.permute.xlu0 %1263
        %1265 = vrot.lane.b32.xlu0 %v1236, 64
        %v1266 = vpop.permute.xlu0 %1265
        %1267 = vrot.lane.b32.xlu0 %v1237, 64
        %v1268 = vpop.permute.xlu0 %1267
        %1269 = vrot.lane.b32.xlu0 %v1238, 64
        %v1270 = vpop.permute.xlu0 %1269
        %vm1271 = vcmask 523264
        %v1274 = vsel %vm1271, %v1175, %v1240
        %v1277 = vsel %vm1271, %v1176, %v1242
        %v1280 = vsel %vm1271, %v1177, %v1244
        %v1283 = vsel %vm1271, %v1178, %v1246
        %v1286 = vsel %vm1271, %v1179, %v1248
        %v1289 = vsel %vm1271, %v1180, %v1250
        %v1292 = vsel %vm1271, %v1181, %v1252
        %v1295 = vsel %vm1271, %v1182, %v1254
        %v1298 = vsel %vm1271, %v1183, %v1256
        %v1301 = vsel %vm1271, %v1184, %v1258
        %v1304 = vsel %vm1271, %v1185, %v1260
        %v1307 = vsel %vm1271, %v1186, %v1262
        %v1310 = vsel %vm1271, %v1187, %v1264
        %v1313 = vsel %vm1271, %v1188, %v1266
        %v1316 = vsel %vm1271, %v1189, %v1268
        %v1319 = vsel %vm1271, %v1190, %v1270
        %v1336 = vunpack.c.l.b16 %v1274
        %v1337 = vunpack.c.h.b16 %v1274
        %v1338 = vunpack.c.l.b16 %v1277
        %v1339 = vunpack.c.h.b16 %v1277
        %v1340 = vunpack.c.l.b16 %v1280
        %v1341 = vunpack.c.h.b16 %v1280
        %v1342 = vunpack.c.l.b16 %v1283
        %v1343 = vunpack.c.h.b16 %v1283
        %v1344 = vunpack.c.l.b16 %v1286
        %v1345 = vunpack.c.h.b16 %v1286
        %v1346 = vunpack.c.l.b16 %v1289
        %v1347 = vunpack.c.h.b16 %v1289
        %v1348 = vunpack.c.l.b16 %v1292
        %v1349 = vunpack.c.h.b16 %v1292
        %v1350 = vunpack.c.l.b16 %v1295
        %v1351 = vunpack.c.h.b16 %v1295
        %v1352 = vunpack.c.l.b16 %v1298
        %v1353 = vunpack.c.h.b16 %v1298
        %v1354 = vunpack.c.l.b16 %v1301
        %v1355 = vunpack.c.h.b16 %v1301
        %v1356 = vunpack.c.l.b16 %v1304
        %v1357 = vunpack.c.h.b16 %v1304
        %v1358 = vunpack.c.l.b16 %v1307
        %v1359 = vunpack.c.h.b16 %v1307
        %v1360 = vunpack.c.l.b16 %v1310
        %v1361 = vunpack.c.h.b16 %v1310
        %v1362 = vunpack.c.l.b16 %v1313
        %v1363 = vunpack.c.h.b16 %v1313
        %v1364 = vunpack.c.l.b16 %v1316
        %v1365 = vunpack.c.h.b16 %v1316
        %v1366 = vunpack.c.l.b16 %v1319
        %v1367 = vunpack.c.h.b16 %v1319
        %v1368 = vpack.c.b16 %v1336, %v1336
        %v1369 = vpack.c.b16 %v1337, %v1337
        %v1370 = vpack.c.b16 %v1338, %v1338
        %v1371 = vpack.c.b16 %v1339, %v1339
        %v1372 = vpack.c.b16 %v1340, %v1340
        %v1373 = vpack.c.b16 %v1341, %v1341
        %v1374 = vpack.c.b16 %v1342, %v1342
        %v1375 = vpack.c.b16 %v1343, %v1343
        %v1376 = vpack.c.b16 %v1344, %v1344
        %v1377 = vpack.c.b16 %v1345, %v1345
        %v1378 = vpack.c.b16 %v1346, %v1346
        %v1379 = vpack.c.b16 %v1347, %v1347
        %v1380 = vpack.c.b16 %v1348, %v1348
        %v1381 = vpack.c.b16 %v1349, %v1349
        %v1382 = vpack.c.b16 %v1350, %v1350
        %v1383 = vpack.c.b16 %v1351, %v1351
        %v1384 = vpack.c.b16 %v1352, %v1352
        %v1385 = vpack.c.b16 %v1353, %v1353
        %v1386 = vpack.c.b16 %v1354, %v1354
        %v1387 = vpack.c.b16 %v1355, %v1355
        %v1388 = vpack.c.b16 %v1356, %v1356
        %v1389 = vpack.c.b16 %v1357, %v1357
        %v1390 = vpack.c.b16 %v1358, %v1358
        %v1391 = vpack.c.b16 %v1359, %v1359
        %v1392 = vpack.c.b16 %v1360, %v1360
        %v1393 = vpack.c.b16 %v1361, %v1361
        %v1394 = vpack.c.b16 %v1362, %v1362
        %v1395 = vpack.c.b16 %v1363, %v1363
        %v1396 = vpack.c.b16 %v1364, %v1364
        %v1397 = vpack.c.b16 %v1365, %v1365
        %v1398 = vpack.c.b16 %v1366, %v1366
        %v1399 = vpack.c.b16 %v1367, %v1367
        %1432 = vst [vmem:[#allocation3] sm:$0xf] %v1368
        %1433 = vst [vmem:[#allocation3 + $0x14] sm:$0xf] %v1369
        %1434 = vst [vmem:[#allocation3 + $0x28] sm:$0xf] %v1370
        %1435 = vst [vmem:[#allocation3 + $0x3c] sm:$0xf] %v1371
        %1436 = vst [vmem:[#allocation3 + $0x50] sm:$0xf] %v1372
        %1437 = vst [vmem:[#allocation3 + $0x64] sm:$0xf] %v1373
        %1438 = vst [vmem:[#allocation3 + $0x78] sm:$0xf] %v1374
        %1439 = vst [vmem:[#allocation3 + $0x8c] sm:$0xf] %v1375
        %1440 = vst [vmem:[#allocation3 + $0xa0] sm:$0xf] %v1376
        %1441 = vst [vmem:[#allocation3 + $0xb4] sm:$0xf] %v1377
        %1442 = vst [vmem:[#allocation3 + $0xc8] sm:$0xf] %v1378
        %1443 = vst [vmem:[#allocation3 + $0xdc] sm:$0xf] %v1379
        %1444 = vst [vmem:[#allocation3 + $0xf0] sm:$0xf] %v1380
        %1445 = vst [vmem:[#allocation3 + $0x104] sm:$0xf] %v1381
        %1446 = vst [vmem:[#allocation3 + $0x118] sm:$0xf] %v1382
        %1447 = vst [vmem:[#allocation3 + $0x12c] sm:$0xf] %v1383
        %1448 = vst [vmem:[#allocation3 + $0x140] sm:$0xf] %v1384
        %1449 = vst [vmem:[#allocation3 + $0x154] sm:$0xf] %v1385
        %1450 = vst [vmem:[#allocation3 + $0x168] sm:$0xf] %v1386
        %1451 = vst [vmem:[#allocation3 + $0x17c] sm:$0xf] %v1387
        %1452 = vst [vmem:[#allocation3 + $0x190] sm:$0xf] %v1388
        %1453 = vst [vmem:[#allocation3 + $0x1a4] sm:$0xf] %v1389
        %1454 = vst [vmem:[#allocation3 + $0x1b8] sm:$0xf] %v1390
        %1455 = vst [vmem:[#allocation3 + $0x1cc] sm:$0xf] %v1391
        %1456 = vst [vmem:[#allocation3 + $0x1e0] sm:$0xf] %v1392
        %1457 = vst [vmem:[#allocation3 + $0x1f4] sm:$0xf] %v1393
        %1458 = vst [vmem:[#allocation3 + $0x208] sm:$0xf] %v1394
        %1459 = vst [vmem:[#allocation3 + $0x21c] sm:$0xf] %v1395
        %1460 = vst [vmem:[#allocation3 + $0x230] sm:$0xf] %v1396
        %1461 = vst [vmem:[#allocation3 + $0x244] sm:$0xf] %v1397
        %1462 = vst [vmem:[#allocation3 + $0x258] sm:$0xf] %v1398
        %1463 = vst [vmem:[#allocation3 + $0x26c] sm:$0xf] %v1399
        %v1464 = vld [vmem:[#allocation2] sm:$0xe]
        %v1465 = vld [vmem:[#allocation2 + $0x4] sm:$0xf]
        %v1466 = vld [vmem:[#allocation2 + $0x8] sm:$0x1]
        %v1467 = vld [vmem:[#allocation2 + $0xc] sm:$0xe]
        %v1468 = vld [vmem:[#allocation2 + $0x10] sm:$0xf]
        %v1469 = vld [vmem:[#allocation2 + $0x14] sm:$0x1]
        %v1470 = vld [vmem:[#allocation2 + $0x18] sm:$0xe]
        %v1471 = vld [vmem:[#allocation2 + $0x1c] sm:$0xf]
        %v1472 = vld [vmem:[#allocation2 + $0x20] sm:$0x1]
        %v1473 = vld [vmem:[#allocation2 + $0x24] sm:$0xe]
        %v1474 = vld [vmem:[#allocation2 + $0x28] sm:$0xf]
        %v1475 = vld [vmem:[#allocation2 + $0x2c] sm:$0x1]
        %v1476 = vld [vmem:[#allocation2 + $0x30] sm:$0xe]
        %v1477 = vld [vmem:[#allocation2 + $0x34] sm:$0xf]
        %v1478 = vld [vmem:[#allocation2 + $0x38] sm:$0x1]
        %v1479 = vld [vmem:[#allocation2 + $0x3c] sm:$0xe]
        %v1480 = vld [vmem:[#allocation2 + $0x40] sm:$0xf]
        %v1481 = vld [vmem:[#allocation2 + $0x44] sm:$0x1]
        %v1482 = vld [vmem:[#allocation2 + $0x48] sm:$0xe]
        %v1483 = vld [vmem:[#allocation2 + $0x4c] sm:$0xf]
        %v1484 = vld [vmem:[#allocation2 + $0x50] sm:$0x1]
        %v1485 = vld [vmem:[#allocation2 + $0x54] sm:$0xe]
        %v1486 = vld [vmem:[#allocation2 + $0x58] sm:$0xf]
        %v1487 = vld [vmem:[#allocation2 + $0x5c] sm:$0x1]
        %v1488 = vld [vmem:[#allocation2 + $0x60] sm:$0xe]
        %v1489 = vld [vmem:[#allocation2 + $0x64] sm:$0xf]
        %v1490 = vld [vmem:[#allocation2 + $0x68] sm:$0x1]
        %v1491 = vld [vmem:[#allocation2 + $0x6c] sm:$0xe]
        %v1492 = vld [vmem:[#allocation2 + $0x70] sm:$0xf]
        %v1493 = vld [vmem:[#allocation2 + $0x74] sm:$0x1]
        %v1494 = vld [vmem:[#allocation2 + $0x78] sm:$0xe]
        %v1495 = vld [vmem:[#allocation2 + $0x7c] sm:$0xf]
        %v1496 = vld [vmem:[#allocation2 + $0x80] sm:$0x1]
        %v1497 = vld [vmem:[#allocation2 + $0x84] sm:$0xe]
        %v1498 = vld [vmem:[#allocation2 + $0x88] sm:$0xf]
        %v1499 = vld [vmem:[#allocation2 + $0x8c] sm:$0x1]
        %v1500 = vld [vmem:[#allocation2 + $0x90] sm:$0xe]
        %v1501 = vld [vmem:[#allocation2 + $0x94] sm:$0xf]
        %v1502 = vld [vmem:[#allocation2 + $0x98] sm:$0x1]
        %v1503 = vld [vmem:[#allocation2 + $0x9c] sm:$0xe]
        %v1504 = vld [vmem:[#allocation2 + $0xa0] sm:$0xf]
        %v1505 = vld [vmem:[#allocation2 + $0xa4] sm:$0x1]
        %v1506 = vld [vmem:[#allocation2 + $0xa8] sm:$0xe]
        %v1507 = vld [vmem:[#allocation2 + $0xac] sm:$0xf]
        %v1508 = vld [vmem:[#allocation2 + $0xb0] sm:$0x1]
        %v1509 = vld [vmem:[#allocation2 + $0xb4] sm:$0xe]
        %v1510 = vld [vmem:[#allocation2 + $0xb8] sm:$0xf]
        %v1511 = vld [vmem:[#allocation2 + $0xbc] sm:$0x1]
        %vm1560 = vcmask 1042432
        %vm1561 = vcmask 1046532
        %vm1562 = vmor %vm1560, %vm1561
        %v1563 = vrot.slane %v1464, 5
        %v1564 = vrot.slane %v1563, 4
        %v1565 = vrot.slane %v1465, 5
        %v1566 = vsel %vm1562, %v1564, %v1565
        %v1567 = vrot.slane %v1565, 4
        %v1568 = vrot.slane %v1466, 5
        %v1569 = vsel %vm1562, %v1567, %v1568
        %v1570 = vrot.slane %v1467, 5
        %v1571 = vrot.slane %v1570, 4
        %v1572 = vrot.slane %v1468, 5
        %v1573 = vsel %vm1562, %v1571, %v1572
        %v1574 = vrot.slane %v1572, 4
        %v1575 = vrot.slane %v1469, 5
        %v1576 = vsel %vm1562, %v1574, %v1575
        %v1577 = vrot.slane %v1470, 5
        %v1578 = vrot.slane %v1577, 4
        %v1579 = vrot.slane %v1471, 5
        %v1580 = vsel %vm1562, %v1578, %v1579
        %v1581 = vrot.slane %v1579, 4
        %v1582 = vrot.slane %v1472, 5
        %v1583 = vsel %vm1562, %v1581, %v1582
        %v1584 = vrot.slane %v1473, 5
        %v1585 = vrot.slane %v1584, 4
        %v1586 = vrot.slane %v1474, 5
        %v1587 = vsel %vm1562, %v1585, %v1586
        %v1588 = vrot.slane %v1586, 4
        %v1589 = vrot.slane %v1475, 5
        %v1590 = vsel %vm1562, %v1588, %v1589
        %v1591 = vrot.slane %v1476, 5
        %v1592 = vrot.slane %v1591, 4
        %v1593 = vrot.slane %v1477, 5
        %v1594 = vsel %vm1562, %v1592, %v1593
        %v1595 = vrot.slane %v1593, 4
        %v1596 = vrot.slane %v1478, 5
        %v1597 = vsel %vm1562, %v1595, %v1596
        %v1598 = vrot.slane %v1479, 5
        %v1599 = vrot.slane %v1598, 4
        %v1600 = vrot.slane %v1480, 5
        %v1601 = vsel %vm1562, %v1599, %v1600
        %v1602 = vrot.slane %v1600, 4
        %v1603 = vrot.slane %v1481, 5
        %v1604 = vsel %vm1562, %v1602, %v1603
        %v1605 = vrot.slane %v1482, 5
        %v1606 = vrot.slane %v1605, 4
        %v1607 = vrot.slane %v1483, 5
        %v1608 = vsel %vm1562, %v1606, %v1607
        %v1609 = vrot.slane %v1607, 4
        %v1610 = vrot.slane %v1484, 5
        %v1611 = vsel %vm1562, %v1609, %v1610
        %v1612 = vrot.slane %v1485, 5
        %v1613 = vrot.slane %v1612, 4
        %v1614 = vrot.slane %v1486, 5
        %v1615 = vsel %vm1562, %v1613, %v1614
        %v1616 = vrot.slane %v1614, 4
        %v1617 = vrot.slane %v1487, 5
        %v1618 = vsel %vm1562, %v1616, %v1617
        %v1619 = vrot.slane %v1488, 5
        %v1620 = vrot.slane %v1619, 4
        %v1621 = vrot.slane %v1489, 5
        %v1622 = vsel %vm1562, %v1620, %v1621
        %v1623 = vrot.slane %v1621, 4
        %v1624 = vrot.slane %v1490, 5
        %v1625 = vsel %vm1562, %v1623, %v1624
        %v1626 = vrot.slane %v1491, 5
        %v1627 = vrot.slane %v1626, 4
        %v1628 = vrot.slane %v1492, 5
        %v1629 = vsel %vm1562, %v1627, %v1628
        %v1630 = vrot.slane %v1628, 4
        %v1631 = vrot.slane %v1493, 5
        %v1632 = vsel %vm1562, %v1630, %v1631
        %v1633 = vrot.slane %v1494, 5
        %v1634 = vrot.slane %v1633, 4
        %v1635 = vrot.slane %v1495, 5
        %v1636 = vsel %vm1562, %v1634, %v1635
        %v1637 = vrot.slane %v1635, 4
        %v1638 = vrot.slane %v1496, 5
        %v1639 = vsel %vm1562, %v1637, %v1638
        %v1640 = vrot.slane %v1497, 5
        %v1641 = vrot.slane %v1640, 4
        %v1642 = vrot.slane %v1498, 5
        %v1643 = vsel %vm1562, %v1641, %v1642
        %v1644 = vrot.slane %v1642, 4
        %v1645 = vrot.slane %v1499, 5
        %v1646 = vsel %vm1562, %v1644, %v1645
        %v1647 = vrot.slane %v1500, 5
        %v1648 = vrot.slane %v1647, 4
        %v1649 = vrot.slane %v1501, 5
        %v1650 = vsel %vm1562, %v1648, %v1649
        %v1651 = vrot.slane %v1649, 4
        %v1652 = vrot.slane %v1502, 5
        %v1653 = vsel %vm1562, %v1651, %v1652
        %v1654 = vrot.slane %v1503, 5
        %v1655 = vrot.slane %v1654, 4
        %v1656 = vrot.slane %v1504, 5
        %v1657 = vsel %vm1562, %v1655, %v1656
        %v1658 = vrot.slane %v1656, 4
        %v1659 = vrot.slane %v1505, 5
        %v1660 = vsel %vm1562, %v1658, %v1659
        %v1661 = vrot.slane %v1506, 5
        %v1662 = vrot.slane %v1661, 4
        %v1663 = vrot.slane %v1507, 5
        %v1664 = vsel %vm1562, %v1662, %v1663
        %v1665 = vrot.slane %v1663, 4
        %v1666 = vrot.slane %v1508, 5
        %v1667 = vsel %vm1562, %v1665, %v1666
        %v1668 = vrot.slane %v1509, 5
        %v1669 = vrot.slane %v1668, 4
        %v1670 = vrot.slane %v1510, 5
        %v1671 = vsel %vm1562, %v1669, %v1670
        %v1672 = vrot.slane %v1670, 4
        %v1673 = vrot.slane %v1511, 5
        %v1674 = vsel %vm1562, %v1672, %v1673
        %s1675 = scalar_lea.vmem [#allocation2], 12
        %v1676 = vld [vmem:[%s1675] sm:$0xf]
        %v1677 = vld [vmem:[%s1675 + $0x4] sm:$0xf]
        %v1678 = vld [vmem:[%s1675 + $0xc] sm:$0xf]
        %v1679 = vld [vmem:[%s1675 + $0x10] sm:$0xf]
        %v1680 = vld [vmem:[%s1675 + $0x18] sm:$0xf]
        %v1681 = vld [vmem:[%s1675 + $0x1c] sm:$0xf]
        %v1682 = vld [vmem:[%s1675 + $0x24] sm:$0xf]
        %v1683 = vld [vmem:[%s1675 + $0x28] sm:$0xf]
        %v1684 = vld [vmem:[%s1675 + $0x30] sm:$0xf]
        %v1685 = vld [vmem:[%s1675 + $0x34] sm:$0xf]
        %v1686 = vld [vmem:[%s1675 + $0x3c] sm:$0xf]
        %v1687 = vld [vmem:[%s1675 + $0x40] sm:$0xf]
        %v1688 = vld [vmem:[%s1675 + $0x48] sm:$0xf]
        %v1689 = vld [vmem:[%s1675 + $0x4c] sm:$0xf]
        %v1690 = vld [vmem:[%s1675 + $0x54] sm:$0xf]
        %v1691 = vld [vmem:[%s1675 + $0x58] sm:$0xf]
        %v1692 = vld [vmem:[%s1675 + $0x60] sm:$0xf]
        %v1693 = vld [vmem:[%s1675 + $0x64] sm:$0xf]
        %v1694 = vld [vmem:[%s1675 + $0x6c] sm:$0xf]
        %v1695 = vld [vmem:[%s1675 + $0x70] sm:$0xf]
        %v1696 = vld [vmem:[%s1675 + $0x78] sm:$0xf]
        %v1697 = vld [vmem:[%s1675 + $0x7c] sm:$0xf]
        %v1698 = vld [vmem:[%s1675 + $0x84] sm:$0xf]
        %v1699 = vld [vmem:[%s1675 + $0x88] sm:$0xf]
        %v1700 = vld [vmem:[%s1675 + $0x90] sm:$0xf]
        %v1701 = vld [vmem:[%s1675 + $0x94] sm:$0xf]
        %v1702 = vld [vmem:[%s1675 + $0x9c] sm:$0xf]
        %v1703 = vld [vmem:[%s1675 + $0xa0] sm:$0xf]
        %v1704 = vld [vmem:[%s1675 + $0xa8] sm:$0xf]
        %v1705 = vld [vmem:[%s1675 + $0xac] sm:$0xf]
        %v1706 = vld [vmem:[%s1675 + $0xb4] sm:$0xf]
        %v1707 = vld [vmem:[%s1675 + $0xb8] sm:$0xf]
        %v1708 = vunpack.c.l.b16 %v1566
        %v1709 = vunpack.c.l.b16 %v1569
        %v1710 = vunpack.c.l.b16 %v1573
        %v1711 = vunpack.c.l.b16 %v1576
        %v1712 = vunpack.c.l.b16 %v1580
        %v1713 = vunpack.c.l.b16 %v1583
        %v1714 = vunpack.c.l.b16 %v1587
        %v1715 = vunpack.c.l.b16 %v1590
        %v1716 = vunpack.c.l.b16 %v1594
        %v1717 = vunpack.c.l.b16 %v1597
        %v1718 = vunpack.c.l.b16 %v1601
        %v1719 = vunpack.c.l.b16 %v1604
        %v1720 = vunpack.c.l.b16 %v1608
        %v1721 = vunpack.c.l.b16 %v1611
        %v1722 = vunpack.c.l.b16 %v1615
        %v1723 = vunpack.c.l.b16 %v1618
        %v1724 = vunpack.c.l.b16 %v1622
        %v1725 = vunpack.c.l.b16 %v1625
        %v1726 = vunpack.c.l.b16 %v1629
        %v1727 = vunpack.c.l.b16 %v1632
        %v1728 = vunpack.c.l.b16 %v1636
        %v1729 = vunpack.c.l.b16 %v1639
        %v1730 = vunpack.c.l.b16 %v1643
        %v1731 = vunpack.c.l.b16 %v1646
        %v1732 = vunpack.c.l.b16 %v1650
        %v1733 = vunpack.c.l.b16 %v1653
        %v1734 = vunpack.c.l.b16 %v1657
        %v1735 = vunpack.c.l.b16 %v1660
        %v1736 = vunpack.c.l.b16 %v1664
        %v1737 = vunpack.c.l.b16 %v1667
        %v1738 = vunpack.c.l.b16 %v1671
        %v1739 = vunpack.c.l.b16 %v1674
        %v1740 = vpack.c.b16 %v1709, %v1708
        %v1741 = vpack.c.b16 %v1711, %v1710
        %v1742 = vpack.c.b16 %v1713, %v1712
        %v1743 = vpack.c.b16 %v1715, %v1714
        %v1744 = vpack.c.b16 %v1717, %v1716
        %v1745 = vpack.c.b16 %v1719, %v1718
        %v1746 = vpack.c.b16 %v1721, %v1720
        %v1747 = vpack.c.b16 %v1723, %v1722
        %v1748 = vpack.c.b16 %v1725, %v1724
        %v1749 = vpack.c.b16 %v1727, %v1726
        %v1750 = vpack.c.b16 %v1729, %v1728
        %v1751 = vpack.c.b16 %v1731, %v1730
        %v1752 = vpack.c.b16 %v1733, %v1732
        %v1753 = vpack.c.b16 %v1735, %v1734
        %v1754 = vpack.c.b16 %v1737, %v1736
        %v1755 = vpack.c.b16 %v1739, %v1738
        %v1788 = vunpack.c.l.b16 %v1676
        %v1789 = vunpack.c.l.b16 %v1677
        %v1790 = vunpack.c.l.b16 %v1678
        %v1791 = vunpack.c.l.b16 %v1679
        %v1792 = vunpack.c.l.b16 %v1680
        %v1793 = vunpack.c.l.b16 %v1681
        %v1794 = vunpack.c.l.b16 %v1682
        %v1795 = vunpack.c.l.b16 %v1683
        %v1796 = vunpack.c.l.b16 %v1684
        %v1797 = vunpack.c.l.b16 %v1685
        %v1798 = vunpack.c.l.b16 %v1686
        %v1799 = vunpack.c.l.b16 %v1687
        %v1800 = vunpack.c.l.b16 %v1688
        %v1801 = vunpack.c.l.b16 %v1689
        %v1802 = vunpack.c.l.b16 %v1690
        %v1803 = vunpack.c.l.b16 %v1691
        %v1804 = vunpack.c.l.b16 %v1692
        %v1805 = vunpack.c.l.b16 %v1693
        %v1806 = vunpack.c.l.b16 %v1694
        %v1807 = vunpack.c.l.b16 %v1695
        %v1808 = vunpack.c.l.b16 %v1696
        %v1809 = vunpack.c.l.b16 %v1697
        %v1810 = vunpack.c.l.b16 %v1698
        %v1811 = vunpack.c.l.b16 %v1699
        %v1812 = vunpack.c.l.b16 %v1700
        %v1813 = vunpack.c.l.b16 %v1701
        %v1814 = vunpack.c.l.b16 %v1702
        %v1815 = vunpack.c.l.b16 %v1703
        %v1816 = vunpack.c.l.b16 %v1704
        %v1817 = vunpack.c.l.b16 %v1705
        %v1818 = vunpack.c.l.b16 %v1706
        %v1819 = vunpack.c.l.b16 %v1707
        %v1820 = vpack.c.b16 %v1789, %v1788
        %v1821 = vpack.c.b16 %v1791, %v1790
        %v1822 = vpack.c.b16 %v1793, %v1792
        %v1823 = vpack.c.b16 %v1795, %v1794
        %v1824 = vpack.c.b16 %v1797, %v1796
        %v1825 = vpack.c.b16 %v1799, %v1798
        %v1826 = vpack.c.b16 %v1801, %v1800
        %v1827 = vpack.c.b16 %v1803, %v1802
        %v1828 = vpack.c.b16 %v1805, %v1804
        %v1829 = vpack.c.b16 %v1807, %v1806
        %v1830 = vpack.c.b16 %v1809, %v1808
        %v1831 = vpack.c.b16 %v1811, %v1810
        %v1832 = vpack.c.b16 %v1813, %v1812
        %v1833 = vpack.c.b16 %v1815, %v1814
        %v1834 = vpack.c.b16 %v1817, %v1816
        %v1835 = vpack.c.b16 %v1819, %v1818
        %1836 = vrot.lane.b32.xlu0 %v1820, 64
        %v1837 = vpop.permute.xlu0 %1836
        %1838 = vrot.lane.b32.xlu0 %v1821, 64
        %v1839 = vpop.permute.xlu0 %1838
        %1840 = vrot.lane.b32.xlu0 %v1822, 64
        %v1841 = vpop.permute.xlu0 %1840
        %1842 = vrot.lane.b32.xlu0 %v1823, 64
        %v1843 = vpop.permute.xlu0 %1842
        %1844 = vrot.lane.b32.xlu0 %v1824, 64
        %v1845 = vpop.permute.xlu0 %1844
        %1846 = vrot.lane.b32.xlu0 %v1825, 64
        %v1847 = vpop.permute.xlu0 %1846
        %1848 = vrot.lane.b32.xlu0 %v1826, 64
        %v1849 = vpop.permute.xlu0 %1848
        %1850 = vrot.lane.b32.xlu0 %v1827, 64
        %v1851 = vpop.permute.xlu0 %1850
        %1852 = vrot.lane.b32.xlu0 %v1828, 64
        %v1853 = vpop.permute.xlu0 %1852
        %1854 = vrot.lane.b32.xlu0 %v1829, 64
        %v1855 = vpop.permute.xlu0 %1854
        %1856 = vrot.lane.b32.xlu0 %v1830, 64
        %v1857 = vpop.permute.xlu0 %1856
        %1858 = vrot.lane.b32.xlu0 %v1831, 64
        %v1859 = vpop.permute.xlu0 %1858
        %1860 = vrot.lane.b32.xlu0 %v1832, 64
        %v1861 = vpop.permute.xlu0 %1860
        %1862 = vrot.lane.b32.xlu0 %v1833, 64
        %v1863 = vpop.permute.xlu0 %1862
        %1864 = vrot.lane.b32.xlu0 %v1834, 64
        %v1865 = vpop.permute.xlu0 %1864
        %1866 = vrot.lane.b32.xlu0 %v1835, 64
        %v1867 = vpop.permute.xlu0 %1866
        %v1870 = vsel %vm1271, %v1740, %v1837
        %v1873 = vsel %vm1271, %v1741, %v1839
        %v1876 = vsel %vm1271, %v1742, %v1841
        %v1879 = vsel %vm1271, %v1743, %v1843
        %v1882 = vsel %vm1271, %v1744, %v1845
        %v1885 = vsel %vm1271, %v1745, %v1847
        %v1888 = vsel %vm1271, %v1746, %v1849
        %v1891 = vsel %vm1271, %v1747, %v1851
        %v1894 = vsel %vm1271, %v1748, %v1853
        %v1897 = vsel %vm1271, %v1749, %v1855
        %v1900 = vsel %vm1271, %v1750, %v1857
        %v1903 = vsel %vm1271, %v1751, %v1859
        %v1906 = vsel %vm1271, %v1752, %v1861
        %v1909 = vsel %vm1271, %v1753, %v1863
        %v1912 = vsel %vm1271, %v1754, %v1865
        %v1915 = vsel %vm1271, %v1755, %v1867
        %v1932 = vunpack.c.l.b16 %v1870
        %v1933 = vunpack.c.h.b16 %v1870
        %v1934 = vunpack.c.l.b16 %v1873
        %v1935 = vunpack.c.h.b16 %v1873
        %v1936 = vunpack.c.l.b16 %v1876
        %v1937 = vunpack.c.h.b16 %v1876
        %v1938 = vunpack.c.l.b16 %v1879
        %v1939 = vunpack.c.h.b16 %v1879
        %v1940 = vunpack.c.l.b16 %v1882
        %v1941 = vunpack.c.h.b16 %v1882
        %v1942 = vunpack.c.l.b16 %v1885
        %v1943 = vunpack.c.h.b16 %v1885
        %v1944 = vunpack.c.l.b16 %v1888
        %v1945 = vunpack.c.h.b16 %v1888
        %v1946 = vunpack.c.l.b16 %v1891
        %v1947 = vunpack.c.h.b16 %v1891
        %v1948 = vunpack.c.l.b16 %v1894
        %v1949 = vunpack.c.h.b16 %v1894
        %v1950 = vunpack.c.l.b16 %v1897
        %v1951 = vunpack.c.h.b16 %v1897
        %v1952 = vunpack.c.l.b16 %v1900
        %v1953 = vunpack.c.h.b16 %v1900
        %v1954 = vunpack.c.l.b16 %v1903
        %v1955 = vunpack.c.h.b16 %v1903
        %v1956 = vunpack.c.l.b16 %v1906
        %v1957 = vunpack.c.h.b16 %v1906
        %v1958 = vunpack.c.l.b16 %v1909
        %v1959 = vunpack.c.h.b16 %v1909
        %v1960 = vunpack.c.l.b16 %v1912
        %v1961 = vunpack.c.h.b16 %v1912
        %v1962 = vunpack.c.l.b16 %v1915
        %v1963 = vunpack.c.h.b16 %v1915
        %v1964 = vpack.c.b16 %v1932, %v1932
        %v1965 = vpack.c.b16 %v1933, %v1933
        %v1966 = vpack.c.b16 %v1934, %v1934
        %v1967 = vpack.c.b16 %v1935, %v1935
        %v1968 = vpack.c.b16 %v1936, %v1936
        %v1969 = vpack.c.b16 %v1937, %v1937
        %v1970 = vpack.c.b16 %v1938, %v1938
        %v1971 = vpack.c.b16 %v1939, %v1939
        %v1972 = vpack.c.b16 %v1940, %v1940
        %v1973 = vpack.c.b16 %v1941, %v1941
        %v1974 = vpack.c.b16 %v1942, %v1942
        %v1975 = vpack.c.b16 %v1943, %v1943
        %v1976 = vpack.c.b16 %v1944, %v1944
        %v1977 = vpack.c.b16 %v1945, %v1945
        %v1978 = vpack.c.b16 %v1946, %v1946
        %v1979 = vpack.c.b16 %v1947, %v1947
        %v1980 = vpack.c.b16 %v1948, %v1948
        %v1981 = vpack.c.b16 %v1949, %v1949
        %v1982 = vpack.c.b16 %v1950, %v1950
        %v1983 = vpack.c.b16 %v1951, %v1951
        %v1984 = vpack.c.b16 %v1952, %v1952
        %v1985 = vpack.c.b16 %v1953, %v1953
        %v1986 = vpack.c.b16 %v1954, %v1954
        %v1987 = vpack.c.b16 %v1955, %v1955
        %v1988 = vpack.c.b16 %v1956, %v1956
        %v1989 = vpack.c.b16 %v1957, %v1957
        %v1990 = vpack.c.b16 %v1958, %v1958
        %v1991 = vpack.c.b16 %v1959, %v1959
        %v1992 = vpack.c.b16 %v1960, %v1960
        %v1993 = vpack.c.b16 %v1961, %v1961
        %v1994 = vpack.c.b16 %v1962, %v1962
        %v1995 = vpack.c.b16 %v1963, %v1963
        %2028 = vst [vmem:[#allocation3 + $0x4] sm:$0xf] %v1964
        %2029 = vst [vmem:[#allocation3 + $0x18] sm:$0xf] %v1965
        %2030 = vst [vmem:[#allocation3 + $0x2c] sm:$0xf] %v1966
        %2031 = vst [vmem:[#allocation3 + $0x40] sm:$0xf] %v1967
        %2032 = vst [vmem:[#allocation3 + $0x54] sm:$0xf] %v1968
        %2033 = vst [vmem:[#allocation3 + $0x68] sm:$0xf] %v1969
        %2034 = vst [vmem:[#allocation3 + $0x7c] sm:$0xf] %v1970
        %2035 = vst [vmem:[#allocation3 + $0x90] sm:$0xf] %v1971
        %2036 = vst [vmem:[#allocation3 + $0xa4] sm:$0xf] %v1972
        %2037 = vst [vmem:[#allocation3 + $0xb8] sm:$0xf] %v1973
        %2038 = vst [vmem:[#allocation3 + $0xcc] sm:$0xf] %v1974
        %2039 = vst [vmem:[#allocation3 + $0xe0] sm:$0xf] %v1975
        %2040 = vst [vmem:[#allocation3 + $0xf4] sm:$0xf] %v1976
        %2041 = vst [vmem:[#allocation3 + $0x108] sm:$0xf] %v1977
        %2042 = vst [vmem:[#allocation3 + $0x11c] sm:$0xf] %v1978
        %2043 = vst [vmem:[#allocation3 + $0x130] sm:$0xf] %v1979
        %2044 = vst [vmem:[#allocation3 + $0x144] sm:$0xf] %v1980
        %2045 = vst [vmem:[#allocation3 + $0x158] sm:$0xf] %v1981
        %2046 = vst [vmem:[#allocation3 + $0x16c] sm:$0xf] %v1982
        %2047 = vst [vmem:[#allocation3 + $0x180] sm:$0xf] %v1983
        %2048 = vst [vmem:[#allocation3 + $0x194] sm:$0xf] %v1984
        %2049 = vst [vmem:[#allocation3 + $0x1a8] sm:$0xf] %v1985
        %2050 = vst [vmem:[#allocation3 + $0x1bc] sm:$0xf] %v1986
        %2051 = vst [vmem:[#allocation3 + $0x1d0] sm:$0xf] %v1987
        %2052 = vst [vmem:[#allocation3 + $0x1e4] sm:$0xf] %v1988
        %2053 = vst [vmem:[#allocation3 + $0x1f8] sm:$0xf] %v1989
        %2054 = vst [vmem:[#allocation3 + $0x20c] sm:$0xf] %v1990
        %2055 = vst [vmem:[#allocation3 + $0x220] sm:$0xf] %v1991
        %2056 = vst [vmem:[#allocation3 + $0x234] sm:$0xf] %v1992
        %2057 = vst [vmem:[#allocation3 + $0x248] sm:$0xf] %v1993
        %2058 = vst [vmem:[#allocation3 + $0x25c] sm:$0xf] %v1994
        %2059 = vst [vmem:[#allocation3 + $0x270] sm:$0xf] %v1995
        %v2060 = vld [vmem:[%s1675] sm:$0xf]
        %v2061 = vld [vmem:[%s1675 + $0x4] sm:$0xf]
        %v2062 = vld [vmem:[%s1675 + $0x8] sm:$0x1]
        %v2063 = vld [vmem:[%s1675 + $0xc] sm:$0xf]
        %v2064 = vld [vmem:[%s1675 + $0x10] sm:$0xf]
        %v2065 = vld [vmem:[%s1675 + $0x14] sm:$0x1]
        %v2066 = vld [vmem:[%s1675 + $0x18] sm:$0xf]
        %v2067 = vld [vmem:[%s1675 + $0x1c] sm:$0xf]
        %v2068 = vld [vmem:[%s1675 + $0x20] sm:$0x1]
        %v2069 = vld [vmem:[%s1675 + $0x24] sm:$0xf]
        %v2070 = vld [vmem:[%s1675 + $0x28] sm:$0xf]
        %v2071 = vld [vmem:[%s1675 + $0x2c] sm:$0x1]
        %v2072 = vld [vmem:[%s1675 + $0x30] sm:$0xf]
        %v2073 = vld [vmem:[%s1675 + $0x34] sm:$0xf]
        %v2074 = vld [vmem:[%s1675 + $0x38] sm:$0x1]
        %v2075 = vld [vmem:[%s1675 + $0x3c] sm:$0xf]
        %v2076 = vld [vmem:[%s1675 + $0x40] sm:$0xf]
        %v2077 = vld [vmem:[%s1675 + $0x44] sm:$0x1]
        %v2078 = vld [vmem:[%s1675 + $0x48] sm:$0xf]
        %v2079 = vld [vmem:[%s1675 + $0x4c] sm:$0xf]
        %v2080 = vld [vmem:[%s1675 + $0x50] sm:$0x1]
        %v2081 = vld [vmem:[%s1675 + $0x54] sm:$0xf]
        %v2082 = vld [vmem:[%s1675 + $0x58] sm:$0xf]
        %v2083 = vld [vmem:[%s1675 + $0x5c] sm:$0x1]
        %v2084 = vld [vmem:[%s1675 + $0x60] sm:$0xf]
        %v2085 = vld [vmem:[%s1675 + $0x64] sm:$0xf]
        %v2086 = vld [vmem:[%s1675 + $0x68] sm:$0x1]
        %v2087 = vld [vmem:[%s1675 + $0x6c] sm:$0xf]
        %v2088 = vld [vmem:[%s1675 + $0x70] sm:$0xf]
        %v2089 = vld [vmem:[%s1675 + $0x74] sm:$0x1]
        %v2090 = vld [vmem:[%s1675 + $0x78] sm:$0xf]
        %v2091 = vld [vmem:[%s1675 + $0x7c] sm:$0xf]
        %v2092 = vld [vmem:[%s1675 + $0x80] sm:$0x1]
        %v2093 = vld [vmem:[%s1675 + $0x84] sm:$0xf]
        %v2094 = vld [vmem:[%s1675 + $0x88] sm:$0xf]
        %v2095 = vld [vmem:[%s1675 + $0x8c] sm:$0x1]
        %v2096 = vld [vmem:[%s1675 + $0x90] sm:$0xf]
        %v2097 = vld [vmem:[%s1675 + $0x94] sm:$0xf]
        %v2098 = vld [vmem:[%s1675 + $0x98] sm:$0x1]
        %v2099 = vld [vmem:[%s1675 + $0x9c] sm:$0xf]
        %v2100 = vld [vmem:[%s1675 + $0xa0] sm:$0xf]
        %v2101 = vld [vmem:[%s1675 + $0xa4] sm:$0x1]
        %v2102 = vld [vmem:[%s1675 + $0xa8] sm:$0xf]
        %v2103 = vld [vmem:[%s1675 + $0xac] sm:$0xf]
        %v2104 = vld [vmem:[%s1675 + $0xb0] sm:$0x1]
        %v2105 = vld [vmem:[%s1675 + $0xb4] sm:$0xf]
        %v2106 = vld [vmem:[%s1675 + $0xb8] sm:$0xf]
        %v2107 = vld [vmem:[%s1675 + $0xbc] sm:$0x1]
        %v2109 = vshrl.u32 %v2060, 16
        %v2111 = vrot.slane %v2109, 4
        %v2112 = vshll.u32 %v2060, 16
        %v2114 = vrot.slane %v2112, 5
        %v2115 = vor.u32 %v2111, %v2114
        %v2116 = vrot.slane %v2115, 4
        %v2118 = vshll.u32 %v2061, 16
        %v2120 = vrot.slane %v2118, 5
        %v2121 = vsel %vm726, %v2116, %v2120
        %v2122 = vshrl.u32 %v2061, 16
        %v2124 = vrot.slane %v2122, 4
        %v2125 = vor.u32 %v2124, %v2120
        %v2126 = vrot.slane %v2125, 4
        %v2128 = vshll.u32 %v2062, 16
        %v2130 = vrot.slane %v2128, 5
        %v2131 = vsel %vm726, %v2126, %v2130
        %v2133 = vshrl.u32 %v2063, 16
        %v2135 = vrot.slane %v2133, 4
        %v2136 = vshll.u32 %v2063, 16
        %v2138 = vrot.slane %v2136, 5
        %v2139 = vor.u32 %v2135, %v2138
        %v2140 = vrot.slane %v2139, 4
        %v2142 = vshll.u32 %v2064, 16
        %v2144 = vrot.slane %v2142, 5
        %v2145 = vsel %vm726, %v2140, %v2144
        %v2146 = vshrl.u32 %v2064, 16
        %v2148 = vrot.slane %v2146, 4
        %v2149 = vor.u32 %v2148, %v2144
        %v2150 = vrot.slane %v2149, 4
        %v2152 = vshll.u32 %v2065, 16
        %v2154 = vrot.slane %v2152, 5
        %v2155 = vsel %vm726, %v2150, %v2154
        %v2157 = vshrl.u32 %v2066, 16
        %v2159 = vrot.slane %v2157, 4
        %v2160 = vshll.u32 %v2066, 16
        %v2162 = vrot.slane %v2160, 5
        %v2163 = vor.u32 %v2159, %v2162
        %v2164 = vrot.slane %v2163, 4
        %v2166 = vshll.u32 %v2067, 16
        %v2168 = vrot.slane %v2166, 5
        %v2169 = vsel %vm726, %v2164, %v2168
        %v2170 = vshrl.u32 %v2067, 16
        %v2172 = vrot.slane %v2170, 4
        %v2173 = vor.u32 %v2172, %v2168
        %v2174 = vrot.slane %v2173, 4
        %v2176 = vshll.u32 %v2068, 16
        %v2178 = vrot.slane %v2176, 5
        %v2179 = vsel %vm726, %v2174, %v2178
        %v2181 = vshrl.u32 %v2069, 16
        %v2183 = vrot.slane %v2181, 4
        %v2184 = vshll.u32 %v2069, 16
        %v2186 = vrot.slane %v2184, 5
        %v2187 = vor.u32 %v2183, %v2186
        %v2188 = vrot.slane %v2187, 4
        %v2190 = vshll.u32 %v2070, 16
        %v2192 = vrot.slane %v2190, 5
        %v2193 = vsel %vm726, %v2188, %v2192
        %v2194 = vshrl.u32 %v2070, 16
        %v2196 = vrot.slane %v2194, 4
        %v2197 = vor.u32 %v2196, %v2192
        %v2198 = vrot.slane %v2197, 4
        %v2200 = vshll.u32 %v2071, 16
        %v2202 = vrot.slane %v2200, 5
        %v2203 = vsel %vm726, %v2198, %v2202
        %v2205 = vshrl.u32 %v2072, 16
        %v2207 = vrot.slane %v2205, 4
        %v2208 = vshll.u32 %v2072, 16
        %v2210 = vrot.slane %v2208, 5
        %v2211 = vor.u32 %v2207, %v2210
        %v2212 = vrot.slane %v2211, 4
        %v2214 = vshll.u32 %v2073, 16
        %v2216 = vrot.slane %v2214, 5
        %v2217 = vsel %vm726, %v2212, %v2216
        %v2218 = vshrl.u32 %v2073, 16
        %v2220 = vrot.slane %v2218, 4
        %v2221 = vor.u32 %v2220, %v2216
        %v2222 = vrot.slane %v2221, 4
        %v2224 = vshll.u32 %v2074, 16
        %v2226 = vrot.slane %v2224, 5
        %v2227 = vsel %vm726, %v2222, %v2226
        %v2229 = vshrl.u32 %v2075, 16
        %v2231 = vrot.slane %v2229, 4
        %v2232 = vshll.u32 %v2075, 16
        %v2234 = vrot.slane %v2232, 5
        %v2235 = vor.u32 %v2231, %v2234
        %v2236 = vrot.slane %v2235, 4
        %v2238 = vshll.u32 %v2076, 16
        %v2240 = vrot.slane %v2238, 5
        %v2241 = vsel %vm726, %v2236, %v2240
        %v2242 = vshrl.u32 %v2076, 16
        %v2244 = vrot.slane %v2242, 4
        %v2245 = vor.u32 %v2244, %v2240
        %v2246 = vrot.slane %v2245, 4
        %v2248 = vshll.u32 %v2077, 16
        %v2250 = vrot.slane %v2248, 5
        %v2251 = vsel %vm726, %v2246, %v2250
        %v2253 = vshrl.u32 %v2078, 16
        %v2255 = vrot.slane %v2253, 4
        %v2256 = vshll.u32 %v2078, 16
        %v2258 = vrot.slane %v2256, 5
        %v2259 = vor.u32 %v2255, %v2258
        %v2260 = vrot.slane %v2259, 4
        %v2262 = vshll.u32 %v2079, 16
        %v2264 = vrot.slane %v2262, 5
        %v2265 = vsel %vm726, %v2260, %v2264
        %v2266 = vshrl.u32 %v2079, 16
        %v2268 = vrot.slane %v2266, 4
        %v2269 = vor.u32 %v2268, %v2264
        %v2270 = vrot.slane %v2269, 4
        %v2272 = vshll.u32 %v2080, 16
        %v2274 = vrot.slane %v2272, 5
        %v2275 = vsel %vm726, %v2270, %v2274
        %v2277 = vshrl.u32 %v2081, 16
        %v2279 = vrot.slane %v2277, 4
        %v2280 = vshll.u32 %v2081, 16
        %v2282 = vrot.slane %v2280, 5
        %v2283 = vor.u32 %v2279, %v2282
        %v2284 = vrot.slane %v2283, 4
        %v2286 = vshll.u32 %v2082, 16
        %v2288 = vrot.slane %v2286, 5
        %v2289 = vsel %vm726, %v2284, %v2288
        %v2290 = vshrl.u32 %v2082, 16
        %v2292 = vrot.slane %v2290, 4
        %v2293 = vor.u32 %v2292, %v2288
        %v2294 = vrot.slane %v2293, 4
        %v2296 = vshll.u32 %v2083, 16
        %v2298 = vrot.slane %v2296, 5
        %v2299 = vsel %vm726, %v2294, %v2298
        %v2301 = vshrl.u32 %v2084, 16
        %v2303 = vrot.slane %v2301, 4
        %v2304 = vshll.u32 %v2084, 16
        %v2306 = vrot.slane %v2304, 5
        %v2307 = vor.u32 %v2303, %v2306
        %v2308 = vrot.slane %v2307, 4
        %v2310 = vshll.u32 %v2085, 16
        %v2312 = vrot.slane %v2310, 5
        %v2313 = vsel %vm726, %v2308, %v2312
        %v2314 = vshrl.u32 %v2085, 16
        %v2316 = vrot.slane %v2314, 4
        %v2317 = vor.u32 %v2316, %v2312
        %v2318 = vrot.slane %v2317, 4
        %v2320 = vshll.u32 %v2086, 16
        %v2322 = vrot.slane %v2320, 5
        %v2323 = vsel %vm726, %v2318, %v2322
        %v2325 = vshrl.u32 %v2087, 16
        %v2327 = vrot.slane %v2325, 4
        %v2328 = vshll.u32 %v2087, 16
        %v2330 = vrot.slane %v2328, 5
        %v2331 = vor.u32 %v2327, %v2330
        %v2332 = vrot.slane %v2331, 4
        %v2334 = vshll.u32 %v2088, 16
        %v2336 = vrot.slane %v2334, 5
        %v2337 = vsel %vm726, %v2332, %v2336
        %v2338 = vshrl.u32 %v2088, 16
        %v2340 = vrot.slane %v2338, 4
        %v2341 = vor.u32 %v2340, %v2336
        %v2342 = vrot.slane %v2341, 4
        %v2344 = vshll.u32 %v2089, 16
        %v2346 = vrot.slane %v2344, 5
        %v2347 = vsel %vm726, %v2342, %v2346
        %v2349 = vshrl.u32 %v2090, 16
        %v2351 = vrot.slane %v2349, 4
        %v2352 = vshll.u32 %v2090, 16
        %v2354 = vrot.slane %v2352, 5
        %v2355 = vor.u32 %v2351, %v2354
        %v2356 = vrot.slane %v2355, 4
        %v2358 = vshll.u32 %v2091, 16
        %v2360 = vrot.slane %v2358, 5
        %v2361 = vsel %vm726, %v2356, %v2360
        %v2362 = vshrl.u32 %v2091, 16
        %v2364 = vrot.slane %v2362, 4
        %v2365 = vor.u32 %v2364, %v2360
        %v2366 = vrot.slane %v2365, 4
        %v2368 = vshll.u32 %v2092, 16
        %v2370 = vrot.slane %v2368, 5
        %v2371 = vsel %vm726, %v2366, %v2370
        %v2373 = vshrl.u32 %v2093, 16
        %v2375 = vrot.slane %v2373, 4
        %v2376 = vshll.u32 %v2093, 16
        %v2378 = vrot.slane %v2376, 5
        %v2379 = vor.u32 %v2375, %v2378
        %v2380 = vrot.slane %v2379, 4
        %v2382 = vshll.u32 %v2094, 16
        %v2384 = vrot.slane %v2382, 5
        %v2385 = vsel %vm726, %v2380, %v2384
        %v2386 = vshrl.u32 %v2094, 16
        %v2388 = vrot.slane %v2386, 4
        %v2389 = vor.u32 %v2388, %v2384
        %v2390 = vrot.slane %v2389, 4
        %v2392 = vshll.u32 %v2095, 16
        %v2394 = vrot.slane %v2392, 5
        %v2395 = vsel %vm726, %v2390, %v2394
        %v2397 = vshrl.u32 %v2096, 16
        %v2399 = vrot.slane %v2397, 4
        %v2400 = vshll.u32 %v2096, 16
        %v2402 = vrot.slane %v2400, 5
        %v2403 = vor.u32 %v2399, %v2402
        %v2404 = vrot.slane %v2403, 4
        %v2406 = vshll.u32 %v2097, 16
        %v2408 = vrot.slane %v2406, 5
        %v2409 = vsel %vm726, %v2404, %v2408
        %v2410 = vshrl.u32 %v2097, 16
        %v2412 = vrot.slane %v2410, 4
        %v2413 = vor.u32 %v2412, %v2408
        %v2414 = vrot.slane %v2413, 4
        %v2416 = vshll.u32 %v2098, 16
        %v2418 = vrot.slane %v2416, 5
        %v2419 = vsel %vm726, %v2414, %v2418
        %v2421 = vshrl.u32 %v2099, 16
        %v2423 = vrot.slane %v2421, 4
        %v2424 = vshll.u32 %v2099, 16
        %v2426 = vrot.slane %v2424, 5
        %v2427 = vor.u32 %v2423, %v2426
        %v2428 = vrot.slane %v2427, 4
        %v2430 = vshll.u32 %v2100, 16
        %v2432 = vrot.slane %v2430, 5
        %v2433 = vsel %vm726, %v2428, %v2432
        %v2434 = vshrl.u32 %v2100, 16
        %v2436 = vrot.slane %v2434, 4
        %v2437 = vor.u32 %v2436, %v2432
        %v2438 = vrot.slane %v2437, 4
        %v2440 = vshll.u32 %v2101, 16
        %v2442 = vrot.slane %v2440, 5
        %v2443 = vsel %vm726, %v2438, %v2442
        %v2445 = vshrl.u32 %v2102, 16
        %v2447 = vrot.slane %v2445, 4
        %v2448 = vshll.u32 %v2102, 16
        %v2450 = vrot.slane %v2448, 5
        %v2451 = vor.u32 %v2447, %v2450
        %v2452 = vrot.slane %v2451, 4
        %v2454 = vshll.u32 %v2103, 16
        %v2456 = vrot.slane %v2454, 5
        %v2457 = vsel %vm726, %v2452, %v2456
        %v2458 = vshrl.u32 %v2103, 16
        %v2460 = vrot.slane %v2458, 4
        %v2461 = vor.u32 %v2460, %v2456
        %v2462 = vrot.slane %v2461, 4
        %v2464 = vshll.u32 %v2104, 16
        %v2466 = vrot.slane %v2464, 5
        %v2467 = vsel %vm726, %v2462, %v2466
        %v2469 = vshrl.u32 %v2105, 16
        %v2471 = vrot.slane %v2469, 4
        %v2472 = vshll.u32 %v2105, 16
        %v2474 = vrot.slane %v2472, 5
        %v2475 = vor.u32 %v2471, %v2474
        %v2476 = vrot.slane %v2475, 4
        %v2478 = vshll.u32 %v2106, 16
        %v2480 = vrot.slane %v2478, 5
        %v2481 = vsel %vm726, %v2476, %v2480
        %v2482 = vshrl.u32 %v2106, 16
        %v2484 = vrot.slane %v2482, 4
        %v2485 = vor.u32 %v2484, %v2480
        %v2486 = vrot.slane %v2485, 4
        %v2488 = vshll.u32 %v2107, 16
        %v2490 = vrot.slane %v2488, 5
        %v2491 = vsel %vm726, %v2486, %v2490
        %v2492 = vld [vmem:[%s1675] sm:$0xe]
        %v2493 = vld [vmem:[%s1675 + $0xc] sm:$0xe]
        %v2494 = vld [vmem:[%s1675 + $0x18] sm:$0xe]
        %v2495 = vld [vmem:[%s1675 + $0x24] sm:$0xe]
        %v2496 = vld [vmem:[%s1675 + $0x30] sm:$0xe]
        %v2497 = vld [vmem:[%s1675 + $0x3c] sm:$0xe]
        %v2498 = vld [vmem:[%s1675 + $0x48] sm:$0xe]
        %v2499 = vld [vmem:[%s1675 + $0x54] sm:$0xe]
        %v2500 = vld [vmem:[%s1675 + $0x60] sm:$0xe]
        %v2501 = vld [vmem:[%s1675 + $0x6c] sm:$0xe]
        %v2502 = vld [vmem:[%s1675 + $0x78] sm:$0xe]
        %v2503 = vld [vmem:[%s1675 + $0x84] sm:$0xe]
        %v2504 = vld [vmem:[%s1675 + $0x90] sm:$0xe]
        %v2505 = vld [vmem:[%s1675 + $0x9c] sm:$0xe]
        %v2506 = vld [vmem:[%s1675 + $0xa8] sm:$0xe]
        %v2507 = vld [vmem:[%s1675 + $0xb4] sm:$0xe]
        %v2556 = vrot.slane %v2492, 5
        %v2557 = vrot.slane %v2556, 4
        %v2558 = vrot.slane %v2061, 5
        %v2559 = vsel %vm1562, %v2557, %v2558
        %v2560 = vrot.slane %v2558, 4
        %v2561 = vrot.slane %v2062, 5
        %v2562 = vsel %vm1562, %v2560, %v2561
        %v2563 = vrot.slane %v2493, 5
        %v2564 = vrot.slane %v2563, 4
        %v2565 = vrot.slane %v2064, 5
        %v2566 = vsel %vm1562, %v2564, %v2565
        %v2567 = vrot.slane %v2565, 4
        %v2568 = vrot.slane %v2065, 5
        %v2569 = vsel %vm1562, %v2567, %v2568
        %v2570 = vrot.slane %v2494, 5
        %v2571 = vrot.slane %v2570, 4
        %v2572 = vrot.slane %v2067, 5
        %v2573 = vsel %vm1562, %v2571, %v2572
        %v2574 = vrot.slane %v2572, 4
        %v2575 = vrot.slane %v2068, 5
        %v2576 = vsel %vm1562, %v2574, %v2575
        %v2577 = vrot.slane %v2495, 5
        %v2578 = vrot.slane %v2577, 4
        %v2579 = vrot.slane %v2070, 5
        %v2580 = vsel %vm1562, %v2578, %v2579
        %v2581 = vrot.slane %v2579, 4
        %v2582 = vrot.slane %v2071, 5
        %v2583 = vsel %vm1562, %v2581, %v2582
        %v2584 = vrot.slane %v2496, 5
        %v2585 = vrot.slane %v2584, 4
        %v2586 = vrot.slane %v2073, 5
        %v2587 = vsel %vm1562, %v2585, %v2586
        %v2588 = vrot.slane %v2586, 4
        %v2589 = vrot.slane %v2074, 5
        %v2590 = vsel %vm1562, %v2588, %v2589
        %v2591 = vrot.slane %v2497, 5
        %v2592 = vrot.slane %v2591, 4
        %v2593 = vrot.slane %v2076, 5
        %v2594 = vsel %vm1562, %v2592, %v2593
        %v2595 = vrot.slane %v2593, 4
        %v2596 = vrot.slane %v2077, 5
        %v2597 = vsel %vm1562, %v2595, %v2596
        %v2598 = vrot.slane %v2498, 5
        %v2599 = vrot.slane %v2598, 4
        %v2600 = vrot.slane %v2079, 5
        %v2601 = vsel %vm1562, %v2599, %v2600
        %v2602 = vrot.slane %v2600, 4
        %v2603 = vrot.slane %v2080, 5
        %v2604 = vsel %vm1562, %v2602, %v2603
        %v2605 = vrot.slane %v2499, 5
        %v2606 = vrot.slane %v2605, 4
        %v2607 = vrot.slane %v2082, 5
        %v2608 = vsel %vm1562, %v2606, %v2607
        %v2609 = vrot.slane %v2607, 4
        %v2610 = vrot.slane %v2083, 5
        %v2611 = vsel %vm1562, %v2609, %v2610
        %v2612 = vrot.slane %v2500, 5
        %v2613 = vrot.slane %v2612, 4
        %v2614 = vrot.slane %v2085, 5
        %v2615 = vsel %vm1562, %v2613, %v2614
        %v2616 = vrot.slane %v2614, 4
        %v2617 = vrot.slane %v2086, 5
        %v2618 = vsel %vm1562, %v2616, %v2617
        %v2619 = vrot.slane %v2501, 5
        %v2620 = vrot.slane %v2619, 4
        %v2621 = vrot.slane %v2088, 5
        %v2622 = vsel %vm1562, %v2620, %v2621
        %v2623 = vrot.slane %v2621, 4
        %v2624 = vrot.slane %v2089, 5
        %v2625 = vsel %vm1562, %v2623, %v2624
        %v2626 = vrot.slane %v2502, 5
        %v2627 = vrot.slane %v2626, 4
        %v2628 = vrot.slane %v2091, 5
        %v2629 = vsel %vm1562, %v2627, %v2628
        %v2630 = vrot.slane %v2628, 4
        %v2631 = vrot.slane %v2092, 5
        %v2632 = vsel %vm1562, %v2630, %v2631
        %v2633 = vrot.slane %v2503, 5
        %v2634 = vrot.slane %v2633, 4
        %v2635 = vrot.slane %v2094, 5
        %v2636 = vsel %vm1562, %v2634, %v2635
        %v2637 = vrot.slane %v2635, 4
        %v2638 = vrot.slane %v2095, 5
        %v2639 = vsel %vm1562, %v2637, %v2638
        %v2640 = vrot.slane %v2504, 5
        %v2641 = vrot.slane %v2640, 4
        %v2642 = vrot.slane %v2097, 5
        %v2643 = vsel %vm1562, %v2641, %v2642
        %v2644 = vrot.slane %v2642, 4
        %v2645 = vrot.slane %v2098, 5
        %v2646 = vsel %vm1562, %v2644, %v2645
        %v2647 = vrot.slane %v2505, 5
        %v2648 = vrot.slane %v2647, 4
        %v2649 = vrot.slane %v2100, 5
        %v2650 = vsel %vm1562, %v2648, %v2649
        %v2651 = vrot.slane %v2649, 4
        %v2652 = vrot.slane %v2101, 5
        %v2653 = vsel %vm1562, %v2651, %v2652
        %v2654 = vrot.slane %v2506, 5
        %v2655 = vrot.slane %v2654, 4
        %v2656 = vrot.slane %v2103, 5
        %v2657 = vsel %vm1562, %v2655, %v2656
        %v2658 = vrot.slane %v2656, 4
        %v2659 = vrot.slane %v2104, 5
        %v2660 = vsel %vm1562, %v2658, %v2659
        %v2661 = vrot.slane %v2507, 5
        %v2662 = vrot.slane %v2661, 4
        %v2663 = vrot.slane %v2106, 5
        %v2664 = vsel %vm1562, %v2662, %v2663
        %v2665 = vrot.slane %v2663, 4
        %v2666 = vrot.slane %v2107, 5
        %v2667 = vsel %vm1562, %v2665, %v2666
        %v2668 = vunpack.c.l.b16 %v2121
        %v2669 = vunpack.c.l.b16 %v2131
        %v2670 = vunpack.c.l.b16 %v2145
        %v2671 = vunpack.c.l.b16 %v2155
        %v2672 = vunpack.c.l.b16 %v2169
        %v2673 = vunpack.c.l.b16 %v2179
        %v2674 = vunpack.c.l.b16 %v2193
        %v2675 = vunpack.c.l.b16 %v2203
        %v2676 = vunpack.c.l.b16 %v2217
        %v2677 = vunpack.c.l.b16 %v2227
        %v2678 = vunpack.c.l.b16 %v2241
        %v2679 = vunpack.c.l.b16 %v2251
        %v2680 = vunpack.c.l.b16 %v2265
        %v2681 = vunpack.c.l.b16 %v2275
        %v2682 = vunpack.c.l.b16 %v2289
        %v2683 = vunpack.c.l.b16 %v2299
        %v2684 = vunpack.c.l.b16 %v2313
        %v2685 = vunpack.c.l.b16 %v2323
        %v2686 = vunpack.c.l.b16 %v2337
        %v2687 = vunpack.c.l.b16 %v2347
        %v2688 = vunpack.c.l.b16 %v2361
        %v2689 = vunpack.c.l.b16 %v2371
        %v2690 = vunpack.c.l.b16 %v2385
        %v2691 = vunpack.c.l.b16 %v2395
        %v2692 = vunpack.c.l.b16 %v2409
        %v2693 = vunpack.c.l.b16 %v2419
        %v2694 = vunpack.c.l.b16 %v2433
        %v2695 = vunpack.c.l.b16 %v2443
        %v2696 = vunpack.c.l.b16 %v2457
        %v2697 = vunpack.c.l.b16 %v2467
        %v2698 = vunpack.c.l.b16 %v2481
        %v2699 = vunpack.c.l.b16 %v2491
        %v2700 = vpack.c.b16 %v2669, %v2668
        %v2701 = vpack.c.b16 %v2671, %v2670
        %v2702 = vpack.c.b16 %v2673, %v2672
        %v2703 = vpack.c.b16 %v2675, %v2674
        %v2704 = vpack.c.b16 %v2677, %v2676
        %v2705 = vpack.c.b16 %v2679, %v2678
        %v2706 = vpack.c.b16 %v2681, %v2680
        %v2707 = vpack.c.b16 %v2683, %v2682
        %v2708 = vpack.c.b16 %v2685, %v2684
        %v2709 = vpack.c.b16 %v2687, %v2686
        %v2710 = vpack.c.b16 %v2689, %v2688
        %v2711 = vpack.c.b16 %v2691, %v2690
        %v2712 = vpack.c.b16 %v2693, %v2692
        %v2713 = vpack.c.b16 %v2695, %v2694
        %v2714 = vpack.c.b16 %v2697, %v2696
        %v2715 = vpack.c.b16 %v2699, %v2698
        %v2716 = vunpack.c.l.b16 %v2559
        %v2717 = vunpack.c.l.b16 %v2562
        %v2718 = vunpack.c.l.b16 %v2566
        %v2719 = vunpack.c.l.b16 %v2569
        %v2720 = vunpack.c.l.b16 %v2573
        %v2721 = vunpack.c.l.b16 %v2576
        %v2722 = vunpack.c.l.b16 %v2580
        %v2723 = vunpack.c.l.b16 %v2583
        %v2724 = vunpack.c.l.b16 %v2587
        %v2725 = vunpack.c.l.b16 %v2590
        %v2726 = vunpack.c.l.b16 %v2594
        %v2727 = vunpack.c.l.b16 %v2597
        %v2728 = vunpack.c.l.b16 %v2601
        %v2729 = vunpack.c.l.b16 %v2604
        %v2730 = vunpack.c.l.b16 %v2608
        %v2731 = vunpack.c.l.b16 %v2611
        %v2732 = vunpack.c.l.b16 %v2615
        %v2733 = vunpack.c.l.b16 %v2618
        %v2734 = vunpack.c.l.b16 %v2622
        %v2735 = vunpack.c.l.b16 %v2625
        %v2736 = vunpack.c.l.b16 %v2629
        %v2737 = vunpack.c.l.b16 %v2632
        %v2738 = vunpack.c.l.b16 %v2636
        %v2739 = vunpack.c.l.b16 %v2639
        %v2740 = vunpack.c.l.b16 %v2643
        %v2741 = vunpack.c.l.b16 %v2646
        %v2742 = vunpack.c.l.b16 %v2650
        %v2743 = vunpack.c.l.b16 %v2653
        %v2744 = vunpack.c.l.b16 %v2657
        %v2745 = vunpack.c.l.b16 %v2660
        %v2746 = vunpack.c.l.b16 %v2664
        %v2747 = vunpack.c.l.b16 %v2667
        %v2748 = vpack.c.b16 %v2717, %v2716
        %v2749 = vpack.c.b16 %v2719, %v2718
        %v2750 = vpack.c.b16 %v2721, %v2720
        %v2751 = vpack.c.b16 %v2723, %v2722
        %v2752 = vpack.c.b16 %v2725, %v2724
        %v2753 = vpack.c.b16 %v2727, %v2726
        %v2754 = vpack.c.b16 %v2729, %v2728
        %v2755 = vpack.c.b16 %v2731, %v2730
        %v2756 = vpack.c.b16 %v2733, %v2732
        %v2757 = vpack.c.b16 %v2735, %v2734
        %v2758 = vpack.c.b16 %v2737, %v2736
        %v2759 = vpack.c.b16 %v2739, %v2738
        %v2760 = vpack.c.b16 %v2741, %v2740
        %v2761 = vpack.c.b16 %v2743, %v2742
        %v2762 = vpack.c.b16 %v2745, %v2744
        %v2763 = vpack.c.b16 %v2747, %v2746
        %2764 = vrot.lane.b32.xlu0 %v2748, 64
        %v2765 = vpop.permute.xlu0 %2764
        %2766 = vrot.lane.b32.xlu0 %v2749, 64
        %v2767 = vpop.permute.xlu0 %2766
        %2768 = vrot.lane.b32.xlu0 %v2750, 64
        %v2769 = vpop.permute.xlu0 %2768
        %2770 = vrot.lane.b32.xlu0 %v2751, 64
        %v2771 = vpop.permute.xlu0 %2770
        %2772 = vrot.lane.b32.xlu0 %v2752, 64
        %v2773 = vpop.permute.xlu0 %2772
        %2774 = vrot.lane.b32.xlu0 %v2753, 64
        %v2775 = vpop.permute.xlu0 %2774
        %2776 = vrot.lane.b32.xlu0 %v2754, 64
        %v2777 = vpop.permute.xlu0 %2776
        %2778 = vrot.lane.b32.xlu0 %v2755, 64
        %v2779 = vpop.permute.xlu0 %2778
        %2780 = vrot.lane.b32.xlu0 %v2756, 64
        %v2781 = vpop.permute.xlu0 %2780
        %2782 = vrot.lane.b32.xlu0 %v2757, 64
        %v2783 = vpop.permute.xlu0 %2782
        %2784 = vrot.lane.b32.xlu0 %v2758, 64
        %v2785 = vpop.permute.xlu0 %2784
        %2786 = vrot.lane.b32.xlu0 %v2759, 64
        %v2787 = vpop.permute.xlu0 %2786
        %2788 = vrot.lane.b32.xlu0 %v2760, 64
        %v2789 = vpop.permute.xlu0 %2788
        %2790 = vrot.lane.b32.xlu0 %v2761, 64
        %v2791 = vpop.permute.xlu0 %2790
        %2792 = vrot.lane.b32.xlu0 %v2762, 64
        %v2793 = vpop.permute.xlu0 %2792
        %2794 = vrot.lane.b32.xlu0 %v2763, 64
        %v2795 = vpop.permute.xlu0 %2794
        %v2798 = vsel %vm1271, %v2700, %v2765
        %v2801 = vsel %vm1271, %v2701, %v2767
        %v2804 = vsel %vm1271, %v2702, %v2769
        %v2807 = vsel %vm1271, %v2703, %v2771
        %v2810 = vsel %vm1271, %v2704, %v2773
        %v2813 = vsel %vm1271, %v2705, %v2775
        %v2816 = vsel %vm1271, %v2706, %v2777
        %v2819 = vsel %vm1271, %v2707, %v2779
        %v2822 = vsel %vm1271, %v2708, %v2781
        %v2825 = vsel %vm1271, %v2709, %v2783
        %v2828 = vsel %vm1271, %v2710, %v2785
        %v2831 = vsel %vm1271, %v2711, %v2787
        %v2834 = vsel %vm1271, %v2712, %v2789
        %v2837 = vsel %vm1271, %v2713, %v2791
        %v2840 = vsel %vm1271, %v2714, %v2793
        %v2843 = vsel %vm1271, %v2715, %v2795
        %v2860 = vunpack.c.l.b16 %v2798
        %v2861 = vunpack.c.h.b16 %v2798
        %v2862 = vunpack.c.l.b16 %v2801
        %v2863 = vunpack.c.h.b16 %v2801
        %v2864 = vunpack.c.l.b16 %v2804
        %v2865 = vunpack.c.h.b16 %v2804
        %v2866 = vunpack.c.l.b16 %v2807
        %v2867 = vunpack.c.h.b16 %v2807
        %v2868 = vunpack.c.l.b16 %v2810
        %v2869 = vunpack.c.h.b16 %v2810
        %v2870 = vunpack.c.l.b16 %v2813
        %v2871 = vunpack.c.h.b16 %v2813
        %v2872 = vunpack.c.l.b16 %v2816
        %v2873 = vunpack.c.h.b16 %v2816
        %v2874 = vunpack.c.l.b16 %v2819
        %v2875 = vunpack.c.h.b16 %v2819
        %v2876 = vunpack.c.l.b16 %v2822
        %v2877 = vunpack.c.h.b16 %v2822
        %v2878 = vunpack.c.l.b16 %v2825
        %v2879 = vunpack.c.h.b16 %v2825
        %v2880 = vunpack.c.l.b16 %v2828
        %v2881 = vunpack.c.h.b16 %v2828
        %v2882 = vunpack.c.l.b16 %v2831
        %v2883 = vunpack.c.h.b16 %v2831
        %v2884 = vunpack.c.l.b16 %v2834
        %v2885 = vunpack.c.h.b16 %v2834
        %v2886 = vunpack.c.l.b16 %v2837
        %v2887 = vunpack.c.h.b16 %v2837
        %v2888 = vunpack.c.l.b16 %v2840
        %v2889 = vunpack.c.h.b16 %v2840
        %v2890 = vunpack.c.l.b16 %v2843
        %v2891 = vunpack.c.h.b16 %v2843
        %v2892 = vpack.c.b16 %v2860, %v2860
        %v2893 = vpack.c.b16 %v2861, %v2861
        %v2894 = vpack.c.b16 %v2862, %v2862
        %v2895 = vpack.c.b16 %v2863, %v2863
        %v2896 = vpack.c.b16 %v2864, %v2864
        %v2897 = vpack.c.b16 %v2865, %v2865
        %v2898 = vpack.c.b16 %v2866, %v2866
        %v2899 = vpack.c.b16 %v2867, %v2867
        %v2900 = vpack.c.b16 %v2868, %v2868
        %v2901 = vpack.c.b16 %v2869, %v2869
        %v2902 = vpack.c.b16 %v2870, %v2870
        %v2903 = vpack.c.b16 %v2871, %v2871
        %v2904 = vpack.c.b16 %v2872, %v2872
        %v2905 = vpack.c.b16 %v2873, %v2873
        %v2906 = vpack.c.b16 %v2874, %v2874
        %v2907 = vpack.c.b16 %v2875, %v2875
        %v2908 = vpack.c.b16 %v2876, %v2876
        %v2909 = vpack.c.b16 %v2877, %v2877
        %v2910 = vpack.c.b16 %v2878, %v2878
        %v2911 = vpack.c.b16 %v2879, %v2879
        %v2912 = vpack.c.b16 %v2880, %v2880
        %v2913 = vpack.c.b16 %v2881, %v2881
        %v2914 = vpack.c.b16 %v2882, %v2882
        %v2915 = vpack.c.b16 %v2883, %v2883
        %v2916 = vpack.c.b16 %v2884, %v2884
        %v2917 = vpack.c.b16 %v2885, %v2885
        %v2918 = vpack.c.b16 %v2886, %v2886
        %v2919 = vpack.c.b16 %v2887, %v2887
        %v2920 = vpack.c.b16 %v2888, %v2888
        %v2921 = vpack.c.b16 %v2889, %v2889
        %v2922 = vpack.c.b16 %v2890, %v2890
        %v2923 = vpack.c.b16 %v2891, %v2891
        %2956 = vst [vmem:[#allocation3 + $0x8] sm:$0xf] %v2892
        %2957 = vst [vmem:[#allocation3 + $0x1c] sm:$0xf] %v2893
        %2958 = vst [vmem:[#allocation3 + $0x30] sm:$0xf] %v2894
        %2959 = vst [vmem:[#allocation3 + $0x44] sm:$0xf] %v2895
        %2960 = vst [vmem:[#allocation3 + $0x58] sm:$0xf] %v2896
        %2961 = vst [vmem:[#allocation3 + $0x6c] sm:$0xf] %v2897
        %2962 = vst [vmem:[#allocation3 + $0x80] sm:$0xf] %v2898
        %2963 = vst [vmem:[#allocation3 + $0x94] sm:$0xf] %v2899
        %2964 = vst [vmem:[#allocation3 + $0xa8] sm:$0xf] %v2900
        %2965 = vst [vmem:[#allocation3 + $0xbc] sm:$0xf] %v2901
        %2966 = vst [vmem:[#allocation3 + $0xd0] sm:$0xf] %v2902
        %2967 = vst [vmem:[#allocation3 + $0xe4] sm:$0xf] %v2903
        %2968 = vst [vmem:[#allocation3 + $0xf8] sm:$0xf] %v2904
        %2969 = vst [vmem:[#allocation3 + $0x10c] sm:$0xf] %v2905
        %2970 = vst [vmem:[#allocation3 + $0x120] sm:$0xf] %v2906
        %2971 = vst [vmem:[#allocation3 + $0x134] sm:$0xf] %v2907
        %2972 = vst [vmem:[#allocation3 + $0x148] sm:$0xf] %v2908
        %2973 = vst [vmem:[#allocation3 + $0x15c] sm:$0xf] %v2909
        %2974 = vst [vmem:[#allocation3 + $0x170] sm:$0xf] %v2910
        %2975 = vst [vmem:[#allocation3 + $0x184] sm:$0xf] %v2911
        %2976 = vst [vmem:[#allocation3 + $0x198] sm:$0xf] %v2912
        %2977 = vst [vmem:[#allocation3 + $0x1ac] sm:$0xf] %v2913
        %2978 = vst [vmem:[#allocation3 + $0x1c0] sm:$0xf] %v2914
        %2979 = vst [vmem:[#allocation3 + $0x1d4] sm:$0xf] %v2915
        %2980 = vst [vmem:[#allocation3 + $0x1e8] sm:$0xf] %v2916
        %2981 = vst [vmem:[#allocation3 + $0x1fc] sm:$0xf] %v2917
        %2982 = vst [vmem:[#allocation3 + $0x210] sm:$0xf] %v2918
        %2983 = vst [vmem:[#allocation3 + $0x224] sm:$0xf] %v2919
        %2984 = vst [vmem:[#allocation3 + $0x238] sm:$0xf] %v2920
        %2985 = vst [vmem:[#allocation3 + $0x24c] sm:$0xf] %v2921
        %2986 = vst [vmem:[#allocation3 + $0x260] sm:$0xf] %v2922
        %2987 = vst [vmem:[#allocation3 + $0x274] sm:$0xf] %v2923
        %s2988 = scalar_lea.vmem [#allocation2], 24
        %v2989 = vld [vmem:[%s2988] sm:$0xf]
        %v2990 = vld [vmem:[%s2988 + $0x4] sm:$0xf]
        %v2991 = vld [vmem:[%s2988 + $0xc] sm:$0xf]
        %v2992 = vld [vmem:[%s2988 + $0x10] sm:$0xf]
        %v2993 = vld [vmem:[%s2988 + $0x18] sm:$0xf]
        %v2994 = vld [vmem:[%s2988 + $0x1c] sm:$0xf]
        %v2995 = vld [vmem:[%s2988 + $0x24] sm:$0xf]
        %v2996 = vld [vmem:[%s2988 + $0x28] sm:$0xf]
        %v2997 = vld [vmem:[%s2988 + $0x30] sm:$0xf]
        %v2998 = vld [vmem:[%s2988 + $0x34] sm:$0xf]
        %v2999 = vld [vmem:[%s2988 + $0x3c] sm:$0xf]
        %v3000 = vld [vmem:[%s2988 + $0x40] sm:$0xf]
        %v3001 = vld [vmem:[%s2988 + $0x48] sm:$0xf]
        %v3002 = vld [vmem:[%s2988 + $0x4c] sm:$0xf]
        %v3003 = vld [vmem:[%s2988 + $0x54] sm:$0xf]
        %v3004 = vld [vmem:[%s2988 + $0x58] sm:$0xf]
        %v3005 = vld [vmem:[%s2988 + $0x60] sm:$0xf]
        %v3006 = vld [vmem:[%s2988 + $0x64] sm:$0xf]
        %v3007 = vld [vmem:[%s2988 + $0x6c] sm:$0xf]
        %v3008 = vld [vmem:[%s2988 + $0x70] sm:$0xf]
        %v3009 = vld [vmem:[%s2988 + $0x78] sm:$0xf]
        %v3010 = vld [vmem:[%s2988 + $0x7c] sm:$0xf]
        %v3011 = vld [vmem:[%s2988 + $0x84] sm:$0xf]
        %v3012 = vld [vmem:[%s2988 + $0x88] sm:$0xf]
        %v3013 = vld [vmem:[%s2988 + $0x90] sm:$0xf]
        %v3014 = vld [vmem:[%s2988 + $0x94] sm:$0xf]
        %v3015 = vld [vmem:[%s2988 + $0x9c] sm:$0xf]
        %v3016 = vld [vmem:[%s2988 + $0xa0] sm:$0xf]
        %v3017 = vld [vmem:[%s2988 + $0xa8] sm:$0xf]
        %v3018 = vld [vmem:[%s2988 + $0xac] sm:$0xf]
        %v3019 = vld [vmem:[%s2988 + $0xb4] sm:$0xf]
        %v3020 = vld [vmem:[%s2988 + $0xb8] sm:$0xf]
        %v3021 = vld [vmem:[%s2988 + $0x8] sm:$0x1]
        %v3022 = vld [vmem:[%s2988 + $0x14] sm:$0x1]
        %v3023 = vld [vmem:[%s2988 + $0x20] sm:$0x1]
        %v3024 = vld [vmem:[%s2988 + $0x2c] sm:$0x1]
        %v3025 = vld [vmem:[%s2988 + $0x38] sm:$0x1]
        %v3026 = vld [vmem:[%s2988 + $0x44] sm:$0x1]
        %v3027 = vld [vmem:[%s2988 + $0x50] sm:$0x1]
        %v3028 = vld [vmem:[%s2988 + $0x5c] sm:$0x1]
        %v3029 = vld [vmem:[%s2988 + $0x68] sm:$0x1]
        %v3030 = vld [vmem:[%s2988 + $0x74] sm:$0x1]
        %v3031 = vld [vmem:[%s2988 + $0x80] sm:$0x1]
        %v3032 = vld [vmem:[%s2988 + $0x8c] sm:$0x1]
        %v3033 = vld [vmem:[%s2988 + $0x98] sm:$0x1]
        %v3034 = vld [vmem:[%s2988 + $0xa4] sm:$0x1]
        %v3035 = vld [vmem:[%s2988 + $0xb0] sm:$0x1]
        %v3036 = vld [vmem:[%s2988 + $0xbc] sm:$0x1]
        %v3038 = vshrl.u32 %v2989, 16
        %v3040 = vrot.slane %v3038, 4
        %v3041 = vshll.u32 %v2989, 16
        %v3043 = vrot.slane %v3041, 5
        %v3044 = vor.u32 %v3040, %v3043
        %v3045 = vrot.slane %v3044, 4
        %v3047 = vshll.u32 %v2990, 16
        %v3049 = vrot.slane %v3047, 5
        %v3050 = vsel %vm726, %v3045, %v3049
        %v3051 = vshrl.u32 %v2990, 16
        %v3053 = vrot.slane %v3051, 4
        %v3054 = vor.u32 %v3053, %v3049
        %v3055 = vrot.slane %v3054, 4
        %v3057 = vshll.u32 %v3021, 16
        %v3059 = vrot.slane %v3057, 5
        %v3060 = vsel %vm726, %v3055, %v3059
        %v3062 = vshrl.u32 %v2991, 16
        %v3064 = vrot.slane %v3062, 4
        %v3065 = vshll.u32 %v2991, 16
        %v3067 = vrot.slane %v3065, 5
        %v3068 = vor.u32 %v3064, %v3067
        %v3069 = vrot.slane %v3068, 4
        %v3071 = vshll.u32 %v2992, 16
        %v3073 = vrot.slane %v3071, 5
        %v3074 = vsel %vm726, %v3069, %v3073
        %v3075 = vshrl.u32 %v2992, 16
        %v3077 = vrot.slane %v3075, 4
        %v3078 = vor.u32 %v3077, %v3073
        %v3079 = vrot.slane %v3078, 4
        %v3081 = vshll.u32 %v3022, 16
        %v3083 = vrot.slane %v3081, 5
        %v3084 = vsel %vm726, %v3079, %v3083
        %v3086 = vshrl.u32 %v2993, 16
        %v3088 = vrot.slane %v3086, 4
        %v3089 = vshll.u32 %v2993, 16
        %v3091 = vrot.slane %v3089, 5
        %v3092 = vor.u32 %v3088, %v3091
        %v3093 = vrot.slane %v3092, 4
        %v3095 = vshll.u32 %v2994, 16
        %v3097 = vrot.slane %v3095, 5
        %v3098 = vsel %vm726, %v3093, %v3097
        %v3099 = vshrl.u32 %v2994, 16
        %v3101 = vrot.slane %v3099, 4
        %v3102 = vor.u32 %v3101, %v3097
        %v3103 = vrot.slane %v3102, 4
        %v3105 = vshll.u32 %v3023, 16
        %v3107 = vrot.slane %v3105, 5
        %v3108 = vsel %vm726, %v3103, %v3107
        %v3110 = vshrl.u32 %v2995, 16
        %v3112 = vrot.slane %v3110, 4
        %v3113 = vshll.u32 %v2995, 16
        %v3115 = vrot.slane %v3113, 5
        %v3116 = vor.u32 %v3112, %v3115
        %v3117 = vrot.slane %v3116, 4
        %v3119 = vshll.u32 %v2996, 16
        %v3121 = vrot.slane %v3119, 5
        %v3122 = vsel %vm726, %v3117, %v3121
        %v3123 = vshrl.u32 %v2996, 16
        %v3125 = vrot.slane %v3123, 4
        %v3126 = vor.u32 %v3125, %v3121
        %v3127 = vrot.slane %v3126, 4
        %v3129 = vshll.u32 %v3024, 16
        %v3131 = vrot.slane %v3129, 5
        %v3132 = vsel %vm726, %v3127, %v3131
        %v3134 = vshrl.u32 %v2997, 16
        %v3136 = vrot.slane %v3134, 4
        %v3137 = vshll.u32 %v2997, 16
        %v3139 = vrot.slane %v3137, 5
        %v3140 = vor.u32 %v3136, %v3139
        %v3141 = vrot.slane %v3140, 4
        %v3143 = vshll.u32 %v2998, 16
        %v3145 = vrot.slane %v3143, 5
        %v3146 = vsel %vm726, %v3141, %v3145
        %v3147 = vshrl.u32 %v2998, 16
        %v3149 = vrot.slane %v3147, 4
        %v3150 = vor.u32 %v3149, %v3145
        %v3151 = vrot.slane %v3150, 4
        %v3153 = vshll.u32 %v3025, 16
        %v3155 = vrot.slane %v3153, 5
        %v3156 = vsel %vm726, %v3151, %v3155
        %v3158 = vshrl.u32 %v2999, 16
        %v3160 = vrot.slane %v3158, 4
        %v3161 = vshll.u32 %v2999, 16
        %v3163 = vrot.slane %v3161, 5
        %v3164 = vor.u32 %v3160, %v3163
        %v3165 = vrot.slane %v3164, 4
        %v3167 = vshll.u32 %v3000, 16
        %v3169 = vrot.slane %v3167, 5
        %v3170 = vsel %vm726, %v3165, %v3169
        %v3171 = vshrl.u32 %v3000, 16
        %v3173 = vrot.slane %v3171, 4
        %v3174 = vor.u32 %v3173, %v3169
        %v3175 = vrot.slane %v3174, 4
        %v3177 = vshll.u32 %v3026, 16
        %v3179 = vrot.slane %v3177, 5
        %v3180 = vsel %vm726, %v3175, %v3179
        %v3182 = vshrl.u32 %v3001, 16
        %v3184 = vrot.slane %v3182, 4
        %v3185 = vshll.u32 %v3001, 16
        %v3187 = vrot.slane %v3185, 5
        %v3188 = vor.u32 %v3184, %v3187
        %v3189 = vrot.slane %v3188, 4
        %v3191 = vshll.u32 %v3002, 16
        %v3193 = vrot.slane %v3191, 5
        %v3194 = vsel %vm726, %v3189, %v3193
        %v3195 = vshrl.u32 %v3002, 16
        %v3197 = vrot.slane %v3195, 4
        %v3198 = vor.u32 %v3197, %v3193
        %v3199 = vrot.slane %v3198, 4
        %v3201 = vshll.u32 %v3027, 16
        %v3203 = vrot.slane %v3201, 5
        %v3204 = vsel %vm726, %v3199, %v3203
        %v3206 = vshrl.u32 %v3003, 16
        %v3208 = vrot.slane %v3206, 4
        %v3209 = vshll.u32 %v3003, 16
        %v3211 = vrot.slane %v3209, 5
        %v3212 = vor.u32 %v3208, %v3211
        %v3213 = vrot.slane %v3212, 4
        %v3215 = vshll.u32 %v3004, 16
        %v3217 = vrot.slane %v3215, 5
        %v3218 = vsel %vm726, %v3213, %v3217
        %v3219 = vshrl.u32 %v3004, 16
        %v3221 = vrot.slane %v3219, 4
        %v3222 = vor.u32 %v3221, %v3217
        %v3223 = vrot.slane %v3222, 4
        %v3225 = vshll.u32 %v3028, 16
        %v3227 = vrot.slane %v3225, 5
        %v3228 = vsel %vm726, %v3223, %v3227
        %v3230 = vshrl.u32 %v3005, 16
        %v3232 = vrot.slane %v3230, 4
        %v3233 = vshll.u32 %v3005, 16
        %v3235 = vrot.slane %v3233, 5
        %v3236 = vor.u32 %v3232, %v3235
        %v3237 = vrot.slane %v3236, 4
        %v3239 = vshll.u32 %v3006, 16
        %v3241 = vrot.slane %v3239, 5
        %v3242 = vsel %vm726, %v3237, %v3241
        %v3243 = vshrl.u32 %v3006, 16
        %v3245 = vrot.slane %v3243, 4
        %v3246 = vor.u32 %v3245, %v3241
        %v3247 = vrot.slane %v3246, 4
        %v3249 = vshll.u32 %v3029, 16
        %v3251 = vrot.slane %v3249, 5
        %v3252 = vsel %vm726, %v3247, %v3251
        %v3254 = vshrl.u32 %v3007, 16
        %v3256 = vrot.slane %v3254, 4
        %v3257 = vshll.u32 %v3007, 16
        %v3259 = vrot.slane %v3257, 5
        %v3260 = vor.u32 %v3256, %v3259
        %v3261 = vrot.slane %v3260, 4
        %v3263 = vshll.u32 %v3008, 16
        %v3265 = vrot.slane %v3263, 5
        %v3266 = vsel %vm726, %v3261, %v3265
        %v3267 = vshrl.u32 %v3008, 16
        %v3269 = vrot.slane %v3267, 4
        %v3270 = vor.u32 %v3269, %v3265
        %v3271 = vrot.slane %v3270, 4
        %v3273 = vshll.u32 %v3030, 16
        %v3275 = vrot.slane %v3273, 5
        %v3276 = vsel %vm726, %v3271, %v3275
        %v3278 = vshrl.u32 %v3009, 16
        %v3280 = vrot.slane %v3278, 4
        %v3281 = vshll.u32 %v3009, 16
        %v3283 = vrot.slane %v3281, 5
        %v3284 = vor.u32 %v3280, %v3283
        %v3285 = vrot.slane %v3284, 4
        %v3287 = vshll.u32 %v3010, 16
        %v3289 = vrot.slane %v3287, 5
        %v3290 = vsel %vm726, %v3285, %v3289
        %v3291 = vshrl.u32 %v3010, 16
        %v3293 = vrot.slane %v3291, 4
        %v3294 = vor.u32 %v3293, %v3289
        %v3295 = vrot.slane %v3294, 4
        %v3297 = vshll.u32 %v3031, 16
        %v3299 = vrot.slane %v3297, 5
        %v3300 = vsel %vm726, %v3295, %v3299
        %v3302 = vshrl.u32 %v3011, 16
        %v3304 = vrot.slane %v3302, 4
        %v3305 = vshll.u32 %v3011, 16
        %v3307 = vrot.slane %v3305, 5
        %v3308 = vor.u32 %v3304, %v3307
        %v3309 = vrot.slane %v3308, 4
        %v3311 = vshll.u32 %v3012, 16
        %v3313 = vrot.slane %v3311, 5
        %v3314 = vsel %vm726, %v3309, %v3313
        %v3315 = vshrl.u32 %v3012, 16
        %v3317 = vrot.slane %v3315, 4
        %v3318 = vor.u32 %v3317, %v3313
        %v3319 = vrot.slane %v3318, 4
        %v3321 = vshll.u32 %v3032, 16
        %v3323 = vrot.slane %v3321, 5
        %v3324 = vsel %vm726, %v3319, %v3323
        %v3326 = vshrl.u32 %v3013, 16
        %v3328 = vrot.slane %v3326, 4
        %v3329 = vshll.u32 %v3013, 16
        %v3331 = vrot.slane %v3329, 5
        %v3332 = vor.u32 %v3328, %v3331
        %v3333 = vrot.slane %v3332, 4
        %v3335 = vshll.u32 %v3014, 16
        %v3337 = vrot.slane %v3335, 5
        %v3338 = vsel %vm726, %v3333, %v3337
        %v3339 = vshrl.u32 %v3014, 16
        %v3341 = vrot.slane %v3339, 4
        %v3342 = vor.u32 %v3341, %v3337
        %v3343 = vrot.slane %v3342, 4
        %v3345 = vshll.u32 %v3033, 16
        %v3347 = vrot.slane %v3345, 5
        %v3348 = vsel %vm726, %v3343, %v3347
        %v3350 = vshrl.u32 %v3015, 16
        %v3352 = vrot.slane %v3350, 4
        %v3353 = vshll.u32 %v3015, 16
        %v3355 = vrot.slane %v3353, 5
        %v3356 = vor.u32 %v3352, %v3355
        %v3357 = vrot.slane %v3356, 4
        %v3359 = vshll.u32 %v3016, 16
        %v3361 = vrot.slane %v3359, 5
        %v3362 = vsel %vm726, %v3357, %v3361
        %v3363 = vshrl.u32 %v3016, 16
        %v3365 = vrot.slane %v3363, 4
        %v3366 = vor.u32 %v3365, %v3361
        %v3367 = vrot.slane %v3366, 4
        %v3369 = vshll.u32 %v3034, 16
        %v3371 = vrot.slane %v3369, 5
        %v3372 = vsel %vm726, %v3367, %v3371
        %v3374 = vshrl.u32 %v3017, 16
        %v3376 = vrot.slane %v3374, 4
        %v3377 = vshll.u32 %v3017, 16
        %v3379 = vrot.slane %v3377, 5
        %v3380 = vor.u32 %v3376, %v3379
        %v3381 = vrot.slane %v3380, 4
        %v3383 = vshll.u32 %v3018, 16
        %v3385 = vrot.slane %v3383, 5
        %v3386 = vsel %vm726, %v3381, %v3385
        %v3387 = vshrl.u32 %v3018, 16
        %v3389 = vrot.slane %v3387, 4
        %v3390 = vor.u32 %v3389, %v3385
        %v3391 = vrot.slane %v3390, 4
        %v3393 = vshll.u32 %v3035, 16
        %v3395 = vrot.slane %v3393, 5
        %v3396 = vsel %vm726, %v3391, %v3395
        %v3398 = vshrl.u32 %v3019, 16
        %v3400 = vrot.slane %v3398, 4
        %v3401 = vshll.u32 %v3019, 16
        %v3403 = vrot.slane %v3401, 5
        %v3404 = vor.u32 %v3400, %v3403
        %v3405 = vrot.slane %v3404, 4
        %v3407 = vshll.u32 %v3020, 16
        %v3409 = vrot.slane %v3407, 5
        %v3410 = vsel %vm726, %v3405, %v3409
        %v3411 = vshrl.u32 %v3020, 16
        %v3413 = vrot.slane %v3411, 4
        %v3414 = vor.u32 %v3413, %v3409
        %v3415 = vrot.slane %v3414, 4
        %v3417 = vshll.u32 %v3036, 16
        %v3419 = vrot.slane %v3417, 5
        %v3420 = vsel %vm726, %v3415, %v3419
        %v3453 = vunpack.c.l.b16 %v2989
        %v3454 = vunpack.c.l.b16 %v2990
        %v3455 = vunpack.c.l.b16 %v2991
        %v3456 = vunpack.c.l.b16 %v2992
        %v3457 = vunpack.c.l.b16 %v2993
        %v3458 = vunpack.c.l.b16 %v2994
        %v3459 = vunpack.c.l.b16 %v2995
        %v3460 = vunpack.c.l.b16 %v2996
        %v3461 = vunpack.c.l.b16 %v2997
        %v3462 = vunpack.c.l.b16 %v2998
        %v3463 = vunpack.c.l.b16 %v2999
        %v3464 = vunpack.c.l.b16 %v3000
        %v3465 = vunpack.c.l.b16 %v3001
        %v3466 = vunpack.c.l.b16 %v3002
        %v3467 = vunpack.c.l.b16 %v3003
        %v3468 = vunpack.c.l.b16 %v3004
        %v3469 = vunpack.c.l.b16 %v3005
        %v3470 = vunpack.c.l.b16 %v3006
        %v3471 = vunpack.c.l.b16 %v3007
        %v3472 = vunpack.c.l.b16 %v3008
        %v3473 = vunpack.c.l.b16 %v3009
        %v3474 = vunpack.c.l.b16 %v3010
        %v3475 = vunpack.c.l.b16 %v3011
        %v3476 = vunpack.c.l.b16 %v3012
        %v3477 = vunpack.c.l.b16 %v3013
        %v3478 = vunpack.c.l.b16 %v3014
        %v3479 = vunpack.c.l.b16 %v3015
        %v3480 = vunpack.c.l.b16 %v3016
        %v3481 = vunpack.c.l.b16 %v3017
        %v3482 = vunpack.c.l.b16 %v3018
        %v3483 = vunpack.c.l.b16 %v3019
        %v3484 = vunpack.c.l.b16 %v3020
        %v3485 = vpack.c.b16 %v3454, %v3453
        %v3486 = vpack.c.b16 %v3456, %v3455
        %v3487 = vpack.c.b16 %v3458, %v3457
        %v3488 = vpack.c.b16 %v3460, %v3459
        %v3489 = vpack.c.b16 %v3462, %v3461
        %v3490 = vpack.c.b16 %v3464, %v3463
        %v3491 = vpack.c.b16 %v3466, %v3465
        %v3492 = vpack.c.b16 %v3468, %v3467
        %v3493 = vpack.c.b16 %v3470, %v3469
        %v3494 = vpack.c.b16 %v3472, %v3471
        %v3495 = vpack.c.b16 %v3474, %v3473
        %v3496 = vpack.c.b16 %v3476, %v3475
        %v3497 = vpack.c.b16 %v3478, %v3477
        %v3498 = vpack.c.b16 %v3480, %v3479
        %v3499 = vpack.c.b16 %v3482, %v3481
        %v3500 = vpack.c.b16 %v3484, %v3483
        %v3501 = vunpack.c.l.b16 %v3050
        %v3502 = vunpack.c.l.b16 %v3060
        %v3503 = vunpack.c.l.b16 %v3074
        %v3504 = vunpack.c.l.b16 %v3084
        %v3505 = vunpack.c.l.b16 %v3098
        %v3506 = vunpack.c.l.b16 %v3108
        %v3507 = vunpack.c.l.b16 %v3122
        %v3508 = vunpack.c.l.b16 %v3132
        %v3509 = vunpack.c.l.b16 %v3146
        %v3510 = vunpack.c.l.b16 %v3156
        %v3511 = vunpack.c.l.b16 %v3170
        %v3512 = vunpack.c.l.b16 %v3180
        %v3513 = vunpack.c.l.b16 %v3194
        %v3514 = vunpack.c.l.b16 %v3204
        %v3515 = vunpack.c.l.b16 %v3218
        %v3516 = vunpack.c.l.b16 %v3228
        %v3517 = vunpack.c.l.b16 %v3242
        %v3518 = vunpack.c.l.b16 %v3252
        %v3519 = vunpack.c.l.b16 %v3266
        %v3520 = vunpack.c.l.b16 %v3276
        %v3521 = vunpack.c.l.b16 %v3290
        %v3522 = vunpack.c.l.b16 %v3300
        %v3523 = vunpack.c.l.b16 %v3314
        %v3524 = vunpack.c.l.b16 %v3324
        %v3525 = vunpack.c.l.b16 %v3338
        %v3526 = vunpack.c.l.b16 %v3348
        %v3527 = vunpack.c.l.b16 %v3362
        %v3528 = vunpack.c.l.b16 %v3372
        %v3529 = vunpack.c.l.b16 %v3386
        %v3530 = vunpack.c.l.b16 %v3396
        %v3531 = vunpack.c.l.b16 %v3410
        %v3532 = vunpack.c.l.b16 %v3420
        %v3533 = vpack.c.b16 %v3502, %v3501
        %v3534 = vpack.c.b16 %v3504, %v3503
        %v3535 = vpack.c.b16 %v3506, %v3505
        %v3536 = vpack.c.b16 %v3508, %v3507
        %v3537 = vpack.c.b16 %v3510, %v3509
        %v3538 = vpack.c.b16 %v3512, %v3511
        %v3539 = vpack.c.b16 %v3514, %v3513
        %v3540 = vpack.c.b16 %v3516, %v3515
        %v3541 = vpack.c.b16 %v3518, %v3517
        %v3542 = vpack.c.b16 %v3520, %v3519
        %v3543 = vpack.c.b16 %v3522, %v3521
        %v3544 = vpack.c.b16 %v3524, %v3523
        %v3545 = vpack.c.b16 %v3526, %v3525
        %v3546 = vpack.c.b16 %v3528, %v3527
        %v3547 = vpack.c.b16 %v3530, %v3529
        %v3548 = vpack.c.b16 %v3532, %v3531
        %3549 = vrot.lane.b32.xlu0 %v3533, 64
        %v3550 = vpop.permute.xlu0 %3549
        %3551 = vrot.lane.b32.xlu0 %v3534, 64
        %v3552 = vpop.permute.xlu0 %3551
        %3553 = vrot.lane.b32.xlu0 %v3535, 64
        %v3554 = vpop.permute.xlu0 %3553
        %3555 = vrot.lane.b32.xlu0 %v3536, 64
        %v3556 = vpop.permute.xlu0 %3555
        %3557 = vrot.lane.b32.xlu0 %v3537, 64
        %v3558 = vpop.permute.xlu0 %3557
        %3559 = vrot.lane.b32.xlu0 %v3538, 64
        %v3560 = vpop.permute.xlu0 %3559
        %3561 = vrot.lane.b32.xlu0 %v3539, 64
        %v3562 = vpop.permute.xlu0 %3561
        %3563 = vrot.lane.b32.xlu0 %v3540, 64
        %v3564 = vpop.permute.xlu0 %3563
        %3565 = vrot.lane.b32.xlu0 %v3541, 64
        %v3566 = vpop.permute.xlu0 %3565
        %3567 = vrot.lane.b32.xlu0 %v3542, 64
        %v3568 = vpop.permute.xlu0 %3567
        %3569 = vrot.lane.b32.xlu0 %v3543, 64
        %v3570 = vpop.permute.xlu0 %3569
        %3571 = vrot.lane.b32.xlu0 %v3544, 64
        %v3572 = vpop.permute.xlu0 %3571
        %3573 = vrot.lane.b32.xlu0 %v3545, 64
        %v3574 = vpop.permute.xlu0 %3573
        %3575 = vrot.lane.b32.xlu0 %v3546, 64
        %v3576 = vpop.permute.xlu0 %3575
        %3577 = vrot.lane.b32.xlu0 %v3547, 64
        %v3578 = vpop.permute.xlu0 %3577
        %3579 = vrot.lane.b32.xlu0 %v3548, 64
        %v3580 = vpop.permute.xlu0 %3579
        %v3583 = vsel %vm1271, %v3485, %v3550
        %v3586 = vsel %vm1271, %v3486, %v3552
        %v3589 = vsel %vm1271, %v3487, %v3554
        %v3592 = vsel %vm1271, %v3488, %v3556
        %v3595 = vsel %vm1271, %v3489, %v3558
        %v3598 = vsel %vm1271, %v3490, %v3560
        %v3601 = vsel %vm1271, %v3491, %v3562
        %v3604 = vsel %vm1271, %v3492, %v3564
        %v3607 = vsel %vm1271, %v3493, %v3566
        %v3610 = vsel %vm1271, %v3494, %v3568
        %v3613 = vsel %vm1271, %v3495, %v3570
        %v3616 = vsel %vm1271, %v3496, %v3572
        %v3619 = vsel %vm1271, %v3497, %v3574
        %v3622 = vsel %vm1271, %v3498, %v3576
        %v3625 = vsel %vm1271, %v3499, %v3578
        %v3628 = vsel %vm1271, %v3500, %v3580
        %v3645 = vunpack.c.l.b16 %v3583
        %v3646 = vunpack.c.h.b16 %v3583
        %v3647 = vunpack.c.l.b16 %v3586
        %v3648 = vunpack.c.h.b16 %v3586
        %v3649 = vunpack.c.l.b16 %v3589
        %v3650 = vunpack.c.h.b16 %v3589
        %v3651 = vunpack.c.l.b16 %v3592
        %v3652 = vunpack.c.h.b16 %v3592
        %v3653 = vunpack.c.l.b16 %v3595
        %v3654 = vunpack.c.h.b16 %v3595
        %v3655 = vunpack.c.l.b16 %v3598
        %v3656 = vunpack.c.h.b16 %v3598
        %v3657 = vunpack.c.l.b16 %v3601
        %v3658 = vunpack.c.h.b16 %v3601
        %v3659 = vunpack.c.l.b16 %v3604
        %v3660 = vunpack.c.h.b16 %v3604
        %v3661 = vunpack.c.l.b16 %v3607
        %v3662 = vunpack.c.h.b16 %v3607
        %v3663 = vunpack.c.l.b16 %v3610
        %v3664 = vunpack.c.h.b16 %v3610
        %v3665 = vunpack.c.l.b16 %v3613
        %v3666 = vunpack.c.h.b16 %v3613
        %v3667 = vunpack.c.l.b16 %v3616
        %v3668 = vunpack.c.h.b16 %v3616
        %v3669 = vunpack.c.l.b16 %v3619
        %v3670 = vunpack.c.h.b16 %v3619
        %v3671 = vunpack.c.l.b16 %v3622
        %v3672 = vunpack.c.h.b16 %v3622
        %v3673 = vunpack.c.l.b16 %v3625
        %v3674 = vunpack.c.h.b16 %v3625
        %v3675 = vunpack.c.l.b16 %v3628
        %v3676 = vunpack.c.h.b16 %v3628
        %v3677 = vpack.c.b16 %v3645, %v3645
        %v3678 = vpack.c.b16 %v3646, %v3646
        %v3679 = vpack.c.b16 %v3647, %v3647
        %v3680 = vpack.c.b16 %v3648, %v3648
        %v3681 = vpack.c.b16 %v3649, %v3649
        %v3682 = vpack.c.b16 %v3650, %v3650
        %v3683 = vpack.c.b16 %v3651, %v3651
        %v3684 = vpack.c.b16 %v3652, %v3652
        %v3685 = vpack.c.b16 %v3653, %v3653
        %v3686 = vpack.c.b16 %v3654, %v3654
        %v3687 = vpack.c.b16 %v3655, %v3655
        %v3688 = vpack.c.b16 %v3656, %v3656
        %v3689 = vpack.c.b16 %v3657, %v3657
        %v3690 = vpack.c.b16 %v3658, %v3658
        %v3691 = vpack.c.b16 %v3659, %v3659
        %v3692 = vpack.c.b16 %v3660, %v3660
        %v3693 = vpack.c.b16 %v3661, %v3661
        %v3694 = vpack.c.b16 %v3662, %v3662
        %v3695 = vpack.c.b16 %v3663, %v3663
        %v3696 = vpack.c.b16 %v3664, %v3664
        %v3697 = vpack.c.b16 %v3665, %v3665
        %v3698 = vpack.c.b16 %v3666, %v3666
        %v3699 = vpack.c.b16 %v3667, %v3667
        %v3700 = vpack.c.b16 %v3668, %v3668
        %v3701 = vpack.c.b16 %v3669, %v3669
        %v3702 = vpack.c.b16 %v3670, %v3670
        %v3703 = vpack.c.b16 %v3671, %v3671
        %v3704 = vpack.c.b16 %v3672, %v3672
        %v3705 = vpack.c.b16 %v3673, %v3673
        %v3706 = vpack.c.b16 %v3674, %v3674
        %v3707 = vpack.c.b16 %v3675, %v3675
        %v3708 = vpack.c.b16 %v3676, %v3676
        %3741 = vst [vmem:[#allocation3 + $0xc] sm:$0xf] %v3677
        %3742 = vst [vmem:[#allocation3 + $0x20] sm:$0xf] %v3678
        %3743 = vst [vmem:[#allocation3 + $0x34] sm:$0xf] %v3679
        %3744 = vst [vmem:[#allocation3 + $0x48] sm:$0xf] %v3680
        %3745 = vst [vmem:[#allocation3 + $0x5c] sm:$0xf] %v3681
        %3746 = vst [vmem:[#allocation3 + $0x70] sm:$0xf] %v3682
        %3747 = vst [vmem:[#allocation3 + $0x84] sm:$0xf] %v3683
        %3748 = vst [vmem:[#allocation3 + $0x98] sm:$0xf] %v3684
        %3749 = vst [vmem:[#allocation3 + $0xac] sm:$0xf] %v3685
        %3750 = vst [vmem:[#allocation3 + $0xc0] sm:$0xf] %v3686
        %3751 = vst [vmem:[#allocation3 + $0xd4] sm:$0xf] %v3687
        %3752 = vst [vmem:[#allocation3 + $0xe8] sm:$0xf] %v3688
        %3753 = vst [vmem:[#allocation3 + $0xfc] sm:$0xf] %v3689
        %3754 = vst [vmem:[#allocation3 + $0x110] sm:$0xf] %v3690
        %3755 = vst [vmem:[#allocation3 + $0x124] sm:$0xf] %v3691
        %3756 = vst [vmem:[#allocation3 + $0x138] sm:$0xf] %v3692
        %3757 = vst [vmem:[#allocation3 + $0x14c] sm:$0xf] %v3693
        %3758 = vst [vmem:[#allocation3 + $0x160] sm:$0xf] %v3694
        %3759 = vst [vmem:[#allocation3 + $0x174] sm:$0xf] %v3695
        %3760 = vst [vmem:[#allocation3 + $0x188] sm:$0xf] %v3696
        %3761 = vst [vmem:[#allocation3 + $0x19c] sm:$0xf] %v3697
        %3762 = vst [vmem:[#allocation3 + $0x1b0] sm:$0xf] %v3698
        %3763 = vst [vmem:[#allocation3 + $0x1c4] sm:$0xf] %v3699
        %3764 = vst [vmem:[#allocation3 + $0x1d8] sm:$0xf] %v3700
        %3765 = vst [vmem:[#allocation3 + $0x1ec] sm:$0xf] %v3701
        %3766 = vst [vmem:[#allocation3 + $0x200] sm:$0xf] %v3702
        %3767 = vst [vmem:[#allocation3 + $0x214] sm:$0xf] %v3703
        %3768 = vst [vmem:[#allocation3 + $0x228] sm:$0xf] %v3704
        %3769 = vst [vmem:[#allocation3 + $0x23c] sm:$0xf] %v3705
        %3770 = vst [vmem:[#allocation3 + $0x250] sm:$0xf] %v3706
        %3771 = vst [vmem:[#allocation3 + $0x264] sm:$0xf] %v3707
        %3772 = vst [vmem:[#allocation3 + $0x278] sm:$0xf] %v3708
        %v3773 = vld [vmem:[%s2988] sm:$0xe]
        %v3774 = vld [vmem:[%s2988 + $0x4] sm:$0xf]
        %v3775 = vld [vmem:[%s2988 + $0x8] sm:$0x1]
        %v3776 = vld [vmem:[%s2988 + $0xc] sm:$0xe]
        %v3777 = vld [vmem:[%s2988 + $0x10] sm:$0xf]
        %v3778 = vld [vmem:[%s2988 + $0x14] sm:$0x1]
        %v3779 = vld [vmem:[%s2988 + $0x18] sm:$0xe]
        %v3780 = vld [vmem:[%s2988 + $0x1c] sm:$0xf]
        %v3781 = vld [vmem:[%s2988 + $0x20] sm:$0x1]
        %v3782 = vld [vmem:[%s2988 + $0x24] sm:$0xe]
        %v3783 = vld [vmem:[%s2988 + $0x28] sm:$0xf]
        %v3784 = vld [vmem:[%s2988 + $0x2c] sm:$0x1]
        %v3785 = vld [vmem:[%s2988 + $0x30] sm:$0xe]
        %v3786 = vld [vmem:[%s2988 + $0x34] sm:$0xf]
        %v3787 = vld [vmem:[%s2988 + $0x38] sm:$0x1]
        %v3788 = vld [vmem:[%s2988 + $0x3c] sm:$0xe]
        %v3789 = vld [vmem:[%s2988 + $0x40] sm:$0xf]
        %v3790 = vld [vmem:[%s2988 + $0x44] sm:$0x1]
        %v3791 = vld [vmem:[%s2988 + $0x48] sm:$0xe]
        %v3792 = vld [vmem:[%s2988 + $0x4c] sm:$0xf]
        %v3793 = vld [vmem:[%s2988 + $0x50] sm:$0x1]
        %v3794 = vld [vmem:[%s2988 + $0x54] sm:$0xe]
        %v3795 = vld [vmem:[%s2988 + $0x58] sm:$0xf]
        %v3796 = vld [vmem:[%s2988 + $0x5c] sm:$0x1]
        %v3797 = vld [vmem:[%s2988 + $0x60] sm:$0xe]
        %v3798 = vld [vmem:[%s2988 + $0x64] sm:$0xf]
        %v3799 = vld [vmem:[%s2988 + $0x68] sm:$0x1]
        %v3800 = vld [vmem:[%s2988 + $0x6c] sm:$0xe]
        %v3801 = vld [vmem:[%s2988 + $0x70] sm:$0xf]
        %v3802 = vld [vmem:[%s2988 + $0x74] sm:$0x1]
        %v3803 = vld [vmem:[%s2988 + $0x78] sm:$0xe]
        %v3804 = vld [vmem:[%s2988 + $0x7c] sm:$0xf]
        %v3805 = vld [vmem:[%s2988 + $0x80] sm:$0x1]
        %v3806 = vld [vmem:[%s2988 + $0x84] sm:$0xe]
        %v3807 = vld [vmem:[%s2988 + $0x88] sm:$0xf]
        %v3808 = vld [vmem:[%s2988 + $0x8c] sm:$0x1]
        %v3809 = vld [vmem:[%s2988 + $0x90] sm:$0xe]
        %v3810 = vld [vmem:[%s2988 + $0x94] sm:$0xf]
        %v3811 = vld [vmem:[%s2988 + $0x98] sm:$0x1]
        %v3812 = vld [vmem:[%s2988 + $0x9c] sm:$0xe]
        %v3813 = vld [vmem:[%s2988 + $0xa0] sm:$0xf]
        %v3814 = vld [vmem:[%s2988 + $0xa4] sm:$0x1]
        %v3815 = vld [vmem:[%s2988 + $0xa8] sm:$0xe]
        %v3816 = vld [vmem:[%s2988 + $0xac] sm:$0xf]
        %v3817 = vld [vmem:[%s2988 + $0xb0] sm:$0x1]
        %v3818 = vld [vmem:[%s2988 + $0xb4] sm:$0xe]
        %v3819 = vld [vmem:[%s2988 + $0xb8] sm:$0xf]
        %v3820 = vld [vmem:[%s2988 + $0xbc] sm:$0x1]
        %v3869 = vrot.slane %v3773, 5
        %v3870 = vrot.slane %v3869, 4
        %v3871 = vrot.slane %v3774, 5
        %v3872 = vsel %vm1562, %v3870, %v3871
        %v3873 = vrot.slane %v3871, 4
        %v3874 = vrot.slane %v3775, 5
        %v3875 = vsel %vm1562, %v3873, %v3874
        %v3876 = vrot.slane %v3776, 5
        %v3877 = vrot.slane %v3876, 4
        %v3878 = vrot.slane %v3777, 5
        %v3879 = vsel %vm1562, %v3877, %v3878
        %v3880 = vrot.slane %v3878, 4
        %v3881 = vrot.slane %v3778, 5
        %v3882 = vsel %vm1562, %v3880, %v3881
        %v3883 = vrot.slane %v3779, 5
        %v3884 = vrot.slane %v3883, 4
        %v3885 = vrot.slane %v3780, 5
        %v3886 = vsel %vm1562, %v3884, %v3885
        %v3887 = vrot.slane %v3885, 4
        %v3888 = vrot.slane %v3781, 5
        %v3889 = vsel %vm1562, %v3887, %v3888
        %v3890 = vrot.slane %v3782, 5
        %v3891 = vrot.slane %v3890, 4
        %v3892 = vrot.slane %v3783, 5
        %v3893 = vsel %vm1562, %v3891, %v3892
        %v3894 = vrot.slane %v3892, 4
        %v3895 = vrot.slane %v3784, 5
        %v3896 = vsel %vm1562, %v3894, %v3895
        %v3897 = vrot.slane %v3785, 5
        %v3898 = vrot.slane %v3897, 4
        %v3899 = vrot.slane %v3786, 5
        %v3900 = vsel %vm1562, %v3898, %v3899
        %v3901 = vrot.slane %v3899, 4
        %v3902 = vrot.slane %v3787, 5
        %v3903 = vsel %vm1562, %v3901, %v3902
        %v3904 = vrot.slane %v3788, 5
        %v3905 = vrot.slane %v3904, 4
        %v3906 = vrot.slane %v3789, 5
        %v3907 = vsel %vm1562, %v3905, %v3906
        %v3908 = vrot.slane %v3906, 4
        %v3909 = vrot.slane %v3790, 5
        %v3910 = vsel %vm1562, %v3908, %v3909
        %v3911 = vrot.slane %v3791, 5
        %v3912 = vrot.slane %v3911, 4
        %v3913 = vrot.slane %v3792, 5
        %v3914 = vsel %vm1562, %v3912, %v3913
        %v3915 = vrot.slane %v3913, 4
        %v3916 = vrot.slane %v3793, 5
        %v3917 = vsel %vm1562, %v3915, %v3916
        %v3918 = vrot.slane %v3794, 5
        %v3919 = vrot.slane %v3918, 4
        %v3920 = vrot.slane %v3795, 5
        %v3921 = vsel %vm1562, %v3919, %v3920
        %v3922 = vrot.slane %v3920, 4
        %v3923 = vrot.slane %v3796, 5
        %v3924 = vsel %vm1562, %v3922, %v3923
        %v3925 = vrot.slane %v3797, 5
        %v3926 = vrot.slane %v3925, 4
        %v3927 = vrot.slane %v3798, 5
        %v3928 = vsel %vm1562, %v3926, %v3927
        %v3929 = vrot.slane %v3927, 4
        %v3930 = vrot.slane %v3799, 5
        %v3931 = vsel %vm1562, %v3929, %v3930
        %v3932 = vrot.slane %v3800, 5
        %v3933 = vrot.slane %v3932, 4
        %v3934 = vrot.slane %v3801, 5
        %v3935 = vsel %vm1562, %v3933, %v3934
        %v3936 = vrot.slane %v3934, 4
        %v3937 = vrot.slane %v3802, 5
        %v3938 = vsel %vm1562, %v3936, %v3937
        %v3939 = vrot.slane %v3803, 5
        %v3940 = vrot.slane %v3939, 4
        %v3941 = vrot.slane %v3804, 5
        %v3942 = vsel %vm1562, %v3940, %v3941
        %v3943 = vrot.slane %v3941, 4
        %v3944 = vrot.slane %v3805, 5
        %v3945 = vsel %vm1562, %v3943, %v3944
        %v3946 = vrot.slane %v3806, 5
        %v3947 = vrot.slane %v3946, 4
        %v3948 = vrot.slane %v3807, 5
        %v3949 = vsel %vm1562, %v3947, %v3948
        %v3950 = vrot.slane %v3948, 4
        %v3951 = vrot.slane %v3808, 5
        %v3952 = vsel %vm1562, %v3950, %v3951
        %v3953 = vrot.slane %v3809, 5
        %v3954 = vrot.slane %v3953, 4
        %v3955 = vrot.slane %v3810, 5
        %v3956 = vsel %vm1562, %v3954, %v3955
        %v3957 = vrot.slane %v3955, 4
        %v3958 = vrot.slane %v3811, 5
        %v3959 = vsel %vm1562, %v3957, %v3958
        %v3960 = vrot.slane %v3812, 5
        %v3961 = vrot.slane %v3960, 4
        %v3962 = vrot.slane %v3813, 5
        %v3963 = vsel %vm1562, %v3961, %v3962
        %v3964 = vrot.slane %v3962, 4
        %v3965 = vrot.slane %v3814, 5
        %v3966 = vsel %vm1562, %v3964, %v3965
        %v3967 = vrot.slane %v3815, 5
        %v3968 = vrot.slane %v3967, 4
        %v3969 = vrot.slane %v3816, 5
        %v3970 = vsel %vm1562, %v3968, %v3969
        %v3971 = vrot.slane %v3969, 4
        %v3972 = vrot.slane %v3817, 5
        %v3973 = vsel %vm1562, %v3971, %v3972
        %v3974 = vrot.slane %v3818, 5
        %v3975 = vrot.slane %v3974, 4
        %v3976 = vrot.slane %v3819, 5
        %v3977 = vsel %vm1562, %v3975, %v3976
        %v3978 = vrot.slane %v3976, 4
        %v3979 = vrot.slane %v3820, 5
        %v3980 = vsel %vm1562, %v3978, %v3979
        %v3981 = vunpack.c.l.b16 %v3872
        %v3982 = vunpack.c.l.b16 %v3875
        %v3983 = vunpack.c.l.b16 %v3879
        %v3984 = vunpack.c.l.b16 %v3882
        %v3985 = vunpack.c.l.b16 %v3886
        %v3986 = vunpack.c.l.b16 %v3889
        %v3987 = vunpack.c.l.b16 %v3893
        %v3988 = vunpack.c.l.b16 %v3896
        %v3989 = vunpack.c.l.b16 %v3900
        %v3990 = vunpack.c.l.b16 %v3903
        %v3991 = vunpack.c.l.b16 %v3907
        %v3992 = vunpack.c.l.b16 %v3910
        %v3993 = vunpack.c.l.b16 %v3914
        %v3994 = vunpack.c.l.b16 %v3917
        %v3995 = vunpack.c.l.b16 %v3921
        %v3996 = vunpack.c.l.b16 %v3924
        %v3997 = vunpack.c.l.b16 %v3928
        %v3998 = vunpack.c.l.b16 %v3931
        %v3999 = vunpack.c.l.b16 %v3935
        %v4000 = vunpack.c.l.b16 %v3938
        %v4001 = vunpack.c.l.b16 %v3942
        %v4002 = vunpack.c.l.b16 %v3945
        %v4003 = vunpack.c.l.b16 %v3949
        %v4004 = vunpack.c.l.b16 %v3952
        %v4005 = vunpack.c.l.b16 %v3956
        %v4006 = vunpack.c.l.b16 %v3959
        %v4007 = vunpack.c.l.b16 %v3963
        %v4008 = vunpack.c.l.b16 %v3966
        %v4009 = vunpack.c.l.b16 %v3970
        %v4010 = vunpack.c.l.b16 %v3973
        %v4011 = vunpack.c.l.b16 %v3977
        %v4012 = vunpack.c.l.b16 %v3980
        %v4013 = vpack.c.b16 %v3982, %v3981
        %v4014 = vpack.c.b16 %v3984, %v3983
        %v4015 = vpack.c.b16 %v3986, %v3985
        %v4016 = vpack.c.b16 %v3988, %v3987
        %v4017 = vpack.c.b16 %v3990, %v3989
        %v4018 = vpack.c.b16 %v3992, %v3991
        %v4019 = vpack.c.b16 %v3994, %v3993
        %v4020 = vpack.c.b16 %v3996, %v3995
        %v4021 = vpack.c.b16 %v3998, %v3997
        %v4022 = vpack.c.b16 %v4000, %v3999
        %v4023 = vpack.c.b16 %v4002, %v4001
        %v4024 = vpack.c.b16 %v4004, %v4003
        %v4025 = vpack.c.b16 %v4006, %v4005
        %v4026 = vpack.c.b16 %v4008, %v4007
        %v4027 = vpack.c.b16 %v4010, %v4009
        %v4028 = vpack.c.b16 %v4012, %v4011
        %v4031 = vsel %vm1271, %v4013, 0
        %v4033 = vsel %vm1271, %v4014, 0
        %v4035 = vsel %vm1271, %v4015, 0
        %v4037 = vsel %vm1271, %v4016, 0
        %v4039 = vsel %vm1271, %v4017, 0
        %v4041 = vsel %vm1271, %v4018, 0
        %v4043 = vsel %vm1271, %v4019, 0
        %v4045 = vsel %vm1271, %v4020, 0
        %v4047 = vsel %vm1271, %v4021, 0
        %v4049 = vsel %vm1271, %v4022, 0
        %v4051 = vsel %vm1271, %v4023, 0
        %v4053 = vsel %vm1271, %v4024, 0
        %v4055 = vsel %vm1271, %v4025, 0
        %v4057 = vsel %vm1271, %v4026, 0
        %v4059 = vsel %vm1271, %v4027, 0
        %v4061 = vsel %vm1271, %v4028, 0
        %v4078 = vunpack.c.l.b16 %v4031
        %v4079 = vunpack.c.h.b16 %v4031
        %v4080 = vunpack.c.l.b16 %v4033
        %v4081 = vunpack.c.h.b16 %v4033
        %v4082 = vunpack.c.l.b16 %v4035
        %v4083 = vunpack.c.h.b16 %v4035
        %v4084 = vunpack.c.l.b16 %v4037
        %v4085 = vunpack.c.h.b16 %v4037
        %v4086 = vunpack.c.l.b16 %v4039
        %v4087 = vunpack.c.h.b16 %v4039
        %v4088 = vunpack.c.l.b16 %v4041
        %v4089 = vunpack.c.h.b16 %v4041
        %v4090 = vunpack.c.l.b16 %v4043
        %v4091 = vunpack.c.h.b16 %v4043
        %v4092 = vunpack.c.l.b16 %v4045
        %v4093 = vunpack.c.h.b16 %v4045
        %v4094 = vunpack.c.l.b16 %v4047
        %v4095 = vunpack.c.h.b16 %v4047
        %v4096 = vunpack.c.l.b16 %v4049
        %v4097 = vunpack.c.h.b16 %v4049
        %v4098 = vunpack.c.l.b16 %v4051
        %v4099 = vunpack.c.h.b16 %v4051
        %v4100 = vunpack.c.l.b16 %v4053
        %v4101 = vunpack.c.h.b16 %v4053
        %v4102 = vunpack.c.l.b16 %v4055
        %v4103 = vunpack.c.h.b16 %v4055
        %v4104 = vunpack.c.l.b16 %v4057
        %v4105 = vunpack.c.h.b16 %v4057
        %v4106 = vunpack.c.l.b16 %v4059
        %v4107 = vunpack.c.h.b16 %v4059
        %v4108 = vunpack.c.l.b16 %v4061
        %v4109 = vunpack.c.h.b16 %v4061
        %v4110 = vpack.c.b16 %v4078, %v4078
        %v4111 = vpack.c.b16 %v4079, %v4079
        %v4112 = vpack.c.b16 %v4080, %v4080
        %v4113 = vpack.c.b16 %v4081, %v4081
        %v4114 = vpack.c.b16 %v4082, %v4082
        %v4115 = vpack.c.b16 %v4083, %v4083
        %v4116 = vpack.c.b16 %v4084, %v4084
        %v4117 = vpack.c.b16 %v4085, %v4085
        %v4118 = vpack.c.b16 %v4086, %v4086
        %v4119 = vpack.c.b16 %v4087, %v4087
        %v4120 = vpack.c.b16 %v4088, %v4088
        %v4121 = vpack.c.b16 %v4089, %v4089
        %v4122 = vpack.c.b16 %v4090, %v4090
        %v4123 = vpack.c.b16 %v4091, %v4091
        %v4124 = vpack.c.b16 %v4092, %v4092
        %v4125 = vpack.c.b16 %v4093, %v4093
        %v4126 = vpack.c.b16 %v4094, %v4094
        %v4127 = vpack.c.b16 %v4095, %v4095
        %v4128 = vpack.c.b16 %v4096, %v4096
        %v4129 = vpack.c.b16 %v4097, %v4097
        %v4130 = vpack.c.b16 %v4098, %v4098
        %v4131 = vpack.c.b16 %v4099, %v4099
        %v4132 = vpack.c.b16 %v4100, %v4100
        %v4133 = vpack.c.b16 %v4101, %v4101
        %v4134 = vpack.c.b16 %v4102, %v4102
        %v4135 = vpack.c.b16 %v4103, %v4103
        %v4136 = vpack.c.b16 %v4104, %v4104
        %v4137 = vpack.c.b16 %v4105, %v4105
        %v4138 = vpack.c.b16 %v4106, %v4106
        %v4139 = vpack.c.b16 %v4107, %v4107
        %v4140 = vpack.c.b16 %v4108, %v4108
        %v4141 = vpack.c.b16 %v4109, %v4109
        %4174 = vst [vmem:[#allocation3 + $0x10] sm:$0xf] %v4110
        %4175 = vst [vmem:[#allocation3 + $0x24] sm:$0xf] %v4111
        %4176 = vst [vmem:[#allocation3 + $0x38] sm:$0xf] %v4112
        %4177 = vst [vmem:[#allocation3 + $0x4c] sm:$0xf] %v4113
        %4178 = vst [vmem:[#allocation3 + $0x60] sm:$0xf] %v4114
        %4179 = vst [vmem:[#allocation3 + $0x74] sm:$0xf] %v4115
        %4180 = vst [vmem:[#allocation3 + $0x88] sm:$0xf] %v4116
        %4181 = vst [vmem:[#allocation3 + $0x9c] sm:$0xf] %v4117
        %4182 = vst [vmem:[#allocation3 + $0xb0] sm:$0xf] %v4118
        %4183 = vst [vmem:[#allocation3 + $0xc4] sm:$0xf] %v4119
        %4184 = vst [vmem:[#allocation3 + $0xd8] sm:$0xf] %v4120
        %4185 = vst [vmem:[#allocation3 + $0xec] sm:$0xf] %v4121
        %4186 = vst [vmem:[#allocation3 + $0x100] sm:$0xf] %v4122
        %4187 = vst [vmem:[#allocation3 + $0x114] sm:$0xf] %v4123
        %4188 = vst [vmem:[#allocation3 + $0x128] sm:$0xf] %v4124
        %4189 = vst [vmem:[#allocation3 + $0x13c] sm:$0xf] %v4125
        %4190 = vst [vmem:[#allocation3 + $0x150] sm:$0xf] %v4126
        %4191 = vst [vmem:[#allocation3 + $0x164] sm:$0xf] %v4127
        %4192 = vst [vmem:[#allocation3 + $0x178] sm:$0xf] %v4128
        %4193 = vst [vmem:[#allocation3 + $0x18c] sm:$0xf] %v4129
        %4194 = vst [vmem:[#allocation3 + $0x1a0] sm:$0xf] %v4130
        %4195 = vst [vmem:[#allocation3 + $0x1b4] sm:$0xf] %v4131
        %4196 = vst [vmem:[#allocation3 + $0x1c8] sm:$0xf] %v4132
        %4197 = vst [vmem:[#allocation3 + $0x1dc] sm:$0xf] %v4133
        %4198 = vst [vmem:[#allocation3 + $0x1f0] sm:$0xf] %v4134
        %4199 = vst [vmem:[#allocation3 + $0x204] sm:$0xf] %v4135
        %4200 = vst [vmem:[#allocation3 + $0x218] sm:$0xf] %v4136
        %4201 = vst [vmem:[#allocation3 + $0x22c] sm:$0xf] %v4137
        %4202 = vst [vmem:[#allocation3 + $0x240] sm:$0xf] %v4138
        %4203 = vst [vmem:[#allocation3 + $0x254] sm:$0xf] %v4139
        %4204 = vst [vmem:[#allocation3 + $0x268] sm:$0xf] %v4140
        %4205 = vst [vmem:[#allocation3 + $0x27c] sm:$0xf] %v4141
        %v4206 = vld [vmem:[#allocation3] sm:$0xff]
        %v4207 = vld [vmem:[#allocation3 + $0x8] sm:$0xff]
        %v4208 = vld [vmem:[#allocation3 + $0x10] sm:$0xf]
        %v4209 = vld [vmem:[#allocation3 + $0x14] sm:$0xff]
        %v4210 = vld [vmem:[#allocation3 + $0x1c] sm:$0xff]
        %v4211 = vld [vmem:[#allocation3 + $0x24] sm:$0xf]
        %v4212 = vld [vmem:[#allocation3 + $0x28] sm:$0xff]
        %v4213 = vld [vmem:[#allocation3 + $0x30] sm:$0xff]
        %v4214 = vld [vmem:[#allocation3 + $0x38] sm:$0xf]
        %v4215 = vld [vmem:[#allocation3 + $0x3c] sm:$0xff]
        %v4216 = vld [vmem:[#allocation3 + $0x44] sm:$0xff]
        %v4217 = vld [vmem:[#allocation3 + $0x4c] sm:$0xf]
        %v4218 = vld [vmem:[#allocation3 + $0x50] sm:$0xff]
        %v4219 = vld [vmem:[#allocation3 + $0x58] sm:$0xff]
        %v4220 = vld [vmem:[#allocation3 + $0x60] sm:$0xf]
        %v4221 = vld [vmem:[#allocation3 + $0x64] sm:$0xff]
        %v4222 = vld [vmem:[#allocation3 + $0x6c] sm:$0xff]
        %v4223 = vld [vmem:[#allocation3 + $0x74] sm:$0xf]
        %v4224 = vld [vmem:[#allocation3 + $0x78] sm:$0xff]
        %v4225 = vld [vmem:[#allocation3 + $0x80] sm:$0xff]
        %v4226 = vld [vmem:[#allocation3 + $0x88] sm:$0xf]
        %v4227 = vld [vmem:[#allocation3 + $0x8c] sm:$0xff]
        %v4228 = vld [vmem:[#allocation3 + $0x94] sm:$0xff]
        %v4229 = vld [vmem:[#allocation3 + $0x9c] sm:$0xf]
        %v4230 = vld [vmem:[#allocation3 + $0xa0] sm:$0xff]
        %v4231 = vld [vmem:[#allocation3 + $0xa8] sm:$0xff]
        %v4232 = vld [vmem:[#allocation3 + $0xb0] sm:$0xf]
        %v4233 = vld [vmem:[#allocation3 + $0xb4] sm:$0xff]
        %v4234 = vld [vmem:[#allocation3 + $0xbc] sm:$0xff]
        %v4235 = vld [vmem:[#allocation3 + $0xc4] sm:$0xf]
        %v4236 = vld [vmem:[#allocation3 + $0xc8] sm:$0xff]
        %v4237 = vld [vmem:[#allocation3 + $0xd0] sm:$0xff]
        %v4238 = vld [vmem:[#allocation3 + $0xd8] sm:$0xf]
        %v4239 = vld [vmem:[#allocation3 + $0xdc] sm:$0xff]
        %v4240 = vld [vmem:[#allocation3 + $0xe4] sm:$0xff]
        %v4241 = vld [vmem:[#allocation3 + $0xec] sm:$0xf]
        %v4242 = vld [vmem:[#allocation3 + $0xf0] sm:$0xff]
        %v4243 = vld [vmem:[#allocation3 + $0xf8] sm:$0xff]
        %v4244 = vld [vmem:[#allocation3 + $0x100] sm:$0xf]
        %v4245 = vld [vmem:[#allocation3 + $0x104] sm:$0xff]
        %v4246 = vld [vmem:[#allocation3 + $0x10c] sm:$0xff]
        %v4247 = vld [vmem:[#allocation3 + $0x114] sm:$0xf]
        %v4248 = vld [vmem:[#allocation3 + $0x118] sm:$0xff]
        %v4249 = vld [vmem:[#allocation3 + $0x120] sm:$0xff]
        %v4250 = vld [vmem:[#allocation3 + $0x128] sm:$0xf]
        %v4251 = vld [vmem:[#allocation3 + $0x12c] sm:$0xff]
        %v4252 = vld [vmem:[#allocation3 + $0x134] sm:$0xff]
        %v4253 = vld [vmem:[#allocation3 + $0x13c] sm:$0xf]
        %v4254 = vld [vmem:[#allocation3 + $0x140] sm:$0xff]
        %v4255 = vld [vmem:[#allocation3 + $0x148] sm:$0xff]
        %v4256 = vld [vmem:[#allocation3 + $0x150] sm:$0xf]
        %v4257 = vld [vmem:[#allocation3 + $0x154] sm:$0xff]
        %v4258 = vld [vmem:[#allocation3 + $0x15c] sm:$0xff]
        %v4259 = vld [vmem:[#allocation3 + $0x164] sm:$0xf]
        %v4260 = vld [vmem:[#allocation3 + $0x168] sm:$0xff]
        %v4261 = vld [vmem:[#allocation3 + $0x170] sm:$0xff]
        %v4262 = vld [vmem:[#allocation3 + $0x178] sm:$0xf]
        %v4263 = vld [vmem:[#allocation3 + $0x17c] sm:$0xff]
        %v4264 = vld [vmem:[#allocation3 + $0x184] sm:$0xff]
        %v4265 = vld [vmem:[#allocation3 + $0x18c] sm:$0xf]
        %v4266 = vld [vmem:[#allocation3 + $0x190] sm:$0xff]
        %v4267 = vld [vmem:[#allocation3 + $0x198] sm:$0xff]
        %v4268 = vld [vmem:[#allocation3 + $0x1a0] sm:$0xf]
        %v4269 = vld [vmem:[#allocation3 + $0x1a4] sm:$0xff]
        %v4270 = vld [vmem:[#allocation3 + $0x1ac] sm:$0xff]
        %v4271 = vld [vmem:[#allocation3 + $0x1b4] sm:$0xf]
        %v4272 = vld [vmem:[#allocation3 + $0x1b8] sm:$0xff]
        %v4273 = vld [vmem:[#allocation3 + $0x1c0] sm:$0xff]
        %v4274 = vld [vmem:[#allocation3 + $0x1c8] sm:$0xf]
        %v4275 = vld [vmem:[#allocation3 + $0x1cc] sm:$0xff]
        %v4276 = vld [vmem:[#allocation3 + $0x1d4] sm:$0xff]
        %v4277 = vld [vmem:[#allocation3 + $0x1dc] sm:$0xf]
        %v4278 = vld [vmem:[#allocation3 + $0x1e0] sm:$0xff]
        %v4279 = vld [vmem:[#allocation3 + $0x1e8] sm:$0xff]
        %v4280 = vld [vmem:[#allocation3 + $0x1f0] sm:$0xf]
        %v4281 = vld [vmem:[#allocation3 + $0x1f4] sm:$0xff]
        %v4282 = vld [vmem:[#allocation3 + $0x1fc] sm:$0xff]
        %v4283 = vld [vmem:[#allocation3 + $0x204] sm:$0xf]
        %v4284 = vld [vmem:[#allocation3 + $0x208] sm:$0xff]
        %v4285 = vld [vmem:[#allocation3 + $0x210] sm:$0xff]
        %v4286 = vld [vmem:[#allocation3 + $0x218] sm:$0xf]
        %v4287 = vld [vmem:[#allocation3 + $0x21c] sm:$0xff]
        %v4288 = vld [vmem:[#allocation3 + $0x224] sm:$0xff]
        %v4289 = vld [vmem:[#allocation3 + $0x22c] sm:$0xf]
        %v4290 = vld [vmem:[#allocation3 + $0x230] sm:$0xff]
        %v4291 = vld [vmem:[#allocation3 + $0x238] sm:$0xff]
        %v4292 = vld [vmem:[#allocation3 + $0x240] sm:$0xf]
        %v4293 = vld [vmem:[#allocation3 + $0x244] sm:$0xff]
        %v4294 = vld [vmem:[#allocation3 + $0x24c] sm:$0xff]
        %v4295 = vld [vmem:[#allocation3 + $0x254] sm:$0xf]
        %v4296 = vld [vmem:[#allocation3 + $0x258] sm:$0xff]
        %v4297 = vld [vmem:[#allocation3 + $0x260] sm:$0xff]
        %v4298 = vld [vmem:[#allocation3 + $0x268] sm:$0xf]
        %v4299 = vld [vmem:[#allocation3 + $0x26c] sm:$0xff]
        %v4300 = vld [vmem:[#allocation3 + $0x274] sm:$0xff]
        %v4301 = vld [vmem:[#allocation3 + $0x27c] sm:$0xf]
        %v4302 = vld [vmem:[%s1] sm:$0xf]
        %v4303 = vld [vmem:[%s1 + $0x4] sm:$0xf]
        %v4304 = vld [vmem:[%s1 + $0x8] sm:$0xf]
        %v4305 = vld [vmem:[%s1 + $0xc] sm:$0xf]
        %v4306 = vld [vmem:[%s1 + $0x10] sm:$0xf]
        %v4307 = vld [vmem:[%s1 + $0x14] sm:$0xf]
        %v4308 = vld [vmem:[%s1 + $0x18] sm:$0xf]
        %v4309 = vld [vmem:[%s1 + $0x1c] sm:$0xf]
        %v4310 = vld [vmem:[%s1 + $0x20] sm:$0xf]
        %v4311 = vld [vmem:[%s1 + $0x24] sm:$0xf]
        %v4312 = vld [vmem:[%s1 + $0x28] sm:$0xf]
        %v4313 = vld [vmem:[%s1 + $0x2c] sm:$0xf]
        %v4314 = vld [vmem:[%s1 + $0x30] sm:$0xf]
        %v4315 = vld [vmem:[%s1 + $0x34] sm:$0xf]
        %v4316 = vld [vmem:[%s1 + $0x38] sm:$0xf]
        %v4317 = vld [vmem:[%s1 + $0x3c] sm:$0xf]
        %v4318 = vld [vmem:[%s1 + $0x40] sm:$0xf]
        %v4319 = vld [vmem:[%s1 + $0x44] sm:$0xf]
        %v4320 = vld [vmem:[%s1 + $0x48] sm:$0xf]
        %v4321 = vld [vmem:[%s1 + $0x4c] sm:$0xf]
        %v4322 = vld [vmem:[%s1 + $0x50] sm:$0xf]
        %v4323 = vld [vmem:[%s1 + $0x54] sm:$0xf]
        %v4324 = vld [vmem:[%s1 + $0x58] sm:$0xf]
        %v4325 = vld [vmem:[%s1 + $0x5c] sm:$0xf]
        %v4326 = vld [vmem:[%s1 + $0x60] sm:$0xf]
        %v4327 = vld [vmem:[%s1 + $0x64] sm:$0xf]
        %v4328 = vld [vmem:[%s1 + $0x68] sm:$0xf]
        %v4329 = vld [vmem:[%s1 + $0x6c] sm:$0xf]
        %v4330 = vld [vmem:[%s1 + $0x70] sm:$0xf]
        %v4331 = vld [vmem:[%s1 + $0x74] sm:$0xf]
        %v4332 = vld [vmem:[%s1 + $0x78] sm:$0xf]
        %v4333 = vld [vmem:[%s1 + $0x7c] sm:$0xf]
        %v4334 = vld [vmem:[%s1 + $0x80] sm:$0xf]
        %v4335 = vld [vmem:[%s1 + $0x84] sm:$0xf]
        %v4336 = vld [vmem:[%s1 + $0x88] sm:$0xf]
        %v4337 = vld [vmem:[%s1 + $0x8c] sm:$0xf]
        %v4338 = vld [vmem:[%s1 + $0x90] sm:$0xf]
        %v4339 = vld [vmem:[%s1 + $0x94] sm:$0xf]
        %v4340 = vld [vmem:[%s1 + $0x98] sm:$0xf]
        %v4341 = vld [vmem:[%s1 + $0x9c] sm:$0xf]
        %v4342 = vld [vmem:[%s1 + $0xa0] sm:$0xf]
        %v4343 = vld [vmem:[%s1 + $0xa4] sm:$0xf]
        %v4344 = vld [vmem:[%s1 + $0xa8] sm:$0xf]
        %v4345 = vld [vmem:[%s1 + $0xac] sm:$0xf]
        %v4346 = vld [vmem:[%s1 + $0xb0] sm:$0xf]
        %v4347 = vld [vmem:[%s1 + $0xb4] sm:$0xf]
        %v4348 = vld [vmem:[%s1 + $0xb8] sm:$0xf]
        %v4349 = vld [vmem:[%s1 + $0xbc] sm:$0xf]
        %v4350 = vld [vmem:[%s1 + $0xc0] sm:$0xf]
        %v4351 = vld [vmem:[%s1 + $0xc4] sm:$0xf]
        %v4352 = vld [vmem:[%s1 + $0xc8] sm:$0xf]
        %v4353 = vld [vmem:[%s1 + $0xcc] sm:$0xf]
        %v4354 = vld [vmem:[%s1 + $0xd0] sm:$0xf]
        %v4355 = vld [vmem:[%s1 + $0xd4] sm:$0xf]
        %v4356 = vld [vmem:[%s1 + $0xd8] sm:$0xf]
        %v4357 = vld [vmem:[%s1 + $0xdc] sm:$0xf]
        %v4358 = vld [vmem:[%s1 + $0xe0] sm:$0xf]
        %v4359 = vld [vmem:[%s1 + $0xe4] sm:$0xf]
        %v4360 = vld [vmem:[%s1 + $0xe8] sm:$0xf]
        %v4361 = vld [vmem:[%s1 + $0xec] sm:$0xf]
        %v4362 = vld [vmem:[%s1 + $0xf0] sm:$0xf]
        %v4363 = vld [vmem:[%s1 + $0xf4] sm:$0xf]
        %v4364 = vld [vmem:[%s1 + $0xf8] sm:$0xf]
        %v4365 = vld [vmem:[%s1 + $0xfc] sm:$0xf]
        %v4366 = vld [vmem:[%s1 + $0x100] sm:$0xf]
        %v4367 = vld [vmem:[%s1 + $0x104] sm:$0xf]
        %v4368 = vld [vmem:[%s1 + $0x108] sm:$0xf]
        %v4369 = vld [vmem:[%s1 + $0x10c] sm:$0xf]
        %v4370 = vld [vmem:[%s1 + $0x110] sm:$0xf]
        %v4371 = vld [vmem:[%s1 + $0x114] sm:$0xf]
        %v4372 = vld [vmem:[%s1 + $0x118] sm:$0xf]
        %v4373 = vld [vmem:[%s1 + $0x11c] sm:$0xf]
        %v4374 = vld [vmem:[%s1 + $0x120] sm:$0xf]
        %v4375 = vld [vmem:[%s1 + $0x124] sm:$0xf]
        %v4376 = vld [vmem:[%s1 + $0x128] sm:$0xf]
        %v4377 = vld [vmem:[%s1 + $0x12c] sm:$0xf]
        %v4378 = vld [vmem:[%s1 + $0x130] sm:$0xf]
        %v4379 = vld [vmem:[%s1 + $0x134] sm:$0xf]
        %v4380 = vld [vmem:[%s1 + $0x138] sm:$0xf]
        %v4381 = vld [vmem:[%s1 + $0x13c] sm:$0xf]
        %v4382 = vld [vmem:[%s2] sm:$0x1]
        %v4384 = vlaneseq
        %v4385 = vshrl.u32 %v4384, 7
        %v4386 = vsub.s32 0, %v4385
        %v4387 = vrot.slane %v4382, %v4386
        %v4485 = vunpack.c.l.b16 %v4206
        %v4486 = vunpack.c.h.b16 %v4206
        %v4487 = vunpack.c.l.b16 %v4207
        %v4488 = vunpack.c.h.b16 %v4207
        %v4489 = vunpack.c.l.b16 %v4208
        %v4490 = vunpack.c.l.b16 %v4209
        %v4491 = vunpack.c.h.b16 %v4209
        %v4492 = vunpack.c.l.b16 %v4210
        %v4493 = vunpack.c.h.b16 %v4210
        %v4494 = vunpack.c.l.b16 %v4211
        %v4495 = vunpack.c.l.b16 %v4212
        %v4496 = vunpack.c.h.b16 %v4212
        %v4497 = vunpack.c.l.b16 %v4213
        %v4498 = vunpack.c.h.b16 %v4213
        %v4499 = vunpack.c.l.b16 %v4214
        %v4500 = vunpack.c.l.b16 %v4215
        %v4501 = vunpack.c.h.b16 %v4215
        %v4502 = vunpack.c.l.b16 %v4216
        %v4503 = vunpack.c.h.b16 %v4216
        %v4504 = vunpack.c.l.b16 %v4217
        %v4505 = vunpack.c.l.b16 %v4218
        %v4506 = vunpack.c.h.b16 %v4218
        %v4507 = vunpack.c.l.b16 %v4219
        %v4508 = vunpack.c.h.b16 %v4219
        %v4509 = vunpack.c.l.b16 %v4220
        %v4510 = vunpack.c.l.b16 %v4221
        %v4511 = vunpack.c.h.b16 %v4221
        %v4512 = vunpack.c.l.b16 %v4222
        %v4513 = vunpack.c.h.b16 %v4222
        %v4514 = vunpack.c.l.b16 %v4223
        %v4515 = vunpack.c.l.b16 %v4224
        %v4516 = vunpack.c.h.b16 %v4224
        %v4517 = vunpack.c.l.b16 %v4225
        %v4518 = vunpack.c.h.b16 %v4225
        %v4519 = vunpack.c.l.b16 %v4226
        %v4520 = vunpack.c.l.b16 %v4227
        %v4521 = vunpack.c.h.b16 %v4227
        %v4522 = vunpack.c.l.b16 %v4228
        %v4523 = vunpack.c.h.b16 %v4228
        %v4524 = vunpack.c.l.b16 %v4229
        %v4525 = vunpack.c.l.b16 %v4230
        %v4526 = vunpack.c.h.b16 %v4230
        %v4527 = vunpack.c.l.b16 %v4231
        %v4528 = vunpack.c.h.b16 %v4231
        %v4529 = vunpack.c.l.b16 %v4232
        %v4530 = vunpack.c.l.b16 %v4233
        %v4531 = vunpack.c.h.b16 %v4233
        %v4532 = vunpack.c.l.b16 %v4234
        %v4533 = vunpack.c.h.b16 %v4234
        %v4534 = vunpack.c.l.b16 %v4235
        %v4535 = vunpack.c.l.b16 %v4236
        %v4536 = vunpack.c.h.b16 %v4236
        %v4537 = vunpack.c.l.b16 %v4237
        %v4538 = vunpack.c.h.b16 %v4237
        %v4539 = vunpack.c.l.b16 %v4238
        %v4540 = vunpack.c.l.b16 %v4239
        %v4541 = vunpack.c.h.b16 %v4239
        %v4542 = vunpack.c.l.b16 %v4240
        %v4543 = vunpack.c.h.b16 %v4240
        %v4544 = vunpack.c.l.b16 %v4241
        %v4545 = vunpack.c.l.b16 %v4242
        %v4546 = vunpack.c.h.b16 %v4242
        %v4547 = vunpack.c.l.b16 %v4243
        %v4548 = vunpack.c.h.b16 %v4243
        %v4549 = vunpack.c.l.b16 %v4244
        %v4550 = vunpack.c.l.b16 %v4245
        %v4551 = vunpack.c.h.b16 %v4245
        %v4552 = vunpack.c.l.b16 %v4246
        %v4553 = vunpack.c.h.b16 %v4246
        %v4554 = vunpack.c.l.b16 %v4247
        %v4555 = vunpack.c.l.b16 %v4248
        %v4556 = vunpack.c.h.b16 %v4248
        %v4557 = vunpack.c.l.b16 %v4249
        %v4558 = vunpack.c.h.b16 %v4249
        %v4559 = vunpack.c.l.b16 %v4250
        %v4560 = vunpack.c.l.b16 %v4251
        %v4561 = vunpack.c.h.b16 %v4251
        %v4562 = vunpack.c.l.b16 %v4252
        %v4563 = vunpack.c.h.b16 %v4252
        %v4564 = vunpack.c.l.b16 %v4253
        %v4565 = vunpack.c.l.b16 %v4254
        %v4566 = vunpack.c.h.b16 %v4254
        %v4567 = vunpack.c.l.b16 %v4255
        %v4568 = vunpack.c.h.b16 %v4255
        %v4569 = vunpack.c.l.b16 %v4256
        %v4570 = vunpack.c.l.b16 %v4257
        %v4571 = vunpack.c.h.b16 %v4257
        %v4572 = vunpack.c.l.b16 %v4258
        %v4573 = vunpack.c.h.b16 %v4258
        %v4574 = vunpack.c.l.b16 %v4259
        %v4575 = vunpack.c.l.b16 %v4260
        %v4576 = vunpack.c.h.b16 %v4260
        %v4577 = vunpack.c.l.b16 %v4261
        %v4578 = vunpack.c.h.b16 %v4261
        %v4579 = vunpack.c.l.b16 %v4262
        %v4580 = vunpack.c.l.b16 %v4263
        %v4581 = vunpack.c.h.b16 %v4263
        %v4582 = vunpack.c.l.b16 %v4264
        %v4583 = vunpack.c.h.b16 %v4264
        %v4584 = vunpack.c.l.b16 %v4265
        %v4585 = vunpack.c.l.b16 %v4266
        %v4586 = vunpack.c.h.b16 %v4266
        %v4587 = vunpack.c.l.b16 %v4267
        %v4588 = vunpack.c.h.b16 %v4267
        %v4589 = vunpack.c.l.b16 %v4268
        %v4590 = vunpack.c.l.b16 %v4269
        %v4591 = vunpack.c.h.b16 %v4269
        %v4592 = vunpack.c.l.b16 %v4270
        %v4593 = vunpack.c.h.b16 %v4270
        %v4594 = vunpack.c.l.b16 %v4271
        %v4595 = vunpack.c.l.b16 %v4272
        %v4596 = vunpack.c.h.b16 %v4272
        %v4597 = vunpack.c.l.b16 %v4273
        %v4598 = vunpack.c.h.b16 %v4273
        %v4599 = vunpack.c.l.b16 %v4274
        %v4600 = vunpack.c.l.b16 %v4275
        %v4601 = vunpack.c.h.b16 %v4275
        %v4602 = vunpack.c.l.b16 %v4276
        %v4603 = vunpack.c.h.b16 %v4276
        %v4604 = vunpack.c.l.b16 %v4277
        %v4605 = vunpack.c.l.b16 %v4278
        %v4606 = vunpack.c.h.b16 %v4278
        %v4607 = vunpack.c.l.b16 %v4279
        %v4608 = vunpack.c.h.b16 %v4279
        %v4609 = vunpack.c.l.b16 %v4280
        %v4610 = vunpack.c.l.b16 %v4281
        %v4611 = vunpack.c.h.b16 %v4281
        %v4612 = vunpack.c.l.b16 %v4282
        %v4613 = vunpack.c.h.b16 %v4282
        %v4614 = vunpack.c.l.b16 %v4283
        %v4615 = vunpack.c.l.b16 %v4284
        %v4616 = vunpack.c.h.b16 %v4284
        %v4617 = vunpack.c.l.b16 %v4285
        %v4618 = vunpack.c.h.b16 %v4285
        %v4619 = vunpack.c.l.b16 %v4286
        %v4620 = vunpack.c.l.b16 %v4287
        %v4621 = vunpack.c.h.b16 %v4287
        %v4622 = vunpack.c.l.b16 %v4288
        %v4623 = vunpack.c.h.b16 %v4288
        %v4624 = vunpack.c.l.b16 %v4289
        %v4625 = vunpack.c.l.b16 %v4290
        %v4626 = vunpack.c.h.b16 %v4290
        %v4627 = vunpack.c.l.b16 %v4291
        %v4628 = vunpack.c.h.b16 %v4291
        %v4629 = vunpack.c.l.b16 %v4292
        %v4630 = vunpack.c.l.b16 %v4293
        %v4631 = vunpack.c.h.b16 %v4293
        %v4632 = vunpack.c.l.b16 %v4294
        %v4633 = vunpack.c.h.b16 %v4294
        %v4634 = vunpack.c.l.b16 %v4295
        %v4635 = vunpack.c.l.b16 %v4296
        %v4636 = vunpack.c.h.b16 %v4296
        %v4637 = vunpack.c.l.b16 %v4297
        %v4638 = vunpack.c.h.b16 %v4297
        %v4639 = vunpack.c.l.b16 %v4298
        %v4640 = vunpack.c.l.b16 %v4299
        %v4641 = vunpack.c.h.b16 %v4299
        %v4642 = vunpack.c.l.b16 %v4300
        %v4643 = vunpack.c.h.b16 %v4300
        %v4644 = vunpack.c.l.b16 %v4301
        %v4645 = vpack.c.b16 %v4490, %v4485
        %v4646 = vpack.c.b16 %v4491, %v4486
        %v4647 = vpack.c.b16 %v4492, %v4487
        %v4648 = vpack.c.b16 %v4493, %v4488
        %v4649 = vpack.c.b16 %v4494, %v4489
        %v4650 = vpack.c.b16 %v4500, %v4495
        %v4651 = vpack.c.b16 %v4501, %v4496
        %v4652 = vpack.c.b16 %v4502, %v4497
        %v4653 = vpack.c.b16 %v4503, %v4498
        %v4654 = vpack.c.b16 %v4504, %v4499
        %v4655 = vpack.c.b16 %v4510, %v4505
        %v4656 = vpack.c.b16 %v4511, %v4506
        %v4657 = vpack.c.b16 %v4512, %v4507
        %v4658 = vpack.c.b16 %v4513, %v4508
        %v4659 = vpack.c.b16 %v4514, %v4509
        %v4660 = vpack.c.b16 %v4520, %v4515
        %v4661 = vpack.c.b16 %v4521, %v4516
        %v4662 = vpack.c.b16 %v4522, %v4517
        %v4663 = vpack.c.b16 %v4523, %v4518
        %v4664 = vpack.c.b16 %v4524, %v4519
        %v4665 = vpack.c.b16 %v4530, %v4525
        %v4666 = vpack.c.b16 %v4531, %v4526
        %v4667 = vpack.c.b16 %v4532, %v4527
        %v4668 = vpack.c.b16 %v4533, %v4528
        %v4669 = vpack.c.b16 %v4534, %v4529
        %v4670 = vpack.c.b16 %v4540, %v4535
        %v4671 = vpack.c.b16 %v4541, %v4536
        %v4672 = vpack.c.b16 %v4542, %v4537
        %v4673 = vpack.c.b16 %v4543, %v4538
        %v4674 = vpack.c.b16 %v4544, %v4539
        %v4675 = vpack.c.b16 %v4550, %v4545
        %v4676 = vpack.c.b16 %v4551, %v4546
        %v4677 = vpack.c.b16 %v4552, %v4547
        %v4678 = vpack.c.b16 %v4553, %v4548
        %v4679 = vpack.c.b16 %v4554, %v4549
        %v4680 = vpack.c.b16 %v4560, %v4555
        %v4681 = vpack.c.b16 %v4561, %v4556
        %v4682 = vpack.c.b16 %v4562, %v4557
        %v4683 = vpack.c.b16 %v4563, %v4558
        %v4684 = vpack.c.b16 %v4564, %v4559
        %v4685 = vpack.c.b16 %v4570, %v4565
        %v4686 = vpack.c.b16 %v4571, %v4566
        %v4687 = vpack.c.b16 %v4572, %v4567
        %v4688 = vpack.c.b16 %v4573, %v4568
        %v4689 = vpack.c.b16 %v4574, %v4569
        %v4690 = vpack.c.b16 %v4580, %v4575
        %v4691 = vpack.c.b16 %v4581, %v4576
        %v4692 = vpack.c.b16 %v4582, %v4577
        %v4693 = vpack.c.b16 %v4583, %v4578
        %v4694 = vpack.c.b16 %v4584, %v4579
        %v4695 = vpack.c.b16 %v4590, %v4585
        %v4696 = vpack.c.b16 %v4591, %v4586
        %v4697 = vpack.c.b16 %v4592, %v4587
        %v4698 = vpack.c.b16 %v4593, %v4588
        %v4699 = vpack.c.b16 %v4594, %v4589
        %v4700 = vpack.c.b16 %v4600, %v4595
        %v4701 = vpack.c.b16 %v4601, %v4596
        %v4702 = vpack.c.b16 %v4602, %v4597
        %v4703 = vpack.c.b16 %v4603, %v4598
        %v4704 = vpack.c.b16 %v4604, %v4599
        %v4705 = vpack.c.b16 %v4610, %v4605
        %v4706 = vpack.c.b16 %v4611, %v4606
        %v4707 = vpack.c.b16 %v4612, %v4607
        %v4708 = vpack.c.b16 %v4613, %v4608
        %v4709 = vpack.c.b16 %v4614, %v4609
        %v4710 = vpack.c.b16 %v4620, %v4615
        %v4711 = vpack.c.b16 %v4621, %v4616
        %v4712 = vpack.c.b16 %v4622, %v4617
        %v4713 = vpack.c.b16 %v4623, %v4618
        %v4714 = vpack.c.b16 %v4624, %v4619
        %v4715 = vpack.c.b16 %v4630, %v4625
        %v4716 = vpack.c.b16 %v4631, %v4626
        %v4717 = vpack.c.b16 %v4632, %v4627
        %v4718 = vpack.c.b16 %v4633, %v4628
        %v4719 = vpack.c.b16 %v4634, %v4629
        %v4720 = vpack.c.b16 %v4640, %v4635
        %v4721 = vpack.c.b16 %v4641, %v4636
        %v4722 = vpack.c.b16 %v4642, %v4637
        %v4723 = vpack.c.b16 %v4643, %v4638
        %v4724 = vpack.c.b16 %v4644, %v4639
        %v4885 = vunpack.c.l.b16 %v4302
        %v4886 = vunpack.c.l.b16 %v4303
        %v4887 = vunpack.c.l.b16 %v4304
        %v4888 = vunpack.c.l.b16 %v4305
        %v4889 = vunpack.c.l.b16 %v4306
        %v4890 = vunpack.c.l.b16 %v4307
        %v4891 = vunpack.c.l.b16 %v4308
        %v4892 = vunpack.c.l.b16 %v4309
        %v4893 = vunpack.c.l.b16 %v4310
        %v4894 = vunpack.c.l.b16 %v4311
        %v4895 = vunpack.c.l.b16 %v4312
        %v4896 = vunpack.c.l.b16 %v4313
        %v4897 = vunpack.c.l.b16 %v4314
        %v4898 = vunpack.c.l.b16 %v4315
        %v4899 = vunpack.c.l.b16 %v4316
        %v4900 = vunpack.c.l.b16 %v4317
        %v4901 = vunpack.c.l.b16 %v4318
        %v4902 = vunpack.c.l.b16 %v4319
        %v4903 = vunpack.c.l.b16 %v4320
        %v4904 = vunpack.c.l.b16 %v4321
        %v4905 = vunpack.c.l.b16 %v4322
        %v4906 = vunpack.c.l.b16 %v4323
        %v4907 = vunpack.c.l.b16 %v4324
        %v4908 = vunpack.c.l.b16 %v4325
        %v4909 = vunpack.c.l.b16 %v4326
        %v4910 = vunpack.c.l.b16 %v4327
        %v4911 = vunpack.c.l.b16 %v4328
        %v4912 = vunpack.c.l.b16 %v4329
        %v4913 = vunpack.c.l.b16 %v4330
        %v4914 = vunpack.c.l.b16 %v4331
        %v4915 = vunpack.c.l.b16 %v4332
        %v4916 = vunpack.c.l.b16 %v4333
        %v4917 = vunpack.c.l.b16 %v4334
        %v4918 = vunpack.c.l.b16 %v4335
        %v4919 = vunpack.c.l.b16 %v4336
        %v4920 = vunpack.c.l.b16 %v4337
        %v4921 = vunpack.c.l.b16 %v4338
        %v4922 = vunpack.c.l.b16 %v4339
        %v4923 = vunpack.c.l.b16 %v4340
        %v4924 = vunpack.c.l.b16 %v4341
        %v4925 = vunpack.c.l.b16 %v4342
        %v4926 = vunpack.c.l.b16 %v4343
        %v4927 = vunpack.c.l.b16 %v4344
        %v4928 = vunpack.c.l.b16 %v4345
        %v4929 = vunpack.c.l.b16 %v4346
        %v4930 = vunpack.c.l.b16 %v4347
        %v4931 = vunpack.c.l.b16 %v4348
        %v4932 = vunpack.c.l.b16 %v4349
        %v4933 = vunpack.c.l.b16 %v4350
        %v4934 = vunpack.c.l.b16 %v4351
        %v4935 = vunpack.c.l.b16 %v4352
        %v4936 = vunpack.c.l.b16 %v4353
        %v4937 = vunpack.c.l.b16 %v4354
        %v4938 = vunpack.c.l.b16 %v4355
        %v4939 = vunpack.c.l.b16 %v4356
        %v4940 = vunpack.c.l.b16 %v4357
        %v4941 = vunpack.c.l.b16 %v4358
        %v4942 = vunpack.c.l.b16 %v4359
        %v4943 = vunpack.c.l.b16 %v4360
        %v4944 = vunpack.c.l.b16 %v4361
        %v4945 = vunpack.c.l.b16 %v4362
        %v4946 = vunpack.c.l.b16 %v4363
        %v4947 = vunpack.c.l.b16 %v4364
        %v4948 = vunpack.c.l.b16 %v4365
        %v4949 = vunpack.c.l.b16 %v4366
        %v4950 = vunpack.c.l.b16 %v4367
        %v4951 = vunpack.c.l.b16 %v4368
        %v4952 = vunpack.c.l.b16 %v4369
        %v4953 = vunpack.c.l.b16 %v4370
        %v4954 = vunpack.c.l.b16 %v4371
        %v4955 = vunpack.c.l.b16 %v4372
        %v4956 = vunpack.c.l.b16 %v4373
        %v4957 = vunpack.c.l.b16 %v4374
        %v4958 = vunpack.c.l.b16 %v4375
        %v4959 = vunpack.c.l.b16 %v4376
        %v4960 = vunpack.c.l.b16 %v4377
        %v4961 = vunpack.c.l.b16 %v4378
        %v4962 = vunpack.c.l.b16 %v4379
        %v4963 = vunpack.c.l.b16 %v4380
        %v4964 = vunpack.c.l.b16 %v4381
        %v4965 = vpack.c.b16 %v4886, %v4885
        %v4966 = vpack.c.b16 %v4888, %v4887
        %v4967 = vpack.c.b16 %v4890, %v4889
        %v4968 = vpack.c.b16 %v4892, %v4891
        %v4969 = vpack.c.b16 %v4894, %v4893
        %v4970 = vpack.c.b16 %v4896, %v4895
        %v4971 = vpack.c.b16 %v4898, %v4897
        %v4972 = vpack.c.b16 %v4900, %v4899
        %v4973 = vpack.c.b16 %v4902, %v4901
        %v4974 = vpack.c.b16 %v4904, %v4903
        %v4975 = vpack.c.b16 %v4906, %v4905
        %v4976 = vpack.c.b16 %v4908, %v4907
        %v4977 = vpack.c.b16 %v4910, %v4909
        %v4978 = vpack.c.b16 %v4912, %v4911
        %v4979 = vpack.c.b16 %v4914, %v4913
        %v4980 = vpack.c.b16 %v4916, %v4915
        %v4981 = vpack.c.b16 %v4918, %v4917
        %v4982 = vpack.c.b16 %v4920, %v4919
        %v4983 = vpack.c.b16 %v4922, %v4921
        %v4984 = vpack.c.b16 %v4924, %v4923
        %v4985 = vpack.c.b16 %v4926, %v4925
        %v4986 = vpack.c.b16 %v4928, %v4927
        %v4987 = vpack.c.b16 %v4930, %v4929
        %v4988 = vpack.c.b16 %v4932, %v4931
        %v4989 = vpack.c.b16 %v4934, %v4933
        %v4990 = vpack.c.b16 %v4936, %v4935
        %v4991 = vpack.c.b16 %v4938, %v4937
        %v4992 = vpack.c.b16 %v4940, %v4939
        %v4993 = vpack.c.b16 %v4942, %v4941
        %v4994 = vpack.c.b16 %v4944, %v4943
        %v4995 = vpack.c.b16 %v4946, %v4945
        %v4996 = vpack.c.b16 %v4948, %v4947
        %v4997 = vpack.c.b16 %v4950, %v4949
        %v4998 = vpack.c.b16 %v4952, %v4951
        %v4999 = vpack.c.b16 %v4954, %v4953
        %v5000 = vpack.c.b16 %v4956, %v4955
        %v5001 = vpack.c.b16 %v4958, %v4957
        %v5002 = vpack.c.b16 %v4960, %v4959
        %v5003 = vpack.c.b16 %v4962, %v4961
        %v5004 = vpack.c.b16 %v4964, %v4963
        %5045 = vmatprep.subr.bf16.mxu0 0
        %5046 = vmatpush1.bf16.msra.mxu0 %v4972
        %5047 = vmatprep.subr.bf16.mxu0 0
        %5048 = vmatpush1.bf16.msra.mxu0 %v4971
        %5049 = vmatprep.subr.bf16.mxu0 0
        %5050 = vmatpush1.bf16.msra.mxu0 %v4970
        %5051 = vmatprep.subr.bf16.mxu0 0
        %5052 = vmatpush1.bf16.msra.mxu0 %v4969
        %5053 = vmatprep.subr.bf16.mxu0 0
        %5054 = vmatpush1.bf16.msra.mxu0 %v4968
        %5055 = vmatprep.subr.bf16.mxu0 0
        %5056 = vmatpush1.bf16.msra.mxu0 %v4967
        %5057 = vmatprep.subr.bf16.mxu0 0
        %5058 = vmatpush1.bf16.msra.mxu0 %v4966
        %5059 = vmatprep.subr.bf16.mxu0 0
        %5060 = vmatpush1.bf16.msra.mxu0 %v4965
        %5061 = vmatprep.subr.bf16.mxu0 0
        %5062 = vmatpush2.bf16.msra.mxu0 %v4980
        %5063 = vmatprep.subr.bf16.mxu0 0
        %5064 = vmatpush2.bf16.msra.mxu0 %v4979
        %5065 = vmatprep.subr.bf16.mxu0 0
        %5066 = vmatpush2.bf16.msra.mxu0 %v4978
        %5067 = vmatprep.subr.bf16.mxu0 0
        %5068 = vmatpush2.bf16.msra.mxu0 %v4977
        %5069 = vmatprep.subr.bf16.mxu0 0
        %5070 = vmatpush2.bf16.msra.mxu0 %v4976
        %5071 = vmatprep.subr.bf16.mxu0 0
        %5072 = vmatpush2.bf16.msra.mxu0 %v4975
        %5073 = vmatprep.subr.bf16.mxu0 0
        %5074 = vmatpush2.bf16.msra.mxu0 %v4974
        %5075 = vmatprep.subr.bf16.mxu0 0
        %5076 = vmatpush2.bf16.msra.mxu0 %v4973
        %5077 = vmatprep.mubr.bf16.mxu0 %v4646
        %5078 = vmatmul.mubr.bf16.gmra.mxu0 %v4645
        %v5079 = vpop.f32.mrf.mxu0
        %v5080 = vadd.f32 %v4387, %v5079
        %v5081 = vpop.f32.mrf.mxu0
        %v5082 = vpop.f32.mrf.mxu0
        %v5083 = vadd.f32 %v4387, %v5082
        %v5084 = vpop.f32.mrf.mxu0
        %5085 = vmatprep.mubr.bf16.mxu0 %v4651
        %5086 = vmatmul.mubr.bf16.gmra.mxu0 %v4650
        %v5087 = vpop.f32.mrf.mxu0
        %v5088 = vadd.f32 %v4387, %v5087
        %v5089 = vpop.f32.mrf.mxu0
        %v5090 = vpop.f32.mrf.mxu0
        %v5091 = vadd.f32 %v4387, %v5090
        %v5092 = vpop.f32.mrf.mxu0
        %5093 = vmatprep.mubr.bf16.mxu0 %v4656
        %5094 = vmatmul.mubr.bf16.gmra.mxu0 %v4655
        %v5095 = vpop.f32.mrf.mxu0
        %v5096 = vadd.f32 %v4387, %v5095
        %v5097 = vpop.f32.mrf.mxu0
        %v5098 = vpop.f32.mrf.mxu0
        %v5099 = vadd.f32 %v4387, %v5098
        %v5100 = vpop.f32.mrf.mxu0
        %5101 = vmatprep.mubr.bf16.mxu0 %v4661
        %5102 = vmatmul.mubr.bf16.gmra.mxu0 %v4660
        %v5103 = vpop.f32.mrf.mxu0
        %v5104 = vadd.f32 %v4387, %v5103
        %v5105 = vpop.f32.mrf.mxu0
        %v5106 = vpop.f32.mrf.mxu0
        %v5107 = vadd.f32 %v4387, %v5106
        %v5108 = vpop.f32.mrf.mxu0
        %5109 = vmatprep.mubr.bf16.mxu0 %v4666
        %5110 = vmatmul.mubr.bf16.gmra.mxu0 %v4665
        %v5111 = vpop.f32.mrf.mxu0
        %v5112 = vadd.f32 %v4387, %v5111
        %v5113 = vpop.f32.mrf.mxu0
        %v5114 = vpop.f32.mrf.mxu0
        %v5115 = vadd.f32 %v4387, %v5114
        %v5116 = vpop.f32.mrf.mxu0
        %5117 = vmatprep.mubr.bf16.mxu0 %v4671
        %5118 = vmatmul.mubr.bf16.gmra.mxu0 %v4670
        %v5119 = vpop.f32.mrf.mxu0
        %v5120 = vadd.f32 %v4387, %v5119
        %v5121 = vpop.f32.mrf.mxu0
        %v5122 = vpop.f32.mrf.mxu0
        %v5123 = vadd.f32 %v4387, %v5122
        %v5124 = vpop.f32.mrf.mxu0
        %5125 = vmatprep.mubr.bf16.mxu0 %v4676
        %5126 = vmatmul.mubr.bf16.gmra.mxu0 %v4675
        %v5127 = vpop.f32.mrf.mxu0
        %v5128 = vadd.f32 %v4387, %v5127
        %v5129 = vpop.f32.mrf.mxu0
        %v5130 = vpop.f32.mrf.mxu0
        %v5131 = vadd.f32 %v4387, %v5130
        %v5132 = vpop.f32.mrf.mxu0
        %5133 = vmatprep.mubr.bf16.mxu0 %v4681
        %5134 = vmatmul.mubr.bf16.gmra.mxu0 %v4680
        %v5135 = vpop.f32.mrf.mxu0
        %v5136 = vadd.f32 %v4387, %v5135
        %v5137 = vpop.f32.mrf.mxu0
        %v5138 = vpop.f32.mrf.mxu0
        %v5139 = vadd.f32 %v4387, %v5138
        %v5140 = vpop.f32.mrf.mxu0
        %5141 = vmatprep.mubr.bf16.mxu0 %v4686
        %5142 = vmatmul.mubr.bf16.gmra.mxu0 %v4685
        %v5143 = vpop.f32.mrf.mxu0
        %v5144 = vadd.f32 %v4387, %v5143
        %v5145 = vpop.f32.mrf.mxu0
        %v5146 = vpop.f32.mrf.mxu0
        %v5147 = vadd.f32 %v4387, %v5146
        %v5148 = vpop.f32.mrf.mxu0
        %5149 = vmatprep.mubr.bf16.mxu0 %v4691
        %5150 = vmatmul.mubr.bf16.gmra.mxu0 %v4690
        %v5151 = vpop.f32.mrf.mxu0
        %v5152 = vadd.f32 %v4387, %v5151
        %v5153 = vpop.f32.mrf.mxu0
        %v5154 = vpop.f32.mrf.mxu0
        %v5155 = vadd.f32 %v4387, %v5154
        %v5156 = vpop.f32.mrf.mxu0
        %5157 = vmatprep.mubr.bf16.mxu0 %v4696
        %5158 = vmatmul.mubr.bf16.gmra.mxu0 %v4695
        %v5159 = vpop.f32.mrf.mxu0
        %v5160 = vadd.f32 %v4387, %v5159
        %v5161 = vpop.f32.mrf.mxu0
        %v5162 = vpop.f32.mrf.mxu0
        %v5163 = vadd.f32 %v4387, %v5162
        %v5164 = vpop.f32.mrf.mxu0
        %5165 = vmatprep.mubr.bf16.mxu0 %v4701
        %5166 = vmatmul.mubr.bf16.gmra.mxu0 %v4700
        %v5167 = vpop.f32.mrf.mxu0
        %v5168 = vadd.f32 %v4387, %v5167
        %v5169 = vpop.f32.mrf.mxu0
        %v5170 = vpop.f32.mrf.mxu0
        %v5171 = vadd.f32 %v4387, %v5170
        %v5172 = vpop.f32.mrf.mxu0
        %5173 = vmatprep.mubr.bf16.mxu0 %v4706
        %5174 = vmatmul.mubr.bf16.gmra.mxu0 %v4705
        %v5175 = vpop.f32.mrf.mxu0
        %v5176 = vadd.f32 %v4387, %v5175
        %v5177 = vpop.f32.mrf.mxu0
        %v5178 = vpop.f32.mrf.mxu0
        %v5179 = vadd.f32 %v4387, %v5178
        %v5180 = vpop.f32.mrf.mxu0
        %5181 = vmatprep.mubr.bf16.mxu0 %v4711
        %5182 = vmatmul.mubr.bf16.gmra.mxu0 %v4710
        %v5183 = vpop.f32.mrf.mxu0
        %v5184 = vadd.f32 %v4387, %v5183
        %v5185 = vpop.f32.mrf.mxu0
        %v5186 = vpop.f32.mrf.mxu0
        %v5187 = vadd.f32 %v4387, %v5186
        %v5188 = vpop.f32.mrf.mxu0
        %5189 = vmatprep.mubr.bf16.mxu0 %v4716
        %5190 = vmatmul.mubr.bf16.gmra.mxu0 %v4715
        %v5191 = vpop.f32.mrf.mxu0
        %v5192 = vadd.f32 %v4387, %v5191
        %v5193 = vpop.f32.mrf.mxu0
        %v5194 = vpop.f32.mrf.mxu0
        %v5195 = vadd.f32 %v4387, %v5194
        %v5196 = vpop.f32.mrf.mxu0
        %5197 = vmatprep.mubr.bf16.mxu0 %v4721
        %5198 = vmatmul.mubr.bf16.gmra.mxu0 %v4720
        %v5199 = vpop.f32.mrf.mxu0
        %v5200 = vadd.f32 %v4387, %v5199
        %v5201 = vpop.f32.mrf.mxu0
        %v5202 = vpop.f32.mrf.mxu0
        %v5203 = vadd.f32 %v4387, %v5202
        %v5204 = vpop.f32.mrf.mxu0
        %5205 = vdwg.mxu0
        %5206 = vmatprep.subr.bf16.mxu0 0
        %5207 = vmatpush1.bf16.msra.mxu0 %v4988
        %5208 = vmatprep.subr.bf16.mxu0 0
        %5209 = vmatpush1.bf16.msra.mxu0 %v4987
        %5210 = vmatprep.subr.bf16.mxu0 0
        %5211 = vmatpush1.bf16.msra.mxu0 %v4986
        %5212 = vmatprep.subr.bf16.mxu0 0
        %5213 = vmatpush1.bf16.msra.mxu0 %v4985
        %5214 = vmatprep.subr.bf16.mxu0 0
        %5215 = vmatpush1.bf16.msra.mxu0 %v4984
        %5216 = vmatprep.subr.bf16.mxu0 0
        %5217 = vmatpush1.bf16.msra.mxu0 %v4983
        %5218 = vmatprep.subr.bf16.mxu0 0
        %5219 = vmatpush1.bf16.msra.mxu0 %v4982
        %5220 = vmatprep.subr.bf16.mxu0 0
        %5221 = vmatpush1.bf16.msra.mxu0 %v4981
        %5222 = vmatprep.subr.bf16.mxu0 0
        %5223 = vmatpush2.bf16.msra.mxu0 %v4996
        %5224 = vmatprep.subr.bf16.mxu0 0
        %5225 = vmatpush2.bf16.msra.mxu0 %v4995
        %5226 = vmatprep.subr.bf16.mxu0 0
        %5227 = vmatpush2.bf16.msra.mxu0 %v4994
        %5228 = vmatprep.subr.bf16.mxu0 0
        %5229 = vmatpush2.bf16.msra.mxu0 %v4993
        %5230 = vmatprep.subr.bf16.mxu0 0
        %5231 = vmatpush2.bf16.msra.mxu0 %v4992
        %5232 = vmatprep.subr.bf16.mxu0 0
        %5233 = vmatpush2.bf16.msra.mxu0 %v4991
        %5234 = vmatprep.subr.bf16.mxu0 0
        %5235 = vmatpush2.bf16.msra.mxu0 %v4990
        %5236 = vmatprep.subr.bf16.mxu0 0
        %5237 = vmatpush2.bf16.msra.mxu0 %v4989
        %5238 = vmatprep.mubr.bf16.mxu0 %v4648
        %5239 = vmatmul.mubr.bf16.gmra.mxu0 %v4647
        %v5240 = vpop.f32.mrf.mxu0
        %v5241 = vadd.f32 %v5080, %v5240
        %v5242 = vpop.f32.mrf.mxu0
        %v5243 = vpop.f32.mrf.mxu0
        %v5244 = vadd.f32 %v5083, %v5243
        %v5245 = vpop.f32.mrf.mxu0
        %5246 = vmatprep.mubr.bf16.mxu0 %v4653
        %5247 = vmatmul.mubr.bf16.gmra.mxu0 %v4652
        %v5248 = vpop.f32.mrf.mxu0
        %v5249 = vadd.f32 %v5088, %v5248
        %v5250 = vpop.f32.mrf.mxu0
        %v5251 = vpop.f32.mrf.mxu0
        %v5252 = vadd.f32 %v5091, %v5251
        %v5253 = vpop.f32.mrf.mxu0
        %5254 = vmatprep.mubr.bf16.mxu0 %v4658
        %5255 = vmatmul.mubr.bf16.gmra.mxu0 %v4657
        %v5256 = vpop.f32.mrf.mxu0
        %v5257 = vadd.f32 %v5096, %v5256
        %v5258 = vpop.f32.mrf.mxu0
        %v5259 = vpop.f32.mrf.mxu0
        %v5260 = vadd.f32 %v5099, %v5259
        %v5261 = vpop.f32.mrf.mxu0
        %5262 = vmatprep.mubr.bf16.mxu0 %v4663
        %5263 = vmatmul.mubr.bf16.gmra.mxu0 %v4662
        %v5264 = vpop.f32.mrf.mxu0
        %v5265 = vadd.f32 %v5104, %v5264
        %v5266 = vpop.f32.mrf.mxu0
        %v5267 = vpop.f32.mrf.mxu0
        %v5268 = vadd.f32 %v5107, %v5267
        %v5269 = vpop.f32.mrf.mxu0
        %5270 = vmatprep.mubr.bf16.mxu0 %v4668
        %5271 = vmatmul.mubr.bf16.gmra.mxu0 %v4667
        %v5272 = vpop.f32.mrf.mxu0
        %v5273 = vadd.f32 %v5112, %v5272
        %v5274 = vpop.f32.mrf.mxu0
        %v5275 = vpop.f32.mrf.mxu0
        %v5276 = vadd.f32 %v5115, %v5275
        %v5277 = vpop.f32.mrf.mxu0
        %5278 = vmatprep.mubr.bf16.mxu0 %v4673
        %5279 = vmatmul.mubr.bf16.gmra.mxu0 %v4672
        %v5280 = vpop.f32.mrf.mxu0
        %v5281 = vadd.f32 %v5120, %v5280
        %v5282 = vpop.f32.mrf.mxu0
        %v5283 = vpop.f32.mrf.mxu0
        %v5284 = vadd.f32 %v5123, %v5283
        %v5285 = vpop.f32.mrf.mxu0
        %5286 = vmatprep.mubr.bf16.mxu0 %v4678
        %5287 = vmatmul.mubr.bf16.gmra.mxu0 %v4677
        %v5288 = vpop.f32.mrf.mxu0
        %v5289 = vadd.f32 %v5128, %v5288
        %v5290 = vpop.f32.mrf.mxu0
        %v5291 = vpop.f32.mrf.mxu0
        %v5292 = vadd.f32 %v5131, %v5291
        %v5293 = vpop.f32.mrf.mxu0
        %5294 = vmatprep.mubr.bf16.mxu0 %v4683
        %5295 = vmatmul.mubr.bf16.gmra.mxu0 %v4682
        %v5296 = vpop.f32.mrf.mxu0
        %v5297 = vadd.f32 %v5136, %v5296
        %v5298 = vpop.f32.mrf.mxu0
        %v5299 = vpop.f32.mrf.mxu0
        %v5300 = vadd.f32 %v5139, %v5299
        %v5301 = vpop.f32.mrf.mxu0
        %5302 = vmatprep.mubr.bf16.mxu0 %v4688
        %5303 = vmatmul.mubr.bf16.gmra.mxu0 %v4687
        %v5304 = vpop.f32.mrf.mxu0
        %v5305 = vadd.f32 %v5144, %v5304
        %v5306 = vpop.f32.mrf.mxu0
        %v5307 = vpop.f32.mrf.mxu0
        %v5308 = vadd.f32 %v5147, %v5307
        %v5309 = vpop.f32.mrf.mxu0
        %5310 = vmatprep.mubr.bf16.mxu0 %v4693
        %5311 = vmatmul.mubr.bf16.gmra.mxu0 %v4692
        %v5312 = vpop.f32.mrf.mxu0
        %v5313 = vadd.f32 %v5152, %v5312
        %v5314 = vpop.f32.mrf.mxu0
        %v5315 = vpop.f32.mrf.mxu0
        %v5316 = vadd.f32 %v5155, %v5315
        %v5317 = vpop.f32.mrf.mxu0
        %5318 = vmatprep.mubr.bf16.mxu0 %v4698
        %5319 = vmatmul.mubr.bf16.gmra.mxu0 %v4697
        %v5320 = vpop.f32.mrf.mxu0
        %v5321 = vadd.f32 %v5160, %v5320
        %v5322 = vpop.f32.mrf.mxu0
        %v5323 = vpop.f32.mrf.mxu0
        %v5324 = vadd.f32 %v5163, %v5323
        %v5325 = vpop.f32.mrf.mxu0
        %5326 = vmatprep.mubr.bf16.mxu0 %v4703
        %5327 = vmatmul.mubr.bf16.gmra.mxu0 %v4702
        %v5328 = vpop.f32.mrf.mxu0
        %v5329 = vadd.f32 %v5168, %v5328
        %v5330 = vpop.f32.mrf.mxu0
        %v5331 = vpop.f32.mrf.mxu0
        %v5332 = vadd.f32 %v5171, %v5331
        %v5333 = vpop.f32.mrf.mxu0
        %5334 = vmatprep.mubr.bf16.mxu0 %v4708
        %5335 = vmatmul.mubr.bf16.gmra.mxu0 %v4707
        %v5336 = vpop.f32.mrf.mxu0
        %v5337 = vadd.f32 %v5176, %v5336
        %v5338 = vpop.f32.mrf.mxu0
        %v5339 = vpop.f32.mrf.mxu0
        %v5340 = vadd.f32 %v5179, %v5339
        %v5341 = vpop.f32.mrf.mxu0
        %5342 = vmatprep.mubr.bf16.mxu0 %v4713
        %5343 = vmatmul.mubr.bf16.gmra.mxu0 %v4712
        %v5344 = vpop.f32.mrf.mxu0
        %v5345 = vadd.f32 %v5184, %v5344
        %v5346 = vpop.f32.mrf.mxu0
        %v5347 = vpop.f32.mrf.mxu0
        %v5348 = vadd.f32 %v5187, %v5347
        %v5349 = vpop.f32.mrf.mxu0
        %5350 = vmatprep.mubr.bf16.mxu0 %v4718
        %5351 = vmatmul.mubr.bf16.gmra.mxu0 %v4717
        %v5352 = vpop.f32.mrf.mxu0
        %v5353 = vadd.f32 %v5192, %v5352
        %v5354 = vpop.f32.mrf.mxu0
        %v5355 = vpop.f32.mrf.mxu0
        %v5356 = vadd.f32 %v5195, %v5355
        %v5357 = vpop.f32.mrf.mxu0
        %5358 = vmatprep.mubr.bf16.mxu0 %v4723
        %5359 = vmatmul.mubr.bf16.gmra.mxu0 %v4722
        %v5360 = vpop.f32.mrf.mxu0
        %v5361 = vadd.f32 %v5200, %v5360
        %v5362 = vpop.f32.mrf.mxu0
        %v5363 = vpop.f32.mrf.mxu0
        %v5364 = vadd.f32 %v5203, %v5363
        %v5365 = vpop.f32.mrf.mxu0
        %5366 = vdwg.mxu0
        %5367 = vmatprep.subr.bf16.mxu0 0
        %5368 = vmatpush1.bf16.msra.mxu0 %v5004
        %5369 = vmatprep.subr.bf16.mxu0 0
        %5370 = vmatpush1.bf16.msra.mxu0 %v5003
        %5371 = vmatprep.subr.bf16.mxu0 0
        %5372 = vmatpush1.bf16.msra.mxu0 %v5002
        %5373 = vmatprep.subr.bf16.mxu0 0
        %5374 = vmatpush1.bf16.msra.mxu0 %v5001
        %5375 = vmatprep.subr.bf16.mxu0 0
        %5376 = vmatpush1.bf16.msra.mxu0 %v5000
        %5377 = vmatprep.subr.bf16.mxu0 0
        %5378 = vmatpush1.bf16.msra.mxu0 %v4999
        %5379 = vmatprep.subr.bf16.mxu0 0
        %5380 = vmatpush1.bf16.msra.mxu0 %v4998
        %5381 = vmatprep.subr.bf16.mxu0 0
        %5382 = vmatpush1.bf16.msra.mxu0 %v4997
        %5383 = vmatprep.subr.bf16.mxu0 0
        %5384 = vmatpush2.bf16.msra.mxu0 0
        %5385 = vmatprep.subr.bf16.mxu0 0
        %5386 = vmatpush2.bf16.msra.mxu0 0
        %5387 = vmatprep.subr.bf16.mxu0 0
        %5388 = vmatpush2.bf16.msra.mxu0 0
        %5389 = vmatprep.subr.bf16.mxu0 0
        %5390 = vmatpush2.bf16.msra.mxu0 0
        %5391 = vmatprep.subr.bf16.mxu0 0
        %5392 = vmatpush2.bf16.msra.mxu0 0
        %5393 = vmatprep.subr.bf16.mxu0 0
        %5394 = vmatpush2.bf16.msra.mxu0 0
        %5395 = vmatprep.subr.bf16.mxu0 0
        %5396 = vmatpush2.bf16.msra.mxu0 0
        %5397 = vmatprep.subr.bf16.mxu0 0
        %5398 = vmatpush2.bf16.msra.mxu0 0
        %5399 = vmatprep.mubr.bf16.mxu0 0
        %5400 = vmatmul.mubr.bf16.gmra.mxu0 %v4649
        %v5401 = vpop.f32.mrf.mxu0
        %v5402 = vadd.f32 %v5241, %v5401
        %v5403 = vpop.f32.mrf.mxu0
        %v5404 = vpop.f32.mrf.mxu0
        %v5405 = vadd.f32 %v5244, %v5404
        %v5406 = vpop.f32.mrf.mxu0
        %5407 = vmatprep.mubr.bf16.mxu0 0
        %5408 = vmatmul.mubr.bf16.gmra.mxu0 %v4654
        %v5409 = vpop.f32.mrf.mxu0
        %v5410 = vadd.f32 %v5249, %v5409
        %v5411 = vpop.f32.mrf.mxu0
        %v5412 = vpop.f32.mrf.mxu0
        %v5413 = vadd.f32 %v5252, %v5412
        %v5414 = vpop.f32.mrf.mxu0
        %5415 = vmatprep.mubr.bf16.mxu0 0
        %5416 = vmatmul.mubr.bf16.gmra.mxu0 %v4659
        %v5417 = vpop.f32.mrf.mxu0
        %v5418 = vadd.f32 %v5257, %v5417
        %v5419 = vpop.f32.mrf.mxu0
        %v5420 = vpop.f32.mrf.mxu0
        %v5421 = vadd.f32 %v5260, %v5420
        %v5422 = vpop.f32.mrf.mxu0
        %5423 = vmatprep.mubr.bf16.mxu0 0
        %5424 = vmatmul.mubr.bf16.gmra.mxu0 %v4664
        %v5425 = vpop.f32.mrf.mxu0
        %v5426 = vadd.f32 %v5265, %v5425
        %v5427 = vpop.f32.mrf.mxu0
        %v5428 = vpop.f32.mrf.mxu0
        %v5429 = vadd.f32 %v5268, %v5428
        %v5430 = vpop.f32.mrf.mxu0
        %5431 = vmatprep.mubr.bf16.mxu0 0
        %5432 = vmatmul.mubr.bf16.gmra.mxu0 %v4669
        %v5433 = vpop.f32.mrf.mxu0
        %v5434 = vadd.f32 %v5273, %v5433
        %v5435 = vpop.f32.mrf.mxu0
        %v5436 = vpop.f32.mrf.mxu0
        %v5437 = vadd.f32 %v5276, %v5436
        %v5438 = vpop.f32.mrf.mxu0
        %5439 = vmatprep.mubr.bf16.mxu0 0
        %5440 = vmatmul.mubr.bf16.gmra.mxu0 %v4674
        %v5441 = vpop.f32.mrf.mxu0
        %v5442 = vadd.f32 %v5281, %v5441
        %v5443 = vpop.f32.mrf.mxu0
        %v5444 = vpop.f32.mrf.mxu0
        %v5445 = vadd.f32 %v5284, %v5444
        %v5446 = vpop.f32.mrf.mxu0
        %5447 = vmatprep.mubr.bf16.mxu0 0
        %5448 = vmatmul.mubr.bf16.gmra.mxu0 %v4679
        %v5449 = vpop.f32.mrf.mxu0
        %v5450 = vadd.f32 %v5289, %v5449
        %v5451 = vpop.f32.mrf.mxu0
        %v5452 = vpop.f32.mrf.mxu0
        %v5453 = vadd.f32 %v5292, %v5452
        %v5454 = vpop.f32.mrf.mxu0
        %5455 = vmatprep.mubr.bf16.mxu0 0
        %5456 = vmatmul.mubr.bf16.gmra.mxu0 %v4684
        %v5457 = vpop.f32.mrf.mxu0
        %v5458 = vadd.f32 %v5297, %v5457
        %v5459 = vpop.f32.mrf.mxu0
        %v5460 = vpop.f32.mrf.mxu0
        %v5461 = vadd.f32 %v5300, %v5460
        %v5462 = vpop.f32.mrf.mxu0
        %5463 = vmatprep.mubr.bf16.mxu0 0
        %5464 = vmatmul.mubr.bf16.gmra.mxu0 %v4689
        %v5465 = vpop.f32.mrf.mxu0
        %v5466 = vadd.f32 %v5305, %v5465
        %v5467 = vpop.f32.mrf.mxu0
        %v5468 = vpop.f32.mrf.mxu0
        %v5469 = vadd.f32 %v5308, %v5468
        %v5470 = vpop.f32.mrf.mxu0
        %5471 = vmatprep.mubr.bf16.mxu0 0
        %5472 = vmatmul.mubr.bf16.gmra.mxu0 %v4694
        %v5473 = vpop.f32.mrf.mxu0
        %v5474 = vadd.f32 %v5313, %v5473
        %v5475 = vpop.f32.mrf.mxu0
        %v5476 = vpop.f32.mrf.mxu0
        %v5477 = vadd.f32 %v5316, %v5476
        %v5478 = vpop.f32.mrf.mxu0
        %5479 = vmatprep.mubr.bf16.mxu0 0
        %5480 = vmatmul.mubr.bf16.gmra.mxu0 %v4699
        %v5481 = vpop.f32.mrf.mxu0
        %v5482 = vadd.f32 %v5321, %v5481
        %v5483 = vpop.f32.mrf.mxu0
        %v5484 = vpop.f32.mrf.mxu0
        %v5485 = vadd.f32 %v5324, %v5484
        %v5486 = vpop.f32.mrf.mxu0
        %5487 = vmatprep.mubr.bf16.mxu0 0
        %5488 = vmatmul.mubr.bf16.gmra.mxu0 %v4704
        %v5489 = vpop.f32.mrf.mxu0
        %v5490 = vadd.f32 %v5329, %v5489
        %v5491 = vpop.f32.mrf.mxu0
        %v5492 = vpop.f32.mrf.mxu0
        %v5493 = vadd.f32 %v5332, %v5492
        %v5494 = vpop.f32.mrf.mxu0
        %5495 = vmatprep.mubr.bf16.mxu0 0
        %5496 = vmatmul.mubr.bf16.gmra.mxu0 %v4709
        %v5497 = vpop.f32.mrf.mxu0
        %v5498 = vadd.f32 %v5337, %v5497
        %v5499 = vpop.f32.mrf.mxu0
        %v5500 = vpop.f32.mrf.mxu0
        %v5501 = vadd.f32 %v5340, %v5500
        %v5502 = vpop.f32.mrf.mxu0
        %5503 = vmatprep.mubr.bf16.mxu0 0
        %5504 = vmatmul.mubr.bf16.gmra.mxu0 %v4714
        %v5505 = vpop.f32.mrf.mxu0
        %v5506 = vadd.f32 %v5345, %v5505
        %v5507 = vpop.f32.mrf.mxu0
        %v5508 = vpop.f32.mrf.mxu0
        %v5509 = vadd.f32 %v5348, %v5508
        %v5510 = vpop.f32.mrf.mxu0
        %5511 = vmatprep.mubr.bf16.mxu0 0
        %5512 = vmatmul.mubr.bf16.gmra.mxu0 %v4719
        %v5513 = vpop.f32.mrf.mxu0
        %v5514 = vadd.f32 %v5353, %v5513
        %v5515 = vpop.f32.mrf.mxu0
        %v5516 = vpop.f32.mrf.mxu0
        %v5517 = vadd.f32 %v5356, %v5516
        %v5518 = vpop.f32.mrf.mxu0
        %5519 = vmatprep.mubr.bf16.mxu0 0
        %5520 = vmatmul.mubr.bf16.gmra.mxu0 %v4724
        %v5521 = vpop.f32.mrf.mxu0
        %v5522 = vadd.f32 %v5361, %v5521
        %v5523 = vpop.f32.mrf.mxu0
        %v5524 = vpop.f32.mrf.mxu0
        %v5525 = vadd.f32 %v5364, %v5524
        %v5526 = vpop.f32.mrf.mxu0
        %5527 = vdwg.mxu0
        %v5528 = vmax.f32 %v5402, 0.0
        %v5529 = vmax.f32 %v5405, 0.0
        %v5530 = vmax.f32 %v5410, 0.0
        %v5531 = vmax.f32 %v5413, 0.0
        %v5532 = vmax.f32 %v5418, 0.0
        %v5533 = vmax.f32 %v5421, 0.0
        %v5534 = vmax.f32 %v5426, 0.0
        %v5535 = vmax.f32 %v5429, 0.0
        %v5536 = vmax.f32 %v5434, 0.0
        %v5537 = vmax.f32 %v5437, 0.0
        %v5538 = vmax.f32 %v5442, 0.0
        %v5539 = vmax.f32 %v5445, 0.0
        %v5540 = vmax.f32 %v5450, 0.0
        %v5541 = vmax.f32 %v5453, 0.0
        %v5542 = vmax.f32 %v5458, 0.0
        %v5543 = vmax.f32 %v5461, 0.0
        %v5544 = vmax.f32 %v5466, 0.0
        %v5545 = vmax.f32 %v5469, 0.0
        %v5546 = vmax.f32 %v5474, 0.0
        %v5547 = vmax.f32 %v5477, 0.0
        %v5548 = vmax.f32 %v5482, 0.0
        %v5549 = vmax.f32 %v5485, 0.0
        %v5550 = vmax.f32 %v5490, 0.0
        %v5551 = vmax.f32 %v5493, 0.0
        %v5552 = vmax.f32 %v5498, 0.0
        %v5553 = vmax.f32 %v5501, 0.0
        %v5554 = vmax.f32 %v5506, 0.0
        %v5555 = vmax.f32 %v5509, 0.0
        %v5556 = vmax.f32 %v5514, 0.0
        %v5557 = vmax.f32 %v5517, 0.0
        %v5558 = vmax.f32 %v5522, 0.0
        %v5559 = vmax.f32 %v5525, 0.0
        %5560 = vst.msk [vmem:[#allocation4] sm:$0xff] %vm1271, 0.0
        %5561 = vst.msk [vmem:[#allocation4 + $0x8] sm:$0xff] %vm1271, 0.0
        %vm5562 = vcmask 517120
        %5563 = vst.msk [vmem:[#allocation4 + $0x10] sm:$0x3] %vm5562, 0.0
        %s5564 = scalar_lea.vmem [#allocation4], 408
        %5565 = vst.msk [vmem:[%s5564] sm:$0xff] %vm1271, 0.0
        %5566 = vst.msk [vmem:[%s5564 + $0x8] sm:$0xff] %vm1271, 0.0
        %5567 = vst.msk [vmem:[%s5564 + $0x10] sm:$0x3] %vm5562, 0.0
        %5568 = vst.msk [vmem:[#allocation4] sm:$0x1] %vm623, 0.0
        %5569 = vst.msk [vmem:[#allocation4 + $0x18] sm:$0x1] %vm623, 0.0
        %5570 = vst.msk [vmem:[#allocation4 + $0x30] sm:$0x1] %vm623, 0.0
        %5571 = vst.msk [vmem:[#allocation4 + $0x48] sm:$0x1] %vm623, 0.0
        %5572 = vst.msk [vmem:[#allocation4 + $0x60] sm:$0x1] %vm623, 0.0
        %5573 = vst.msk [vmem:[#allocation4 + $0x78] sm:$0x1] %vm623, 0.0
        %5574 = vst.msk [vmem:[#allocation4 + $0x90] sm:$0x1] %vm623, 0.0
        %5575 = vst.msk [vmem:[#allocation4 + $0xa8] sm:$0x1] %vm623, 0.0
        %5576 = vst.msk [vmem:[#allocation4 + $0xc0] sm:$0x1] %vm623, 0.0
        %5577 = vst.msk [vmem:[#allocation4 + $0xd8] sm:$0x1] %vm623, 0.0
        %5578 = vst.msk [vmem:[#allocation4 + $0xf0] sm:$0x1] %vm623, 0.0
        %5579 = vst.msk [vmem:[#allocation4 + $0x108] sm:$0x1] %vm623, 0.0
        %5580 = vst.msk [vmem:[#allocation4 + $0x120] sm:$0x1] %vm623, 0.0
        %5581 = vst.msk [vmem:[#allocation4 + $0x138] sm:$0x1] %vm623, 0.0
        %5582 = vst.msk [vmem:[#allocation4 + $0x150] sm:$0x1] %vm623, 0.0
        %5583 = vst.msk [vmem:[#allocation4 + $0x168] sm:$0x1] %vm623, 0.0
        %5584 = vst.msk [vmem:[#allocation4 + $0x180] sm:$0x1] %vm623, 0.0
        %5585 = vst.msk [vmem:[#allocation4 + $0x198] sm:$0x1] %vm623, 0.0
        %5586 = vst.msk [vmem:[#allocation4 + $0x11] sm:$0x1] %vm623, 0.0
        %5587 = vst.msk [vmem:[#allocation4 + $0x29] sm:$0x1] %vm623, 0.0
        %5588 = vst.msk [vmem:[#allocation4 + $0x41] sm:$0x1] %vm623, 0.0
        %5589 = vst.msk [vmem:[#allocation4 + $0x59] sm:$0x1] %vm623, 0.0
        %5590 = vst.msk [vmem:[#allocation4 + $0x71] sm:$0x1] %vm623, 0.0
        %5591 = vst.msk [vmem:[#allocation4 + $0x89] sm:$0x1] %vm623, 0.0
        %5592 = vst.msk [vmem:[#allocation4 + $0xa1] sm:$0x1] %vm623, 0.0
        %5593 = vst.msk [vmem:[#allocation4 + $0xb9] sm:$0x1] %vm623, 0.0
        %5594 = vst.msk [vmem:[#allocation4 + $0xd1] sm:$0x1] %vm623, 0.0
        %5595 = vst.msk [vmem:[#allocation4 + $0xe9] sm:$0x1] %vm623, 0.0
        %5596 = vst.msk [vmem:[#allocation4 + $0x101] sm:$0x1] %vm623, 0.0
        %5597 = vst.msk [vmem:[#allocation4 + $0x119] sm:$0x1] %vm623, 0.0
        %5598 = vst.msk [vmem:[#allocation4 + $0x131] sm:$0x1] %vm623, 0.0
        %5599 = vst.msk [vmem:[#allocation4 + $0x149] sm:$0x1] %vm623, 0.0
        %5600 = vst.msk [vmem:[#allocation4 + $0x161] sm:$0x1] %vm623, 0.0
        %5601 = vst.msk [vmem:[#allocation4 + $0x179] sm:$0x1] %vm623, 0.0
        %5602 = vst.msk [vmem:[#allocation4 + $0x191] sm:$0x1] %vm623, 0.0
        %5603 = vst.msk [vmem:[#allocation4 + $0x1a9] sm:$0x1] %vm623, 0.0
        %s5604 = scalar_lea.vmem [#allocation4], 24
        %5605 = vst.msk [vmem:[%s5604 + $0x1] sm:$0xff] %vm1271, %v5528
        %5606 = vst.msk [vmem:[%s5604 + $0x9] sm:$0xff] %vm1271, %v5529
        %5607 = vst.msk [vmem:[%s5604 + $0x19] sm:$0xff] %vm1271, %v5530
        %5608 = vst.msk [vmem:[%s5604 + $0x21] sm:$0xff] %vm1271, %v5531
        %5609 = vst.msk [vmem:[%s5604 + $0x31] sm:$0xff] %vm1271, %v5532
        %5610 = vst.msk [vmem:[%s5604 + $0x39] sm:$0xff] %vm1271, %v5533
        %5611 = vst.msk [vmem:[%s5604 + $0x49] sm:$0xff] %vm1271, %v5534
        %5612 = vst.msk [vmem:[%s5604 + $0x51] sm:$0xff] %vm1271, %v5535
        %5613 = vst.msk [vmem:[%s5604 + $0x61] sm:$0xff] %vm1271, %v5536
        %5614 = vst.msk [vmem:[%s5604 + $0x69] sm:$0xff] %vm1271, %v5537
        %5615 = vst.msk [vmem:[%s5604 + $0x79] sm:$0xff] %vm1271, %v5538
        %5616 = vst.msk [vmem:[%s5604 + $0x81] sm:$0xff] %vm1271, %v5539
        %5617 = vst.msk [vmem:[%s5604 + $0x91] sm:$0xff] %vm1271, %v5540
        %5618 = vst.msk [vmem:[%s5604 + $0x99] sm:$0xff] %vm1271, %v5541
        %5619 = vst.msk [vmem:[%s5604 + $0xa9] sm:$0xff] %vm1271, %v5542
        %5620 = vst.msk [vmem:[%s5604 + $0xb1] sm:$0xff] %vm1271, %v5543
        %5621 = vst.msk [vmem:[%s5604 + $0xc1] sm:$0xff] %vm1271, %v5544
        %5622 = vst.msk [vmem:[%s5604 + $0xc9] sm:$0xff] %vm1271, %v5545
        %5623 = vst.msk [vmem:[%s5604 + $0xd9] sm:$0xff] %vm1271, %v5546
        %5624 = vst.msk [vmem:[%s5604 + $0xe1] sm:$0xff] %vm1271, %v5547
        %5625 = vst.msk [vmem:[%s5604 + $0xf1] sm:$0xff] %vm1271, %v5548
        %5626 = vst.msk [vmem:[%s5604 + $0xf9] sm:$0xff] %vm1271, %v5549
        %5627 = vst.msk [vmem:[%s5604 + $0x109] sm:$0xff] %vm1271, %v5550
        %5628 = vst.msk [vmem:[%s5604 + $0x111] sm:$0xff] %vm1271, %v5551
        %5629 = vst.msk [vmem:[%s5604 + $0x121] sm:$0xff] %vm1271, %v5552
        %5630 = vst.msk [vmem:[%s5604 + $0x129] sm:$0xff] %vm1271, %v5553
        %5631 = vst.msk [vmem:[%s5604 + $0x139] sm:$0xff] %vm1271, %v5554
        %5632 = vst.msk [vmem:[%s5604 + $0x141] sm:$0xff] %vm1271, %v5555
        %5633 = vst.msk [vmem:[%s5604 + $0x151] sm:$0xff] %vm1271, %v5556
        %5634 = vst.msk [vmem:[%s5604 + $0x159] sm:$0xff] %vm1271, %v5557
        %5635 = vst.msk [vmem:[%s5604 + $0x169] sm:$0xff] %vm1271, %v5558
        %5636 = vst.msk [vmem:[%s5604 + $0x171] sm:$0xff] %vm1271, %v5559
        %v5637 = vld [vmem:[#allocation4] sm:$0xff]
        %v5638 = vld [vmem:[#allocation4 + $0x8] sm:$0xff]
        %v5639 = vld [vmem:[#allocation4 + $0x18] sm:$0xff]
        %v5640 = vld [vmem:[#allocation4 + $0x20] sm:$0xff]
        %v5641 = vld [vmem:[#allocation4 + $0x30] sm:$0xff]
        %v5642 = vld [vmem:[#allocation4 + $0x38] sm:$0xff]
        %v5643 = vld [vmem:[#allocation4 + $0x48] sm:$0xff]
        %v5644 = vld [vmem:[#allocation4 + $0x50] sm:$0xff]
        %v5645 = vld [vmem:[#allocation4 + $0x60] sm:$0xff]
        %v5646 = vld [vmem:[#allocation4 + $0x68] sm:$0xff]
        %v5647 = vld [vmem:[#allocation4 + $0x78] sm:$0xff]
        %v5648 = vld [vmem:[#allocation4 + $0x80] sm:$0xff]
        %v5649 = vld [vmem:[#allocation4 + $0x90] sm:$0xff]
        %v5650 = vld [vmem:[#allocation4 + $0x98] sm:$0xff]
        %v5651 = vld [vmem:[#allocation4 + $0xa8] sm:$0xff]
        %v5652 = vld [vmem:[#allocation4 + $0xb0] sm:$0xff]
        %v5653 = vld [vmem:[#allocation4 + $0xc0] sm:$0xff]
        %v5654 = vld [vmem:[#allocation4 + $0xc8] sm:$0xff]
        %v5655 = vld [vmem:[#allocation4 + $0xd8] sm:$0xff]
        %v5656 = vld [vmem:[#allocation4 + $0xe0] sm:$0xff]
        %v5657 = vld [vmem:[#allocation4 + $0xf0] sm:$0xff]
        %v5658 = vld [vmem:[#allocation4 + $0xf8] sm:$0xff]
        %v5659 = vld [vmem:[#allocation4 + $0x108] sm:$0xff]
        %v5660 = vld [vmem:[#allocation4 + $0x110] sm:$0xff]
        %v5661 = vld [vmem:[#allocation4 + $0x120] sm:$0xff]
        %v5662 = vld [vmem:[#allocation4 + $0x128] sm:$0xff]
        %v5663 = vld [vmem:[#allocation4 + $0x138] sm:$0xff]
        %v5664 = vld [vmem:[#allocation4 + $0x140] sm:$0xff]
        %v5665 = vld [vmem:[#allocation4 + $0x150] sm:$0xff]
        %v5666 = vld [vmem:[#allocation4 + $0x158] sm:$0xff]
        %v5667 = vld [vmem:[#allocation4 + $0x168] sm:$0xff]
        %v5668 = vld [vmem:[#allocation4 + $0x170] sm:$0xff]
        %v5669 = vpack.c.bf16 %v5638, %v5637
        %v5670 = vpack.c.bf16 %v5640, %v5639
        %v5671 = vpack.c.bf16 %v5642, %v5641
        %v5672 = vpack.c.bf16 %v5644, %v5643
        %v5673 = vpack.c.bf16 %v5646, %v5645
        %v5674 = vpack.c.bf16 %v5648, %v5647
        %v5675 = vpack.c.bf16 %v5650, %v5649
        %v5676 = vpack.c.bf16 %v5652, %v5651
        %v5677 = vpack.c.bf16 %v5654, %v5653
        %v5678 = vpack.c.bf16 %v5656, %v5655
        %v5679 = vpack.c.bf16 %v5658, %v5657
        %v5680 = vpack.c.bf16 %v5660, %v5659
        %v5681 = vpack.c.bf16 %v5662, %v5661
        %v5682 = vpack.c.bf16 %v5664, %v5663
        %v5683 = vpack.c.bf16 %v5666, %v5665
        %v5684 = vpack.c.bf16 %v5668, %v5667
        %v5685 = vld [vmem:[#allocation4 + $0x1] sm:$0xff]
        %v5686 = vld [vmem:[#allocation4 + $0x9] sm:$0xff]
        %v5687 = vld [vmem:[#allocation4 + $0x19] sm:$0xff]
        %v5688 = vld [vmem:[#allocation4 + $0x21] sm:$0xff]
        %v5689 = vld [vmem:[#allocation4 + $0x31] sm:$0xff]
        %v5690 = vld [vmem:[#allocation4 + $0x39] sm:$0xff]
        %v5691 = vld [vmem:[#allocation4 + $0x49] sm:$0xff]
        %v5692 = vld [vmem:[#allocation4 + $0x51] sm:$0xff]
        %v5693 = vld [vmem:[#allocation4 + $0x61] sm:$0xff]
        %v5694 = vld [vmem:[#allocation4 + $0x69] sm:$0xff]
        %v5695 = vld [vmem:[#allocation4 + $0x79] sm:$0xff]
        %v5696 = vld [vmem:[#allocation4 + $0x81] sm:$0xff]
        %v5697 = vld [vmem:[#allocation4 + $0x91] sm:$0xff]
        %v5698 = vld [vmem:[#allocation4 + $0x99] sm:$0xff]
        %v5699 = vld [vmem:[#allocation4 + $0xa9] sm:$0xff]
        %v5700 = vld [vmem:[#allocation4 + $0xb1] sm:$0xff]
        %v5701 = vld [vmem:[#allocation4 + $0xc1] sm:$0xff]
        %v5702 = vld [vmem:[#allocation4 + $0xc9] sm:$0xff]
        %v5703 = vld [vmem:[#allocation4 + $0xd9] sm:$0xff]
        %v5704 = vld [vmem:[#allocation4 + $0xe1] sm:$0xff]
        %v5705 = vld [vmem:[#allocation4 + $0xf1] sm:$0xff]
        %v5706 = vld [vmem:[#allocation4 + $0xf9] sm:$0xff]
        %v5707 = vld [vmem:[#allocation4 + $0x109] sm:$0xff]
        %v5708 = vld [vmem:[#allocation4 + $0x111] sm:$0xff]
        %v5709 = vld [vmem:[#allocation4 + $0x121] sm:$0xff]
        %v5710 = vld [vmem:[#allocation4 + $0x129] sm:$0xff]
        %v5711 = vld [vmem:[#allocation4 + $0x139] sm:$0xff]
        %v5712 = vld [vmem:[#allocation4 + $0x141] sm:$0xff]
        %v5713 = vld [vmem:[#allocation4 + $0x151] sm:$0xff]
        %v5714 = vld [vmem:[#allocation4 + $0x159] sm:$0xff]
        %v5715 = vld [vmem:[#allocation4 + $0x169] sm:$0xff]
        %v5716 = vld [vmem:[#allocation4 + $0x171] sm:$0xff]
        %v5717 = vpack.c.bf16 %v5686, %v5685
        %v5718 = vpack.c.bf16 %v5688, %v5687
        %v5719 = vpack.c.bf16 %v5690, %v5689
        %v5720 = vpack.c.bf16 %v5692, %v5691
        %v5721 = vpack.c.bf16 %v5694, %v5693
        %v5722 = vpack.c.bf16 %v5696, %v5695
        %v5723 = vpack.c.bf16 %v5698, %v5697
        %v5724 = vpack.c.bf16 %v5700, %v5699
        %v5725 = vpack.c.bf16 %v5702, %v5701
        %v5726 = vpack.c.bf16 %v5704, %v5703
        %v5727 = vpack.c.bf16 %v5706, %v5705
        %v5728 = vpack.c.bf16 %v5708, %v5707
        %v5729 = vpack.c.bf16 %v5710, %v5709
        %v5730 = vpack.c.bf16 %v5712, %v5711
        %v5731 = vpack.c.bf16 %v5714, %v5713
        %v5732 = vpack.c.bf16 %v5716, %v5715
        %5749 = vrot.lane.b32.xlu0 %v5717, 64
        %v5750 = vpop.permute.xlu0 %5749
        %5751 = vrot.lane.b32.xlu0 %v5718, 64
        %v5752 = vpop.permute.xlu0 %5751
        %5753 = vrot.lane.b32.xlu0 %v5719, 64
        %v5754 = vpop.permute.xlu0 %5753
        %5755 = vrot.lane.b32.xlu0 %v5720, 64
        %v5756 = vpop.permute.xlu0 %5755
        %5757 = vrot.lane.b32.xlu0 %v5721, 64
        %v5758 = vpop.permute.xlu0 %5757
        %5759 = vrot.lane.b32.xlu0 %v5722, 64
        %v5760 = vpop.permute.xlu0 %5759
        %5761 = vrot.lane.b32.xlu0 %v5723, 64
        %v5762 = vpop.permute.xlu0 %5761
        %5763 = vrot.lane.b32.xlu0 %v5724, 64
        %v5764 = vpop.permute.xlu0 %5763
        %5765 = vrot.lane.b32.xlu0 %v5725, 64
        %v5766 = vpop.permute.xlu0 %5765
        %5767 = vrot.lane.b32.xlu0 %v5726, 64
        %v5768 = vpop.permute.xlu0 %5767
        %5769 = vrot.lane.b32.xlu0 %v5727, 64
        %v5770 = vpop.permute.xlu0 %5769
        %5771 = vrot.lane.b32.xlu0 %v5728, 64
        %v5772 = vpop.permute.xlu0 %5771
        %5773 = vrot.lane.b32.xlu0 %v5729, 64
        %v5774 = vpop.permute.xlu0 %5773
        %5775 = vrot.lane.b32.xlu0 %v5730, 64
        %v5776 = vpop.permute.xlu0 %5775
        %5777 = vrot.lane.b32.xlu0 %v5731, 64
        %v5778 = vpop.permute.xlu0 %5777
        %5779 = vrot.lane.b32.xlu0 %v5732, 64
        %v5780 = vpop.permute.xlu0 %5779
        %v5783 = vsel %vm1271, %v5669, %v5750
        %v5786 = vsel %vm1271, %v5670, %v5752
        %v5789 = vsel %vm1271, %v5671, %v5754
        %v5792 = vsel %vm1271, %v5672, %v5756
        %v5795 = vsel %vm1271, %v5673, %v5758
        %v5798 = vsel %vm1271, %v5674, %v5760
        %v5801 = vsel %vm1271, %v5675, %v5762
        %v5804 = vsel %vm1271, %v5676, %v5764
        %v5807 = vsel %vm1271, %v5677, %v5766
        %v5810 = vsel %vm1271, %v5678, %v5768
        %v5813 = vsel %vm1271, %v5679, %v5770
        %v5816 = vsel %vm1271, %v5680, %v5772
        %v5819 = vsel %vm1271, %v5681, %v5774
        %v5822 = vsel %vm1271, %v5682, %v5776
        %v5825 = vsel %vm1271, %v5683, %v5778
        %v5828 = vsel %vm1271, %v5684, %v5780
        %v5845 = vunpack.c.l.b16 %v5783
        %v5846 = vunpack.c.h.b16 %v5783
        %v5847 = vunpack.c.l.b16 %v5786
        %v5848 = vunpack.c.h.b16 %v5786
        %v5849 = vunpack.c.l.b16 %v5789
        %v5850 = vunpack.c.h.b16 %v5789
        %v5851 = vunpack.c.l.b16 %v5792
        %v5852 = vunpack.c.h.b16 %v5792
        %v5853 = vunpack.c.l.b16 %v5795
        %v5854 = vunpack.c.h.b16 %v5795
        %v5855 = vunpack.c.l.b16 %v5798
        %v5856 = vunpack.c.h.b16 %v5798
        %v5857 = vunpack.c.l.b16 %v5801
        %v5858 = vunpack.c.h.b16 %v5801
        %v5859 = vunpack.c.l.b16 %v5804
        %v5860 = vunpack.c.h.b16 %v5804
        %v5861 = vunpack.c.l.b16 %v5807
        %v5862 = vunpack.c.h.b16 %v5807
        %v5863 = vunpack.c.l.b16 %v5810
        %v5864 = vunpack.c.h.b16 %v5810
        %v5865 = vunpack.c.l.b16 %v5813
        %v5866 = vunpack.c.h.b16 %v5813
        %v5867 = vunpack.c.l.b16 %v5816
        %v5868 = vunpack.c.h.b16 %v5816
        %v5869 = vunpack.c.l.b16 %v5819
        %v5870 = vunpack.c.h.b16 %v5819
        %v5871 = vunpack.c.l.b16 %v5822
        %v5872 = vunpack.c.h.b16 %v5822
        %v5873 = vunpack.c.l.b16 %v5825
        %v5874 = vunpack.c.h.b16 %v5825
        %v5875 = vunpack.c.l.b16 %v5828
        %v5876 = vunpack.c.h.b16 %v5828
        %v5877 = vpack.c.b16 %v5845, %v5845
        %v5878 = vpack.c.b16 %v5846, %v5846
        %v5879 = vpack.c.b16 %v5847, %v5847
        %v5880 = vpack.c.b16 %v5848, %v5848
        %v5881 = vpack.c.b16 %v5849, %v5849
        %v5882 = vpack.c.b16 %v5850, %v5850
        %v5883 = vpack.c.b16 %v5851, %v5851
        %v5884 = vpack.c.b16 %v5852, %v5852
        %v5885 = vpack.c.b16 %v5853, %v5853
        %v5886 = vpack.c.b16 %v5854, %v5854
        %v5887 = vpack.c.b16 %v5855, %v5855
        %v5888 = vpack.c.b16 %v5856, %v5856
        %v5889 = vpack.c.b16 %v5857, %v5857
        %v5890 = vpack.c.b16 %v5858, %v5858
        %v5891 = vpack.c.b16 %v5859, %v5859
        %v5892 = vpack.c.b16 %v5860, %v5860
        %v5893 = vpack.c.b16 %v5861, %v5861
        %v5894 = vpack.c.b16 %v5862, %v5862
        %v5895 = vpack.c.b16 %v5863, %v5863
        %v5896 = vpack.c.b16 %v5864, %v5864
        %v5897 = vpack.c.b16 %v5865, %v5865
        %v5898 = vpack.c.b16 %v5866, %v5866
        %v5899 = vpack.c.b16 %v5867, %v5867
        %v5900 = vpack.c.b16 %v5868, %v5868
        %v5901 = vpack.c.b16 %v5869, %v5869
        %v5902 = vpack.c.b16 %v5870, %v5870
        %v5903 = vpack.c.b16 %v5871, %v5871
        %v5904 = vpack.c.b16 %v5872, %v5872
        %v5905 = vpack.c.b16 %v5873, %v5873
        %v5906 = vpack.c.b16 %v5874, %v5874
        %v5907 = vpack.c.b16 %v5875, %v5875
        %v5908 = vpack.c.b16 %v5876, %v5876
        %5941 = vst [vmem:[#allocation3] sm:$0xf] %v5877
        %5942 = vst [vmem:[#allocation3 + $0x14] sm:$0xf] %v5878
        %5943 = vst [vmem:[#allocation3 + $0x28] sm:$0xf] %v5879
        %5944 = vst [vmem:[#allocation3 + $0x3c] sm:$0xf] %v5880
        %5945 = vst [vmem:[#allocation3 + $0x50] sm:$0xf] %v5881
        %5946 = vst [vmem:[#allocation3 + $0x64] sm:$0xf] %v5882
        %5947 = vst [vmem:[#allocation3 + $0x78] sm:$0xf] %v5883
        %5948 = vst [vmem:[#allocation3 + $0x8c] sm:$0xf] %v5884
        %5949 = vst [vmem:[#allocation3 + $0xa0] sm:$0xf] %v5885
        %5950 = vst [vmem:[#allocation3 + $0xb4] sm:$0xf] %v5886
        %5951 = vst [vmem:[#allocation3 + $0xc8] sm:$0xf] %v5887
        %5952 = vst [vmem:[#allocation3 + $0xdc] sm:$0xf] %v5888
        %5953 = vst [vmem:[#allocation3 + $0xf0] sm:$0xf] %v5889
        %5954 = vst [vmem:[#allocation3 + $0x104] sm:$0xf] %v5890
        %5955 = vst [vmem:[#allocation3 + $0x118] sm:$0xf] %v5891
        %5956 = vst [vmem:[#allocation3 + $0x12c] sm:$0xf] %v5892
        %5957 = vst [vmem:[#allocation3 + $0x140] sm:$0xf] %v5893
        %5958 = vst [vmem:[#allocation3 + $0x154] sm:$0xf] %v5894
        %5959 = vst [vmem:[#allocation3 + $0x168] sm:$0xf] %v5895
        %5960 = vst [vmem:[#allocation3 + $0x17c] sm:$0xf] %v5896
        %5961 = vst [vmem:[#allocation3 + $0x190] sm:$0xf] %v5897
        %5962 = vst [vmem:[#allocation3 + $0x1a4] sm:$0xf] %v5898
        %5963 = vst [vmem:[#allocation3 + $0x1b8] sm:$0xf] %v5899
        %5964 = vst [vmem:[#allocation3 + $0x1cc] sm:$0xf] %v5900
        %5965 = vst [vmem:[#allocation3 + $0x1e0] sm:$0xf] %v5901
        %5966 = vst [vmem:[#allocation3 + $0x1f4] sm:$0xf] %v5902
        %5967 = vst [vmem:[#allocation3 + $0x208] sm:$0xf] %v5903
        %5968 = vst [vmem:[#allocation3 + $0x21c] sm:$0xf] %v5904
        %5969 = vst [vmem:[#allocation3 + $0x230] sm:$0xf] %v5905
        %5970 = vst [vmem:[#allocation3 + $0x244] sm:$0xf] %v5906
        %5971 = vst [vmem:[#allocation3 + $0x258] sm:$0xf] %v5907
        %5972 = vst [vmem:[#allocation3 + $0x26c] sm:$0xf] %v5908
        %v5973 = vld [vmem:[#allocation4 + $0x2] sm:$0xff]
        %v5974 = vld [vmem:[#allocation4 + $0xa] sm:$0xff]
        %v5975 = vld [vmem:[#allocation4 + $0x1a] sm:$0xff]
        %v5976 = vld [vmem:[#allocation4 + $0x22] sm:$0xff]
        %v5977 = vld [vmem:[#allocation4 + $0x32] sm:$0xff]
        %v5978 = vld [vmem:[#allocation4 + $0x3a] sm:$0xff]
        %v5979 = vld [vmem:[#allocation4 + $0x4a] sm:$0xff]
        %v5980 = vld [vmem:[#allocation4 + $0x52] sm:$0xff]
        %v5981 = vld [vmem:[#allocation4 + $0x62] sm:$0xff]
        %v5982 = vld [vmem:[#allocation4 + $0x6a] sm:$0xff]
        %v5983 = vld [vmem:[#allocation4 + $0x7a] sm:$0xff]
        %v5984 = vld [vmem:[#allocation4 + $0x82] sm:$0xff]
        %v5985 = vld [vmem:[#allocation4 + $0x92] sm:$0xff]
        %v5986 = vld [vmem:[#allocation4 + $0x9a] sm:$0xff]
        %v5987 = vld [vmem:[#allocation4 + $0xaa] sm:$0xff]
        %v5988 = vld [vmem:[#allocation4 + $0xb2] sm:$0xff]
        %v5989 = vld [vmem:[#allocation4 + $0xc2] sm:$0xff]
        %v5990 = vld [vmem:[#allocation4 + $0xca] sm:$0xff]
        %v5991 = vld [vmem:[#allocation4 + $0xda] sm:$0xff]
        %v5992 = vld [vmem:[#allocation4 + $0xe2] sm:$0xff]
        %v5993 = vld [vmem:[#allocation4 + $0xf2] sm:$0xff]
        %v5994 = vld [vmem:[#allocation4 + $0xfa] sm:$0xff]
        %v5995 = vld [vmem:[#allocation4 + $0x10a] sm:$0xff]
        %v5996 = vld [vmem:[#allocation4 + $0x112] sm:$0xff]
        %v5997 = vld [vmem:[#allocation4 + $0x122] sm:$0xff]
        %v5998 = vld [vmem:[#allocation4 + $0x12a] sm:$0xff]
        %v5999 = vld [vmem:[#allocation4 + $0x13a] sm:$0xff]
        %v6000 = vld [vmem:[#allocation4 + $0x142] sm:$0xff]
        %v6001 = vld [vmem:[#allocation4 + $0x152] sm:$0xff]
        %v6002 = vld [vmem:[#allocation4 + $0x15a] sm:$0xff]
        %v6003 = vld [vmem:[#allocation4 + $0x16a] sm:$0xff]
        %v6004 = vld [vmem:[#allocation4 + $0x172] sm:$0xff]
        %v6005 = vpack.c.bf16 %v5974, %v5973
        %v6006 = vpack.c.bf16 %v5976, %v5975
        %v6007 = vpack.c.bf16 %v5978, %v5977
        %v6008 = vpack.c.bf16 %v5980, %v5979
        %v6009 = vpack.c.bf16 %v5982, %v5981
        %v6010 = vpack.c.bf16 %v5984, %v5983
        %v6011 = vpack.c.bf16 %v5986, %v5985
        %v6012 = vpack.c.bf16 %v5988, %v5987
        %v6013 = vpack.c.bf16 %v5990, %v5989
        %v6014 = vpack.c.bf16 %v5992, %v5991
        %v6015 = vpack.c.bf16 %v5994, %v5993
        %v6016 = vpack.c.bf16 %v5996, %v5995
        %v6017 = vpack.c.bf16 %v5998, %v5997
        %v6018 = vpack.c.bf16 %v6000, %v5999
        %v6019 = vpack.c.bf16 %v6002, %v6001
        %v6020 = vpack.c.bf16 %v6004, %v6003
        %v6021 = vld [vmem:[%s5604] sm:$0xff]
        %v6022 = vld [vmem:[%s5604 + $0x8] sm:$0xff]
        %v6023 = vld [vmem:[%s5604 + $0x18] sm:$0xff]
        %v6024 = vld [vmem:[%s5604 + $0x20] sm:$0xff]
        %v6025 = vld [vmem:[%s5604 + $0x30] sm:$0xff]
        %v6026 = vld [vmem:[%s5604 + $0x38] sm:$0xff]
        %v6027 = vld [vmem:[%s5604 + $0x48] sm:$0xff]
        %v6028 = vld [vmem:[%s5604 + $0x50] sm:$0xff]
        %v6029 = vld [vmem:[%s5604 + $0x60] sm:$0xff]
        %v6030 = vld [vmem:[%s5604 + $0x68] sm:$0xff]
        %v6031 = vld [vmem:[%s5604 + $0x78] sm:$0xff]
        %v6032 = vld [vmem:[%s5604 + $0x80] sm:$0xff]
        %v6033 = vld [vmem:[%s5604 + $0x90] sm:$0xff]
        %v6034 = vld [vmem:[%s5604 + $0x98] sm:$0xff]
        %v6035 = vld [vmem:[%s5604 + $0xa8] sm:$0xff]
        %v6036 = vld [vmem:[%s5604 + $0xb0] sm:$0xff]
        %v6037 = vld [vmem:[%s5604 + $0xc0] sm:$0xff]
        %v6038 = vld [vmem:[%s5604 + $0xc8] sm:$0xff]
        %v6039 = vld [vmem:[%s5604 + $0xd8] sm:$0xff]
        %v6040 = vld [vmem:[%s5604 + $0xe0] sm:$0xff]
        %v6041 = vld [vmem:[%s5604 + $0xf0] sm:$0xff]
        %v6042 = vld [vmem:[%s5604 + $0xf8] sm:$0xff]
        %v6043 = vld [vmem:[%s5604 + $0x108] sm:$0xff]
        %v6044 = vld [vmem:[%s5604 + $0x110] sm:$0xff]
        %v6045 = vld [vmem:[%s5604 + $0x120] sm:$0xff]
        %v6046 = vld [vmem:[%s5604 + $0x128] sm:$0xff]
        %v6047 = vld [vmem:[%s5604 + $0x138] sm:$0xff]
        %v6048 = vld [vmem:[%s5604 + $0x140] sm:$0xff]
        %v6049 = vld [vmem:[%s5604 + $0x150] sm:$0xff]
        %v6050 = vld [vmem:[%s5604 + $0x158] sm:$0xff]
        %v6051 = vld [vmem:[%s5604 + $0x168] sm:$0xff]
        %v6052 = vld [vmem:[%s5604 + $0x170] sm:$0xff]
        %v6053 = vpack.c.bf16 %v6022, %v6021
        %v6054 = vpack.c.bf16 %v6024, %v6023
        %v6055 = vpack.c.bf16 %v6026, %v6025
        %v6056 = vpack.c.bf16 %v6028, %v6027
        %v6057 = vpack.c.bf16 %v6030, %v6029
        %v6058 = vpack.c.bf16 %v6032, %v6031
        %v6059 = vpack.c.bf16 %v6034, %v6033
        %v6060 = vpack.c.bf16 %v6036, %v6035
        %v6061 = vpack.c.bf16 %v6038, %v6037
        %v6062 = vpack.c.bf16 %v6040, %v6039
        %v6063 = vpack.c.bf16 %v6042, %v6041
        %v6064 = vpack.c.bf16 %v6044, %v6043
        %v6065 = vpack.c.bf16 %v6046, %v6045
        %v6066 = vpack.c.bf16 %v6048, %v6047
        %v6067 = vpack.c.bf16 %v6050, %v6049
        %v6068 = vpack.c.bf16 %v6052, %v6051
        %6085 = vrot.lane.b32.xlu0 %v6053, 64
        %v6086 = vpop.permute.xlu0 %6085
        %6087 = vrot.lane.b32.xlu0 %v6054, 64
        %v6088 = vpop.permute.xlu0 %6087
        %6089 = vrot.lane.b32.xlu0 %v6055, 64
        %v6090 = vpop.permute.xlu0 %6089
        %6091 = vrot.lane.b32.xlu0 %v6056, 64
        %v6092 = vpop.permute.xlu0 %6091
        %6093 = vrot.lane.b32.xlu0 %v6057, 64
        %v6094 = vpop.permute.xlu0 %6093
        %6095 = vrot.lane.b32.xlu0 %v6058, 64
        %v6096 = vpop.permute.xlu0 %6095
        %6097 = vrot.lane.b32.xlu0 %v6059, 64
        %v6098 = vpop.permute.xlu0 %6097
        %6099 = vrot.lane.b32.xlu0 %v6060, 64
        %v6100 = vpop.permute.xlu0 %6099
        %6101 = vrot.lane.b32.xlu0 %v6061, 64
        %v6102 = vpop.permute.xlu0 %6101
        %6103 = vrot.lane.b32.xlu0 %v6062, 64
        %v6104 = vpop.permute.xlu0 %6103
        %6105 = vrot.lane.b32.xlu0 %v6063, 64
        %v6106 = vpop.permute.xlu0 %6105
        %6107 = vrot.lane.b32.xlu0 %v6064, 64
        %v6108 = vpop.permute.xlu0 %6107
        %6109 = vrot.lane.b32.xlu0 %v6065, 64
        %v6110 = vpop.permute.xlu0 %6109
        %6111 = vrot.lane.b32.xlu0 %v6066, 64
        %v6112 = vpop.permute.xlu0 %6111
        %6113 = vrot.lane.b32.xlu0 %v6067, 64
        %v6114 = vpop.permute.xlu0 %6113
        %6115 = vrot.lane.b32.xlu0 %v6068, 64
        %v6116 = vpop.permute.xlu0 %6115
        %v6119 = vsel %vm1271, %v6005, %v6086
        %v6122 = vsel %vm1271, %v6006, %v6088
        %v6125 = vsel %vm1271, %v6007, %v6090
        %v6128 = vsel %vm1271, %v6008, %v6092
        %v6131 = vsel %vm1271, %v6009, %v6094
        %v6134 = vsel %vm1271, %v6010, %v6096
        %v6137 = vsel %vm1271, %v6011, %v6098
        %v6140 = vsel %vm1271, %v6012, %v6100
        %v6143 = vsel %vm1271, %v6013, %v6102
        %v6146 = vsel %vm1271, %v6014, %v6104
        %v6149 = vsel %vm1271, %v6015, %v6106
        %v6152 = vsel %vm1271, %v6016, %v6108
        %v6155 = vsel %vm1271, %v6017, %v6110
        %v6158 = vsel %vm1271, %v6018, %v6112
        %v6161 = vsel %vm1271, %v6019, %v6114
        %v6164 = vsel %vm1271, %v6020, %v6116
        %v6181 = vunpack.c.l.b16 %v6119
        %v6182 = vunpack.c.h.b16 %v6119
        %v6183 = vunpack.c.l.b16 %v6122
        %v6184 = vunpack.c.h.b16 %v6122
        %v6185 = vunpack.c.l.b16 %v6125
        %v6186 = vunpack.c.h.b16 %v6125
        %v6187 = vunpack.c.l.b16 %v6128
        %v6188 = vunpack.c.h.b16 %v6128
        %v6189 = vunpack.c.l.b16 %v6131
        %v6190 = vunpack.c.h.b16 %v6131
        %v6191 = vunpack.c.l.b16 %v6134
        %v6192 = vunpack.c.h.b16 %v6134
        %v6193 = vunpack.c.l.b16 %v6137
        %v6194 = vunpack.c.h.b16 %v6137
        %v6195 = vunpack.c.l.b16 %v6140
        %v6196 = vunpack.c.h.b16 %v6140
        %v6197 = vunpack.c.l.b16 %v6143
        %v6198 = vunpack.c.h.b16 %v6143
        %v6199 = vunpack.c.l.b16 %v6146
        %v6200 = vunpack.c.h.b16 %v6146
        %v6201 = vunpack.c.l.b16 %v6149
        %v6202 = vunpack.c.h.b16 %v6149
        %v6203 = vunpack.c.l.b16 %v6152
        %v6204 = vunpack.c.h.b16 %v6152
        %v6205 = vunpack.c.l.b16 %v6155
        %v6206 = vunpack.c.h.b16 %v6155
        %v6207 = vunpack.c.l.b16 %v6158
        %v6208 = vunpack.c.h.b16 %v6158
        %v6209 = vunpack.c.l.b16 %v6161
        %v6210 = vunpack.c.h.b16 %v6161
        %v6211 = vunpack.c.l.b16 %v6164
        %v6212 = vunpack.c.h.b16 %v6164
        %v6213 = vpack.c.b16 %v6181, %v6181
        %v6214 = vpack.c.b16 %v6182, %v6182
        %v6215 = vpack.c.b16 %v6183, %v6183
        %v6216 = vpack.c.b16 %v6184, %v6184
        %v6217 = vpack.c.b16 %v6185, %v6185
        %v6218 = vpack.c.b16 %v6186, %v6186
        %v6219 = vpack.c.b16 %v6187, %v6187
        %v6220 = vpack.c.b16 %v6188, %v6188
        %v6221 = vpack.c.b16 %v6189, %v6189
        %v6222 = vpack.c.b16 %v6190, %v6190
        %v6223 = vpack.c.b16 %v6191, %v6191
        %v6224 = vpack.c.b16 %v6192, %v6192
        %v6225 = vpack.c.b16 %v6193, %v6193
        %v6226 = vpack.c.b16 %v6194, %v6194
        %v6227 = vpack.c.b16 %v6195, %v6195
        %v6228 = vpack.c.b16 %v6196, %v6196
        %v6229 = vpack.c.b16 %v6197, %v6197
        %v6230 = vpack.c.b16 %v6198, %v6198
        %v6231 = vpack.c.b16 %v6199, %v6199
        %v6232 = vpack.c.b16 %v6200, %v6200
        %v6233 = vpack.c.b16 %v6201, %v6201
        %v6234 = vpack.c.b16 %v6202, %v6202
        %v6235 = vpack.c.b16 %v6203, %v6203
        %v6236 = vpack.c.b16 %v6204, %v6204
        %v6237 = vpack.c.b16 %v6205, %v6205
        %v6238 = vpack.c.b16 %v6206, %v6206
        %v6239 = vpack.c.b16 %v6207, %v6207
        %v6240 = vpack.c.b16 %v6208, %v6208
        %v6241 = vpack.c.b16 %v6209, %v6209
        %v6242 = vpack.c.b16 %v6210, %v6210
        %v6243 = vpack.c.b16 %v6211, %v6211
        %v6244 = vpack.c.b16 %v6212, %v6212
        %6277 = vst [vmem:[#allocation3 + $0x4] sm:$0xf] %v6213
        %6278 = vst [vmem:[#allocation3 + $0x18] sm:$0xf] %v6214
        %6279 = vst [vmem:[#allocation3 + $0x2c] sm:$0xf] %v6215
        %6280 = vst [vmem:[#allocation3 + $0x40] sm:$0xf] %v6216
        %6281 = vst [vmem:[#allocation3 + $0x54] sm:$0xf] %v6217
        %6282 = vst [vmem:[#allocation3 + $0x68] sm:$0xf] %v6218
        %6283 = vst [vmem:[#allocation3 + $0x7c] sm:$0xf] %v6219
        %6284 = vst [vmem:[#allocation3 + $0x90] sm:$0xf] %v6220
        %6285 = vst [vmem:[#allocation3 + $0xa4] sm:$0xf] %v6221
        %6286 = vst [vmem:[#allocation3 + $0xb8] sm:$0xf] %v6222
        %6287 = vst [vmem:[#allocation3 + $0xcc] sm:$0xf] %v6223
        %6288 = vst [vmem:[#allocation3 + $0xe0] sm:$0xf] %v6224
        %6289 = vst [vmem:[#allocation3 + $0xf4] sm:$0xf] %v6225
        %6290 = vst [vmem:[#allocation3 + $0x108] sm:$0xf] %v6226
        %6291 = vst [vmem:[#allocation3 + $0x11c] sm:$0xf] %v6227
        %6292 = vst [vmem:[#allocation3 + $0x130] sm:$0xf] %v6228
        %6293 = vst [vmem:[#allocation3 + $0x144] sm:$0xf] %v6229
        %6294 = vst [vmem:[#allocation3 + $0x158] sm:$0xf] %v6230
        %6295 = vst [vmem:[#allocation3 + $0x16c] sm:$0xf] %v6231
        %6296 = vst [vmem:[#allocation3 + $0x180] sm:$0xf] %v6232
        %6297 = vst [vmem:[#allocation3 + $0x194] sm:$0xf] %v6233
        %6298 = vst [vmem:[#allocation3 + $0x1a8] sm:$0xf] %v6234
        %6299 = vst [vmem:[#allocation3 + $0x1bc] sm:$0xf] %v6235
        %6300 = vst [vmem:[#allocation3 + $0x1d0] sm:$0xf] %v6236
        %6301 = vst [vmem:[#allocation3 + $0x1e4] sm:$0xf] %v6237
        %6302 = vst [vmem:[#allocation3 + $0x1f8] sm:$0xf] %v6238
        %6303 = vst [vmem:[#allocation3 + $0x20c] sm:$0xf] %v6239
        %6304 = vst [vmem:[#allocation3 + $0x220] sm:$0xf] %v6240
        %6305 = vst [vmem:[#allocation3 + $0x234] sm:$0xf] %v6241
        %6306 = vst [vmem:[#allocation3 + $0x248] sm:$0xf] %v6242
        %6307 = vst [vmem:[#allocation3 + $0x25c] sm:$0xf] %v6243
        %6308 = vst [vmem:[#allocation3 + $0x270] sm:$0xf] %v6244
        %v6309 = vld [vmem:[%s5604 + $0x1] sm:$0xff]
        %v6310 = vld [vmem:[%s5604 + $0x9] sm:$0xff]
        %v6311 = vld [vmem:[%s5604 + $0x19] sm:$0xff]
        %v6312 = vld [vmem:[%s5604 + $0x21] sm:$0xff]
        %v6313 = vld [vmem:[%s5604 + $0x31] sm:$0xff]
        %v6314 = vld [vmem:[%s5604 + $0x39] sm:$0xff]
        %v6315 = vld [vmem:[%s5604 + $0x49] sm:$0xff]
        %v6316 = vld [vmem:[%s5604 + $0x51] sm:$0xff]
        %v6317 = vld [vmem:[%s5604 + $0x61] sm:$0xff]
        %v6318 = vld [vmem:[%s5604 + $0x69] sm:$0xff]
        %v6319 = vld [vmem:[%s5604 + $0x79] sm:$0xff]
        %v6320 = vld [vmem:[%s5604 + $0x81] sm:$0xff]
        %v6321 = vld [vmem:[%s5604 + $0x91] sm:$0xff]
        %v6322 = vld [vmem:[%s5604 + $0x99] sm:$0xff]
        %v6323 = vld [vmem:[%s5604 + $0xa9] sm:$0xff]
        %v6324 = vld [vmem:[%s5604 + $0xb1] sm:$0xff]
        %v6325 = vld [vmem:[%s5604 + $0xc1] sm:$0xff]
        %v6326 = vld [vmem:[%s5604 + $0xc9] sm:$0xff]
        %v6327 = vld [vmem:[%s5604 + $0xd9] sm:$0xff]
        %v6328 = vld [vmem:[%s5604 + $0xe1] sm:$0xff]
        %v6329 = vld [vmem:[%s5604 + $0xf1] sm:$0xff]
        %v6330 = vld [vmem:[%s5604 + $0xf9] sm:$0xff]
        %v6331 = vld [vmem:[%s5604 + $0x109] sm:$0xff]
        %v6332 = vld [vmem:[%s5604 + $0x111] sm:$0xff]
        %v6333 = vld [vmem:[%s5604 + $0x121] sm:$0xff]
        %v6334 = vld [vmem:[%s5604 + $0x129] sm:$0xff]
        %v6335 = vld [vmem:[%s5604 + $0x139] sm:$0xff]
        %v6336 = vld [vmem:[%s5604 + $0x141] sm:$0xff]
        %v6337 = vld [vmem:[%s5604 + $0x151] sm:$0xff]
        %v6338 = vld [vmem:[%s5604 + $0x159] sm:$0xff]
        %v6339 = vld [vmem:[%s5604 + $0x169] sm:$0xff]
        %v6340 = vld [vmem:[%s5604 + $0x171] sm:$0xff]
        %v6341 = vpack.c.bf16 %v6310, %v6309
        %v6342 = vpack.c.bf16 %v6312, %v6311
        %v6343 = vpack.c.bf16 %v6314, %v6313
        %v6344 = vpack.c.bf16 %v6316, %v6315
        %v6345 = vpack.c.bf16 %v6318, %v6317
        %v6346 = vpack.c.bf16 %v6320, %v6319
        %v6347 = vpack.c.bf16 %v6322, %v6321
        %v6348 = vpack.c.bf16 %v6324, %v6323
        %v6349 = vpack.c.bf16 %v6326, %v6325
        %v6350 = vpack.c.bf16 %v6328, %v6327
        %v6351 = vpack.c.bf16 %v6330, %v6329
        %v6352 = vpack.c.bf16 %v6332, %v6331
        %v6353 = vpack.c.bf16 %v6334, %v6333
        %v6354 = vpack.c.bf16 %v6336, %v6335
        %v6355 = vpack.c.bf16 %v6338, %v6337
        %v6356 = vpack.c.bf16 %v6340, %v6339
        %v6357 = vld [vmem:[%s5604 + $0x2] sm:$0xff]
        %v6358 = vld [vmem:[%s5604 + $0xa] sm:$0xff]
        %v6359 = vld [vmem:[%s5604 + $0x1a] sm:$0xff]
        %v6360 = vld [vmem:[%s5604 + $0x22] sm:$0xff]
        %v6361 = vld [vmem:[%s5604 + $0x32] sm:$0xff]
        %v6362 = vld [vmem:[%s5604 + $0x3a] sm:$0xff]
        %v6363 = vld [vmem:[%s5604 + $0x4a] sm:$0xff]
        %v6364 = vld [vmem:[%s5604 + $0x52] sm:$0xff]
        %v6365 = vld [vmem:[%s5604 + $0x62] sm:$0xff]
        %v6366 = vld [vmem:[%s5604 + $0x6a] sm:$0xff]
        %v6367 = vld [vmem:[%s5604 + $0x7a] sm:$0xff]
        %v6368 = vld [vmem:[%s5604 + $0x82] sm:$0xff]
        %v6369 = vld [vmem:[%s5604 + $0x92] sm:$0xff]
        %v6370 = vld [vmem:[%s5604 + $0x9a] sm:$0xff]
        %v6371 = vld [vmem:[%s5604 + $0xaa] sm:$0xff]
        %v6372 = vld [vmem:[%s5604 + $0xb2] sm:$0xff]
        %v6373 = vld [vmem:[%s5604 + $0xc2] sm:$0xff]
        %v6374 = vld [vmem:[%s5604 + $0xca] sm:$0xff]
        %v6375 = vld [vmem:[%s5604 + $0xda] sm:$0xff]
        %v6376 = vld [vmem:[%s5604 + $0xe2] sm:$0xff]
        %v6377 = vld [vmem:[%s5604 + $0xf2] sm:$0xff]
        %v6378 = vld [vmem:[%s5604 + $0xfa] sm:$0xff]
        %v6379 = vld [vmem:[%s5604 + $0x10a] sm:$0xff]
        %v6380 = vld [vmem:[%s5604 + $0x112] sm:$0xff]
        %v6381 = vld [vmem:[%s5604 + $0x122] sm:$0xff]
        %v6382 = vld [vmem:[%s5604 + $0x12a] sm:$0xff]
        %v6383 = vld [vmem:[%s5604 + $0x13a] sm:$0xff]
        %v6384 = vld [vmem:[%s5604 + $0x142] sm:$0xff]
        %v6385 = vld [vmem:[%s5604 + $0x152] sm:$0xff]
        %v6386 = vld [vmem:[%s5604 + $0x15a] sm:$0xff]
        %v6387 = vld [vmem:[%s5604 + $0x16a] sm:$0xff]
        %v6388 = vld [vmem:[%s5604 + $0x172] sm:$0xff]
        %v6389 = vpack.c.bf16 %v6358, %v6357
        %v6390 = vpack.c.bf16 %v6360, %v6359
        %v6391 = vpack.c.bf16 %v6362, %v6361
        %v6392 = vpack.c.bf16 %v6364, %v6363
        %v6393 = vpack.c.bf16 %v6366, %v6365
        %v6394 = vpack.c.bf16 %v6368, %v6367
        %v6395 = vpack.c.bf16 %v6370, %v6369
        %v6396 = vpack.c.bf16 %v6372, %v6371
        %v6397 = vpack.c.bf16 %v6374, %v6373
        %v6398 = vpack.c.bf16 %v6376, %v6375
        %v6399 = vpack.c.bf16 %v6378, %v6377
        %v6400 = vpack.c.bf16 %v6380, %v6379
        %v6401 = vpack.c.bf16 %v6382, %v6381
        %v6402 = vpack.c.bf16 %v6384, %v6383
        %v6403 = vpack.c.bf16 %v6386, %v6385
        %v6404 = vpack.c.bf16 %v6388, %v6387
        %6421 = vrot.lane.b32.xlu0 %v6389, 64
        %v6422 = vpop.permute.xlu0 %6421
        %6423 = vrot.lane.b32.xlu0 %v6390, 64
        %v6424 = vpop.permute.xlu0 %6423
        %6425 = vrot.lane.b32.xlu0 %v6391, 64
        %v6426 = vpop.permute.xlu0 %6425
        %6427 = vrot.lane.b32.xlu0 %v6392, 64
        %v6428 = vpop.permute.xlu0 %6427
        %6429 = vrot.lane.b32.xlu0 %v6393, 64
        %v6430 = vpop.permute.xlu0 %6429
        %6431 = vrot.lane.b32.xlu0 %v6394, 64
        %v6432 = vpop.permute.xlu0 %6431
        %6433 = vrot.lane.b32.xlu0 %v6395, 64
        %v6434 = vpop.permute.xlu0 %6433
        %6435 = vrot.lane.b32.xlu0 %v6396, 64
        %v6436 = vpop.permute.xlu0 %6435
        %6437 = vrot.lane.b32.xlu0 %v6397, 64
        %v6438 = vpop.permute.xlu0 %6437
        %6439 = vrot.lane.b32.xlu0 %v6398, 64
        %v6440 = vpop.permute.xlu0 %6439
        %6441 = vrot.lane.b32.xlu0 %v6399, 64
        %v6442 = vpop.permute.xlu0 %6441
        %6443 = vrot.lane.b32.xlu0 %v6400, 64
        %v6444 = vpop.permute.xlu0 %6443
        %6445 = vrot.lane.b32.xlu0 %v6401, 64
        %v6446 = vpop.permute.xlu0 %6445
        %6447 = vrot.lane.b32.xlu0 %v6402, 64
        %v6448 = vpop.permute.xlu0 %6447
        %6449 = vrot.lane.b32.xlu0 %v6403, 64
        %v6450 = vpop.permute.xlu0 %6449
        %6451 = vrot.lane.b32.xlu0 %v6404, 64
        %v6452 = vpop.permute.xlu0 %6451
        %v6455 = vsel %vm1271, %v6341, %v6422
        %v6458 = vsel %vm1271, %v6342, %v6424
        %v6461 = vsel %vm1271, %v6343, %v6426
        %v6464 = vsel %vm1271, %v6344, %v6428
        %v6467 = vsel %vm1271, %v6345, %v6430
        %v6470 = vsel %vm1271, %v6346, %v6432
        %v6473 = vsel %vm1271, %v6347, %v6434
        %v6476 = vsel %vm1271, %v6348, %v6436
        %v6479 = vsel %vm1271, %v6349, %v6438
        %v6482 = vsel %vm1271, %v6350, %v6440
        %v6485 = vsel %vm1271, %v6351, %v6442
        %v6488 = vsel %vm1271, %v6352, %v6444
        %v6491 = vsel %vm1271, %v6353, %v6446
        %v6494 = vsel %vm1271, %v6354, %v6448
        %v6497 = vsel %vm1271, %v6355, %v6450
        %v6500 = vsel %vm1271, %v6356, %v6452
        %v6517 = vunpack.c.l.b16 %v6455
        %v6518 = vunpack.c.h.b16 %v6455
        %v6519 = vunpack.c.l.b16 %v6458
        %v6520 = vunpack.c.h.b16 %v6458
        %v6521 = vunpack.c.l.b16 %v6461
        %v6522 = vunpack.c.h.b16 %v6461
        %v6523 = vunpack.c.l.b16 %v6464
        %v6524 = vunpack.c.h.b16 %v6464
        %v6525 = vunpack.c.l.b16 %v6467
        %v6526 = vunpack.c.h.b16 %v6467
        %v6527 = vunpack.c.l.b16 %v6470
        %v6528 = vunpack.c.h.b16 %v6470
        %v6529 = vunpack.c.l.b16 %v6473
        %v6530 = vunpack.c.h.b16 %v6473
        %v6531 = vunpack.c.l.b16 %v6476
        %v6532 = vunpack.c.h.b16 %v6476
        %v6533 = vunpack.c.l.b16 %v6479
        %v6534 = vunpack.c.h.b16 %v6479
        %v6535 = vunpack.c.l.b16 %v6482
        %v6536 = vunpack.c.h.b16 %v6482
        %v6537 = vunpack.c.l.b16 %v6485
        %v6538 = vunpack.c.h.b16 %v6485
        %v6539 = vunpack.c.l.b16 %v6488
        %v6540 = vunpack.c.h.b16 %v6488
        %v6541 = vunpack.c.l.b16 %v6491
        %v6542 = vunpack.c.h.b16 %v6491
        %v6543 = vunpack.c.l.b16 %v6494
        %v6544 = vunpack.c.h.b16 %v6494
        %v6545 = vunpack.c.l.b16 %v6497
        %v6546 = vunpack.c.h.b16 %v6497
        %v6547 = vunpack.c.l.b16 %v6500
        %v6548 = vunpack.c.h.b16 %v6500
        %v6549 = vpack.c.b16 %v6517, %v6517
        %v6550 = vpack.c.b16 %v6518, %v6518
        %v6551 = vpack.c.b16 %v6519, %v6519
        %v6552 = vpack.c.b16 %v6520, %v6520
        %v6553 = vpack.c.b16 %v6521, %v6521
        %v6554 = vpack.c.b16 %v6522, %v6522
        %v6555 = vpack.c.b16 %v6523, %v6523
        %v6556 = vpack.c.b16 %v6524, %v6524
        %v6557 = vpack.c.b16 %v6525, %v6525
        %v6558 = vpack.c.b16 %v6526, %v6526
        %v6559 = vpack.c.b16 %v6527, %v6527
        %v6560 = vpack.c.b16 %v6528, %v6528
        %v6561 = vpack.c.b16 %v6529, %v6529
        %v6562 = vpack.c.b16 %v6530, %v6530
        %v6563 = vpack.c.b16 %v6531, %v6531
        %v6564 = vpack.c.b16 %v6532, %v6532
        %v6565 = vpack.c.b16 %v6533, %v6533
        %v6566 = vpack.c.b16 %v6534, %v6534
        %v6567 = vpack.c.b16 %v6535, %v6535
        %v6568 = vpack.c.b16 %v6536, %v6536
        %v6569 = vpack.c.b16 %v6537, %v6537
        %v6570 = vpack.c.b16 %v6538, %v6538
        %v6571 = vpack.c.b16 %v6539, %v6539
        %v6572 = vpack.c.b16 %v6540, %v6540
        %v6573 = vpack.c.b16 %v6541, %v6541
        %v6574 = vpack.c.b16 %v6542, %v6542
        %v6575 = vpack.c.b16 %v6543, %v6543
        %v6576 = vpack.c.b16 %v6544, %v6544
        %v6577 = vpack.c.b16 %v6545, %v6545
        %v6578 = vpack.c.b16 %v6546, %v6546
        %v6579 = vpack.c.b16 %v6547, %v6547
        %v6580 = vpack.c.b16 %v6548, %v6548
        %6613 = vst [vmem:[#allocation3 + $0x8] sm:$0xf] %v6549
        %6614 = vst [vmem:[#allocation3 + $0x1c] sm:$0xf] %v6550
        %6615 = vst [vmem:[#allocation3 + $0x30] sm:$0xf] %v6551
        %6616 = vst [vmem:[#allocation3 + $0x44] sm:$0xf] %v6552
        %6617 = vst [vmem:[#allocation3 + $0x58] sm:$0xf] %v6553
        %6618 = vst [vmem:[#allocation3 + $0x6c] sm:$0xf] %v6554
        %6619 = vst [vmem:[#allocation3 + $0x80] sm:$0xf] %v6555
        %6620 = vst [vmem:[#allocation3 + $0x94] sm:$0xf] %v6556
        %6621 = vst [vmem:[#allocation3 + $0xa8] sm:$0xf] %v6557
        %6622 = vst [vmem:[#allocation3 + $0xbc] sm:$0xf] %v6558
        %6623 = vst [vmem:[#allocation3 + $0xd0] sm:$0xf] %v6559
        %6624 = vst [vmem:[#allocation3 + $0xe4] sm:$0xf] %v6560
        %6625 = vst [vmem:[#allocation3 + $0xf8] sm:$0xf] %v6561
        %6626 = vst [vmem:[#allocation3 + $0x10c] sm:$0xf] %v6562
        %6627 = vst [vmem:[#allocation3 + $0x120] sm:$0xf] %v6563
        %6628 = vst [vmem:[#allocation3 + $0x134] sm:$0xf] %v6564
        %6629 = vst [vmem:[#allocation3 + $0x148] sm:$0xf] %v6565
        %6630 = vst [vmem:[#allocation3 + $0x15c] sm:$0xf] %v6566
        %6631 = vst [vmem:[#allocation3 + $0x170] sm:$0xf] %v6567
        %6632 = vst [vmem:[#allocation3 + $0x184] sm:$0xf] %v6568
        %6633 = vst [vmem:[#allocation3 + $0x198] sm:$0xf] %v6569
        %6634 = vst [vmem:[#allocation3 + $0x1ac] sm:$0xf] %v6570
        %6635 = vst [vmem:[#allocation3 + $0x1c0] sm:$0xf] %v6571
        %6636 = vst [vmem:[#allocation3 + $0x1d4] sm:$0xf] %v6572
        %6637 = vst [vmem:[#allocation3 + $0x1e8] sm:$0xf] %v6573
        %6638 = vst [vmem:[#allocation3 + $0x1fc] sm:$0xf] %v6574
        %6639 = vst [vmem:[#allocation3 + $0x210] sm:$0xf] %v6575
        %6640 = vst [vmem:[#allocation3 + $0x224] sm:$0xf] %v6576
        %6641 = vst [vmem:[#allocation3 + $0x238] sm:$0xf] %v6577
        %6642 = vst [vmem:[#allocation3 + $0x24c] sm:$0xf] %v6578
        %6643 = vst [vmem:[#allocation3 + $0x260] sm:$0xf] %v6579
        %6644 = vst [vmem:[#allocation3 + $0x274] sm:$0xf] %v6580
        %s6645 = scalar_lea.vmem [#allocation4], 48
        %v6646 = vld [vmem:[%s6645] sm:$0xff]
        %v6647 = vld [vmem:[%s6645 + $0x8] sm:$0xff]
        %v6648 = vld [vmem:[%s6645 + $0x18] sm:$0xff]
        %v6649 = vld [vmem:[%s6645 + $0x20] sm:$0xff]
        %v6650 = vld [vmem:[%s6645 + $0x30] sm:$0xff]
        %v6651 = vld [vmem:[%s6645 + $0x38] sm:$0xff]
        %v6652 = vld [vmem:[%s6645 + $0x48] sm:$0xff]
        %v6653 = vld [vmem:[%s6645 + $0x50] sm:$0xff]
        %v6654 = vld [vmem:[%s6645 + $0x60] sm:$0xff]
        %v6655 = vld [vmem:[%s6645 + $0x68] sm:$0xff]
        %v6656 = vld [vmem:[%s6645 + $0x78] sm:$0xff]
        %v6657 = vld [vmem:[%s6645 + $0x80] sm:$0xff]
        %v6658 = vld [vmem:[%s6645 + $0x90] sm:$0xff]
        %v6659 = vld [vmem:[%s6645 + $0x98] sm:$0xff]
        %v6660 = vld [vmem:[%s6645 + $0xa8] sm:$0xff]
        %v6661 = vld [vmem:[%s6645 + $0xb0] sm:$0xff]
        %v6662 = vld [vmem:[%s6645 + $0xc0] sm:$0xff]
        %v6663 = vld [vmem:[%s6645 + $0xc8] sm:$0xff]
        %v6664 = vld [vmem:[%s6645 + $0xd8] sm:$0xff]
        %v6665 = vld [vmem:[%s6645 + $0xe0] sm:$0xff]
        %v6666 = vld [vmem:[%s6645 + $0xf0] sm:$0xff]
        %v6667 = vld [vmem:[%s6645 + $0xf8] sm:$0xff]
        %v6668 = vld [vmem:[%s6645 + $0x108] sm:$0xff]
        %v6669 = vld [vmem:[%s6645 + $0x110] sm:$0xff]
        %v6670 = vld [vmem:[%s6645 + $0x120] sm:$0xff]
        %v6671 = vld [vmem:[%s6645 + $0x128] sm:$0xff]
        %v6672 = vld [vmem:[%s6645 + $0x138] sm:$0xff]
        %v6673 = vld [vmem:[%s6645 + $0x140] sm:$0xff]
        %v6674 = vld [vmem:[%s6645 + $0x150] sm:$0xff]
        %v6675 = vld [vmem:[%s6645 + $0x158] sm:$0xff]
        %v6676 = vld [vmem:[%s6645 + $0x168] sm:$0xff]
        %v6677 = vld [vmem:[%s6645 + $0x170] sm:$0xff]
        %v6678 = vpack.c.bf16 %v6647, %v6646
        %v6679 = vpack.c.bf16 %v6649, %v6648
        %v6680 = vpack.c.bf16 %v6651, %v6650
        %v6681 = vpack.c.bf16 %v6653, %v6652
        %v6682 = vpack.c.bf16 %v6655, %v6654
        %v6683 = vpack.c.bf16 %v6657, %v6656
        %v6684 = vpack.c.bf16 %v6659, %v6658
        %v6685 = vpack.c.bf16 %v6661, %v6660
        %v6686 = vpack.c.bf16 %v6663, %v6662
        %v6687 = vpack.c.bf16 %v6665, %v6664
        %v6688 = vpack.c.bf16 %v6667, %v6666
        %v6689 = vpack.c.bf16 %v6669, %v6668
        %v6690 = vpack.c.bf16 %v6671, %v6670
        %v6691 = vpack.c.bf16 %v6673, %v6672
        %v6692 = vpack.c.bf16 %v6675, %v6674
        %v6693 = vpack.c.bf16 %v6677, %v6676
        %v6694 = vld [vmem:[%s6645 + $0x1] sm:$0xff]
        %v6695 = vld [vmem:[%s6645 + $0x9] sm:$0xff]
        %v6696 = vld [vmem:[%s6645 + $0x19] sm:$0xff]
        %v6697 = vld [vmem:[%s6645 + $0x21] sm:$0xff]
        %v6698 = vld [vmem:[%s6645 + $0x31] sm:$0xff]
        %v6699 = vld [vmem:[%s6645 + $0x39] sm:$0xff]
        %v6700 = vld [vmem:[%s6645 + $0x49] sm:$0xff]
        %v6701 = vld [vmem:[%s6645 + $0x51] sm:$0xff]
        %v6702 = vld [vmem:[%s6645 + $0x61] sm:$0xff]
        %v6703 = vld [vmem:[%s6645 + $0x69] sm:$0xff]
        %v6704 = vld [vmem:[%s6645 + $0x79] sm:$0xff]
        %v6705 = vld [vmem:[%s6645 + $0x81] sm:$0xff]
        %v6706 = vld [vmem:[%s6645 + $0x91] sm:$0xff]
        %v6707 = vld [vmem:[%s6645 + $0x99] sm:$0xff]
        %v6708 = vld [vmem:[%s6645 + $0xa9] sm:$0xff]
        %v6709 = vld [vmem:[%s6645 + $0xb1] sm:$0xff]
        %v6710 = vld [vmem:[%s6645 + $0xc1] sm:$0xff]
        %v6711 = vld [vmem:[%s6645 + $0xc9] sm:$0xff]
        %v6712 = vld [vmem:[%s6645 + $0xd9] sm:$0xff]
        %v6713 = vld [vmem:[%s6645 + $0xe1] sm:$0xff]
        %v6714 = vld [vmem:[%s6645 + $0xf1] sm:$0xff]
        %v6715 = vld [vmem:[%s6645 + $0xf9] sm:$0xff]
        %v6716 = vld [vmem:[%s6645 + $0x109] sm:$0xff]
        %v6717 = vld [vmem:[%s6645 + $0x111] sm:$0xff]
        %v6718 = vld [vmem:[%s6645 + $0x121] sm:$0xff]
        %v6719 = vld [vmem:[%s6645 + $0x129] sm:$0xff]
        %v6720 = vld [vmem:[%s6645 + $0x139] sm:$0xff]
        %v6721 = vld [vmem:[%s6645 + $0x141] sm:$0xff]
        %v6722 = vld [vmem:[%s6645 + $0x151] sm:$0xff]
        %v6723 = vld [vmem:[%s6645 + $0x159] sm:$0xff]
        %v6724 = vld [vmem:[%s6645 + $0x169] sm:$0xff]
        %v6725 = vld [vmem:[%s6645 + $0x171] sm:$0xff]
        %v6726 = vpack.c.bf16 %v6695, %v6694
        %v6727 = vpack.c.bf16 %v6697, %v6696
        %v6728 = vpack.c.bf16 %v6699, %v6698
        %v6729 = vpack.c.bf16 %v6701, %v6700
        %v6730 = vpack.c.bf16 %v6703, %v6702
        %v6731 = vpack.c.bf16 %v6705, %v6704
        %v6732 = vpack.c.bf16 %v6707, %v6706
        %v6733 = vpack.c.bf16 %v6709, %v6708
        %v6734 = vpack.c.bf16 %v6711, %v6710
        %v6735 = vpack.c.bf16 %v6713, %v6712
        %v6736 = vpack.c.bf16 %v6715, %v6714
        %v6737 = vpack.c.bf16 %v6717, %v6716
        %v6738 = vpack.c.bf16 %v6719, %v6718
        %v6739 = vpack.c.bf16 %v6721, %v6720
        %v6740 = vpack.c.bf16 %v6723, %v6722
        %v6741 = vpack.c.bf16 %v6725, %v6724
        %6758 = vrot.lane.b32.xlu0 %v6726, 64
        %v6759 = vpop.permute.xlu0 %6758
        %6760 = vrot.lane.b32.xlu0 %v6727, 64
        %v6761 = vpop.permute.xlu0 %6760
        %6762 = vrot.lane.b32.xlu0 %v6728, 64
        %v6763 = vpop.permute.xlu0 %6762
        %6764 = vrot.lane.b32.xlu0 %v6729, 64
        %v6765 = vpop.permute.xlu0 %6764
        %6766 = vrot.lane.b32.xlu0 %v6730, 64
        %v6767 = vpop.permute.xlu0 %6766
        %6768 = vrot.lane.b32.xlu0 %v6731, 64
        %v6769 = vpop.permute.xlu0 %6768
        %6770 = vrot.lane.b32.xlu0 %v6732, 64
        %v6771 = vpop.permute.xlu0 %6770
        %6772 = vrot.lane.b32.xlu0 %v6733, 64
        %v6773 = vpop.permute.xlu0 %6772
        %6774 = vrot.lane.b32.xlu0 %v6734, 64
        %v6775 = vpop.permute.xlu0 %6774
        %6776 = vrot.lane.b32.xlu0 %v6735, 64
        %v6777 = vpop.permute.xlu0 %6776
        %6778 = vrot.lane.b32.xlu0 %v6736, 64
        %v6779 = vpop.permute.xlu0 %6778
        %6780 = vrot.lane.b32.xlu0 %v6737, 64
        %v6781 = vpop.permute.xlu0 %6780
        %6782 = vrot.lane.b32.xlu0 %v6738, 64
        %v6783 = vpop.permute.xlu0 %6782
        %6784 = vrot.lane.b32.xlu0 %v6739, 64
        %v6785 = vpop.permute.xlu0 %6784
        %6786 = vrot.lane.b32.xlu0 %v6740, 64
        %v6787 = vpop.permute.xlu0 %6786
        %6788 = vrot.lane.b32.xlu0 %v6741, 64
        %v6789 = vpop.permute.xlu0 %6788
        %v6792 = vsel %vm1271, %v6678, %v6759
        %v6795 = vsel %vm1271, %v6679, %v6761
        %v6798 = vsel %vm1271, %v6680, %v6763
        %v6801 = vsel %vm1271, %v6681, %v6765
        %v6804 = vsel %vm1271, %v6682, %v6767
        %v6807 = vsel %vm1271, %v6683, %v6769
        %v6810 = vsel %vm1271, %v6684, %v6771
        %v6813 = vsel %vm1271, %v6685, %v6773
        %v6816 = vsel %vm1271, %v6686, %v6775
        %v6819 = vsel %vm1271, %v6687, %v6777
        %v6822 = vsel %vm1271, %v6688, %v6779
        %v6825 = vsel %vm1271, %v6689, %v6781
        %v6828 = vsel %vm1271, %v6690, %v6783
        %v6831 = vsel %vm1271, %v6691, %v6785
        %v6834 = vsel %vm1271, %v6692, %v6787
        %v6837 = vsel %vm1271, %v6693, %v6789
        %v6854 = vunpack.c.l.b16 %v6792
        %v6855 = vunpack.c.h.b16 %v6792
        %v6856 = vunpack.c.l.b16 %v6795
        %v6857 = vunpack.c.h.b16 %v6795
        %v6858 = vunpack.c.l.b16 %v6798
        %v6859 = vunpack.c.h.b16 %v6798
        %v6860 = vunpack.c.l.b16 %v6801
        %v6861 = vunpack.c.h.b16 %v6801
        %v6862 = vunpack.c.l.b16 %v6804
        %v6863 = vunpack.c.h.b16 %v6804
        %v6864 = vunpack.c.l.b16 %v6807
        %v6865 = vunpack.c.h.b16 %v6807
        %v6866 = vunpack.c.l.b16 %v6810
        %v6867 = vunpack.c.h.b16 %v6810
        %v6868 = vunpack.c.l.b16 %v6813
        %v6869 = vunpack.c.h.b16 %v6813
        %v6870 = vunpack.c.l.b16 %v6816
        %v6871 = vunpack.c.h.b16 %v6816
        %v6872 = vunpack.c.l.b16 %v6819
        %v6873 = vunpack.c.h.b16 %v6819
        %v6874 = vunpack.c.l.b16 %v6822
        %v6875 = vunpack.c.h.b16 %v6822
        %v6876 = vunpack.c.l.b16 %v6825
        %v6877 = vunpack.c.h.b16 %v6825
        %v6878 = vunpack.c.l.b16 %v6828
        %v6879 = vunpack.c.h.b16 %v6828
        %v6880 = vunpack.c.l.b16 %v6831
        %v6881 = vunpack.c.h.b16 %v6831
        %v6882 = vunpack.c.l.b16 %v6834
        %v6883 = vunpack.c.h.b16 %v6834
        %v6884 = vunpack.c.l.b16 %v6837
        %v6885 = vunpack.c.h.b16 %v6837
        %v6886 = vpack.c.b16 %v6854, %v6854
        %v6887 = vpack.c.b16 %v6855, %v6855
        %v6888 = vpack.c.b16 %v6856, %v6856
        %v6889 = vpack.c.b16 %v6857, %v6857
        %v6890 = vpack.c.b16 %v6858, %v6858
        %v6891 = vpack.c.b16 %v6859, %v6859
        %v6892 = vpack.c.b16 %v6860, %v6860
        %v6893 = vpack.c.b16 %v6861, %v6861
        %v6894 = vpack.c.b16 %v6862, %v6862
        %v6895 = vpack.c.b16 %v6863, %v6863
        %v6896 = vpack.c.b16 %v6864, %v6864
        %v6897 = vpack.c.b16 %v6865, %v6865
        %v6898 = vpack.c.b16 %v6866, %v6866
        %v6899 = vpack.c.b16 %v6867, %v6867
        %v6900 = vpack.c.b16 %v6868, %v6868
        %v6901 = vpack.c.b16 %v6869, %v6869
        %v6902 = vpack.c.b16 %v6870, %v6870
        %v6903 = vpack.c.b16 %v6871, %v6871
        %v6904 = vpack.c.b16 %v6872, %v6872
        %v6905 = vpack.c.b16 %v6873, %v6873
        %v6906 = vpack.c.b16 %v6874, %v6874
        %v6907 = vpack.c.b16 %v6875, %v6875
        %v6908 = vpack.c.b16 %v6876, %v6876
        %v6909 = vpack.c.b16 %v6877, %v6877
        %v6910 = vpack.c.b16 %v6878, %v6878
        %v6911 = vpack.c.b16 %v6879, %v6879
        %v6912 = vpack.c.b16 %v6880, %v6880
        %v6913 = vpack.c.b16 %v6881, %v6881
        %v6914 = vpack.c.b16 %v6882, %v6882
        %v6915 = vpack.c.b16 %v6883, %v6883
        %v6916 = vpack.c.b16 %v6884, %v6884
        %v6917 = vpack.c.b16 %v6885, %v6885
        %6950 = vst [vmem:[#allocation3 + $0xc] sm:$0xf] %v6886
        %6951 = vst [vmem:[#allocation3 + $0x20] sm:$0xf] %v6887
        %6952 = vst [vmem:[#allocation3 + $0x34] sm:$0xf] %v6888
        %6953 = vst [vmem:[#allocation3 + $0x48] sm:$0xf] %v6889
        %6954 = vst [vmem:[#allocation3 + $0x5c] sm:$0xf] %v6890
        %6955 = vst [vmem:[#allocation3 + $0x70] sm:$0xf] %v6891
        %6956 = vst [vmem:[#allocation3 + $0x84] sm:$0xf] %v6892
        %6957 = vst [vmem:[#allocation3 + $0x98] sm:$0xf] %v6893
        %6958 = vst [vmem:[#allocation3 + $0xac] sm:$0xf] %v6894
        %6959 = vst [vmem:[#allocation3 + $0xc0] sm:$0xf] %v6895
        %6960 = vst [vmem:[#allocation3 + $0xd4] sm:$0xf] %v6896
        %6961 = vst [vmem:[#allocation3 + $0xe8] sm:$0xf] %v6897
        %6962 = vst [vmem:[#allocation3 + $0xfc] sm:$0xf] %v6898
        %6963 = vst [vmem:[#allocation3 + $0x110] sm:$0xf] %v6899
        %6964 = vst [vmem:[#allocation3 + $0x124] sm:$0xf] %v6900
        %6965 = vst [vmem:[#allocation3 + $0x138] sm:$0xf] %v6901
        %6966 = vst [vmem:[#allocation3 + $0x14c] sm:$0xf] %v6902
        %6967 = vst [vmem:[#allocation3 + $0x160] sm:$0xf] %v6903
        %6968 = vst [vmem:[#allocation3 + $0x174] sm:$0xf] %v6904
        %6969 = vst [vmem:[#allocation3 + $0x188] sm:$0xf] %v6905
        %6970 = vst [vmem:[#allocation3 + $0x19c] sm:$0xf] %v6906
        %6971 = vst [vmem:[#allocation3 + $0x1b0] sm:$0xf] %v6907
        %6972 = vst [vmem:[#allocation3 + $0x1c4] sm:$0xf] %v6908
        %6973 = vst [vmem:[#allocation3 + $0x1d8] sm:$0xf] %v6909
        %6974 = vst [vmem:[#allocation3 + $0x1ec] sm:$0xf] %v6910
        %6975 = vst [vmem:[#allocation3 + $0x200] sm:$0xf] %v6911
        %6976 = vst [vmem:[#allocation3 + $0x214] sm:$0xf] %v6912
        %6977 = vst [vmem:[#allocation3 + $0x228] sm:$0xf] %v6913
        %6978 = vst [vmem:[#allocation3 + $0x23c] sm:$0xf] %v6914
        %6979 = vst [vmem:[#allocation3 + $0x250] sm:$0xf] %v6915
        %6980 = vst [vmem:[#allocation3 + $0x264] sm:$0xf] %v6916
        %6981 = vst [vmem:[#allocation3 + $0x278] sm:$0xf] %v6917
        %v6982 = vld [vmem:[%s6645 + $0x2] sm:$0xff]
        %v6983 = vld [vmem:[%s6645 + $0xa] sm:$0xff]
        %v6984 = vld [vmem:[%s6645 + $0x1a] sm:$0xff]
        %v6985 = vld [vmem:[%s6645 + $0x22] sm:$0xff]
        %v6986 = vld [vmem:[%s6645 + $0x32] sm:$0xff]
        %v6987 = vld [vmem:[%s6645 + $0x3a] sm:$0xff]
        %v6988 = vld [vmem:[%s6645 + $0x4a] sm:$0xff]
        %v6989 = vld [vmem:[%s6645 + $0x52] sm:$0xff]
        %v6990 = vld [vmem:[%s6645 + $0x62] sm:$0xff]
        %v6991 = vld [vmem:[%s6645 + $0x6a] sm:$0xff]
        %v6992 = vld [vmem:[%s6645 + $0x7a] sm:$0xff]
        %v6993 = vld [vmem:[%s6645 + $0x82] sm:$0xff]
        %v6994 = vld [vmem:[%s6645 + $0x92] sm:$0xff]
        %v6995 = vld [vmem:[%s6645 + $0x9a] sm:$0xff]
        %v6996 = vld [vmem:[%s6645 + $0xaa] sm:$0xff]
        %v6997 = vld [vmem:[%s6645 + $0xb2] sm:$0xff]
        %v6998 = vld [vmem:[%s6645 + $0xc2] sm:$0xff]
        %v6999 = vld [vmem:[%s6645 + $0xca] sm:$0xff]
        %v7000 = vld [vmem:[%s6645 + $0xda] sm:$0xff]
        %v7001 = vld [vmem:[%s6645 + $0xe2] sm:$0xff]
        %v7002 = vld [vmem:[%s6645 + $0xf2] sm:$0xff]
        %v7003 = vld [vmem:[%s6645 + $0xfa] sm:$0xff]
        %v7004 = vld [vmem:[%s6645 + $0x10a] sm:$0xff]
        %v7005 = vld [vmem:[%s6645 + $0x112] sm:$0xff]
        %v7006 = vld [vmem:[%s6645 + $0x122] sm:$0xff]
        %v7007 = vld [vmem:[%s6645 + $0x12a] sm:$0xff]
        %v7008 = vld [vmem:[%s6645 + $0x13a] sm:$0xff]
        %v7009 = vld [vmem:[%s6645 + $0x142] sm:$0xff]
        %v7010 = vld [vmem:[%s6645 + $0x152] sm:$0xff]
        %v7011 = vld [vmem:[%s6645 + $0x15a] sm:$0xff]
        %v7012 = vld [vmem:[%s6645 + $0x16a] sm:$0xff]
        %v7013 = vld [vmem:[%s6645 + $0x172] sm:$0xff]
        %v7014 = vpack.c.bf16 %v6983, %v6982
        %v7015 = vpack.c.bf16 %v6985, %v6984
        %v7016 = vpack.c.bf16 %v6987, %v6986
        %v7017 = vpack.c.bf16 %v6989, %v6988
        %v7018 = vpack.c.bf16 %v6991, %v6990
        %v7019 = vpack.c.bf16 %v6993, %v6992
        %v7020 = vpack.c.bf16 %v6995, %v6994
        %v7021 = vpack.c.bf16 %v6997, %v6996
        %v7022 = vpack.c.bf16 %v6999, %v6998
        %v7023 = vpack.c.bf16 %v7001, %v7000
        %v7024 = vpack.c.bf16 %v7003, %v7002
        %v7025 = vpack.c.bf16 %v7005, %v7004
        %v7026 = vpack.c.bf16 %v7007, %v7006
        %v7027 = vpack.c.bf16 %v7009, %v7008
        %v7028 = vpack.c.bf16 %v7011, %v7010
        %v7029 = vpack.c.bf16 %v7013, %v7012
        %v7031 = vsel %vm1271, %v7014, 0
        %v7033 = vsel %vm1271, %v7015, 0
        %v7035 = vsel %vm1271, %v7016, 0
        %v7037 = vsel %vm1271, %v7017, 0
        %v7039 = vsel %vm1271, %v7018, 0
        %v7041 = vsel %vm1271, %v7019, 0
        %v7043 = vsel %vm1271, %v7020, 0
        %v7045 = vsel %vm1271, %v7021, 0
        %v7047 = vsel %vm1271, %v7022, 0
        %v7049 = vsel %vm1271, %v7023, 0
        %v7051 = vsel %vm1271, %v7024, 0
        %v7053 = vsel %vm1271, %v7025, 0
        %v7055 = vsel %vm1271, %v7026, 0
        %v7057 = vsel %vm1271, %v7027, 0
        %v7059 = vsel %vm1271, %v7028, 0
        %v7061 = vsel %vm1271, %v7029, 0
        %v7078 = vunpack.c.l.b16 %v7031
        %v7079 = vunpack.c.h.b16 %v7031
        %v7080 = vunpack.c.l.b16 %v7033
        %v7081 = vunpack.c.h.b16 %v7033
        %v7082 = vunpack.c.l.b16 %v7035
        %v7083 = vunpack.c.h.b16 %v7035
        %v7084 = vunpack.c.l.b16 %v7037
        %v7085 = vunpack.c.h.b16 %v7037
        %v7086 = vunpack.c.l.b16 %v7039
        %v7087 = vunpack.c.h.b16 %v7039
        %v7088 = vunpack.c.l.b16 %v7041
        %v7089 = vunpack.c.h.b16 %v7041
        %v7090 = vunpack.c.l.b16 %v7043
        %v7091 = vunpack.c.h.b16 %v7043
        %v7092 = vunpack.c.l.b16 %v7045
        %v7093 = vunpack.c.h.b16 %v7045
        %v7094 = vunpack.c.l.b16 %v7047
        %v7095 = vunpack.c.h.b16 %v7047
        %v7096 = vunpack.c.l.b16 %v7049
        %v7097 = vunpack.c.h.b16 %v7049
        %v7098 = vunpack.c.l.b16 %v7051
        %v7099 = vunpack.c.h.b16 %v7051
        %v7100 = vunpack.c.l.b16 %v7053
        %v7101 = vunpack.c.h.b16 %v7053
        %v7102 = vunpack.c.l.b16 %v7055
        %v7103 = vunpack.c.h.b16 %v7055
        %v7104 = vunpack.c.l.b16 %v7057
        %v7105 = vunpack.c.h.b16 %v7057
        %v7106 = vunpack.c.l.b16 %v7059
        %v7107 = vunpack.c.h.b16 %v7059
        %v7108 = vunpack.c.l.b16 %v7061
        %v7109 = vunpack.c.h.b16 %v7061
        %v7110 = vpack.c.b16 %v7078, %v7078
        %v7111 = vpack.c.b16 %v7079, %v7079
        %v7112 = vpack.c.b16 %v7080, %v7080
        %v7113 = vpack.c.b16 %v7081, %v7081
        %v7114 = vpack.c.b16 %v7082, %v7082
        %v7115 = vpack.c.b16 %v7083, %v7083
        %v7116 = vpack.c.b16 %v7084, %v7084
        %v7117 = vpack.c.b16 %v7085, %v7085
        %v7118 = vpack.c.b16 %v7086, %v7086
        %v7119 = vpack.c.b16 %v7087, %v7087
        %v7120 = vpack.c.b16 %v7088, %v7088
        %v7121 = vpack.c.b16 %v7089, %v7089
        %v7122 = vpack.c.b16 %v7090, %v7090
        %v7123 = vpack.c.b16 %v7091, %v7091
        %v7124 = vpack.c.b16 %v7092, %v7092
        %v7125 = vpack.c.b16 %v7093, %v7093
        %v7126 = vpack.c.b16 %v7094, %v7094
        %v7127 = vpack.c.b16 %v7095, %v7095
        %v7128 = vpack.c.b16 %v7096, %v7096
        %v7129 = vpack.c.b16 %v7097, %v7097
        %v7130 = vpack.c.b16 %v7098, %v7098
        %v7131 = vpack.c.b16 %v7099, %v7099
        %v7132 = vpack.c.b16 %v7100, %v7100
        %v7133 = vpack.c.b16 %v7101, %v7101
        %v7134 = vpack.c.b16 %v7102, %v7102
        %v7135 = vpack.c.b16 %v7103, %v7103
        %v7136 = vpack.c.b16 %v7104, %v7104
        %v7137 = vpack.c.b16 %v7105, %v7105
        %v7138 = vpack.c.b16 %v7106, %v7106
        %v7139 = vpack.c.b16 %v7107, %v7107
        %v7140 = vpack.c.b16 %v7108, %v7108
        %v7141 = vpack.c.b16 %v7109, %v7109
        %7174 = vst [vmem:[#allocation3 + $0x10] sm:$0xf] %v7110
        %7175 = vst [vmem:[#allocation3 + $0x24] sm:$0xf] %v7111
        %7176 = vst [vmem:[#allocation3 + $0x38] sm:$0xf] %v7112
        %7177 = vst [vmem:[#allocation3 + $0x4c] sm:$0xf] %v7113
        %7178 = vst [vmem:[#allocation3 + $0x60] sm:$0xf] %v7114
        %7179 = vst [vmem:[#allocation3 + $0x74] sm:$0xf] %v7115
        %7180 = vst [vmem:[#allocation3 + $0x88] sm:$0xf] %v7116
        %7181 = vst [vmem:[#allocation3 + $0x9c] sm:$0xf] %v7117
        %7182 = vst [vmem:[#allocation3 + $0xb0] sm:$0xf] %v7118
        %7183 = vst [vmem:[#allocation3 + $0xc4] sm:$0xf] %v7119
        %7184 = vst [vmem:[#allocation3 + $0xd8] sm:$0xf] %v7120
        %7185 = vst [vmem:[#allocation3 + $0xec] sm:$0xf] %v7121
        %7186 = vst [vmem:[#allocation3 + $0x100] sm:$0xf] %v7122
        %7187 = vst [vmem:[#allocation3 + $0x114] sm:$0xf] %v7123
        %7188 = vst [vmem:[#allocation3 + $0x128] sm:$0xf] %v7124
        %7189 = vst [vmem:[#allocation3 + $0x13c] sm:$0xf] %v7125
        %7190 = vst [vmem:[#allocation3 + $0x150] sm:$0xf] %v7126
        %7191 = vst [vmem:[#allocation3 + $0x164] sm:$0xf] %v7127
        %7192 = vst [vmem:[#allocation3 + $0x178] sm:$0xf] %v7128
        %7193 = vst [vmem:[#allocation3 + $0x18c] sm:$0xf] %v7129
        %7194 = vst [vmem:[#allocation3 + $0x1a0] sm:$0xf] %v7130
        %7195 = vst [vmem:[#allocation3 + $0x1b4] sm:$0xf] %v7131
        %7196 = vst [vmem:[#allocation3 + $0x1c8] sm:$0xf] %v7132
        %7197 = vst [vmem:[#allocation3 + $0x1dc] sm:$0xf] %v7133
        %7198 = vst [vmem:[#allocation3 + $0x1f0] sm:$0xf] %v7134
        %7199 = vst [vmem:[#allocation3 + $0x204] sm:$0xf] %v7135
        %7200 = vst [vmem:[#allocation3 + $0x218] sm:$0xf] %v7136
        %7201 = vst [vmem:[#allocation3 + $0x22c] sm:$0xf] %v7137
        %7202 = vst [vmem:[#allocation3 + $0x240] sm:$0xf] %v7138
        %7203 = vst [vmem:[#allocation3 + $0x254] sm:$0xf] %v7139
        %7204 = vst [vmem:[#allocation3 + $0x268] sm:$0xf] %v7140
        %7205 = vst [vmem:[#allocation3 + $0x27c] sm:$0xf] %v7141
        %v7206 = vld [vmem:[#allocation3] sm:$0xff]
        %v7207 = vld [vmem:[#allocation3 + $0x8] sm:$0xff]
        %v7208 = vld [vmem:[#allocation3 + $0x10] sm:$0xf]
        %v7209 = vld [vmem:[#allocation3 + $0x14] sm:$0xff]
        %v7210 = vld [vmem:[#allocation3 + $0x1c] sm:$0xff]
        %v7211 = vld [vmem:[#allocation3 + $0x24] sm:$0xf]
        %v7212 = vld [vmem:[#allocation3 + $0x28] sm:$0xff]
        %v7213 = vld [vmem:[#allocation3 + $0x30] sm:$0xff]
        %v7214 = vld [vmem:[#allocation3 + $0x38] sm:$0xf]
        %v7215 = vld [vmem:[#allocation3 + $0x3c] sm:$0xff]
        %v7216 = vld [vmem:[#allocation3 + $0x44] sm:$0xff]
        %v7217 = vld [vmem:[#allocation3 + $0x4c] sm:$0xf]
        %v7218 = vld [vmem:[#allocation3 + $0x50] sm:$0xff]
        %v7219 = vld [vmem:[#allocation3 + $0x58] sm:$0xff]
        %v7220 = vld [vmem:[#allocation3 + $0x60] sm:$0xf]
        %v7221 = vld [vmem:[#allocation3 + $0x64] sm:$0xff]
        %v7222 = vld [vmem:[#allocation3 + $0x6c] sm:$0xff]
        %v7223 = vld [vmem:[#allocation3 + $0x74] sm:$0xf]
        %v7224 = vld [vmem:[#allocation3 + $0x78] sm:$0xff]
        %v7225 = vld [vmem:[#allocation3 + $0x80] sm:$0xff]
        %v7226 = vld [vmem:[#allocation3 + $0x88] sm:$0xf]
        %v7227 = vld [vmem:[#allocation3 + $0x8c] sm:$0xff]
        %v7228 = vld [vmem:[#allocation3 + $0x94] sm:$0xff]
        %v7229 = vld [vmem:[#allocation3 + $0x9c] sm:$0xf]
        %v7230 = vld [vmem:[#allocation3 + $0xa0] sm:$0xff]
        %v7231 = vld [vmem:[#allocation3 + $0xa8] sm:$0xff]
        %v7232 = vld [vmem:[#allocation3 + $0xb0] sm:$0xf]
        %v7233 = vld [vmem:[#allocation3 + $0xb4] sm:$0xff]
        %v7234 = vld [vmem:[#allocation3 + $0xbc] sm:$0xff]
        %v7235 = vld [vmem:[#allocation3 + $0xc4] sm:$0xf]
        %v7236 = vld [vmem:[#allocation3 + $0xc8] sm:$0xff]
        %v7237 = vld [vmem:[#allocation3 + $0xd0] sm:$0xff]
        %v7238 = vld [vmem:[#allocation3 + $0xd8] sm:$0xf]
        %v7239 = vld [vmem:[#allocation3 + $0xdc] sm:$0xff]
        %v7240 = vld [vmem:[#allocation3 + $0xe4] sm:$0xff]
        %v7241 = vld [vmem:[#allocation3 + $0xec] sm:$0xf]
        %v7242 = vld [vmem:[#allocation3 + $0xf0] sm:$0xff]
        %v7243 = vld [vmem:[#allocation3 + $0xf8] sm:$0xff]
        %v7244 = vld [vmem:[#allocation3 + $0x100] sm:$0xf]
        %v7245 = vld [vmem:[#allocation3 + $0x104] sm:$0xff]
        %v7246 = vld [vmem:[#allocation3 + $0x10c] sm:$0xff]
        %v7247 = vld [vmem:[#allocation3 + $0x114] sm:$0xf]
        %v7248 = vld [vmem:[#allocation3 + $0x118] sm:$0xff]
        %v7249 = vld [vmem:[#allocation3 + $0x120] sm:$0xff]
        %v7250 = vld [vmem:[#allocation3 + $0x128] sm:$0xf]
        %v7251 = vld [vmem:[#allocation3 + $0x12c] sm:$0xff]
        %v7252 = vld [vmem:[#allocation3 + $0x134] sm:$0xff]
        %v7253 = vld [vmem:[#allocation3 + $0x13c] sm:$0xf]
        %v7254 = vld [vmem:[#allocation3 + $0x140] sm:$0xff]
        %v7255 = vld [vmem:[#allocation3 + $0x148] sm:$0xff]
        %v7256 = vld [vmem:[#allocation3 + $0x150] sm:$0xf]
        %v7257 = vld [vmem:[#allocation3 + $0x154] sm:$0xff]
        %v7258 = vld [vmem:[#allocation3 + $0x15c] sm:$0xff]
        %v7259 = vld [vmem:[#allocation3 + $0x164] sm:$0xf]
        %v7260 = vld [vmem:[#allocation3 + $0x168] sm:$0xff]
        %v7261 = vld [vmem:[#allocation3 + $0x170] sm:$0xff]
        %v7262 = vld [vmem:[#allocation3 + $0x178] sm:$0xf]
        %v7263 = vld [vmem:[#allocation3 + $0x17c] sm:$0xff]
        %v7264 = vld [vmem:[#allocation3 + $0x184] sm:$0xff]
        %v7265 = vld [vmem:[#allocation3 + $0x18c] sm:$0xf]
        %v7266 = vld [vmem:[#allocation3 + $0x190] sm:$0xff]
        %v7267 = vld [vmem:[#allocation3 + $0x198] sm:$0xff]
        %v7268 = vld [vmem:[#allocation3 + $0x1a0] sm:$0xf]
        %v7269 = vld [vmem:[#allocation3 + $0x1a4] sm:$0xff]
        %v7270 = vld [vmem:[#allocation3 + $0x1ac] sm:$0xff]
        %v7271 = vld [vmem:[#allocation3 + $0x1b4] sm:$0xf]
        %v7272 = vld [vmem:[#allocation3 + $0x1b8] sm:$0xff]
        %v7273 = vld [vmem:[#allocation3 + $0x1c0] sm:$0xff]
        %v7274 = vld [vmem:[#allocation3 + $0x1c8] sm:$0xf]
        %v7275 = vld [vmem:[#allocation3 + $0x1cc] sm:$0xff]
        %v7276 = vld [vmem:[#allocation3 + $0x1d4] sm:$0xff]
        %v7277 = vld [vmem:[#allocation3 + $0x1dc] sm:$0xf]
        %v7278 = vld [vmem:[#allocation3 + $0x1e0] sm:$0xff]
        %v7279 = vld [vmem:[#allocation3 + $0x1e8] sm:$0xff]
        %v7280 = vld [vmem:[#allocation3 + $0x1f0] sm:$0xf]
        %v7281 = vld [vmem:[#allocation3 + $0x1f4] sm:$0xff]
        %v7282 = vld [vmem:[#allocation3 + $0x1fc] sm:$0xff]
        %v7283 = vld [vmem:[#allocation3 + $0x204] sm:$0xf]
        %v7284 = vld [vmem:[#allocation3 + $0x208] sm:$0xff]
        %v7285 = vld [vmem:[#allocation3 + $0x210] sm:$0xff]
        %v7286 = vld [vmem:[#allocation3 + $0x218] sm:$0xf]
        %v7287 = vld [vmem:[#allocation3 + $0x21c] sm:$0xff]
        %v7288 = vld [vmem:[#allocation3 + $0x224] sm:$0xff]
        %v7289 = vld [vmem:[#allocation3 + $0x22c] sm:$0xf]
        %v7290 = vld [vmem:[#allocation3 + $0x230] sm:$0xff]
        %v7291 = vld [vmem:[#allocation3 + $0x238] sm:$0xff]
        %v7292 = vld [vmem:[#allocation3 + $0x240] sm:$0xf]
        %v7293 = vld [vmem:[#allocation3 + $0x244] sm:$0xff]
        %v7294 = vld [vmem:[#allocation3 + $0x24c] sm:$0xff]
        %v7295 = vld [vmem:[#allocation3 + $0x254] sm:$0xf]
        %v7296 = vld [vmem:[#allocation3 + $0x258] sm:$0xff]
        %v7297 = vld [vmem:[#allocation3 + $0x260] sm:$0xff]
        %v7298 = vld [vmem:[#allocation3 + $0x268] sm:$0xf]
        %v7299 = vld [vmem:[#allocation3 + $0x26c] sm:$0xff]
        %v7300 = vld [vmem:[#allocation3 + $0x274] sm:$0xff]
        %v7301 = vld [vmem:[#allocation3 + $0x27c] sm:$0xf]
        %v7302 = vld [vmem:[%s3] sm:$0xf]
        %v7303 = vld [vmem:[%s3 + $0x4] sm:$0xf]
        %v7304 = vld [vmem:[%s3 + $0x8] sm:$0xf]
        %v7305 = vld [vmem:[%s3 + $0xc] sm:$0xf]
        %v7306 = vld [vmem:[%s3 + $0x10] sm:$0xf]
        %v7307 = vld [vmem:[%s3 + $0x14] sm:$0xf]
        %v7308 = vld [vmem:[%s3 + $0x18] sm:$0xf]
        %v7309 = vld [vmem:[%s3 + $0x1c] sm:$0xf]
        %v7310 = vld [vmem:[%s3 + $0x20] sm:$0xf]
        %v7311 = vld [vmem:[%s3 + $0x24] sm:$0xf]
        %v7312 = vld [vmem:[%s3 + $0x28] sm:$0xf]
        %v7313 = vld [vmem:[%s3 + $0x2c] sm:$0xf]
        %v7314 = vld [vmem:[%s3 + $0x30] sm:$0xf]
        %v7315 = vld [vmem:[%s3 + $0x34] sm:$0xf]
        %v7316 = vld [vmem:[%s3 + $0x38] sm:$0xf]
        %v7317 = vld [vmem:[%s3 + $0x3c] sm:$0xf]
        %v7318 = vld [vmem:[%s3 + $0x40] sm:$0xf]
        %v7319 = vld [vmem:[%s3 + $0x44] sm:$0xf]
        %v7320 = vld [vmem:[%s3 + $0x48] sm:$0xf]
        %v7321 = vld [vmem:[%s3 + $0x4c] sm:$0xf]
        %v7322 = vld [vmem:[%s3 + $0x50] sm:$0xf]
        %v7323 = vld [vmem:[%s3 + $0x54] sm:$0xf]
        %v7324 = vld [vmem:[%s3 + $0x58] sm:$0xf]
        %v7325 = vld [vmem:[%s3 + $0x5c] sm:$0xf]
        %v7326 = vld [vmem:[%s3 + $0x60] sm:$0xf]
        %v7327 = vld [vmem:[%s3 + $0x64] sm:$0xf]
        %v7328 = vld [vmem:[%s3 + $0x68] sm:$0xf]
        %v7329 = vld [vmem:[%s3 + $0x6c] sm:$0xf]
        %v7330 = vld [vmem:[%s3 + $0x70] sm:$0xf]
        %v7331 = vld [vmem:[%s3 + $0x74] sm:$0xf]
        %v7332 = vld [vmem:[%s3 + $0x78] sm:$0xf]
        %v7333 = vld [vmem:[%s3 + $0x7c] sm:$0xf]
        %v7334 = vld [vmem:[%s3 + $0x80] sm:$0xf]
        %v7335 = vld [vmem:[%s3 + $0x84] sm:$0xf]
        %v7336 = vld [vmem:[%s3 + $0x88] sm:$0xf]
        %v7337 = vld [vmem:[%s3 + $0x8c] sm:$0xf]
        %v7338 = vld [vmem:[%s3 + $0x90] sm:$0xf]
        %v7339 = vld [vmem:[%s3 + $0x94] sm:$0xf]
        %v7340 = vld [vmem:[%s3 + $0x98] sm:$0xf]
        %v7341 = vld [vmem:[%s3 + $0x9c] sm:$0xf]
        %v7342 = vld [vmem:[%s3 + $0xa0] sm:$0xf]
        %v7343 = vld [vmem:[%s3 + $0xa4] sm:$0xf]
        %v7344 = vld [vmem:[%s3 + $0xa8] sm:$0xf]
        %v7345 = vld [vmem:[%s3 + $0xac] sm:$0xf]
        %v7346 = vld [vmem:[%s3 + $0xb0] sm:$0xf]
        %v7347 = vld [vmem:[%s3 + $0xb4] sm:$0xf]
        %v7348 = vld [vmem:[%s3 + $0xb8] sm:$0xf]
        %v7349 = vld [vmem:[%s3 + $0xbc] sm:$0xf]
        %v7350 = vld [vmem:[%s3 + $0xc0] sm:$0xf]
        %v7351 = vld [vmem:[%s3 + $0xc4] sm:$0xf]
        %v7352 = vld [vmem:[%s3 + $0xc8] sm:$0xf]
        %v7353 = vld [vmem:[%s3 + $0xcc] sm:$0xf]
        %v7354 = vld [vmem:[%s3 + $0xd0] sm:$0xf]
        %v7355 = vld [vmem:[%s3 + $0xd4] sm:$0xf]
        %v7356 = vld [vmem:[%s3 + $0xd8] sm:$0xf]
        %v7357 = vld [vmem:[%s3 + $0xdc] sm:$0xf]
        %v7358 = vld [vmem:[%s3 + $0xe0] sm:$0xf]
        %v7359 = vld [vmem:[%s3 + $0xe4] sm:$0xf]
        %v7360 = vld [vmem:[%s3 + $0xe8] sm:$0xf]
        %v7361 = vld [vmem:[%s3 + $0xec] sm:$0xf]
        %v7362 = vld [vmem:[%s3 + $0xf0] sm:$0xf]
        %v7363 = vld [vmem:[%s3 + $0xf4] sm:$0xf]
        %v7364 = vld [vmem:[%s3 + $0xf8] sm:$0xf]
        %v7365 = vld [vmem:[%s3 + $0xfc] sm:$0xf]
        %v7366 = vld [vmem:[%s3 + $0x100] sm:$0xf]
        %v7367 = vld [vmem:[%s3 + $0x104] sm:$0xf]
        %v7368 = vld [vmem:[%s3 + $0x108] sm:$0xf]
        %v7369 = vld [vmem:[%s3 + $0x10c] sm:$0xf]
        %v7370 = vld [vmem:[%s3 + $0x110] sm:$0xf]
        %v7371 = vld [vmem:[%s3 + $0x114] sm:$0xf]
        %v7372 = vld [vmem:[%s3 + $0x118] sm:$0xf]
        %v7373 = vld [vmem:[%s3 + $0x11c] sm:$0xf]
        %v7374 = vld [vmem:[%s3 + $0x120] sm:$0xf]
        %v7375 = vld [vmem:[%s3 + $0x124] sm:$0xf]
        %v7376 = vld [vmem:[%s3 + $0x128] sm:$0xf]
        %v7377 = vld [vmem:[%s3 + $0x12c] sm:$0xf]
        %v7378 = vld [vmem:[%s3 + $0x130] sm:$0xf]
        %v7379 = vld [vmem:[%s3 + $0x134] sm:$0xf]
        %v7380 = vld [vmem:[%s3 + $0x138] sm:$0xf]
        %v7381 = vld [vmem:[%s3 + $0x13c] sm:$0xf]
        %v7382 = vld [vmem:[%s4] sm:$0x1]
        %v7384 = vlaneseq
        %v7385 = vshrl.u32 %v7384, 7
        %v7386 = vsub.s32 0, %v7385
        %v7387 = vrot.slane %v7382, %v7386
        %v7485 = vunpack.c.l.b16 %v7206
        %v7486 = vunpack.c.h.b16 %v7206
        %v7487 = vunpack.c.l.b16 %v7207
        %v7488 = vunpack.c.h.b16 %v7207
        %v7489 = vunpack.c.l.b16 %v7208
        %v7490 = vunpack.c.l.b16 %v7209
        %v7491 = vunpack.c.h.b16 %v7209
        %v7492 = vunpack.c.l.b16 %v7210
        %v7493 = vunpack.c.h.b16 %v7210
        %v7494 = vunpack.c.l.b16 %v7211
        %v7495 = vunpack.c.l.b16 %v7212
        %v7496 = vunpack.c.h.b16 %v7212
        %v7497 = vunpack.c.l.b16 %v7213
        %v7498 = vunpack.c.h.b16 %v7213
        %v7499 = vunpack.c.l.b16 %v7214
        %v7500 = vunpack.c.l.b16 %v7215
        %v7501 = vunpack.c.h.b16 %v7215
        %v7502 = vunpack.c.l.b16 %v7216
        %v7503 = vunpack.c.h.b16 %v7216
        %v7504 = vunpack.c.l.b16 %v7217
        %v7505 = vunpack.c.l.b16 %v7218
        %v7506 = vunpack.c.h.b16 %v7218
        %v7507 = vunpack.c.l.b16 %v7219
        %v7508 = vunpack.c.h.b16 %v7219
        %v7509 = vunpack.c.l.b16 %v7220
        %v7510 = vunpack.c.l.b16 %v7221
        %v7511 = vunpack.c.h.b16 %v7221
        %v7512 = vunpack.c.l.b16 %v7222
        %v7513 = vunpack.c.h.b16 %v7222
        %v7514 = vunpack.c.l.b16 %v7223
        %v7515 = vunpack.c.l.b16 %v7224
        %v7516 = vunpack.c.h.b16 %v7224
        %v7517 = vunpack.c.l.b16 %v7225
        %v7518 = vunpack.c.h.b16 %v7225
        %v7519 = vunpack.c.l.b16 %v7226
        %v7520 = vunpack.c.l.b16 %v7227
        %v7521 = vunpack.c.h.b16 %v7227
        %v7522 = vunpack.c.l.b16 %v7228
        %v7523 = vunpack.c.h.b16 %v7228
        %v7524 = vunpack.c.l.b16 %v7229
        %v7525 = vunpack.c.l.b16 %v7230
        %v7526 = vunpack.c.h.b16 %v7230
        %v7527 = vunpack.c.l.b16 %v7231
        %v7528 = vunpack.c.h.b16 %v7231
        %v7529 = vunpack.c.l.b16 %v7232
        %v7530 = vunpack.c.l.b16 %v7233
        %v7531 = vunpack.c.h.b16 %v7233
        %v7532 = vunpack.c.l.b16 %v7234
        %v7533 = vunpack.c.h.b16 %v7234
        %v7534 = vunpack.c.l.b16 %v7235
        %v7535 = vunpack.c.l.b16 %v7236
        %v7536 = vunpack.c.h.b16 %v7236
        %v7537 = vunpack.c.l.b16 %v7237
        %v7538 = vunpack.c.h.b16 %v7237
        %v7539 = vunpack.c.l.b16 %v7238
        %v7540 = vunpack.c.l.b16 %v7239
        %v7541 = vunpack.c.h.b16 %v7239
        %v7542 = vunpack.c.l.b16 %v7240
        %v7543 = vunpack.c.h.b16 %v7240
        %v7544 = vunpack.c.l.b16 %v7241
        %v7545 = vunpack.c.l.b16 %v7242
        %v7546 = vunpack.c.h.b16 %v7242
        %v7547 = vunpack.c.l.b16 %v7243
        %v7548 = vunpack.c.h.b16 %v7243
        %v7549 = vunpack.c.l.b16 %v7244
        %v7550 = vunpack.c.l.b16 %v7245
        %v7551 = vunpack.c.h.b16 %v7245
        %v7552 = vunpack.c.l.b16 %v7246
        %v7553 = vunpack.c.h.b16 %v7246
        %v7554 = vunpack.c.l.b16 %v7247
        %v7555 = vunpack.c.l.b16 %v7248
        %v7556 = vunpack.c.h.b16 %v7248
        %v7557 = vunpack.c.l.b16 %v7249
        %v7558 = vunpack.c.h.b16 %v7249
        %v7559 = vunpack.c.l.b16 %v7250
        %v7560 = vunpack.c.l.b16 %v7251
        %v7561 = vunpack.c.h.b16 %v7251
        %v7562 = vunpack.c.l.b16 %v7252
        %v7563 = vunpack.c.h.b16 %v7252
        %v7564 = vunpack.c.l.b16 %v7253
        %v7565 = vunpack.c.l.b16 %v7254
        %v7566 = vunpack.c.h.b16 %v7254
        %v7567 = vunpack.c.l.b16 %v7255
        %v7568 = vunpack.c.h.b16 %v7255
        %v7569 = vunpack.c.l.b16 %v7256
        %v7570 = vunpack.c.l.b16 %v7257
        %v7571 = vunpack.c.h.b16 %v7257
        %v7572 = vunpack.c.l.b16 %v7258
        %v7573 = vunpack.c.h.b16 %v7258
        %v7574 = vunpack.c.l.b16 %v7259
        %v7575 = vunpack.c.l.b16 %v7260
        %v7576 = vunpack.c.h.b16 %v7260
        %v7577 = vunpack.c.l.b16 %v7261
        %v7578 = vunpack.c.h.b16 %v7261
        %v7579 = vunpack.c.l.b16 %v7262
        %v7580 = vunpack.c.l.b16 %v7263
        %v7581 = vunpack.c.h.b16 %v7263
        %v7582 = vunpack.c.l.b16 %v7264
        %v7583 = vunpack.c.h.b16 %v7264
        %v7584 = vunpack.c.l.b16 %v7265
        %v7585 = vunpack.c.l.b16 %v7266
        %v7586 = vunpack.c.h.b16 %v7266
        %v7587 = vunpack.c.l.b16 %v7267
        %v7588 = vunpack.c.h.b16 %v7267
        %v7589 = vunpack.c.l.b16 %v7268
        %v7590 = vunpack.c.l.b16 %v7269
        %v7591 = vunpack.c.h.b16 %v7269
        %v7592 = vunpack.c.l.b16 %v7270
        %v7593 = vunpack.c.h.b16 %v7270
        %v7594 = vunpack.c.l.b16 %v7271
        %v7595 = vunpack.c.l.b16 %v7272
        %v7596 = vunpack.c.h.b16 %v7272
        %v7597 = vunpack.c.l.b16 %v7273
        %v7598 = vunpack.c.h.b16 %v7273
        %v7599 = vunpack.c.l.b16 %v7274
        %v7600 = vunpack.c.l.b16 %v7275
        %v7601 = vunpack.c.h.b16 %v7275
        %v7602 = vunpack.c.l.b16 %v7276
        %v7603 = vunpack.c.h.b16 %v7276
        %v7604 = vunpack.c.l.b16 %v7277
        %v7605 = vunpack.c.l.b16 %v7278
        %v7606 = vunpack.c.h.b16 %v7278
        %v7607 = vunpack.c.l.b16 %v7279
        %v7608 = vunpack.c.h.b16 %v7279
        %v7609 = vunpack.c.l.b16 %v7280
        %v7610 = vunpack.c.l.b16 %v7281
        %v7611 = vunpack.c.h.b16 %v7281
        %v7612 = vunpack.c.l.b16 %v7282
        %v7613 = vunpack.c.h.b16 %v7282
        %v7614 = vunpack.c.l.b16 %v7283
        %v7615 = vunpack.c.l.b16 %v7284
        %v7616 = vunpack.c.h.b16 %v7284
        %v7617 = vunpack.c.l.b16 %v7285
        %v7618 = vunpack.c.h.b16 %v7285
        %v7619 = vunpack.c.l.b16 %v7286
        %v7620 = vunpack.c.l.b16 %v7287
        %v7621 = vunpack.c.h.b16 %v7287
        %v7622 = vunpack.c.l.b16 %v7288
        %v7623 = vunpack.c.h.b16 %v7288
        %v7624 = vunpack.c.l.b16 %v7289
        %v7625 = vunpack.c.l.b16 %v7290
        %v7626 = vunpack.c.h.b16 %v7290
        %v7627 = vunpack.c.l.b16 %v7291
        %v7628 = vunpack.c.h.b16 %v7291
        %v7629 = vunpack.c.l.b16 %v7292
        %v7630 = vunpack.c.l.b16 %v7293
        %v7631 = vunpack.c.h.b16 %v7293
        %v7632 = vunpack.c.l.b16 %v7294
        %v7633 = vunpack.c.h.b16 %v7294
        %v7634 = vunpack.c.l.b16 %v7295
        %v7635 = vunpack.c.l.b16 %v7296
        %v7636 = vunpack.c.h.b16 %v7296
        %v7637 = vunpack.c.l.b16 %v7297
        %v7638 = vunpack.c.h.b16 %v7297
        %v7639 = vunpack.c.l.b16 %v7298
        %v7640 = vunpack.c.l.b16 %v7299
        %v7641 = vunpack.c.h.b16 %v7299
        %v7642 = vunpack.c.l.b16 %v7300
        %v7643 = vunpack.c.h.b16 %v7300
        %v7644 = vunpack.c.l.b16 %v7301
        %v7645 = vpack.c.b16 %v7490, %v7485
        %v7646 = vpack.c.b16 %v7491, %v7486
        %v7647 = vpack.c.b16 %v7492, %v7487
        %v7648 = vpack.c.b16 %v7493, %v7488
        %v7649 = vpack.c.b16 %v7494, %v7489
        %v7650 = vpack.c.b16 %v7500, %v7495
        %v7651 = vpack.c.b16 %v7501, %v7496
        %v7652 = vpack.c.b16 %v7502, %v7497
        %v7653 = vpack.c.b16 %v7503, %v7498
        %v7654 = vpack.c.b16 %v7504, %v7499
        %v7655 = vpack.c.b16 %v7510, %v7505
        %v7656 = vpack.c.b16 %v7511, %v7506
        %v7657 = vpack.c.b16 %v7512, %v7507
        %v7658 = vpack.c.b16 %v7513, %v7508
        %v7659 = vpack.c.b16 %v7514, %v7509
        %v7660 = vpack.c.b16 %v7520, %v7515
        %v7661 = vpack.c.b16 %v7521, %v7516
        %v7662 = vpack.c.b16 %v7522, %v7517
        %v7663 = vpack.c.b16 %v7523, %v7518
        %v7664 = vpack.c.b16 %v7524, %v7519
        %v7665 = vpack.c.b16 %v7530, %v7525
        %v7666 = vpack.c.b16 %v7531, %v7526
        %v7667 = vpack.c.b16 %v7532, %v7527
        %v7668 = vpack.c.b16 %v7533, %v7528
        %v7669 = vpack.c.b16 %v7534, %v7529
        %v7670 = vpack.c.b16 %v7540, %v7535
        %v7671 = vpack.c.b16 %v7541, %v7536
        %v7672 = vpack.c.b16 %v7542, %v7537
        %v7673 = vpack.c.b16 %v7543, %v7538
        %v7674 = vpack.c.b16 %v7544, %v7539
        %v7675 = vpack.c.b16 %v7550, %v7545
        %v7676 = vpack.c.b16 %v7551, %v7546
        %v7677 = vpack.c.b16 %v7552, %v7547
        %v7678 = vpack.c.b16 %v7553, %v7548
        %v7679 = vpack.c.b16 %v7554, %v7549
        %v7680 = vpack.c.b16 %v7560, %v7555
        %v7681 = vpack.c.b16 %v7561, %v7556
        %v7682 = vpack.c.b16 %v7562, %v7557
        %v7683 = vpack.c.b16 %v7563, %v7558
        %v7684 = vpack.c.b16 %v7564, %v7559
        %v7685 = vpack.c.b16 %v7570, %v7565
        %v7686 = vpack.c.b16 %v7571, %v7566
        %v7687 = vpack.c.b16 %v7572, %v7567
        %v7688 = vpack.c.b16 %v7573, %v7568
        %v7689 = vpack.c.b16 %v7574, %v7569
        %v7690 = vpack.c.b16 %v7580, %v7575
        %v7691 = vpack.c.b16 %v7581, %v7576
        %v7692 = vpack.c.b16 %v7582, %v7577
        %v7693 = vpack.c.b16 %v7583, %v7578
        %v7694 = vpack.c.b16 %v7584, %v7579
        %v7695 = vpack.c.b16 %v7590, %v7585
        %v7696 = vpack.c.b16 %v7591, %v7586
        %v7697 = vpack.c.b16 %v7592, %v7587
        %v7698 = vpack.c.b16 %v7593, %v7588
        %v7699 = vpack.c.b16 %v7594, %v7589
        %v7700 = vpack.c.b16 %v7600, %v7595
        %v7701 = vpack.c.b16 %v7601, %v7596
        %v7702 = vpack.c.b16 %v7602, %v7597
        %v7703 = vpack.c.b16 %v7603, %v7598
        %v7704 = vpack.c.b16 %v7604, %v7599
        %v7705 = vpack.c.b16 %v7610, %v7605
        %v7706 = vpack.c.b16 %v7611, %v7606
        %v7707 = vpack.c.b16 %v7612, %v7607
        %v7708 = vpack.c.b16 %v7613, %v7608
        %v7709 = vpack.c.b16 %v7614, %v7609
        %v7710 = vpack.c.b16 %v7620, %v7615
        %v7711 = vpack.c.b16 %v7621, %v7616
        %v7712 = vpack.c.b16 %v7622, %v7617
        %v7713 = vpack.c.b16 %v7623, %v7618
        %v7714 = vpack.c.b16 %v7624, %v7619
        %v7715 = vpack.c.b16 %v7630, %v7625
        %v7716 = vpack.c.b16 %v7631, %v7626
        %v7717 = vpack.c.b16 %v7632, %v7627
        %v7718 = vpack.c.b16 %v7633, %v7628
        %v7719 = vpack.c.b16 %v7634, %v7629
        %v7720 = vpack.c.b16 %v7640, %v7635
        %v7721 = vpack.c.b16 %v7641, %v7636
        %v7722 = vpack.c.b16 %v7642, %v7637
        %v7723 = vpack.c.b16 %v7643, %v7638
        %v7724 = vpack.c.b16 %v7644, %v7639
        %v7885 = vunpack.c.l.b16 %v7302
        %v7886 = vunpack.c.l.b16 %v7303
        %v7887 = vunpack.c.l.b16 %v7304
        %v7888 = vunpack.c.l.b16 %v7305
        %v7889 = vunpack.c.l.b16 %v7306
        %v7890 = vunpack.c.l.b16 %v7307
        %v7891 = vunpack.c.l.b16 %v7308
        %v7892 = vunpack.c.l.b16 %v7309
        %v7893 = vunpack.c.l.b16 %v7310
        %v7894 = vunpack.c.l.b16 %v7311
        %v7895 = vunpack.c.l.b16 %v7312
        %v7896 = vunpack.c.l.b16 %v7313
        %v7897 = vunpack.c.l.b16 %v7314
        %v7898 = vunpack.c.l.b16 %v7315
        %v7899 = vunpack.c.l.b16 %v7316
        %v7900 = vunpack.c.l.b16 %v7317
        %v7901 = vunpack.c.l.b16 %v7318
        %v7902 = vunpack.c.l.b16 %v7319
        %v7903 = vunpack.c.l.b16 %v7320
        %v7904 = vunpack.c.l.b16 %v7321
        %v7905 = vunpack.c.l.b16 %v7322
        %v7906 = vunpack.c.l.b16 %v7323
        %v7907 = vunpack.c.l.b16 %v7324
        %v7908 = vunpack.c.l.b16 %v7325
        %v7909 = vunpack.c.l.b16 %v7326
        %v7910 = vunpack.c.l.b16 %v7327
        %v7911 = vunpack.c.l.b16 %v7328
        %v7912 = vunpack.c.l.b16 %v7329
        %v7913 = vunpack.c.l.b16 %v7330
        %v7914 = vunpack.c.l.b16 %v7331
        %v7915 = vunpack.c.l.b16 %v7332
        %v7916 = vunpack.c.l.b16 %v7333
        %v7917 = vunpack.c.l.b16 %v7334
        %v7918 = vunpack.c.l.b16 %v7335
        %v7919 = vunpack.c.l.b16 %v7336
        %v7920 = vunpack.c.l.b16 %v7337
        %v7921 = vunpack.c.l.b16 %v7338
        %v7922 = vunpack.c.l.b16 %v7339
        %v7923 = vunpack.c.l.b16 %v7340
        %v7924 = vunpack.c.l.b16 %v7341
        %v7925 = vunpack.c.l.b16 %v7342
        %v7926 = vunpack.c.l.b16 %v7343
        %v7927 = vunpack.c.l.b16 %v7344
        %v7928 = vunpack.c.l.b16 %v7345
        %v7929 = vunpack.c.l.b16 %v7346
        %v7930 = vunpack.c.l.b16 %v7347
        %v7931 = vunpack.c.l.b16 %v7348
        %v7932 = vunpack.c.l.b16 %v7349
        %v7933 = vunpack.c.l.b16 %v7350
        %v7934 = vunpack.c.l.b16 %v7351
        %v7935 = vunpack.c.l.b16 %v7352
        %v7936 = vunpack.c.l.b16 %v7353
        %v7937 = vunpack.c.l.b16 %v7354
        %v7938 = vunpack.c.l.b16 %v7355
        %v7939 = vunpack.c.l.b16 %v7356
        %v7940 = vunpack.c.l.b16 %v7357
        %v7941 = vunpack.c.l.b16 %v7358
        %v7942 = vunpack.c.l.b16 %v7359
        %v7943 = vunpack.c.l.b16 %v7360
        %v7944 = vunpack.c.l.b16 %v7361
        %v7945 = vunpack.c.l.b16 %v7362
        %v7946 = vunpack.c.l.b16 %v7363
        %v7947 = vunpack.c.l.b16 %v7364
        %v7948 = vunpack.c.l.b16 %v7365
        %v7949 = vunpack.c.l.b16 %v7366
        %v7950 = vunpack.c.l.b16 %v7367
        %v7951 = vunpack.c.l.b16 %v7368
        %v7952 = vunpack.c.l.b16 %v7369
        %v7953 = vunpack.c.l.b16 %v7370
        %v7954 = vunpack.c.l.b16 %v7371
        %v7955 = vunpack.c.l.b16 %v7372
        %v7956 = vunpack.c.l.b16 %v7373
        %v7957 = vunpack.c.l.b16 %v7374
        %v7958 = vunpack.c.l.b16 %v7375
        %v7959 = vunpack.c.l.b16 %v7376
        %v7960 = vunpack.c.l.b16 %v7377
        %v7961 = vunpack.c.l.b16 %v7378
        %v7962 = vunpack.c.l.b16 %v7379
        %v7963 = vunpack.c.l.b16 %v7380
        %v7964 = vunpack.c.l.b16 %v7381
        %v7965 = vpack.c.b16 %v7886, %v7885
        %v7966 = vpack.c.b16 %v7888, %v7887
        %v7967 = vpack.c.b16 %v7890, %v7889
        %v7968 = vpack.c.b16 %v7892, %v7891
        %v7969 = vpack.c.b16 %v7894, %v7893
        %v7970 = vpack.c.b16 %v7896, %v7895
        %v7971 = vpack.c.b16 %v7898, %v7897
        %v7972 = vpack.c.b16 %v7900, %v7899
        %v7973 = vpack.c.b16 %v7902, %v7901
        %v7974 = vpack.c.b16 %v7904, %v7903
        %v7975 = vpack.c.b16 %v7906, %v7905
        %v7976 = vpack.c.b16 %v7908, %v7907
        %v7977 = vpack.c.b16 %v7910, %v7909
        %v7978 = vpack.c.b16 %v7912, %v7911
        %v7979 = vpack.c.b16 %v7914, %v7913
        %v7980 = vpack.c.b16 %v7916, %v7915
        %v7981 = vpack.c.b16 %v7918, %v7917
        %v7982 = vpack.c.b16 %v7920, %v7919
        %v7983 = vpack.c.b16 %v7922, %v7921
        %v7984 = vpack.c.b16 %v7924, %v7923
        %v7985 = vpack.c.b16 %v7926, %v7925
        %v7986 = vpack.c.b16 %v7928, %v7927
        %v7987 = vpack.c.b16 %v7930, %v7929
        %v7988 = vpack.c.b16 %v7932, %v7931
        %v7989 = vpack.c.b16 %v7934, %v7933
        %v7990 = vpack.c.b16 %v7936, %v7935
        %v7991 = vpack.c.b16 %v7938, %v7937
        %v7992 = vpack.c.b16 %v7940, %v7939
        %v7993 = vpack.c.b16 %v7942, %v7941
        %v7994 = vpack.c.b16 %v7944, %v7943
        %v7995 = vpack.c.b16 %v7946, %v7945
        %v7996 = vpack.c.b16 %v7948, %v7947
        %v7997 = vpack.c.b16 %v7950, %v7949
        %v7998 = vpack.c.b16 %v7952, %v7951
        %v7999 = vpack.c.b16 %v7954, %v7953
        %v8000 = vpack.c.b16 %v7956, %v7955
        %v8001 = vpack.c.b16 %v7958, %v7957
        %v8002 = vpack.c.b16 %v7960, %v7959
        %v8003 = vpack.c.b16 %v7962, %v7961
        %v8004 = vpack.c.b16 %v7964, %v7963
        %8045 = vmatprep.subr.bf16.mxu0 0
        %8046 = vmatpush1.bf16.msra.mxu0 %v7972
        %8047 = vmatprep.subr.bf16.mxu0 0
        %8048 = vmatpush1.bf16.msra.mxu0 %v7971
        %8049 = vmatprep.subr.bf16.mxu0 0
        %8050 = vmatpush1.bf16.msra.mxu0 %v7970
        %8051 = vmatprep.subr.bf16.mxu0 0
        %8052 = vmatpush1.bf16.msra.mxu0 %v7969
        %8053 = vmatprep.subr.bf16.mxu0 0
        %8054 = vmatpush1.bf16.msra.mxu0 %v7968
        %8055 = vmatprep.subr.bf16.mxu0 0
        %8056 = vmatpush1.bf16.msra.mxu0 %v7967
        %8057 = vmatprep.subr.bf16.mxu0 0
        %8058 = vmatpush1.bf16.msra.mxu0 %v7966
        %8059 = vmatprep.subr.bf16.mxu0 0
        %8060 = vmatpush1.bf16.msra.mxu0 %v7965
        %8061 = vmatprep.subr.bf16.mxu0 0
        %8062 = vmatpush2.bf16.msra.mxu0 %v7980
        %8063 = vmatprep.subr.bf16.mxu0 0
        %8064 = vmatpush2.bf16.msra.mxu0 %v7979
        %8065 = vmatprep.subr.bf16.mxu0 0
        %8066 = vmatpush2.bf16.msra.mxu0 %v7978
        %8067 = vmatprep.subr.bf16.mxu0 0
        %8068 = vmatpush2.bf16.msra.mxu0 %v7977
        %8069 = vmatprep.subr.bf16.mxu0 0
        %8070 = vmatpush2.bf16.msra.mxu0 %v7976
        %8071 = vmatprep.subr.bf16.mxu0 0
        %8072 = vmatpush2.bf16.msra.mxu0 %v7975
        %8073 = vmatprep.subr.bf16.mxu0 0
        %8074 = vmatpush2.bf16.msra.mxu0 %v7974
        %8075 = vmatprep.subr.bf16.mxu0 0
        %8076 = vmatpush2.bf16.msra.mxu0 %v7973
        %8077 = vmatprep.mubr.bf16.mxu0 %v7646
        %8078 = vmatmul.mubr.bf16.gmra.mxu0 %v7645
        %v8079 = vpop.f32.mrf.mxu0
        %v8080 = vadd.f32 %v7387, %v8079
        %v8081 = vpop.f32.mrf.mxu0
        %v8082 = vpop.f32.mrf.mxu0
        %v8083 = vadd.f32 %v7387, %v8082
        %v8084 = vpop.f32.mrf.mxu0
        %8085 = vmatprep.mubr.bf16.mxu0 %v7651
        %8086 = vmatmul.mubr.bf16.gmra.mxu0 %v7650
        %v8087 = vpop.f32.mrf.mxu0
        %v8088 = vadd.f32 %v7387, %v8087
        %v8089 = vpop.f32.mrf.mxu0
        %v8090 = vpop.f32.mrf.mxu0
        %v8091 = vadd.f32 %v7387, %v8090
        %v8092 = vpop.f32.mrf.mxu0
        %8093 = vmatprep.mubr.bf16.mxu0 %v7656
        %8094 = vmatmul.mubr.bf16.gmra.mxu0 %v7655
        %v8095 = vpop.f32.mrf.mxu0
        %v8096 = vadd.f32 %v7387, %v8095
        %v8097 = vpop.f32.mrf.mxu0
        %v8098 = vpop.f32.mrf.mxu0
        %v8099 = vadd.f32 %v7387, %v8098
        %v8100 = vpop.f32.mrf.mxu0
        %8101 = vmatprep.mubr.bf16.mxu0 %v7661
        %8102 = vmatmul.mubr.bf16.gmra.mxu0 %v7660
        %v8103 = vpop.f32.mrf.mxu0
        %v8104 = vadd.f32 %v7387, %v8103
        %v8105 = vpop.f32.mrf.mxu0
        %v8106 = vpop.f32.mrf.mxu0
        %v8107 = vadd.f32 %v7387, %v8106
        %v8108 = vpop.f32.mrf.mxu0
        %8109 = vmatprep.mubr.bf16.mxu0 %v7666
        %8110 = vmatmul.mubr.bf16.gmra.mxu0 %v7665
        %v8111 = vpop.f32.mrf.mxu0
        %v8112 = vadd.f32 %v7387, %v8111
        %v8113 = vpop.f32.mrf.mxu0
        %v8114 = vpop.f32.mrf.mxu0
        %v8115 = vadd.f32 %v7387, %v8114
        %v8116 = vpop.f32.mrf.mxu0
        %8117 = vmatprep.mubr.bf16.mxu0 %v7671
        %8118 = vmatmul.mubr.bf16.gmra.mxu0 %v7670
        %v8119 = vpop.f32.mrf.mxu0
        %v8120 = vadd.f32 %v7387, %v8119
        %v8121 = vpop.f32.mrf.mxu0
        %v8122 = vpop.f32.mrf.mxu0
        %v8123 = vadd.f32 %v7387, %v8122
        %v8124 = vpop.f32.mrf.mxu0
        %8125 = vmatprep.mubr.bf16.mxu0 %v7676
        %8126 = vmatmul.mubr.bf16.gmra.mxu0 %v7675
        %v8127 = vpop.f32.mrf.mxu0
        %v8128 = vadd.f32 %v7387, %v8127
        %v8129 = vpop.f32.mrf.mxu0
        %v8130 = vpop.f32.mrf.mxu0
        %v8131 = vadd.f32 %v7387, %v8130
        %v8132 = vpop.f32.mrf.mxu0
        %8133 = vmatprep.mubr.bf16.mxu0 %v7681
        %8134 = vmatmul.mubr.bf16.gmra.mxu0 %v7680
        %v8135 = vpop.f32.mrf.mxu0
        %v8136 = vadd.f32 %v7387, %v8135
        %v8137 = vpop.f32.mrf.mxu0
        %v8138 = vpop.f32.mrf.mxu0
        %v8139 = vadd.f32 %v7387, %v8138
        %v8140 = vpop.f32.mrf.mxu0
        %8141 = vmatprep.mubr.bf16.mxu0 %v7686
        %8142 = vmatmul.mubr.bf16.gmra.mxu0 %v7685
        %v8143 = vpop.f32.mrf.mxu0
        %v8144 = vadd.f32 %v7387, %v8143
        %v8145 = vpop.f32.mrf.mxu0
        %v8146 = vpop.f32.mrf.mxu0
        %v8147 = vadd.f32 %v7387, %v8146
        %v8148 = vpop.f32.mrf.mxu0
        %8149 = vmatprep.mubr.bf16.mxu0 %v7691
        %8150 = vmatmul.mubr.bf16.gmra.mxu0 %v7690
        %v8151 = vpop.f32.mrf.mxu0
        %v8152 = vadd.f32 %v7387, %v8151
        %v8153 = vpop.f32.mrf.mxu0
        %v8154 = vpop.f32.mrf.mxu0
        %v8155 = vadd.f32 %v7387, %v8154
        %v8156 = vpop.f32.mrf.mxu0
        %8157 = vmatprep.mubr.bf16.mxu0 %v7696
        %8158 = vmatmul.mubr.bf16.gmra.mxu0 %v7695
        %v8159 = vpop.f32.mrf.mxu0
        %v8160 = vadd.f32 %v7387, %v8159
        %v8161 = vpop.f32.mrf.mxu0
        %v8162 = vpop.f32.mrf.mxu0
        %v8163 = vadd.f32 %v7387, %v8162
        %v8164 = vpop.f32.mrf.mxu0
        %8165 = vmatprep.mubr.bf16.mxu0 %v7701
        %8166 = vmatmul.mubr.bf16.gmra.mxu0 %v7700
        %v8167 = vpop.f32.mrf.mxu0
        %v8168 = vadd.f32 %v7387, %v8167
        %v8169 = vpop.f32.mrf.mxu0
        %v8170 = vpop.f32.mrf.mxu0
        %v8171 = vadd.f32 %v7387, %v8170
        %v8172 = vpop.f32.mrf.mxu0
        %8173 = vmatprep.mubr.bf16.mxu0 %v7706
        %8174 = vmatmul.mubr.bf16.gmra.mxu0 %v7705
        %v8175 = vpop.f32.mrf.mxu0
        %v8176 = vadd.f32 %v7387, %v8175
        %v8177 = vpop.f32.mrf.mxu0
        %v8178 = vpop.f32.mrf.mxu0
        %v8179 = vadd.f32 %v7387, %v8178
        %v8180 = vpop.f32.mrf.mxu0
        %8181 = vmatprep.mubr.bf16.mxu0 %v7711
        %8182 = vmatmul.mubr.bf16.gmra.mxu0 %v7710
        %v8183 = vpop.f32.mrf.mxu0
        %v8184 = vadd.f32 %v7387, %v8183
        %v8185 = vpop.f32.mrf.mxu0
        %v8186 = vpop.f32.mrf.mxu0
        %v8187 = vadd.f32 %v7387, %v8186
        %v8188 = vpop.f32.mrf.mxu0
        %8189 = vmatprep.mubr.bf16.mxu0 %v7716
        %8190 = vmatmul.mubr.bf16.gmra.mxu0 %v7715
        %v8191 = vpop.f32.mrf.mxu0
        %v8192 = vadd.f32 %v7387, %v8191
        %v8193 = vpop.f32.mrf.mxu0
        %v8194 = vpop.f32.mrf.mxu0
        %v8195 = vadd.f32 %v7387, %v8194
        %v8196 = vpop.f32.mrf.mxu0
        %8197 = vmatprep.mubr.bf16.mxu0 %v7721
        %8198 = vmatmul.mubr.bf16.gmra.mxu0 %v7720
        %v8199 = vpop.f32.mrf.mxu0
        %v8200 = vadd.f32 %v7387, %v8199
        %v8201 = vpop.f32.mrf.mxu0
        %v8202 = vpop.f32.mrf.mxu0
        %v8203 = vadd.f32 %v7387, %v8202
        %v8204 = vpop.f32.mrf.mxu0
        %8205 = vdwg.mxu0
        %8206 = vmatprep.subr.bf16.mxu0 0
        %8207 = vmatpush1.bf16.msra.mxu0 %v7988
        %8208 = vmatprep.subr.bf16.mxu0 0
        %8209 = vmatpush1.bf16.msra.mxu0 %v7987
        %8210 = vmatprep.subr.bf16.mxu0 0
        %8211 = vmatpush1.bf16.msra.mxu0 %v7986
        %8212 = vmatprep.subr.bf16.mxu0 0
        %8213 = vmatpush1.bf16.msra.mxu0 %v7985
        %8214 = vmatprep.subr.bf16.mxu0 0
        %8215 = vmatpush1.bf16.msra.mxu0 %v7984
        %8216 = vmatprep.subr.bf16.mxu0 0
        %8217 = vmatpush1.bf16.msra.mxu0 %v7983
        %8218 = vmatprep.subr.bf16.mxu0 0
        %8219 = vmatpush1.bf16.msra.mxu0 %v7982
        %8220 = vmatprep.subr.bf16.mxu0 0
        %8221 = vmatpush1.bf16.msra.mxu0 %v7981
        %8222 = vmatprep.subr.bf16.mxu0 0
        %8223 = vmatpush2.bf16.msra.mxu0 %v7996
        %8224 = vmatprep.subr.bf16.mxu0 0
        %8225 = vmatpush2.bf16.msra.mxu0 %v7995
        %8226 = vmatprep.subr.bf16.mxu0 0
        %8227 = vmatpush2.bf16.msra.mxu0 %v7994
        %8228 = vmatprep.subr.bf16.mxu0 0
        %8229 = vmatpush2.bf16.msra.mxu0 %v7993
        %8230 = vmatprep.subr.bf16.mxu0 0
        %8231 = vmatpush2.bf16.msra.mxu0 %v7992
        %8232 = vmatprep.subr.bf16.mxu0 0
        %8233 = vmatpush2.bf16.msra.mxu0 %v7991
        %8234 = vmatprep.subr.bf16.mxu0 0
        %8235 = vmatpush2.bf16.msra.mxu0 %v7990
        %8236 = vmatprep.subr.bf16.mxu0 0
        %8237 = vmatpush2.bf16.msra.mxu0 %v7989
        %8238 = vmatprep.mubr.bf16.mxu0 %v7648
        %8239 = vmatmul.mubr.bf16.gmra.mxu0 %v7647
        %v8240 = vpop.f32.mrf.mxu0
        %v8241 = vadd.f32 %v8080, %v8240
        %v8242 = vpop.f32.mrf.mxu0
        %v8243 = vpop.f32.mrf.mxu0
        %v8244 = vadd.f32 %v8083, %v8243
        %v8245 = vpop.f32.mrf.mxu0
        %8246 = vmatprep.mubr.bf16.mxu0 %v7653
        %8247 = vmatmul.mubr.bf16.gmra.mxu0 %v7652
        %v8248 = vpop.f32.mrf.mxu0
        %v8249 = vadd.f32 %v8088, %v8248
        %v8250 = vpop.f32.mrf.mxu0
        %v8251 = vpop.f32.mrf.mxu0
        %v8252 = vadd.f32 %v8091, %v8251
        %v8253 = vpop.f32.mrf.mxu0
        %8254 = vmatprep.mubr.bf16.mxu0 %v7658
        %8255 = vmatmul.mubr.bf16.gmra.mxu0 %v7657
        %v8256 = vpop.f32.mrf.mxu0
        %v8257 = vadd.f32 %v8096, %v8256
        %v8258 = vpop.f32.mrf.mxu0
        %v8259 = vpop.f32.mrf.mxu0
        %v8260 = vadd.f32 %v8099, %v8259
        %v8261 = vpop.f32.mrf.mxu0
        %8262 = vmatprep.mubr.bf16.mxu0 %v7663
        %8263 = vmatmul.mubr.bf16.gmra.mxu0 %v7662
        %v8264 = vpop.f32.mrf.mxu0
        %v8265 = vadd.f32 %v8104, %v8264
        %v8266 = vpop.f32.mrf.mxu0
        %v8267 = vpop.f32.mrf.mxu0
        %v8268 = vadd.f32 %v8107, %v8267
        %v8269 = vpop.f32.mrf.mxu0
        %8270 = vmatprep.mubr.bf16.mxu0 %v7668
        %8271 = vmatmul.mubr.bf16.gmra.mxu0 %v7667
        %v8272 = vpop.f32.mrf.mxu0
        %v8273 = vadd.f32 %v8112, %v8272
        %v8274 = vpop.f32.mrf.mxu0
        %v8275 = vpop.f32.mrf.mxu0
        %v8276 = vadd.f32 %v8115, %v8275
        %v8277 = vpop.f32.mrf.mxu0
        %8278 = vmatprep.mubr.bf16.mxu0 %v7673
        %8279 = vmatmul.mubr.bf16.gmra.mxu0 %v7672
        %v8280 = vpop.f32.mrf.mxu0
        %v8281 = vadd.f32 %v8120, %v8280
        %v8282 = vpop.f32.mrf.mxu0
        %v8283 = vpop.f32.mrf.mxu0
        %v8284 = vadd.f32 %v8123, %v8283
        %v8285 = vpop.f32.mrf.mxu0
        %8286 = vmatprep.mubr.bf16.mxu0 %v7678
        %8287 = vmatmul.mubr.bf16.gmra.mxu0 %v7677
        %v8288 = vpop.f32.mrf.mxu0
        %v8289 = vadd.f32 %v8128, %v8288
        %v8290 = vpop.f32.mrf.mxu0
        %v8291 = vpop.f32.mrf.mxu0
        %v8292 = vadd.f32 %v8131, %v8291
        %v8293 = vpop.f32.mrf.mxu0
        %8294 = vmatprep.mubr.bf16.mxu0 %v7683
        %8295 = vmatmul.mubr.bf16.gmra.mxu0 %v7682
        %v8296 = vpop.f32.mrf.mxu0
        %v8297 = vadd.f32 %v8136, %v8296
        %v8298 = vpop.f32.mrf.mxu0
        %v8299 = vpop.f32.mrf.mxu0
        %v8300 = vadd.f32 %v8139, %v8299
        %v8301 = vpop.f32.mrf.mxu0
        %8302 = vmatprep.mubr.bf16.mxu0 %v7688
        %8303 = vmatmul.mubr.bf16.gmra.mxu0 %v7687
        %v8304 = vpop.f32.mrf.mxu0
        %v8305 = vadd.f32 %v8144, %v8304
        %v8306 = vpop.f32.mrf.mxu0
        %v8307 = vpop.f32.mrf.mxu0
        %v8308 = vadd.f32 %v8147, %v8307
        %v8309 = vpop.f32.mrf.mxu0
        %8310 = vmatprep.mubr.bf16.mxu0 %v7693
        %8311 = vmatmul.mubr.bf16.gmra.mxu0 %v7692
        %v8312 = vpop.f32.mrf.mxu0
        %v8313 = vadd.f32 %v8152, %v8312
        %v8314 = vpop.f32.mrf.mxu0
        %v8315 = vpop.f32.mrf.mxu0
        %v8316 = vadd.f32 %v8155, %v8315
        %v8317 = vpop.f32.mrf.mxu0
        %8318 = vmatprep.mubr.bf16.mxu0 %v7698
        %8319 = vmatmul.mubr.bf16.gmra.mxu0 %v7697
        %v8320 = vpop.f32.mrf.mxu0
        %v8321 = vadd.f32 %v8160, %v8320
        %v8322 = vpop.f32.mrf.mxu0
        %v8323 = vpop.f32.mrf.mxu0
        %v8324 = vadd.f32 %v8163, %v8323
        %v8325 = vpop.f32.mrf.mxu0
        %8326 = vmatprep.mubr.bf16.mxu0 %v7703
        %8327 = vmatmul.mubr.bf16.gmra.mxu0 %v7702
        %v8328 = vpop.f32.mrf.mxu0
        %v8329 = vadd.f32 %v8168, %v8328
        %v8330 = vpop.f32.mrf.mxu0
        %v8331 = vpop.f32.mrf.mxu0
        %v8332 = vadd.f32 %v8171, %v8331
        %v8333 = vpop.f32.mrf.mxu0
        %8334 = vmatprep.mubr.bf16.mxu0 %v7708
        %8335 = vmatmul.mubr.bf16.gmra.mxu0 %v7707
        %v8336 = vpop.f32.mrf.mxu0
        %v8337 = vadd.f32 %v8176, %v8336
        %v8338 = vpop.f32.mrf.mxu0
        %v8339 = vpop.f32.mrf.mxu0
        %v8340 = vadd.f32 %v8179, %v8339
        %v8341 = vpop.f32.mrf.mxu0
        %8342 = vmatprep.mubr.bf16.mxu0 %v7713
        %8343 = vmatmul.mubr.bf16.gmra.mxu0 %v7712
        %v8344 = vpop.f32.mrf.mxu0
        %v8345 = vadd.f32 %v8184, %v8344
        %v8346 = vpop.f32.mrf.mxu0
        %v8347 = vpop.f32.mrf.mxu0
        %v8348 = vadd.f32 %v8187, %v8347
        %v8349 = vpop.f32.mrf.mxu0
        %8350 = vmatprep.mubr.bf16.mxu0 %v7718
        %8351 = vmatmul.mubr.bf16.gmra.mxu0 %v7717
        %v8352 = vpop.f32.mrf.mxu0
        %v8353 = vadd.f32 %v8192, %v8352
        %v8354 = vpop.f32.mrf.mxu0
        %v8355 = vpop.f32.mrf.mxu0
        %v8356 = vadd.f32 %v8195, %v8355
        %v8357 = vpop.f32.mrf.mxu0
        %8358 = vmatprep.mubr.bf16.mxu0 %v7723
        %8359 = vmatmul.mubr.bf16.gmra.mxu0 %v7722
        %v8360 = vpop.f32.mrf.mxu0
        %v8361 = vadd.f32 %v8200, %v8360
        %v8362 = vpop.f32.mrf.mxu0
        %v8363 = vpop.f32.mrf.mxu0
        %v8364 = vadd.f32 %v8203, %v8363
        %v8365 = vpop.f32.mrf.mxu0
        %8366 = vdwg.mxu0
        %8367 = vmatprep.subr.bf16.mxu0 0
        %8368 = vmatpush1.bf16.msra.mxu0 %v8004
        %8369 = vmatprep.subr.bf16.mxu0 0
        %8370 = vmatpush1.bf16.msra.mxu0 %v8003
        %8371 = vmatprep.subr.bf16.mxu0 0
        %8372 = vmatpush1.bf16.msra.mxu0 %v8002
        %8373 = vmatprep.subr.bf16.mxu0 0
        %8374 = vmatpush1.bf16.msra.mxu0 %v8001
        %8375 = vmatprep.subr.bf16.mxu0 0
        %8376 = vmatpush1.bf16.msra.mxu0 %v8000
        %8377 = vmatprep.subr.bf16.mxu0 0
        %8378 = vmatpush1.bf16.msra.mxu0 %v7999
        %8379 = vmatprep.subr.bf16.mxu0 0
        %8380 = vmatpush1.bf16.msra.mxu0 %v7998
        %8381 = vmatprep.subr.bf16.mxu0 0
        %8382 = vmatpush1.bf16.msra.mxu0 %v7997
        %8383 = vmatprep.subr.bf16.mxu0 0
        %8384 = vmatpush2.bf16.msra.mxu0 0
        %8385 = vmatprep.subr.bf16.mxu0 0
        %8386 = vmatpush2.bf16.msra.mxu0 0
        %8387 = vmatprep.subr.bf16.mxu0 0
        %8388 = vmatpush2.bf16.msra.mxu0 0
        %8389 = vmatprep.subr.bf16.mxu0 0
        %8390 = vmatpush2.bf16.msra.mxu0 0
        %8391 = vmatprep.subr.bf16.mxu0 0
        %8392 = vmatpush2.bf16.msra.mxu0 0
        %8393 = vmatprep.subr.bf16.mxu0 0
        %8394 = vmatpush2.bf16.msra.mxu0 0
        %8395 = vmatprep.subr.bf16.mxu0 0
        %8396 = vmatpush2.bf16.msra.mxu0 0
        %8397 = vmatprep.subr.bf16.mxu0 0
        %8398 = vmatpush2.bf16.msra.mxu0 0
        %8399 = vmatprep.mubr.bf16.mxu0 0
        %8400 = vmatmul.mubr.bf16.gmra.mxu0 %v7649
        %v8401 = vpop.f32.mrf.mxu0
        %v8402 = vadd.f32 %v8241, %v8401
        %v8403 = vpop.f32.mrf.mxu0
        %v8404 = vpop.f32.mrf.mxu0
        %v8405 = vadd.f32 %v8244, %v8404
        %v8406 = vpop.f32.mrf.mxu0
        %8407 = vmatprep.mubr.bf16.mxu0 0
        %8408 = vmatmul.mubr.bf16.gmra.mxu0 %v7654
        %v8409 = vpop.f32.mrf.mxu0
        %v8410 = vadd.f32 %v8249, %v8409
        %v8411 = vpop.f32.mrf.mxu0
        %v8412 = vpop.f32.mrf.mxu0
        %v8413 = vadd.f32 %v8252, %v8412
        %v8414 = vpop.f32.mrf.mxu0
        %8415 = vmatprep.mubr.bf16.mxu0 0
        %8416 = vmatmul.mubr.bf16.gmra.mxu0 %v7659
        %v8417 = vpop.f32.mrf.mxu0
        %v8418 = vadd.f32 %v8257, %v8417
        %v8419 = vpop.f32.mrf.mxu0
        %v8420 = vpop.f32.mrf.mxu0
        %v8421 = vadd.f32 %v8260, %v8420
        %v8422 = vpop.f32.mrf.mxu0
        %8423 = vmatprep.mubr.bf16.mxu0 0
        %8424 = vmatmul.mubr.bf16.gmra.mxu0 %v7664
        %v8425 = vpop.f32.mrf.mxu0
        %v8426 = vadd.f32 %v8265, %v8425
        %v8427 = vpop.f32.mrf.mxu0
        %v8428 = vpop.f32.mrf.mxu0
        %v8429 = vadd.f32 %v8268, %v8428
        %v8430 = vpop.f32.mrf.mxu0
        %8431 = vmatprep.mubr.bf16.mxu0 0
        %8432 = vmatmul.mubr.bf16.gmra.mxu0 %v7669
        %v8433 = vpop.f32.mrf.mxu0
        %v8434 = vadd.f32 %v8273, %v8433
        %v8435 = vpop.f32.mrf.mxu0
        %v8436 = vpop.f32.mrf.mxu0
        %v8437 = vadd.f32 %v8276, %v8436
        %v8438 = vpop.f32.mrf.mxu0
        %8439 = vmatprep.mubr.bf16.mxu0 0
        %8440 = vmatmul.mubr.bf16.gmra.mxu0 %v7674
        %v8441 = vpop.f32.mrf.mxu0
        %v8442 = vadd.f32 %v8281, %v8441
        %v8443 = vpop.f32.mrf.mxu0
        %v8444 = vpop.f32.mrf.mxu0
        %v8445 = vadd.f32 %v8284, %v8444
        %v8446 = vpop.f32.mrf.mxu0
        %8447 = vmatprep.mubr.bf16.mxu0 0
        %8448 = vmatmul.mubr.bf16.gmra.mxu0 %v7679
        %v8449 = vpop.f32.mrf.mxu0
        %v8450 = vadd.f32 %v8289, %v8449
        %v8451 = vpop.f32.mrf.mxu0
        %v8452 = vpop.f32.mrf.mxu0
        %v8453 = vadd.f32 %v8292, %v8452
        %v8454 = vpop.f32.mrf.mxu0
        %8455 = vmatprep.mubr.bf16.mxu0 0
        %8456 = vmatmul.mubr.bf16.gmra.mxu0 %v7684
        %v8457 = vpop.f32.mrf.mxu0
        %v8458 = vadd.f32 %v8297, %v8457
        %v8459 = vpop.f32.mrf.mxu0
        %v8460 = vpop.f32.mrf.mxu0
        %v8461 = vadd.f32 %v8300, %v8460
        %v8462 = vpop.f32.mrf.mxu0
        %8463 = vmatprep.mubr.bf16.mxu0 0
        %8464 = vmatmul.mubr.bf16.gmra.mxu0 %v7689
        %v8465 = vpop.f32.mrf.mxu0
        %v8466 = vadd.f32 %v8305, %v8465
        %v8467 = vpop.f32.mrf.mxu0
        %v8468 = vpop.f32.mrf.mxu0
        %v8469 = vadd.f32 %v8308, %v8468
        %v8470 = vpop.f32.mrf.mxu0
        %8471 = vmatprep.mubr.bf16.mxu0 0
        %8472 = vmatmul.mubr.bf16.gmra.mxu0 %v7694
        %v8473 = vpop.f32.mrf.mxu0
        %v8474 = vadd.f32 %v8313, %v8473
        %v8475 = vpop.f32.mrf.mxu0
        %v8476 = vpop.f32.mrf.mxu0
        %v8477 = vadd.f32 %v8316, %v8476
        %v8478 = vpop.f32.mrf.mxu0
        %8479 = vmatprep.mubr.bf16.mxu0 0
        %8480 = vmatmul.mubr.bf16.gmra.mxu0 %v7699
        %v8481 = vpop.f32.mrf.mxu0
        %v8482 = vadd.f32 %v8321, %v8481
        %v8483 = vpop.f32.mrf.mxu0
        %v8484 = vpop.f32.mrf.mxu0
        %v8485 = vadd.f32 %v8324, %v8484
        %v8486 = vpop.f32.mrf.mxu0
        %8487 = vmatprep.mubr.bf16.mxu0 0
        %8488 = vmatmul.mubr.bf16.gmra.mxu0 %v7704
        %v8489 = vpop.f32.mrf.mxu0
        %v8490 = vadd.f32 %v8329, %v8489
        %v8491 = vpop.f32.mrf.mxu0
        %v8492 = vpop.f32.mrf.mxu0
        %v8493 = vadd.f32 %v8332, %v8492
        %v8494 = vpop.f32.mrf.mxu0
        %8495 = vmatprep.mubr.bf16.mxu0 0
        %8496 = vmatmul.mubr.bf16.gmra.mxu0 %v7709
        %v8497 = vpop.f32.mrf.mxu0
        %v8498 = vadd.f32 %v8337, %v8497
        %v8499 = vpop.f32.mrf.mxu0
        %v8500 = vpop.f32.mrf.mxu0
        %v8501 = vadd.f32 %v8340, %v8500
        %v8502 = vpop.f32.mrf.mxu0
        %8503 = vmatprep.mubr.bf16.mxu0 0
        %8504 = vmatmul.mubr.bf16.gmra.mxu0 %v7714
        %v8505 = vpop.f32.mrf.mxu0
        %v8506 = vadd.f32 %v8345, %v8505
        %v8507 = vpop.f32.mrf.mxu0
        %v8508 = vpop.f32.mrf.mxu0
        %v8509 = vadd.f32 %v8348, %v8508
        %v8510 = vpop.f32.mrf.mxu0
        %8511 = vmatprep.mubr.bf16.mxu0 0
        %8512 = vmatmul.mubr.bf16.gmra.mxu0 %v7719
        %v8513 = vpop.f32.mrf.mxu0
        %v8514 = vadd.f32 %v8353, %v8513
        %v8515 = vpop.f32.mrf.mxu0
        %v8516 = vpop.f32.mrf.mxu0
        %v8517 = vadd.f32 %v8356, %v8516
        %v8518 = vpop.f32.mrf.mxu0
        %8519 = vmatprep.mubr.bf16.mxu0 0
        %8520 = vmatmul.mubr.bf16.gmra.mxu0 %v7724
        %v8521 = vpop.f32.mrf.mxu0
        %v8522 = vadd.f32 %v8361, %v8521
        %v8523 = vpop.f32.mrf.mxu0
        %v8524 = vpop.f32.mrf.mxu0
        %v8525 = vadd.f32 %v8364, %v8524
        %v8526 = vpop.f32.mrf.mxu0
        %8527 = vdwg.mxu0
        %v8528 = vsel %vm1271, %v8402, 0.0
        %v8529 = vsel %vm1271, %v8405, 0.0
        %v8530 = vadd.f32 %v8528, %v8529
        %v8531 = vsel %vm1271, %v8410, 0.0
        %v8532 = vadd.f32 %v8530, %v8531
        %v8533 = vsel %vm1271, %v8413, 0.0
        %v8534 = vadd.f32 %v8532, %v8533
        %v8535 = vsel %vm1271, %v8418, 0.0
        %v8536 = vadd.f32 %v8534, %v8535
        %v8537 = vsel %vm1271, %v8421, 0.0
        %v8538 = vadd.f32 %v8536, %v8537
        %v8539 = vsel %vm1271, %v8426, 0.0
        %v8540 = vadd.f32 %v8538, %v8539
        %v8541 = vsel %vm1271, %v8429, 0.0
        %v8542 = vadd.f32 %v8540, %v8541
        %v8543 = vsel %vm1271, %v8434, 0.0
        %v8544 = vadd.f32 %v8542, %v8543
        %v8545 = vsel %vm1271, %v8437, 0.0
        %v8546 = vadd.f32 %v8544, %v8545
        %v8547 = vsel %vm1271, %v8442, 0.0
        %v8548 = vadd.f32 %v8546, %v8547
        %v8549 = vsel %vm1271, %v8445, 0.0
        %v8550 = vadd.f32 %v8548, %v8549
        %v8551 = vsel %vm1271, %v8450, 0.0
        %v8552 = vadd.f32 %v8550, %v8551
        %v8553 = vsel %vm1271, %v8453, 0.0
        %v8554 = vadd.f32 %v8552, %v8553
        %v8555 = vsel %vm1271, %v8458, 0.0
        %v8556 = vadd.f32 %v8554, %v8555
        %v8557 = vsel %vm1271, %v8461, 0.0
        %v8558 = vadd.f32 %v8556, %v8557
        %v8559 = vsel %vm1271, %v8466, 0.0
        %v8560 = vadd.f32 %v8558, %v8559
        %v8561 = vsel %vm1271, %v8469, 0.0
        %v8562 = vadd.f32 %v8560, %v8561
        %v8563 = vsel %vm1271, %v8474, 0.0
        %v8564 = vadd.f32 %v8562, %v8563
        %v8565 = vsel %vm1271, %v8477, 0.0
        %v8566 = vadd.f32 %v8564, %v8565
        %v8567 = vsel %vm1271, %v8482, 0.0
        %v8568 = vadd.f32 %v8566, %v8567
        %v8569 = vsel %vm1271, %v8485, 0.0
        %v8570 = vadd.f32 %v8568, %v8569
        %v8571 = vsel %vm1271, %v8490, 0.0
        %v8572 = vadd.f32 %v8570, %v8571
        %v8573 = vsel %vm1271, %v8493, 0.0
        %v8574 = vadd.f32 %v8572, %v8573
        %v8575 = vsel %vm1271, %v8498, 0.0
        %v8576 = vadd.f32 %v8574, %v8575
        %v8577 = vsel %vm1271, %v8501, 0.0
        %v8578 = vadd.f32 %v8576, %v8577
        %v8579 = vsel %vm1271, %v8506, 0.0
        %v8580 = vadd.f32 %v8578, %v8579
        %v8581 = vsel %vm1271, %v8509, 0.0
        %v8582 = vadd.f32 %v8580, %v8581
        %v8583 = vsel %vm1271, %v8514, 0.0
        %v8584 = vadd.f32 %v8582, %v8583
        %v8585 = vsel %vm1271, %v8517, 0.0
        %v8586 = vadd.f32 %v8584, %v8585
        %v8587 = vsel %vm1271, %v8522, 0.0
        %v8588 = vadd.f32 %v8586, %v8587
        %v8589 = vsel %vm1271, %v8525, 0.0
        %v8590 = vadd.f32 %v8588, %v8589
        %v8591 = vrot.slane %v8590, 4
        %v8592 = vadd.f32 %v8590, %v8591
        %v8593 = vrot.slane %v8592, 2
        %v8594 = vadd.f32 %v8592, %v8593
        %v8595 = vrot.slane %v8594, 1
        %v8596 = vadd.f32 %v8594, %v8595
        %v8597 = vrcp.pop 256.0
        %v8598 = vmul.f32 %v8596, %v8597
        %v8599 = vld [vmem:[%s5] sm:$0xf]
        %v8600 = vmul.f32 %v8598, %v8599
        %v8601 = vsel %vm620, %v8600, 0.0
        %8602 = vadd.xlane.f32.xlu0 %v8601
        %v8603 = vpop.xlane.xlu0 %8602
        %v8604 = vld [vmem:[%s6] sm:$0xf]
        %v8605 = vadd.f32 %v8603, %v8604
        %v8606 = vmax.f32 %v8605, 0.0
        %v8607 = vld [vmem:[%s7] sm:$0xf]
        %8609 = vset.pattern.permute.xlu0 0
        %8610 = vperm.xlu0 %8609, %v8606
        %v8611 = vpop.permute.xlu0 %8610
        %v8613 = vmul.f32 %v8611, %v8607
        %v8614 = vsel %vm620, %v8613, 0.0
        %v8615 = vrot.slane %v8614, 4
        %v8616 = vadd.f32 %v8614, %v8615
        %v8617 = vrot.slane %v8616, 2
        %v8618 = vadd.f32 %v8616, %v8617
        %v8619 = vrot.slane %v8618, 1
        %v8620 = vadd.f32 %v8618, %v8619
        %v8621 = vld [vmem:[%s8] sm:$0x1]
        %v8622 = vadd.f32 %v8620, %v8621
        %v8623 = vxor.u32 %v8622, 2147483648
        %v8624 = vmul.f32 %v8623, 1.442695
        %v8625 = vpow.pop %v8624
        %v8626 = vadd.f32 %v8625, 1.0
        %v8627 = vrcp.pop %v8626
        %v8628 = vmul.f32 1.0, %v8627
        %s8629 = scalar_lea.vmem %s330, 24
        %v8630 = vld [vmem:[%s8629 + $0x1] sm:$0xff]
        %v8631 = vld [vmem:[%s8629 + $0x9] sm:$0xff]
        %v8632 = vld [vmem:[%s8629 + $0x19] sm:$0xff]
        %v8633 = vld [vmem:[%s8629 + $0x21] sm:$0xff]
        %v8634 = vld [vmem:[%s8629 + $0x31] sm:$0xff]
        %v8635 = vld [vmem:[%s8629 + $0x39] sm:$0xff]
        %v8636 = vld [vmem:[%s8629 + $0x49] sm:$0xff]
        %v8637 = vld [vmem:[%s8629 + $0x51] sm:$0xff]
        %v8638 = vld [vmem:[%s8629 + $0x61] sm:$0xff]
        %v8639 = vld [vmem:[%s8629 + $0x69] sm:$0xff]
        %v8640 = vld [vmem:[%s8629 + $0x79] sm:$0xff]
        %v8641 = vld [vmem:[%s8629 + $0x81] sm:$0xff]
        %v8642 = vld [vmem:[%s8629 + $0x91] sm:$0xff]
        %v8643 = vld [vmem:[%s8629 + $0x99] sm:$0xff]
        %v8644 = vld [vmem:[%s8629 + $0xa9] sm:$0xff]
        %v8645 = vld [vmem:[%s8629 + $0xb1] sm:$0xff]
        %v8646 = vld [vmem:[%s8629 + $0xc1] sm:$0xff]
        %v8647 = vld [vmem:[%s8629 + $0xc9] sm:$0xff]
        %v8648 = vld [vmem:[%s8629 + $0xd9] sm:$0xff]
        %v8649 = vld [vmem:[%s8629 + $0xe1] sm:$0xff]
        %v8650 = vld [vmem:[%s8629 + $0xf1] sm:$0xff]
        %v8651 = vld [vmem:[%s8629 + $0xf9] sm:$0xff]
        %v8652 = vld [vmem:[%s8629 + $0x109] sm:$0xff]
        %v8653 = vld [vmem:[%s8629 + $0x111] sm:$0xff]
        %v8654 = vld [vmem:[%s8629 + $0x121] sm:$0xff]
        %v8655 = vld [vmem:[%s8629 + $0x129] sm:$0xff]
        %v8656 = vld [vmem:[%s8629 + $0x139] sm:$0xff]
        %v8657 = vld [vmem:[%s8629 + $0x141] sm:$0xff]
        %v8658 = vld [vmem:[%s8629 + $0x151] sm:$0xff]
        %v8659 = vld [vmem:[%s8629 + $0x159] sm:$0xff]
        %v8660 = vld [vmem:[%s8629 + $0x169] sm:$0xff]
        %v8661 = vld [vmem:[%s8629 + $0x171] sm:$0xff]
        %v8662 = vlaneseq
        %v8663 = vshrl.u32 %v8662, 7
        %v8664 = vsub.s32 0, %v8663
        %v8665 = vrot.slane %v8628, %v8664
        %v8666 = vmul.f32 %v8402, %v8665
        %v8667 = vmul.f32 %v8405, %v8665
        %v8668 = vmul.f32 %v8410, %v8665
        %v8669 = vmul.f32 %v8413, %v8665
        %v8670 = vmul.f32 %v8418, %v8665
        %v8671 = vmul.f32 %v8421, %v8665
        %v8672 = vmul.f32 %v8426, %v8665
        %v8673 = vmul.f32 %v8429, %v8665
        %v8674 = vmul.f32 %v8434, %v8665
        %v8675 = vmul.f32 %v8437, %v8665
        %v8676 = vmul.f32 %v8442, %v8665
        %v8677 = vmul.f32 %v8445, %v8665
        %v8678 = vmul.f32 %v8450, %v8665
        %v8679 = vmul.f32 %v8453, %v8665
        %v8680 = vmul.f32 %v8458, %v8665
        %v8681 = vmul.f32 %v8461, %v8665
        %v8682 = vmul.f32 %v8466, %v8665
        %v8683 = vmul.f32 %v8469, %v8665
        %v8684 = vmul.f32 %v8474, %v8665
        %v8685 = vmul.f32 %v8477, %v8665
        %v8686 = vmul.f32 %v8482, %v8665
        %v8687 = vmul.f32 %v8485, %v8665
        %v8688 = vmul.f32 %v8490, %v8665
        %v8689 = vmul.f32 %v8493, %v8665
        %v8690 = vmul.f32 %v8498, %v8665
        %v8691 = vmul.f32 %v8501, %v8665
        %v8692 = vmul.f32 %v8506, %v8665
        %v8693 = vmul.f32 %v8509, %v8665
        %v8694 = vmul.f32 %v8514, %v8665
        %v8695 = vmul.f32 %v8517, %v8665
        %v8696 = vmul.f32 %v8522, %v8665
        %v8697 = vmul.f32 %v8525, %v8665
        %v8698 = vadd.f32 %v8666, %v8630
        %v8699 = vadd.f32 %v8667, %v8631
        %v8700 = vadd.f32 %v8668, %v8632
        %v8701 = vadd.f32 %v8669, %v8633
        %v8702 = vadd.f32 %v8670, %v8634
        %v8703 = vadd.f32 %v8671, %v8635
        %v8704 = vadd.f32 %v8672, %v8636
        %v8705 = vadd.f32 %v8673, %v8637
        %v8706 = vadd.f32 %v8674, %v8638
        %v8707 = vadd.f32 %v8675, %v8639
        %v8708 = vadd.f32 %v8676, %v8640
        %v8709 = vadd.f32 %v8677, %v8641
        %v8710 = vadd.f32 %v8678, %v8642
        %v8711 = vadd.f32 %v8679, %v8643
        %v8712 = vadd.f32 %v8680, %v8644
        %v8713 = vadd.f32 %v8681, %v8645
        %v8714 = vadd.f32 %v8682, %v8646
        %v8715 = vadd.f32 %v8683, %v8647
        %v8716 = vadd.f32 %v8684, %v8648
        %v8717 = vadd.f32 %v8685, %v8649
        %v8718 = vadd.f32 %v8686, %v8650
        %v8719 = vadd.f32 %v8687, %v8651
        %v8720 = vadd.f32 %v8688, %v8652
        %v8721 = vadd.f32 %v8689, %v8653
        %v8722 = vadd.f32 %v8690, %v8654
        %v8723 = vadd.f32 %v8691, %v8655
        %v8724 = vadd.f32 %v8692, %v8656
        %v8725 = vadd.f32 %v8693, %v8657
        %v8726 = vadd.f32 %v8694, %v8658
        %v8727 = vadd.f32 %v8695, %v8659
        %v8728 = vadd.f32 %v8696, %v8660
        %v8729 = vadd.f32 %v8697, %v8661
        %8730 = vst.msk [vmem:[%s325] sm:$0xff] %vm1271, %v8698
        %8731 = vst.msk [vmem:[%s325 + $0x8] sm:$0xff] %vm1271, %v8699
        %8732 = vst.msk [vmem:[%s325 + $0x10] sm:$0xff] %vm1271, %v8700
        %8733 = vst.msk [vmem:[%s325 + $0x18] sm:$0xff] %vm1271, %v8701
        %8734 = vst.msk [vmem:[%s325 + $0x20] sm:$0xff] %vm1271, %v8702
        %8735 = vst.msk [vmem:[%s325 + $0x28] sm:$0xff] %vm1271, %v8703
        %8736 = vst.msk [vmem:[%s325 + $0x30] sm:$0xff] %vm1271, %v8704
        %8737 = vst.msk [vmem:[%s325 + $0x38] sm:$0xff] %vm1271, %v8705
        %8738 = vst.msk [vmem:[%s325 + $0x40] sm:$0xff] %vm1271, %v8706
        %8739 = vst.msk [vmem:[%s325 + $0x48] sm:$0xff] %vm1271, %v8707
        %8740 = vst.msk [vmem:[%s325 + $0x50] sm:$0xff] %vm1271, %v8708
        %8741 = vst.msk [vmem:[%s325 + $0x58] sm:$0xff] %vm1271, %v8709
        %8742 = vst.msk [vmem:[%s325 + $0x60] sm:$0xff] %vm1271, %v8710
        %8743 = vst.msk [vmem:[%s325 + $0x68] sm:$0xff] %vm1271, %v8711
        %8744 = vst.msk [vmem:[%s325 + $0x70] sm:$0xff] %vm1271, %v8712
        %8745 = vst.msk [vmem:[%s325 + $0x78] sm:$0xff] %vm1271, %v8713
        %8746 = vst.msk [vmem:[%s325 + $0x80] sm:$0xff] %vm1271, %v8714
        %8747 = vst.msk [vmem:[%s325 + $0x88] sm:$0xff] %vm1271, %v8715
        %8748 = vst.msk [vmem:[%s325 + $0x90] sm:$0xff] %vm1271, %v8716
        %8749 = vst.msk [vmem:[%s325 + $0x98] sm:$0xff] %vm1271, %v8717
        %8750 = vst.msk [vmem:[%s325 + $0xa0] sm:$0xff] %vm1271, %v8718
        %8751 = vst.msk [vmem:[%s325 + $0xa8] sm:$0xff] %vm1271, %v8719
        %8752 = vst.msk [vmem:[%s325 + $0xb0] sm:$0xff] %vm1271, %v8720
        %8753 = vst.msk [vmem:[%s325 + $0xb8] sm:$0xff] %vm1271, %v8721
        %8754 = vst.msk [vmem:[%s325 + $0xc0] sm:$0xff] %vm1271, %v8722
        %8755 = vst.msk [vmem:[%s325 + $0xc8] sm:$0xff] %vm1271, %v8723
        %8756 = vst.msk [vmem:[%s325 + $0xd0] sm:$0xff] %vm1271, %v8724
        %8757 = vst.msk [vmem:[%s325 + $0xd8] sm:$0xff] %vm1271, %v8725
        %8758 = vst.msk [vmem:[%s325 + $0xe0] sm:$0xff] %vm1271, %v8726
        %8759 = vst.msk [vmem:[%s325 + $0xe8] sm:$0xff] %vm1271, %v8727
        %8760 = vst.msk [vmem:[%s325 + $0xf0] sm:$0xff] %vm1271, %v8728
        %8761 = vst.msk [vmem:[%s325 + $0xf8] sm:$0xff] %vm1271, %v8729
        %s8762 = sand.u32 %s225, 1
        %s8763 = scalar_lea.sflag [#allocation6], %s8762
        %s8764 = sand.u32 %s225, 1
        %s8765 = smul.addr %s8764, 256
        %s8766 = scalar_lea.vmem [#allocation5], %s8765
        // Predicated region
        $region57: #{tpu_custom_call.1} parent=55 // pred_check
          %p8767 = pneg %p235
        $region58: #{tpu_custom_call.1} parent=55 // pred_check_branch
          %8769 = sbr.rel (%p8767) target = $region60
        $region59: #{tpu_custom_call.1} parent=55 // pred_region
          %s8771 = ssub.s32 4096, 4096
          %8772 = vsyncadd %s8763, %s8771
          %s8773 = smul.addr %s23, 32
          %s8774 = smul.addr %s8773, 128
          %s8775 = scalar_lea.hbm %s9, %s8774
          %s8776 = sshll.u32 %s8766, 4
          %s8777 = int_to_ptr.vmem [resolvable:$true] %s8776
          %8782 = dma.vmem_to_hbm [thread:$0]  %s8777, 4096, %s8775, %s8763, 128, 128, 8
        $region60: #{tpu_custom_call.1} parent=55 // pred_fallthru
          _
      $region56: #{tpu_custom_call.1} parent=5 // pred_fallthru
        _
      %p8783 = scmp.le.s32.totalorder 2, %s18
      // Predicated region
      $region61: #{tpu_custom_call.1} parent=5 // pred_check
        %p8784 = pneg %p8783
      $region62: #{tpu_custom_call.1} parent=5 // pred_check_branch
        %8786 = sbr.rel (%p8784) target = $region64
      $region63: #{tpu_custom_call.1} parent=5 // pred_region
        %s8787 = ssub.s32 %s18, 2
        // Predicated region
        $region65: #{tpu_custom_call.1} parent=63 // pred_check
          %p8788 = pneg %p241
        $region66: #{tpu_custom_call.1} parent=63 // pred_check_branch
          %8790 = sbr.rel (%p8788) target = $region68
        $region67: #{tpu_custom_call.1} parent=63 // pred_region
          %s8791 = sand.u32 %s226, 1
          %s8792 = scalar_lea.sflag [#allocation6], %s8791
          %s8793 = sand.u32 %s226, 1
          %s8794 = smul.addr %s8793, 256
          %s8795 = scalar_lea.vmem [#allocation5], %s8794
          %8796 = dma.done %s8792, 4096
        $region68: #{tpu_custom_call.1} parent=63 // pred_fallthru
          _
      $region64: #{tpu_custom_call.1} parent=5 // pred_fallthru
        _
    $region6: #{tpu_custom_call.1} parent=1 // loop_footer
      %s22 = sadd.s32 1, %s18
    $region7: #{tpu_custom_call.1} parent=1 // loop_footer_branch
      %17 = sbr.rel target = $region3
    $region8: #{tpu_custom_call.1} parent=1 // loop_exit
      _
    %8797 = vsyncpa [#allocation6], 1
    %s8798 = scalar_lea.sflag [#allocation6], 1
    %8799 = vsyncpa %s8798, 1

</llo_original>
